<compile_context>
chip_gen: v7x
topology: tpu7x:2x2x1
jax: 0.10.0
libtpu: 0.0.40
codegen_flags: <defaults>
</compile_context>

<pallas_src>
import math
import functools

import jax
import jax.numpy as jnp
from jax.experimental import pallas as pl
from jax.experimental.pallas import tpu as pltpu


# ----------------------------------------------------------------------------
# Fused DialogueRNN kernel: grid = (direction,), time loop inside the kernel
# ----------------------------------------------------------------------------

def _dialogue_rnn_kernel(
    # data (per direction)
    uab_ref, qm_ref, pe_ref,
    # packed per-direction weights (a & b streams fused, gate-interleaved)
    dense_w_ref, dense_b_ref,
    g_wih_u_ref, g_wih_q_ref, g_whh_ref, g_bih_ref, g_bhh_ref,
    p_wih_u_ref, p_wih_c_ref, p_whh_ref, p_bih_ref, p_bhh_ref,
    e_wih_ref, e_whh_ref, e_bih_ref, e_bhh_ref,
    att_w_ref, satt_w_ref, satt_b_ref, d12_w_ref, d12_b_ref,
    # output (per direction, written back once)
    e_out_ref,                 # (T, B, 2*D_e)
    # scratch
    ghist,                     # (T, B, 2*D_g)   g history (+ positional encoding), [a|b]
    gu_buf,                    # (T, B, 6*D_g)   hoisted g-cell input gates (incl. bih)
    pu_buf,                    # (T, B, 6*D_p)   hoisted p-cell input gates (incl. bih)
    g_prev,                    # (B, 2*D_g)      previous raw g, [a|b]
    q_state,                   # (party, B, 2*D_p) party states, [a|b]
    e_state,                   # (B, 2*D_e)      emotion states, [a|b]
    c_ctx,                     # (B, 2*D_g)      attention context, [a|b]
):
    T, B, _ = uab_ref.shape
    party = qm_ref.shape[2]
    D_g2 = ghist.shape[2]
    D_g = D_g2 // 2
    D_p2 = q_state.shape[2]

    # ---- per-direction state init (each grid step == one direction) ----
    ghist[...] = jnp.zeros_like(ghist)
    g_prev[...] = jnp.zeros_like(g_prev)
    q_state[...] = jnp.zeros_like(q_state)
    e_state[...] = jnp.zeros_like(e_state)
    c_ctx[...] = jnp.zeros_like(c_ctx)

    # ---- hoist all state-independent matmuls out of the serial time loop ----
    uab = uab_ref[...].reshape(T * B, uab_ref.shape[2])           # [Ua | Ub]
    u_d = jnp.dot(uab, dense_w_ref[...],
                  preferred_element_type=jnp.float32) + dense_b_ref[...]   # (T*B, 2*D_m)
    gu = jnp.dot(u_d, g_wih_u_ref[...],
                 preferred_element_type=jnp.float32) + g_bih_ref[...]      # (T*B, 6*D_g)
    pu = jnp.dot(u_d, p_wih_u_ref[...],
                 preferred_element_type=jnp.float32) + p_bih_ref[...]      # (T*B, 6*D_p)
    gu_buf[...] = gu.reshape(gu_buf.shape)
    pu_buf[...] = pu.reshape(pu_buf.shape)

    def dual_gru_update(gi, gh, h):
        # PyTorch nn.GRUCell semantics, gates interleaved as [r_a r_b | z_a z_b | n_a n_b].
        H2 = h.shape[-1]
        r = jax.nn.sigmoid(gi[:, :H2] + gh[:, :H2])
        z = jax.nn.sigmoid(gi[:, H2:2 * H2] + gh[:, H2:2 * H2])
        n = jnp.tanh(gi[:, 2 * H2:] + r * gh[:, 2 * H2:])
        return (1.0 - z) * n + z * h

    @pl.loop(0, T)
    def _step(t):
        qm = qm_ref[t]                                            # (B, party) one-hot
        # TODO(synk): reference uses argmax-based _select_parties; identical for one-hot qmask.
        q_sel_prev = qm[:, 0:1] * q_state[0]
        for p in range(1, party):
            q_sel_prev = q_sel_prev + qm[:, p:p + 1] * q_state[p]  # (B, 2*D_p) [a|b]

        # ---- global (g) GRU, a & b fused ----
        gi_g = gu_buf[t] + jnp.dot(q_sel_prev, g_wih_q_ref[...],
                                   preferred_element_type=jnp.float32)
        gh_g = jnp.dot(g_prev[...], g_whh_ref[...],
                       preferred_element_type=jnp.float32) + g_bhh_ref[...]
        g_new = dual_gru_update(gi_g, gh_g, g_prev[...])          # (B, 2*D_g)

        # ---- masked context attention over history rows < t (c == 0 at t == 0) ----
        @pl.when(t > 0)
        def _():
            G = ghist[...]                                        # (T, B, 2*D_g)
            scores = jnp.dot(G.reshape(T * B, D_g2), att_w_ref[...],
                             preferred_element_type=jnp.float32).reshape(T, B, 4)
            tids = jax.lax.broadcasted_iota(jnp.int32, (T, B, 1), 0)
            mask = tids < t
            s = jnp.where(mask, scores, jnp.float32(-1e9))
            m = jnp.max(s, axis=0, keepdims=True)
            ex = jnp.exp(s - m) * mask.astype(jnp.float32)
            alpha = ex * pl.reciprocal(jnp.sum(ex, axis=0, keepdims=True), approx=True)

            Ga = G[:, :, :D_g]
            Gb = G[:, :, D_g:]
            c_aa = jnp.sum(alpha[:, :, 0:1] * Ga, axis=0)         # attention1(g_hist_a)
            c_ba = jnp.sum(alpha[:, :, 1:2] * Ga, axis=0)         # attention2(g_hist_a)
            c_ab = jnp.sum(alpha[:, :, 2:3] * Gb, axis=0)         # attention3(g_hist_b)
            c_bb = jnp.sum(alpha[:, :, 3:4] * Gb, axis=0)         # attention4(g_hist_b)

            # TODO(synk): SelfAttention('general2') class not provided; shape-consistent
            # reading: Linear(D_g,1) score, softmax over the 2 contexts, weight, flatten,
            # then dense1/dense2 (2*D_g -> D_g) fused into one block-diagonal weight.
            sw = satt_w_ref[...]                                  # (2, D_g)
            sb = satt_b_ref[...]                                  # (1, 2)

            def pair_weights(cx, cy, widx):
                w_row = sw[widx:widx + 1, :]
                bx = sb[:, widx:widx + 1]
                sx = jnp.sum(cx * w_row, axis=-1, keepdims=True) + bx
                sy = jnp.sum(cy * w_row, axis=-1, keepdims=True) + bx
                mm = jnp.maximum(sx, sy)
                ex_ = jnp.exp(sx - mm)
                ey_ = jnp.exp(sy - mm)
                inv = pl.reciprocal(ex_ + ey_, approx=True)
                return ex_ * inv, ey_ * inv

            wax, way = pair_weights(c_aa, c_ab, 0)
            wbx, wby = pair_weights(c_bb, c_ba, 1)
            dw = d12_w_ref[...]                                   # (4*D_g, 2*D_g)
            c_ctx[...] = (
                jnp.dot(wax * c_aa, dw[0 * D_g:1 * D_g, :],
                        preferred_element_type=jnp.float32)
                + jnp.dot(way * c_ab, dw[1 * D_g:2 * D_g, :],
                          preferred_element_type=jnp.float32)
                + jnp.dot(wbx * c_bb, dw[2 * D_g:3 * D_g, :],
                          preferred_element_type=jnp.float32)
                + jnp.dot(wby * c_ba, dw[3 * D_g:4 * D_g, :],
                          preferred_element_type=jnp.float32)
                + d12_b_ref[...])

        c_now = c_ctx[...]                                        # (B, 2*D_g) [c_a|c_b]

        # ---- party (p) GRU per party, a & b fused (listener_state = False) ----
        gi_p = pu_buf[t] + jnp.dot(c_now, p_wih_c_ref[...],
                                   preferred_element_type=jnp.float32)
        q_sel_new = jnp.zeros((B, D_p2), jnp.float32)
        for p in range(party):
            q0_p = q_state[p]
            gh_p = jnp.dot(q0_p, p_whh_ref[...],
                           preferred_element_type=jnp.float32) + p_bhh_ref[...]
            qs_p = dual_gru_update(gi_p, gh_p, q0_p)
            qmp = qm[:, p:p + 1]
            q_new_p = q0_p * (1.0 - qmp) + qs_p * qmp
            q_state[p] = q_new_p
            q_sel_new = q_sel_new + qmp * q_new_p

        # ---- emotion (e) GRU, a & b fused ----
        gi_e = jnp.dot(q_sel_new, e_wih_ref[...],
                       preferred_element_type=jnp.float32) + e_bih_ref[...]
        gh_e = jnp.dot(e_state[...], e_whh_ref[...],
                       preferred_element_type=jnp.float32) + e_bhh_ref[...]
        e_new = dual_gru_update(gi_e, gh_e, e_state[...])
        e_state[...] = e_new
        # softmax(self_Attention(.)) over a singleton axis == 1.0 -> e = [e_a | e_b]
        e_out_ref[t] = e_new

        # ---- append g (+ positional encoding) to history, carry raw g ----
        ghist[t] = g_new + pe_ref[pl.ds(t, 1), :]
        g_prev[...] = g_new


_W_ORDER = ('dense_w', 'dense_b',
            'g_wih_u', 'g_wih_q', 'g_whh', 'g_bih', 'g_bhh',
            'p_wih_u', 'p_wih_c', 'p_whh', 'p_bih', 'p_bhh',
            'e_wih', 'e_whh', 'e_bih', 'e_bhh',
            'att_w', 'satt_w', 'satt_b', 'd12_w', 'd12_b')


def _dir_spec(arr):
    zeros = (0,) * (arr.ndim - 1)
    return pl.BlockSpec((None,) + tuple(arr.shape[1:]),
                        lambda d, _z=zeros: (d,) + _z)


def dialogue_rnn_fused(packed, Uab_all, qm_all, pe2, dims):
    """Run forward (d=0) and reverse (d=1) DialogueRNN in one fused kernel."""
    _, T, B, _ = Uab_all.shape
    party = qm_all.shape[3]
    D_g, D_p, D_e = dims['D_g'], dims['D_p'], dims['D_e']

    weights = [packed[k] for k in _W_ORDER]
    in_specs = ([_dir_spec(Uab_all), _dir_spec(qm_all),
                 pl.BlockSpec(tuple(pe2.shape), lambda d: (0, 0))]
                + [_dir_spec(w) for w in weights])
    out_specs = pl.BlockSpec((None, T, B, 2 * D_e), lambda d: (d, 0, 0, 0))

    grid_spec = pltpu.PrefetchScalarGridSpec(
        num_scalar_prefetch=0,
        grid=(2,),
        in_specs=in_specs,
        out_specs=out_specs,
        scratch_shapes=[
            pltpu.VMEM((T, B, 2 * D_g), jnp.float32),      # g history (+ PE) [a|b]
            pltpu.VMEM((T, B, 6 * D_g), jnp.float32),      # hoisted g-cell input gates
            pltpu.VMEM((T, B, 6 * D_p), jnp.float32),      # hoisted p-cell input gates
            pltpu.VMEM((B, 2 * D_g), jnp.float32),         # previous raw g
            pltpu.VMEM((party, B, 2 * D_p), jnp.float32),  # party states
            pltpu.VMEM((B, 2 * D_e), jnp.float32),         # emotion states
            pltpu.VMEM((B, 2 * D_g), jnp.float32),         # attention context
        ],
    )
    return pl.pallas_call(
        _dialogue_rnn_kernel,
        out_shape=jax.ShapeDtypeStruct((2, T, B, 2 * D_e), jnp.float32),
        grid_spec=grid_spec,
        compiler_params=pltpu.CompilerParams(
            dimension_semantics=("parallel",)),
    )(Uab_all, qm_all, pe2, *weights)


# ----------------------------------------------------------------------------
# Fused tail kernel: PE add + QKV + 4-head self-attention + out proj + head
# ----------------------------------------------------------------------------

def _tail_kernel(em_ref, pe_ref, wqkv_ref, bqkv_ref, wo_ref, bo_ref,
                 w1_ref, b1_ref, w2_ref, b2_ref, out_ref):
    # TODO(synk): MultiHeadAttention class not provided; standard 4-head self-attention
    # (fused QKV, 1/sqrt(dh) scale, softmax over keys, output projection) assumed; no
    # key-padding mask from umask (exact for the all-ones umask used here).
    B, T, D = em_ref.shape
    H = 4
    dh = D // H
    scale = 1.0 / math.sqrt(dh)

    x = em_ref[...] + pe_ref[...][None, :, :]                       # (B, T, D)
    qkv = (jnp.dot(x.reshape(B * T, D), wqkv_ref[...],
                   preferred_element_type=jnp.float32) + bqkv_ref[...])
    qkv = qkv.reshape(B, T, 3 * D)

    wo = wo_ref[...]
    att = jnp.zeros((B * T, D), jnp.float32)
    for h in range(H):                                              # static head loop, batched over B
        qh = qkv[:, :, h * dh:(h + 1) * dh]
        kh = qkv[:, :, D + h * dh:D + (h + 1) * dh]
        vh = qkv[:, :, 2 * D + h * dh:2 * D + (h + 1) * dh]
        s = jnp.einsum('btd,bsd->bts', qh, kh,
                       preferred_element_type=jnp.float32) * scale
        m = jnp.max(s, axis=-1, keepdims=True)
        p = jnp.exp(s - m)
        p = p * pl.reciprocal(jnp.sum(p, axis=-1, keepdims=True), approx=True)
        ctx = jnp.einsum('bts,bsd->btd', p, vh,
                         preferred_element_type=jnp.float32)        # (B, T, dh)
        att = att + jnp.dot(ctx.reshape(B * T, dh), wo[h * dh:(h + 1) * dh, :],
                            preferred_element_type=jnp.float32)

    att_emotions = att + bo_ref[...]
    hidden = jnp.maximum(
        jnp.dot(att_emotions, w1_ref[...],
                preferred_element_type=jnp.float32) + b1_ref[...], 0.0)
    logits = jnp.dot(hidden, w2_ref[...],
                     preferred_element_type=jnp.float32) + b2_ref[...]
    mx = jnp.max(logits, axis=-1, keepdims=True)
    lse = jnp.log(jnp.sum(jnp.exp(logits - mx), axis=-1, keepdims=True)) + mx
    out_ref[...] = logits - lse


def tail_fused(emotions_bt, pe4, head):
    B, T, _ = emotions_bt.shape
    ncls = head['smax_w'].shape[1]
    args = (emotions_bt, pe4, head['wqkv'], head['bqkv'], head['wo'], head['bo'],
            head['w1'], head['b1'], head['smax_w'], head['smax_b'])
    return pl.pallas_call(
        _tail_kernel,
        out_shape=jax.ShapeDtypeStruct((B * T, ncls), jnp.float32),
        in_specs=[pl.BlockSpec(memory_space=pltpu.MemorySpace.VMEM)] * len(args),
        out_specs=pl.BlockSpec(memory_space=pltpu.MemorySpace.VMEM),
    )(*args)


# ----------------------------------------------------------------------------
# Glue (plain JAX): positional encoding, sequence reversal, top-level forward
# ----------------------------------------------------------------------------

def sinusoidal_pe(d_model, max_len):
    # TODO(synk): PositionalEncoding class not provided; standard sinusoidal add assumed.
    pos = jnp.arange(max_len, dtype=jnp.float32)[:, None]
    div = jnp.exp(jnp.arange(0, d_model, 2, dtype=jnp.float32)
                  * (-math.log(10000.0) / d_model))
    pe = jnp.zeros((max_len, d_model), jnp.float32)
    pe = pe.at[:, 0::2].set(jnp.sin(pos * div))
    pe = pe.at[:, 1::2].set(jnp.cos(pos * div))
    return pe


def reverse_seq(X, umask):
    # TODO(synk): torch pad_sequence would shorten the output if max(lengths) < seq_len;
    # we keep seq_len rows (zero-padded), identical when umask covers the full length.
    T, B = X.shape[0], X.shape[1]
    lengths = jnp.sum(umask, axis=1).astype(jnp.int32)            # (B,)
    t = jnp.arange(T)[:, None]                                    # (T, 1)
    src = jnp.clip(lengths[None, :] - 1 - t, 0, T - 1)            # (T, B)
    valid = (t < lengths[None, :]).astype(X.dtype)                # (T, B)
    gathered = X[src, jnp.arange(B)[None, :]]                     # (T, B, ...)
    return gathered * valid[:, :, None]


def bimodel_forward(params, Ua, Ub, qmask, umask, dims):
    T = Ua.shape[0]

    rev_Ua = reverse_seq(Ua, umask)
    rev_Ub = reverse_seq(Ub, umask)
    rev_qmask = reverse_seq(qmask, umask)

    Uab_all = jnp.stack([jnp.concatenate([Ua, Ub], axis=-1),
                         jnp.concatenate([rev_Ua, rev_Ub], axis=-1)])   # (2, T, B, D_mA+D_mB)
    qm_all = jnp.stack([qmask, rev_qmask])                               # (2, T, B, party)

    e_all = dialogue_rnn_fused(params['packed'], Uab_all, qm_all,
                               params['pe2_g'][:T], dims)                # (2, T, B, 2*D_e)
    emotions_f = e_all[0]
    emotions_r = reverse_seq(e_all[1], umask)
    emotions = jnp.concatenate([emotions_f, emotions_r], axis=-1)        # (T, B, 4*D_e)
    emotions_bt = jnp.transpose(emotions, (1, 0, 2))                     # (B, T, 4*D_e)

    return tail_fused(emotions_bt, params['pe_4e'][:T], params['head'])  # (B*T, ncls)


# ----------------------------------------------------------------------------
# Deterministic parameter init + packing for the fused kernels
# ----------------------------------------------------------------------------

class KeyGen:
    def __init__(self, key):
        self.key = key

    def __call__(self):
        self.key, sub = jax.random.split(self.key)
        return sub


def init_linear(kg, din, dout, scale=0.1):
    return {'w': jax.random.normal(kg(), (din, dout), jnp.float32) * scale,
            'b': jax.random.normal(kg(), (1, dout), jnp.float32) * scale}


def init_gru(kg, din, dh, scale=0.1):
    return {'wih': jax.random.normal(kg(), (din, 3 * dh), jnp.float32) * scale,
            'whh': jax.random.normal(kg(), (dh, 3 * dh), jnp.float32) * scale,
            'bih': jax.random.normal(kg(), (1, 3 * dh), jnp.float32) * scale,
            'bhh': jax.random.normal(kg(), (1, 3 * dh), jnp.float32) * scale}


def init_cell(kg, d):
    return {
        'dense_a': init_linear(kg, d['D_m_A'], d['D_m']),
        'dense_b': init_linear(kg, d['D_m_B'], d['D_m']),
        'g_cell_a': init_gru(kg, d['D_m'] + d['D_p'], d['D_g']),
        'p_cell_a': init_gru(kg, d['D_m'] + d['D_g'], d['D_p']),
        'e_cell_a': init_gru(kg, d['D_p'], d['D_e']),
        'g_cell_b': init_gru(kg, d['D_m'] + d['D_p'], d['D_g']),
        'p_cell_b': init_gru(kg, d['D_m'] + d['D_g'], d['D_p']),
        'e_cell_b': init_gru(kg, d['D_p'], d['D_e']),
        'att1_w': jax.random.normal(kg(), (1, d['D_g']), jnp.float32) * 0.1,
        'att2_w': jax.random.normal(kg(), (1, d['D_g']), jnp.float32) * 0.1,
        'att3_w': jax.random.normal(kg(), (1, d['D_g']), jnp.float32) * 0.1,
        'att4_w': jax.random.normal(kg(), (1, d['D_g']), jnp.float32) * 0.1,
        'satt1_w': jax.random.normal(kg(), (1, d['D_g']), jnp.float32) * 0.1,
        'satt1_b': jax.random.normal(kg(), (1, 1), jnp.float32) * 0.1,
        'satt2_w': jax.random.normal(kg(), (1, d['D_g']), jnp.float32) * 0.1,
        'satt2_b': jax.random.normal(kg(), (1, 1), jnp.float32) * 0.1,
        'dense1': init_linear(kg, 2 * d['D_g'], d['D_g']),
        'dense2': init_linear(kg, 2 * d['D_g'], d['D_g']),
    }


def _dual_gate_w(wa, wb, H):
    """Block-diagonal, gate-interleaved packing: columns [r_a r_b z_a z_b n_a n_b]."""
    da, db = wa.shape[0], wb.shape[0]
    out = jnp.zeros((da + db, 6 * H), jnp.float32)
    for g in range(3):
        out = out.at[:da, 2 * g * H:(2 * g + 1) * H].set(wa[:, g * H:(g + 1) * H])
        out = out.at[da:, (2 * g + 1) * H:(2 * g + 2) * H].set(wb[:, g * H:(g + 1) * H])
    return out


def _dual_gate_b(ba, bb, H):
    parts = []
    for g in range(3):
        parts.append(ba[:, g * H:(g + 1) * H])
        parts.append(bb[:, g * H:(g + 1) * H])
    return jnp.concatenate(parts, axis=1)


def pack_cell(c, d):
    D_m, D_g, D_p, D_e = d['D_m'], d['D_g'], d['D_p'], d['D_e']
    D_mA, D_mB = d['D_m_A'], d['D_m_B']

    dense_w = jnp.zeros((D_mA + D_mB, 2 * D_m), jnp.float32)
    dense_w = dense_w.at[:D_mA, :D_m].set(c['dense_a']['w'])
    dense_w = dense_w.at[D_mA:, D_m:].set(c['dense_b']['w'])

    ga, gb = c['g_cell_a'], c['g_cell_b']
    pa, pb = c['p_cell_a'], c['p_cell_b']
    ea, eb = c['e_cell_a'], c['e_cell_b']

    att_w = jnp.zeros((2 * D_g, 4), jnp.float32)
    att_w = att_w.at[:D_g, 0].set(c['att1_w'][0])
    att_w = att_w.at[:D_g, 1].set(c['att2_w'][0])
    att_w = att_w.at[D_g:, 2].set(c['att3_w'][0])
    att_w = att_w.at[D_g:, 3].set(c['att4_w'][0])

    d12_w = jnp.zeros((4 * D_g, 2 * D_g), jnp.float32)
    d12_w = d12_w.at[0 * D_g:1 * D_g, :D_g].set(c['dense1']['w'][:D_g])
    d12_w = d12_w.at[1 * D_g:2 * D_g, :D_g].set(c['dense1']['w'][D_g:])
    d12_w = d12_w.at[2 * D_g:3 * D_g, D_g:].set(c['dense2']['w'][:D_g])
    d12_w = d12_w.at[3 * D_g:4 * D_g, D_g:].set(c['dense2']['w'][D_g:])

    return {
        'dense_w': dense_w,
        'dense_b': jnp.concatenate([c['dense_a']['b'], c['dense_b']['b']], axis=1),
        'g_wih_u': _dual_gate_w(ga['wih'][:D_m], gb['wih'][:D_m], D_g),
        'g_wih_q': _dual_gate_w(ga['wih'][D_m:], gb['wih'][D_m:], D_g),
        'g_whh': _dual_gate_w(ga['whh'], gb['whh'], D_g),
        'g_bih': _dual_gate_b(ga['bih'], gb['bih'], D_g),
        'g_bhh': _dual_gate_b(ga['bhh'], gb['bhh'], D_g),
        'p_wih_u': _dual_gate_w(pa['wih'][:D_m], pb['wih'][:D_m], D_p),
        'p_wih_c': _dual_gate_w(pa['wih'][D_m:], pb['wih'][D_m:], D_p),
        'p_whh': _dual_gate_w(pa['whh'], pb['whh'], D_p),
        'p_bih': _dual_gate_b(pa['bih'], pb['bih'], D_p),
        'p_bhh': _dual_gate_b(pa['bhh'], pb['bhh'], D_p),
        'e_wih': _dual_gate_w(ea['wih'], eb['wih'], D_e),
        'e_whh': _dual_gate_w(ea['whh'], eb['whh'], D_e),
        'e_bih': _dual_gate_b(ea['bih'], eb['bih'], D_e),
        'e_bhh': _dual_gate_b(ea['bhh'], eb['bhh'], D_e),
        'att_w': att_w,
        'satt_w': jnp.concatenate([c['satt1_w'], c['satt2_w']], axis=0),    # (2, D_g)
        'satt_b': jnp.concatenate([c['satt1_b'], c['satt2_b']], axis=1),    # (1, 2)
        'd12_w': d12_w,
        'd12_b': jnp.concatenate([c['dense1']['b'], c['dense2']['b']], axis=1),
    }


def init_model(key, d, max_len):
    kg = KeyGen(key)
    D4 = 4 * d['D_e']
    cell_f = init_cell(kg, d)
    cell_r = init_cell(kg, d)
    mha_q = init_linear(kg, D4, D4)
    mha_k = init_linear(kg, D4, D4)
    mha_v = init_linear(kg, D4, D4)
    mha_o = init_linear(kg, D4, D4)
    linear = init_linear(kg, D4, 2 * d['D_h'])
    smax = init_linear(kg, 2 * d['D_h'], d['n_classes'])

    pf = pack_cell(cell_f, d)
    pr = pack_cell(cell_r, d)
    packed = {k: jnp.stack([pf[k], pr[k]]) for k in pf}

    pe_g = sinusoidal_pe(d['D_g'], max_len)
    return {
        'packed': packed,
        'head': {
            'wqkv': jnp.concatenate([mha_q['w'], mha_k['w'], mha_v['w']], axis=1),
            'bqkv': jnp.concatenate([mha_q['b'], mha_k['b'], mha_v['b']], axis=1),
            'wo': mha_o['w'], 'bo': mha_o['b'],
            'w1': linear['w'], 'b1': linear['b'],
            'smax_w': smax['w'], 'smax_b': smax['b'],
        },
        'pe2_g': jnp.concatenate([pe_g, pe_g], axis=-1),      # PE for the [a|b] g-history
        'pe_4e': sinusoidal_pe(D4, max_len),
    }


# ----------------------------------------------------------------------------
# main
# ----------------------------------------------------------------------------

if __name__ == "__main__":
    dims = dict(D_m_A=12, D_m_B=10, D_m=16, D_g=16, D_p=16, D_e=16, D_h=16, n_classes=7)
    T, B, party = 6, 2, 2

    root = jax.random.PRNGKey(0)
    k_par, k_ua, k_ub, k_qm = jax.random.split(root, 4)

    params = init_model(k_par, dims, max_len=T)

    Ua = jax.random.normal(k_ua, (T, B, dims['D_m_A']), jnp.float32)
    Ub = jax.random.normal(k_ub, (T, B, dims['D_m_B']), jnp.float32)
    speaker = jax.random.randint(k_qm, (T, B), 0, party)
    qmask = jax.nn.one_hot(speaker, party, dtype=jnp.float32)            # (T, B, party)
    umask = jnp.ones((B, T), jnp.float32)

    fwd = jax.jit(functools.partial(bimodel_forward, params, dims=dims))
    log_prob = fwd(Ua, Ub, qmask, umask)
    jax.block_until_ready(log_prob)

    assert log_prob.shape == (B * T, dims['n_classes'])
    assert bool(jnp.all(jnp.isfinite(log_prob)))
    print("KERNEL_OK")
</pallas_src>

<mosaic_0001>
module attributes {stable_mosaic.version = 11 : i64} {
  func.func @_tail_kernel(%arg0: memref<2x6x64xf32, #tpu.memory_space<vmem>>, %arg1: memref<6x64xf32, #tpu.memory_space<vmem>>, %arg2: memref<64x192xf32, #tpu.memory_space<vmem>>, %arg3: memref<1x192xf32, #tpu.memory_space<vmem>>, %arg4: memref<64x64xf32, #tpu.memory_space<vmem>>, %arg5: memref<1x64xf32, #tpu.memory_space<vmem>>, %arg6: memref<64x32xf32, #tpu.memory_space<vmem>>, %arg7: memref<1x32xf32, #tpu.memory_space<vmem>>, %arg8: memref<32x7xf32, #tpu.memory_space<vmem>>, %arg9: memref<1x7xf32, #tpu.memory_space<vmem>>, %arg10: memref<12x7xf32, #tpu.memory_space<vmem>>) attributes {dimension_semantics = [], scalar_prefetch = 0 : i64, scratch_operands = 0 : i64, tpu.core_type = #tpu.core_type<tc>} {
    %c0 = arith.constant 0 : index
    %c0_0 = arith.constant 0 : index
    %c0_1 = arith.constant 0 : index
    %0 = vector.load %arg0[%c0, %c0_0, %c0_1] : memref<2x6x64xf32, #tpu.memory_space<vmem>>, vector<2x6x64xf32>
    %c0_2 = arith.constant 0 : index
    %c0_3 = arith.constant 0 : index
    %1 = vector.load %arg1[%c0_2, %c0_3] : memref<6x64xf32, #tpu.memory_space<vmem>>, vector<6x64xf32>
    %2 = vector.shape_cast %1 : vector<6x64xf32> to vector<1x6x64xf32>
    %3 = vector.broadcast %2 : vector<1x6x64xf32> to vector<2x6x64xf32>
    %4 = arith.addf %0, %3 : vector<2x6x64xf32>
    %5 = vector.shape_cast %4 : vector<2x6x64xf32> to vector<12x64xf32>
    %c0_4 = arith.constant 0 : index
    %c0_5 = arith.constant 0 : index
    %6 = vector.load %arg2[%c0_4, %c0_5] : memref<64x192xf32, #tpu.memory_space<vmem>>, vector<64x192xf32>
    %cst = arith.constant dense<0.000000e+00> : vector<12x192xf32>
    %7 = tpu.matmul %5, %6, %cst {dimension_numbers = #tpu.dot_dimension_numbers<[1], [0], [0], [1], [0, 0, 1, 1], [], []>} : vector<12x64xf32>, vector<64x192xf32>, vector<12x192xf32> -> vector<12x192xf32>
    %c0_6 = arith.constant 0 : index
    %c0_7 = arith.constant 0 : index
    %8 = vector.load %arg3[%c0_6, %c0_7] : memref<1x192xf32, #tpu.memory_space<vmem>>, vector<1x192xf32>
    %9 = vector.broadcast %8 : vector<1x192xf32> to vector<12x192xf32>
    %10 = arith.addf %7, %9 : vector<12x192xf32>
    %11 = vector.shape_cast %10 : vector<12x192xf32> to vector<2x6x192xf32>
    %c0_8 = arith.constant 0 : index
    %c0_9 = arith.constant 0 : index
    %12 = vector.load %arg4[%c0_8, %c0_9] : memref<64x64xf32, #tpu.memory_space<vmem>>, vector<64x64xf32>
    %cst_10 = arith.constant 0.000000e+00 : f32
    %13 = vector.broadcast %cst_10 : f32 to vector<12x64xf32>
    %14 = vector.extract_strided_slice %11 {offsets = [0, 0, 0], sizes = [2, 6, 16], strides = [1, 1, 1]} : vector<2x6x192xf32> to vector<2x6x16xf32>
    %15 = vector.extract_strided_slice %11 {offsets = [0, 0, 64], sizes = [2, 6, 16], strides = [1, 1, 1]} : vector<2x6x192xf32> to vector<2x6x16xf32>
    %16 = vector.extract_strided_slice %11 {offsets = [0, 0, 128], sizes = [2, 6, 16], strides = [1, 1, 1]} : vector<2x6x192xf32> to vector<2x6x16xf32>
    "tpu.trace_start"() <{level = 10 : i32, message = "btd,bsd->bts"}> : () -> ()
    %cst_11 = arith.constant dense<0.000000e+00> : vector<2x6x6xf32>
    %17 = tpu.matmul %14, %15, %cst_11 {dimension_numbers = #tpu.dot_dimension_numbers<[2], [2], [1], [1], [0, 0, 0, 1, 1, 1], [0], [0]>} : vector<2x6x16xf32>, vector<2x6x16xf32>, vector<2x6x6xf32> -> vector<2x6x6xf32>
    "tpu.trace_stop"() : () -> ()
    %cst_12 = arith.constant 2.500000e-01 : f32
    %18 = vector.broadcast %cst_12 : f32 to vector<2x6x6xf32>
    %19 = arith.mulf %17, %18 : vector<2x6x6xf32>
    %cst_13 = arith.constant dense<0xFF800000> : vector<2x6xf32>
    %20 = vector.multi_reduction <maximumf>, %19, %cst_13 [2] : vector<2x6x6xf32> to vector<2x6xf32>
    %21 = vector.shape_cast %20 : vector<2x6xf32> to vector<2x6x1xf32>
    %22 = vector.broadcast %21 : vector<2x6x1xf32> to vector<2x6x6xf32>
    %23 = arith.subf %19, %22 : vector<2x6x6xf32>
    %24 = math.exp %23 : vector<2x6x6xf32>
    %cst_14 = arith.constant dense<0.000000e+00> : vector<2x6xf32>
    %25 = vector.multi_reduction <add>, %24, %cst_14 [2] : vector<2x6x6xf32> to vector<2x6xf32>
    %26 = vector.shape_cast %25 : vector<2x6xf32> to vector<2x6x1xf32>
    %27 = tpu.reciprocal %26 {approx = true} : vector<2x6x1xf32> -> vector<2x6x1xf32>
    %28 = vector.broadcast %27 : vector<2x6x1xf32> to vector<2x6x6xf32>
    %29 = arith.mulf %24, %28 : vector<2x6x6xf32>
    "tpu.trace_start"() <{level = 10 : i32, message = "bts,bsd->btd"}> : () -> ()
    %cst_15 = arith.constant dense<0.000000e+00> : vector<2x6x16xf32>
    %30 = tpu.matmul %29, %16, %cst_15 {dimension_numbers = #tpu.dot_dimension_numbers<[2], [1], [1], [2], [0, 0, 0, 1, 1, 2], [0], [0]>} : vector<2x6x6xf32>, vector<2x6x16xf32>, vector<2x6x16xf32> -> vector<2x6x16xf32>
    "tpu.trace_stop"() : () -> ()
    %31 = vector.shape_cast %30 : vector<2x6x16xf32> to vector<12x16xf32>
    %32 = vector.extract_strided_slice %12 {offsets = [0, 0], sizes = [16, 64], strides = [1, 1]} : vector<64x64xf32> to vector<16x64xf32>
    %cst_16 = arith.constant dense<0.000000e+00> : vector<12x64xf32>
    %33 = tpu.matmul %31, %32, %cst_16 {dimension_numbers = #tpu.dot_dimension_numbers<[1], [0], [0], [1], [0, 0, 1, 1], [], []>} : vector<12x16xf32>, vector<16x64xf32>, vector<12x64xf32> -> vector<12x64xf32>
    %34 = arith.addf %13, %33 : vector<12x64xf32>
    %35 = vector.extract_strided_slice %11 {offsets = [0, 0, 16], sizes = [2, 6, 16], strides = [1, 1, 1]} : vector<2x6x192xf32> to vector<2x6x16xf32>
    %36 = vector.extract_strided_slice %11 {offsets = [0, 0, 80], sizes = [2, 6, 16], strides = [1, 1, 1]} : vector<2x6x192xf32> to vector<2x6x16xf32>
    %37 = vector.extract_strided_slice %11 {offsets = [0, 0, 144], sizes = [2, 6, 16], strides = [1, 1, 1]} : vector<2x6x192xf32> to vector<2x6x16xf32>
    "tpu.trace_start"() <{level = 10 : i32, message = "btd,bsd->bts"}> : () -> ()
    %cst_17 = arith.constant dense<0.000000e+00> : vector<2x6x6xf32>
    %38 = tpu.matmul %35, %36, %cst_17 {dimension_numbers = #tpu.dot_dimension_numbers<[2], [2], [1], [1], [0, 0, 0, 1, 1, 1], [0], [0]>} : vector<2x6x16xf32>, vector<2x6x16xf32>, vector<2x6x6xf32> -> vector<2x6x6xf32>
    "tpu.trace_stop"() : () -> ()
    %cst_18 = arith.constant 2.500000e-01 : f32
    %39 = vector.broadcast %cst_18 : f32 to vector<2x6x6xf32>
    %40 = arith.mulf %38, %39 : vector<2x6x6xf32>
    %cst_19 = arith.constant dense<0xFF800000> : vector<2x6xf32>
    %41 = vector.multi_reduction <maximumf>, %40, %cst_19 [2] : vector<2x6x6xf32> to vector<2x6xf32>
    %42 = vector.shape_cast %41 : vector<2x6xf32> to vector<2x6x1xf32>
    %43 = vector.broadcast %42 : vector<2x6x1xf32> to vector<2x6x6xf32>
    %44 = arith.subf %40, %43 : vector<2x6x6xf32>
    %45 = math.exp %44 : vector<2x6x6xf32>
    %cst_20 = arith.constant dense<0.000000e+00> : vector<2x6xf32>
    %46 = vector.multi_reduction <add>, %45, %cst_20 [2] : vector<2x6x6xf32> to vector<2x6xf32>
    %47 = vector.shape_cast %46 : vector<2x6xf32> to vector<2x6x1xf32>
    %48 = tpu.reciprocal %47 {approx = true} : vector<2x6x1xf32> -> vector<2x6x1xf32>
    %49 = vector.broadcast %48 : vector<2x6x1xf32> to vector<2x6x6xf32>
    %50 = arith.mulf %45, %49 : vector<2x6x6xf32>
    "tpu.trace_start"() <{level = 10 : i32, message = "bts,bsd->btd"}> : () -> ()
    %cst_21 = arith.constant dense<0.000000e+00> : vector<2x6x16xf32>
    %51 = tpu.matmul %50, %37, %cst_21 {dimension_numbers = #tpu.dot_dimension_numbers<[2], [1], [1], [2], [0, 0, 0, 1, 1, 2], [0], [0]>} : vector<2x6x6xf32>, vector<2x6x16xf32>, vector<2x6x16xf32> -> vector<2x6x16xf32>
    "tpu.trace_stop"() : () -> ()
    %52 = vector.shape_cast %51 : vector<2x6x16xf32> to vector<12x16xf32>
    %53 = vector.extract_strided_slice %12 {offsets = [16, 0], sizes = [16, 64], strides = [1, 1]} : vector<64x64xf32> to vector<16x64xf32>
    %cst_22 = arith.constant dense<0.000000e+00> : vector<12x64xf32>
    %54 = tpu.matmul %52, %53, %cst_22 {dimension_numbers = #tpu.dot_dimension_numbers<[1], [0], [0], [1], [0, 0, 1, 1], [], []>} : vector<12x16xf32>, vector<16x64xf32>, vector<12x64xf32> -> vector<12x64xf32>
    %55 = arith.addf %34, %54 : vector<12x64xf32>
    %56 = vector.extract_strided_slice %11 {offsets = [0, 0, 32], sizes = [2, 6, 16], strides = [1, 1, 1]} : vector<2x6x192xf32> to vector<2x6x16xf32>
    %57 = vector.extract_strided_slice %11 {offsets = [0, 0, 96], sizes = [2, 6, 16], strides = [1, 1, 1]} : vector<2x6x192xf32> to vector<2x6x16xf32>
    %58 = vector.extract_strided_slice %11 {offsets = [0, 0, 160], sizes = [2, 6, 16], strides = [1, 1, 1]} : vector<2x6x192xf32> to vector<2x6x16xf32>
    "tpu.trace_start"() <{level = 10 : i32, message = "btd,bsd->bts"}> : () -> ()
    %cst_23 = arith.constant dense<0.000000e+00> : vector<2x6x6xf32>
    %59 = tpu.matmul %56, %57, %cst_23 {dimension_numbers = #tpu.dot_dimension_numbers<[2], [2], [1], [1], [0, 0, 0, 1, 1, 1], [0], [0]>} : vector<2x6x16xf32>, vector<2x6x16xf32>, vector<2x6x6xf32> -> vector<2x6x6xf32>
    "tpu.trace_stop"() : () -> ()
    %cst_24 = arith.constant 2.500000e-01 : f32
    %60 = vector.broadcast %cst_24 : f32 to vector<2x6x6xf32>
    %61 = arith.mulf %59, %60 : vector<2x6x6xf32>
    %cst_25 = arith.constant dense<0xFF800000> : vector<2x6xf32>
    %62 = vector.multi_reduction <maximumf>, %61, %cst_25 [2] : vector<2x6x6xf32> to vector<2x6xf32>
    %63 = vector.shape_cast %62 : vector<2x6xf32> to vector<2x6x1xf32>
    %64 = vector.broadcast %63 : vector<2x6x1xf32> to vector<2x6x6xf32>
    %65 = arith.subf %61, %64 : vector<2x6x6xf32>
    %66 = math.exp %65 : vector<2x6x6xf32>
    %cst_26 = arith.constant dense<0.000000e+00> : vector<2x6xf32>
    %67 = vector.multi_reduction <add>, %66, %cst_26 [2] : vector<2x6x6xf32> to vector<2x6xf32>
    %68 = vector.shape_cast %67 : vector<2x6xf32> to vector<2x6x1xf32>
    %69 = tpu.reciprocal %68 {approx = true} : vector<2x6x1xf32> -> vector<2x6x1xf32>
    %70 = vector.broadcast %69 : vector<2x6x1xf32> to vector<2x6x6xf32>
    %71 = arith.mulf %66, %70 : vector<2x6x6xf32>
    "tpu.trace_start"() <{level = 10 : i32, message = "bts,bsd->btd"}> : () -> ()
    %cst_27 = arith.constant dense<0.000000e+00> : vector<2x6x16xf32>
    %72 = tpu.matmul %71, %58, %cst_27 {dimension_numbers = #tpu.dot_dimension_numbers<[2], [1], [1], [2], [0, 0, 0, 1, 1, 2], [0], [0]>} : vector<2x6x6xf32>, vector<2x6x16xf32>, vector<2x6x16xf32> -> vector<2x6x16xf32>
    "tpu.trace_stop"() : () -> ()
    %73 = vector.shape_cast %72 : vector<2x6x16xf32> to vector<12x16xf32>
    %74 = vector.extract_strided_slice %12 {offsets = [32, 0], sizes = [16, 64], strides = [1, 1]} : vector<64x64xf32> to vector<16x64xf32>
    %cst_28 = arith.constant dense<0.000000e+00> : vector<12x64xf32>
    %75 = tpu.matmul %73, %74, %cst_28 {dimension_numbers = #tpu.dot_dimension_numbers<[1], [0], [0], [1], [0, 0, 1, 1], [], []>} : vector<12x16xf32>, vector<16x64xf32>, vector<12x64xf32> -> vector<12x64xf32>
    %76 = arith.addf %55, %75 : vector<12x64xf32>
    %77 = vector.extract_strided_slice %11 {offsets = [0, 0, 48], sizes = [2, 6, 16], strides = [1, 1, 1]} : vector<2x6x192xf32> to vector<2x6x16xf32>
    %78 = vector.extract_strided_slice %11 {offsets = [0, 0, 112], sizes = [2, 6, 16], strides = [1, 1, 1]} : vector<2x6x192xf32> to vector<2x6x16xf32>
    %79 = vector.extract_strided_slice %11 {offsets = [0, 0, 176], sizes = [2, 6, 16], strides = [1, 1, 1]} : vector<2x6x192xf32> to vector<2x6x16xf32>
    "tpu.trace_start"() <{level = 10 : i32, message = "btd,bsd->bts"}> : () -> ()
    %cst_29 = arith.constant dense<0.000000e+00> : vector<2x6x6xf32>
    %80 = tpu.matmul %77, %78, %cst_29 {dimension_numbers = #tpu.dot_dimension_numbers<[2], [2], [1], [1], [0, 0, 0, 1, 1, 1], [0], [0]>} : vector<2x6x16xf32>, vector<2x6x16xf32>, vector<2x6x6xf32> -> vector<2x6x6xf32>
    "tpu.trace_stop"() : () -> ()
    %cst_30 = arith.constant 2.500000e-01 : f32
    %81 = vector.broadcast %cst_30 : f32 to vector<2x6x6xf32>
    %82 = arith.mulf %80, %81 : vector<2x6x6xf32>
    %cst_31 = arith.constant dense<0xFF800000> : vector<2x6xf32>
    %83 = vector.multi_reduction <maximumf>, %82, %cst_31 [2] : vector<2x6x6xf32> to vector<2x6xf32>
    %84 = vector.shape_cast %83 : vector<2x6xf32> to vector<2x6x1xf32>
    %85 = vector.broadcast %84 : vector<2x6x1xf32> to vector<2x6x6xf32>
    %86 = arith.subf %82, %85 : vector<2x6x6xf32>
    %87 = math.exp %86 : vector<2x6x6xf32>
    %cst_32 = arith.constant dense<0.000000e+00> : vector<2x6xf32>
    %88 = vector.multi_reduction <add>, %87, %cst_32 [2] : vector<2x6x6xf32> to vector<2x6xf32>
    %89 = vector.shape_cast %88 : vector<2x6xf32> to vector<2x6x1xf32>
    %90 = tpu.reciprocal %89 {approx = true} : vector<2x6x1xf32> -> vector<2x6x1xf32>
    %91 = vector.broadcast %90 : vector<2x6x1xf32> to vector<2x6x6xf32>
    %92 = arith.mulf %87, %91 : vector<2x6x6xf32>
    "tpu.trace_start"() <{level = 10 : i32, message = "bts,bsd->btd"}> : () -> ()
    %cst_33 = arith.constant dense<0.000000e+00> : vector<2x6x16xf32>
    %93 = tpu.matmul %92, %79, %cst_33 {dimension_numbers = #tpu.dot_dimension_numbers<[2], [1], [1], [2], [0, 0, 0, 1, 1, 2], [0], [0]>} : vector<2x6x6xf32>, vector<2x6x16xf32>, vector<2x6x16xf32> -> vector<2x6x16xf32>
    "tpu.trace_stop"() : () -> ()
    %94 = vector.shape_cast %93 : vector<2x6x16xf32> to vector<12x16xf32>
    %95 = vector.extract_strided_slice %12 {offsets = [48, 0], sizes = [16, 64], strides = [1, 1]} : vector<64x64xf32> to vector<16x64xf32>
    %cst_34 = arith.constant dense<0.000000e+00> : vector<12x64xf32>
    %96 = tpu.matmul %94, %95, %cst_34 {dimension_numbers = #tpu.dot_dimension_numbers<[1], [0], [0], [1], [0, 0, 1, 1], [], []>} : vector<12x16xf32>, vector<16x64xf32>, vector<12x64xf32> -> vector<12x64xf32>
    %97 = arith.addf %76, %96 : vector<12x64xf32>
    %c0_35 = arith.constant 0 : index
    %c0_36 = arith.constant 0 : index
    %98 = vector.load %arg5[%c0_35, %c0_36] : memref<1x64xf32, #tpu.memory_space<vmem>>, vector<1x64xf32>
    %99 = vector.broadcast %98 : vector<1x64xf32> to vector<12x64xf32>
    %100 = arith.addf %97, %99 : vector<12x64xf32>
    %c0_37 = arith.constant 0 : index
    %c0_38 = arith.constant 0 : index
    %101 = vector.load %arg6[%c0_37, %c0_38] : memref<64x32xf32, #tpu.memory_space<vmem>>, vector<64x32xf32>
    %cst_39 = arith.constant dense<0.000000e+00> : vector<12x32xf32>
    %102 = tpu.matmul %100, %101, %cst_39 {dimension_numbers = #tpu.dot_dimension_numbers<[1], [0], [0], [1], [0, 0, 1, 1], [], []>} : vector<12x64xf32>, vector<64x32xf32>, vector<12x32xf32> -> vector<12x32xf32>
    %c0_40 = arith.constant 0 : index
    %c0_41 = arith.constant 0 : index
    %103 = vector.load %arg7[%c0_40, %c0_41] : memref<1x32xf32, #tpu.memory_space<vmem>>, vector<1x32xf32>
    %104 = vector.broadcast %103 : vector<1x32xf32> to vector<12x32xf32>
    %105 = arith.addf %102, %104 : vector<12x32xf32>
    %cst_42 = arith.constant 0.000000e+00 : f32
    %106 = vector.broadcast %cst_42 : f32 to vector<12x32xf32>
    %107 = arith.maximumf %105, %106 : vector<12x32xf32>
    %c0_43 = arith.constant 0 : index
    %c0_44 = arith.constant 0 : index
    %108 = vector.load %arg8[%c0_43, %c0_44] : memref<32x7xf32, #tpu.memory_space<vmem>>, vector<32x7xf32>
    %cst_45 = arith.constant dense<0.000000e+00> : vector<12x7xf32>
    %109 = tpu.matmul %107, %108, %cst_45 {dimension_numbers = #tpu.dot_dimension_numbers<[1], [0], [0], [1], [0, 0, 1, 1], [], []>} : vector<12x32xf32>, vector<32x7xf32>, vector<12x7xf32> -> vector<12x7xf32>
    %c0_46 = arith.constant 0 : index
    %c0_47 = arith.constant 0 : index
    %110 = vector.load %arg9[%c0_46, %c0_47] : memref<1x7xf32, #tpu.memory_space<vmem>>, vector<1x7xf32>
    %111 = vector.broadcast %110 : vector<1x7xf32> to vector<12x7xf32>
    %112 = arith.addf %109, %111 : vector<12x7xf32>
    %cst_48 = arith.constant dense<0xFF800000> : vector<12xf32>
    %113 = vector.multi_reduction <maximumf>, %112, %cst_48 [1] : vector<12x7xf32> to vector<12xf32>
    %114 = vector.shape_cast %113 : vector<12xf32> to vector<12x1xf32>
    %115 = vector.broadcast %114 : vector<12x1xf32> to vector<12x7xf32>
    %116 = arith.subf %112, %115 : vector<12x7xf32>
    %117 = math.exp %116 : vector<12x7xf32>
    %cst_49 = arith.constant dense<0.000000e+00> : vector<12xf32>
    %118 = vector.multi_reduction <add>, %117, %cst_49 [1] : vector<12x7xf32> to vector<12xf32>
    %119 = vector.shape_cast %118 : vector<12xf32> to vector<12x1xf32>
    %120 = math.log %119 : vector<12x1xf32>
    %121 = arith.addf %120, %114 : vector<12x1xf32>
    %122 = vector.broadcast %121 : vector<12x1xf32> to vector<12x7xf32>
    %123 = arith.subf %112, %122 : vector<12x7xf32>
    %c0_50 = arith.constant 0 : index
    %c0_51 = arith.constant 0 : index
    %124 = vector.load %arg10[%c0_50, %c0_51] : memref<12x7xf32, #tpu.memory_space<vmem>>, vector<12x7xf32>
    tpu.vector_store %arg10[%c0_50, %c0_51], %123 {strides = array<i32>} : memref<12x7xf32, #tpu.memory_space<vmem>>, vector<12x7xf32>,
    return
  }
}

module attributes {stable_mosaic.version = 11 : i64} {
  func.func @_dialogue_rnn_kernel(%arg0: i32, %arg1: memref<1x6x2x22xf32, #tpu.memory_space<vmem>>, %arg2: memref<1x6x2x2xf32, #tpu.memory_space<vmem>>, %arg3: memref<6x32xf32, #tpu.memory_space<vmem>>, %arg4: memref<1x22x32xf32, #tpu.memory_space<vmem>>, %arg5: memref<1x1x32xf32, #tpu.memory_space<vmem>>, %arg6: memref<1x32x96xf32, #tpu.memory_space<vmem>>, %arg7: memref<1x32x96xf32, #tpu.memory_space<vmem>>, %arg8: memref<1x32x96xf32, #tpu.memory_space<vmem>>, %arg9: memref<1x1x96xf32, #tpu.memory_space<vmem>>, %arg10: memref<1x1x96xf32, #tpu.memory_space<vmem>>, %arg11: memref<1x32x96xf32, #tpu.memory_space<vmem>>, %arg12: memref<1x32x96xf32, #tpu.memory_space<vmem>>, %arg13: memref<1x32x96xf32, #tpu.memory_space<vmem>>, %arg14: memref<1x1x96xf32, #tpu.memory_space<vmem>>, %arg15: memref<1x1x96xf32, #tpu.memory_space<vmem>>, %arg16: memref<1x32x96xf32, #tpu.memory_space<vmem>>, %arg17: memref<1x32x96xf32, #tpu.memory_space<vmem>>, %arg18: memref<1x1x96xf32, #tpu.memory_space<vmem>>, %arg19: memref<1x1x96xf32, #tpu.memory_space<vmem>>, %arg20: memref<1x32x4xf32, #tpu.memory_space<vmem>>, %arg21: memref<1x2x16xf32, #tpu.memory_space<vmem>>, %arg22: memref<1x1x2xf32, #tpu.memory_space<vmem>>, %arg23: memref<1x64x32xf32, #tpu.memory_space<vmem>>, %arg24: memref<1x1x32xf32, #tpu.memory_space<vmem>>, %arg25: memref<1x6x2x32xf32, #tpu.memory_space<vmem>>, %arg26: memref<6x2x32xf32, #tpu.memory_space<vmem>>, %arg27: memref<6x2x96xf32, #tpu.memory_space<vmem>>, %arg28: memref<6x2x96xf32, #tpu.memory_space<vmem>>, %arg29: memref<2x32xf32, #tpu.memory_space<vmem>>, %arg30: memref<2x2x32xf32, #tpu.memory_space<vmem>>, %arg31: memref<2x32xf32, #tpu.memory_space<vmem>>, %arg32: memref<2x32xf32, #tpu.memory_space<vmem>>) attributes {dimension_semantics = [#tpu.dimension_semantics<parallel>], iteration_bounds = array<i64: 2>, scalar_prefetch = 0 : i64, scratch_operands = 7 : i64, tpu.core_type = #tpu.core_type<tc>, window_params = [{transform_indices = @transform_0, window_bounds = array<i64: 1, 6, 2, 22>}, {transform_indices = @transform_1, window_bounds = array<i64: 1, 6, 2, 2>}, {pipeline_mode = #tpu.pipeline_mode<synchronous>, transform_indices = @transform_2, window_bounds = array<i64: 6, 32>}, {transform_indices = @transform_3, window_bounds = array<i64: 1, 22, 32>}, {transform_indices = @transform_4, window_bounds = array<i64: 1, 1, 32>}, {transform_indices = @transform_5, window_bounds = array<i64: 1, 32, 96>}, {transform_indices = @transform_6, window_bounds = array<i64: 1, 32, 96>}, {transform_indices = @transform_7, window_bounds = array<i64: 1, 32, 96>}, {transform_indices = @transform_8, window_bounds = array<i64: 1, 1, 96>}, {transform_indices = @transform_9, window_bounds = array<i64: 1, 1, 96>}, {transform_indices = @transform_10, window_bounds = array<i64: 1, 32, 96>}, {transform_indices = @transform_11, window_bounds = array<i64: 1, 32, 96>}, {transform_indices = @transform_12, window_bounds = array<i64: 1, 32, 96>}, {transform_indices = @transform_13, window_bounds = array<i64: 1, 1, 96>}, {transform_indices = @transform_14, window_bounds = array<i64: 1, 1, 96>}, {transform_indices = @transform_15, window_bounds = array<i64: 1, 32, 96>}, {transform_indices = @transform_16, window_bounds = array<i64: 1, 32, 96>}, {transform_indices = @transform_17, window_bounds = array<i64: 1, 1, 96>}, {transform_indices = @transform_18, window_bounds = array<i64: 1, 1, 96>}, {transform_indices = @transform_19, window_bounds = array<i64: 1, 32, 4>}, {transform_indices = @transform_20, window_bounds = array<i64: 1, 2, 16>}, {transform_indices = @transform_21, window_bounds = array<i64: 1, 1, 2>}, {transform_indices = @transform_22, window_bounds = array<i64: 1, 64, 32>}, {transform_indices = @transform_23, window_bounds = array<i64: 1, 1, 32>}, {transform_indices = @transform_24, window_bounds = array<i64: 1, 6, 2, 32>}]} {
    %cst = arith.constant 0.000000e+00 : f32
    %0 = vector.broadcast %cst : f32 to vector<6x2x32xf32>
    %c0 = arith.constant 0 : index
    %c0_0 = arith.constant 0 : index
    %c0_1 = arith.constant 0 : index
    %1 = vector.load %arg26[%c0, %c0_0, %c0_1] : memref<6x2x32xf32, #tpu.memory_space<vmem>>, vector<6x2x32xf32>
    tpu.vector_store %arg26[%c0, %c0_0, %c0_1], %0 {strides = array<i32>} : memref<6x2x32xf32, #tpu.memory_space<vmem>>, vector<6x2x32xf32>,
    %cst_2 = arith.constant 0.000000e+00 : f32
    %2 = vector.broadcast %cst_2 : f32 to vector<2x32xf32>
    %c0_3 = arith.constant 0 : index
    %c0_4 = arith.constant 0 : index
    %3 = vector.load %arg29[%c0_3, %c0_4] : memref<2x32xf32, #tpu.memory_space<vmem>>, vector<2x32xf32>
    tpu.vector_store %arg29[%c0_3, %c0_4], %2 {strides = array<i32>} : memref<2x32xf32, #tpu.memory_space<vmem>>, vector<2x32xf32>,
    %cst_5 = arith.constant 0.000000e+00 : f32
    %4 = vector.broadcast %cst_5 : f32 to vector<2x2x32xf32>
    %c0_6 = arith.constant 0 : index
    %c0_7 = arith.constant 0 : index
    %c0_8 = arith.constant 0 : index
    %5 = vector.load %arg30[%c0_6, %c0_7, %c0_8] : memref<2x2x32xf32, #tpu.memory_space<vmem>>, vector<2x2x32xf32>
    tpu.vector_store %arg30[%c0_6, %c0_7, %c0_8], %4 {strides = array<i32>} : memref<2x2x32xf32, #tpu.memory_space<vmem>>, vector<2x2x32xf32>,
    %cst_9 = arith.constant 0.000000e+00 : f32
    %6 = vector.broadcast %cst_9 : f32 to vector<2x32xf32>
    %c0_10 = arith.constant 0 : index
    %c0_11 = arith.constant 0 : index
    %7 = vector.load %arg31[%c0_10, %c0_11] : memref<2x32xf32, #tpu.memory_space<vmem>>, vector<2x32xf32>
    tpu.vector_store %arg31[%c0_10, %c0_11], %6 {strides = array<i32>} : memref<2x32xf32, #tpu.memory_space<vmem>>, vector<2x32xf32>,
    %cst_12 = arith.constant 0.000000e+00 : f32
    %8 = vector.broadcast %cst_12 : f32 to vector<2x32xf32>
    %c0_13 = arith.constant 0 : index
    %c0_14 = arith.constant 0 : index
    %9 = vector.load %arg32[%c0_13, %c0_14] : memref<2x32xf32, #tpu.memory_space<vmem>>, vector<2x32xf32>
    tpu.vector_store %arg32[%c0_13, %c0_14], %8 {strides = array<i32>} : memref<2x32xf32, #tpu.memory_space<vmem>>, vector<2x32xf32>,
    %c0_15 = arith.constant 0 : index
    %c0_16 = arith.constant 0 : index
    %c0_17 = arith.constant 0 : index
    %c0_18 = arith.constant 0 : index
    %10 = vector.load %arg1[%c0_15, %c0_16, %c0_17, %c0_18] : memref<1x6x2x22xf32, #tpu.memory_space<vmem>>, vector<1x6x2x22xf32>
    %11 = vector.shape_cast %10 : vector<1x6x2x22xf32> to vector<6x2x22xf32>
    %12 = vector.shape_cast %11 : vector<6x2x22xf32> to vector<12x22xf32>
    %c0_19 = arith.constant 0 : index
    %c0_20 = arith.constant 0 : index
    %c0_21 = arith.constant 0 : index
    %13 = vector.load %arg4[%c0_19, %c0_20, %c0_21] : memref<1x22x32xf32, #tpu.memory_space<vmem>>, vector<1x22x32xf32>
    %14 = vector.shape_cast %13 : vector<1x22x32xf32> to vector<22x32xf32>
    %cst_22 = arith.constant dense<0.000000e+00> : vector<12x32xf32>
    %15 = tpu.matmul %12, %14, %cst_22 {dimension_numbers = #tpu.dot_dimension_numbers<[1], [0], [0], [1], [0, 0, 1, 1], [], []>} : vector<12x22xf32>, vector<22x32xf32>, vector<12x32xf32> -> vector<12x32xf32>
    %c0_23 = arith.constant 0 : index
    %c0_24 = arith.constant 0 : index
    %c0_25 = arith.constant 0 : index
    %16 = vector.load %arg5[%c0_23, %c0_24, %c0_25] : memref<1x1x32xf32, #tpu.memory_space<vmem>>, vector<1x1x32xf32>
    %17 = vector.shape_cast %16 : vector<1x1x32xf32> to vector<1x32xf32>
    %18 = vector.broadcast %17 : vector<1x32xf32> to vector<12x32xf32>
    %19 = arith.addf %15, %18 : vector<12x32xf32>
    %c0_26 = arith.constant 0 : index
    %c0_27 = arith.constant 0 : index
    %c0_28 = arith.constant 0 : index
    %20 = vector.load %arg6[%c0_26, %c0_27, %c0_28] : memref<1x32x96xf32, #tpu.memory_space<vmem>>, vector<1x32x96xf32>
    %21 = vector.shape_cast %20 : vector<1x32x96xf32> to vector<32x96xf32>
    %cst_29 = arith.constant dense<0.000000e+00> : vector<12x96xf32>
    %22 = tpu.matmul %19, %21, %cst_29 {dimension_numbers = #tpu.dot_dimension_numbers<[1], [0], [0], [1], [0, 0, 1, 1], [], []>} : vector<12x32xf32>, vector<32x96xf32>, vector<12x96xf32> -> vector<12x96xf32>
    %c0_30 = arith.constant 0 : index
    %c0_31 = arith.constant 0 : index
    %c0_32 = arith.constant 0 : index
    %23 = vector.load %arg9[%c0_30, %c0_31, %c0_32] : memref<1x1x96xf32, #tpu.memory_space<vmem>>, vector<1x1x96xf32>
    %24 = vector.shape_cast %23 : vector<1x1x96xf32> to vector<1x96xf32>
    %25 = vector.broadcast %24 : vector<1x96xf32> to vector<12x96xf32>
    %26 = arith.addf %22, %25 : vector<12x96xf32>
    %c0_33 = arith.constant 0 : index
    %c0_34 = arith.constant 0 : index
    %c0_35 = arith.constant 0 : index
    %27 = vector.load %arg11[%c0_33, %c0_34, %c0_35] : memref<1x32x96xf32, #tpu.memory_space<vmem>>, vector<1x32x96xf32>
    %28 = vector.shape_cast %27 : vector<1x32x96xf32> to vector<32x96xf32>
    %cst_36 = arith.constant dense<0.000000e+00> : vector<12x96xf32>
    %29 = tpu.matmul %19, %28, %cst_36 {dimension_numbers = #tpu.dot_dimension_numbers<[1], [0], [0], [1], [0, 0, 1, 1], [], []>} : vector<12x32xf32>, vector<32x96xf32>, vector<12x96xf32> -> vector<12x96xf32>
    %c0_37 = arith.constant 0 : index
    %c0_38 = arith.constant 0 : index
    %c0_39 = arith.constant 0 : index
    %30 = vector.load %arg14[%c0_37, %c0_38, %c0_39] : memref<1x1x96xf32, #tpu.memory_space<vmem>>, vector<1x1x96xf32>
    %31 = vector.shape_cast %30 : vector<1x1x96xf32> to vector<1x96xf32>
    %32 = vector.broadcast %31 : vector<1x96xf32> to vector<12x96xf32>
    %33 = arith.addf %29, %32 : vector<12x96xf32>
    %34 = vector.shape_cast %26 : vector<12x96xf32> to vector<6x2x96xf32>
    %c0_40 = arith.constant 0 : index
    %c0_41 = arith.constant 0 : index
    %c0_42 = arith.constant 0 : index
    %35 = vector.load %arg27[%c0_40, %c0_41, %c0_42] : memref<6x2x96xf32, #tpu.memory_space<vmem>>, vector<6x2x96xf32>
    tpu.vector_store %arg27[%c0_40, %c0_41, %c0_42], %34 {strides = array<i32>} : memref<6x2x96xf32, #tpu.memory_space<vmem>>, vector<6x2x96xf32>,
    %36 = vector.shape_cast %33 : vector<12x96xf32> to vector<6x2x96xf32>
    %c0_43 = arith.constant 0 : index
    %c0_44 = arith.constant 0 : index
    %c0_45 = arith.constant 0 : index
    %37 = vector.load %arg28[%c0_43, %c0_44, %c0_45] : memref<6x2x96xf32, #tpu.memory_space<vmem>>, vector<6x2x96xf32>
    tpu.vector_store %arg28[%c0_43, %c0_44, %c0_45], %36 {strides = array<i32>} : memref<6x2x96xf32, #tpu.memory_space<vmem>>, vector<6x2x96xf32>,
    %c0_i32 = arith.constant 0 : i32
    %c6_i32 = arith.constant 6 : i32
    %38 = arith.addi %c0_i32, %c6_i32 : i32
    %c1_i32 = arith.constant 1 : i32
    scf.for %arg33 = %c0_i32 to %38 step %c1_i32  : i32 {
      %c1_i32_47 = arith.constant 1 : i32
      %39 = arith.muli %arg33, %c1_i32_47 : i32
      %c0_i32_48 = arith.constant 0 : i32
      %40 = arith.addi %c0_i32_48, %39 : i32
      %c0_49 = arith.constant 0 : index
      %41 = arith.index_cast %40 : i32 to index
      %c0_50 = arith.constant 0 : index
      %c0_51 = arith.constant 0 : index
      %42 = vector.load %arg2[%c0_49, %41, %c0_50, %c0_51] : memref<1x6x2x2xf32, #tpu.memory_space<vmem>>, vector<1x1x2x2xf32>
      %43 = vector.shape_cast %42 : vector<1x1x2x2xf32> to vector<2x2xf32>
      %44 = vector.extract_strided_slice %43 {offsets = [0, 0], sizes = [2, 1], strides = [1, 1]} : vector<2x2xf32> to vector<2x1xf32>
      %c0_52 = arith.constant 0 : index
      %c0_53 = arith.constant 0 : index
      %c0_54 = arith.constant 0 : index
      %45 = vector.load %arg30[%c0_52, %c0_53, %c0_54] : memref<2x2x32xf32, #tpu.memory_space<vmem>>, vector<1x2x32xf32>
      %46 = vector.shape_cast %45 : vector<1x2x32xf32> to vector<2x32xf32>
      %47 = vector.broadcast %44 : vector<2x1xf32> to vector<2x32xf32>
      %48 = arith.mulf %47, %46 : vector<2x32xf32>
      %49 = vector.extract_strided_slice %43 {offsets = [0, 1], sizes = [2, 1], strides = [1, 1]} : vector<2x2xf32> to vector<2x1xf32>
      %c1 = arith.constant 1 : index
      %c0_55 = arith.constant 0 : index
      %c0_56 = arith.constant 0 : index
      %50 = vector.load %arg30[%c1, %c0_55, %c0_56] : memref<2x2x32xf32, #tpu.memory_space<vmem>>, vector<1x2x32xf32>
      %51 = vector.shape_cast %50 : vector<1x2x32xf32> to vector<2x32xf32>
      %52 = vector.broadcast %49 : vector<2x1xf32> to vector<2x32xf32>
      %53 = arith.mulf %52, %51 : vector<2x32xf32>
      %54 = arith.addf %48, %53 : vector<2x32xf32>
      %55 = arith.index_cast %40 : i32 to index
      %c0_57 = arith.constant 0 : index
      %c0_58 = arith.constant 0 : index
      %56 = vector.load %arg27[%55, %c0_57, %c0_58] : memref<6x2x96xf32, #tpu.memory_space<vmem>>, vector<1x2x96xf32>
      %57 = vector.shape_cast %56 : vector<1x2x96xf32> to vector<2x96xf32>
      %c0_59 = arith.constant 0 : index
      %c0_60 = arith.constant 0 : index
      %c0_61 = arith.constant 0 : index
      %58 = vector.load %arg7[%c0_59, %c0_60, %c0_61] : memref<1x32x96xf32, #tpu.memory_space<vmem>>, vector<1x32x96xf32>
      %59 = vector.shape_cast %58 : vector<1x32x96xf32> to vector<32x96xf32>
      %cst_62 = arith.constant dense<0.000000e+00> : vector<2x96xf32>
      %60 = tpu.matmul %54, %59, %cst_62 {dimension_numbers = #tpu.dot_dimension_numbers<[1], [0], [0], [1], [0, 0, 1, 1], [], []>} : vector<2x32xf32>, vector<32x96xf32>, vector<2x96xf32> -> vector<2x96xf32>
      %61 = arith.addf %57, %60 : vector<2x96xf32>
      %c0_63 = arith.constant 0 : index
      %c0_64 = arith.constant 0 : index
      %62 = vector.load %arg29[%c0_63, %c0_64] : memref<2x32xf32, #tpu.memory_space<vmem>>, vector<2x32xf32>
      %c0_65 = arith.constant 0 : index
      %c0_66 = arith.constant 0 : index
      %c0_67 = arith.constant 0 : index
      %63 = vector.load %arg8[%c0_65, %c0_66, %c0_67] : memref<1x32x96xf32, #tpu.memory_space<vmem>>, vector<1x32x96xf32>
      %64 = vector.shape_cast %63 : vector<1x32x96xf32> to vector<32x96xf32>
      %cst_68 = arith.constant dense<0.000000e+00> : vector<2x96xf32>
      %65 = tpu.matmul %62, %64, %cst_68 {dimension_numbers = #tpu.dot_dimension_numbers<[1], [0], [0], [1], [0, 0, 1, 1], [], []>} : vector<2x32xf32>, vector<32x96xf32>, vector<2x96xf32> -> vector<2x96xf32>
      %c0_69 = arith.constant 0 : index
      %c0_70 = arith.constant 0 : index
      %c0_71 = arith.constant 0 : index
      %66 = vector.load %arg10[%c0_69, %c0_70, %c0_71] : memref<1x1x96xf32, #tpu.memory_space<vmem>>, vector<1x1x96xf32>
      %67 = vector.shape_cast %66 : vector<1x1x96xf32> to vector<1x96xf32>
      %68 = vector.broadcast %67 : vector<1x96xf32> to vector<2x96xf32>
      %69 = arith.addf %65, %68 : vector<2x96xf32>
      %c0_72 = arith.constant 0 : index
      %c0_73 = arith.constant 0 : index
      %70 = vector.load %arg29[%c0_72, %c0_73] : memref<2x32xf32, #tpu.memory_space<vmem>>, vector<2x32xf32>
      %71 = vector.extract_strided_slice %61 {offsets = [0, 0], sizes = [2, 32], strides = [1, 1]} : vector<2x96xf32> to vector<2x32xf32>
      %72 = vector.extract_strided_slice %69 {offsets = [0, 0], sizes = [2, 32], strides = [1, 1]} : vector<2x96xf32> to vector<2x32xf32>
      %73 = arith.addf %71, %72 : vector<2x32xf32>
      %74 = arith.negf %73 : vector<2x32xf32>
      %75 = math.exp %74 : vector<2x32xf32>
      %cst_74 = arith.constant 1.000000e+00 : f32
      %76 = vector.broadcast %cst_74 : f32 to vector<2x32xf32>
      %77 = arith.addf %76, %75 : vector<2x32xf32>
      %78 = arith.divf %76, %77 : vector<2x32xf32>
      %79 = vector.extract_strided_slice %61 {offsets = [0, 32], sizes = [2, 32], strides = [1, 1]} : vector<2x96xf32> to vector<2x32xf32>
      %80 = vector.extract_strided_slice %69 {offsets = [0, 32], sizes = [2, 32], strides = [1, 1]} : vector<2x96xf32> to vector<2x32xf32>
      %81 = arith.addf %79, %80 : vector<2x32xf32>
      %82 = arith.negf %81 : vector<2x32xf32>
      %83 = math.exp %82 : vector<2x32xf32>
      %cst_75 = arith.constant 1.000000e+00 : f32
      %84 = vector.broadcast %cst_75 : f32 to vector<2x32xf32>
      %85 = arith.addf %84, %83 : vector<2x32xf32>
      %86 = arith.divf %84, %85 : vector<2x32xf32>
      %87 = vector.extract_strided_slice %61 {offsets = [0, 64], sizes = [2, 32], strides = [1, 1]} : vector<2x96xf32> to vector<2x32xf32>
      %88 = vector.extract_strided_slice %69 {offsets = [0, 64], sizes = [2, 32], strides = [1, 1]} : vector<2x96xf32> to vector<2x32xf32>
      %89 = arith.mulf %78, %88 : vector<2x32xf32>
      %90 = arith.addf %87, %89 : vector<2x32xf32>
      %91 = math.tanh %90 : vector<2x32xf32>
      %cst_76 = arith.constant 1.000000e+00 : f32
      %92 = vector.broadcast %cst_76 : f32 to vector<2x32xf32>
      %93 = arith.subf %92, %86 : vector<2x32xf32>
      %94 = arith.mulf %93, %91 : vector<2x32xf32>
      %95 = arith.mulf %86, %70 : vector<2x32xf32>
      %96 = arith.addf %94, %95 : vector<2x32xf32>
      %c0_i32_77 = arith.constant 0 : i32
      %97 = arith.cmpi sgt, %40, %c0_i32_77 : i32
      %98 = arith.extui %97 : i1 to i32
      %c0_i32_78 = arith.constant 0 : i32
      %99 = arith.cmpi ne, %98, %c0_i32_78 : i32
      scf.if %99 {
        %c0_153 = arith.constant 0 : index
        %c0_154 = arith.constant 0 : index
        %c0_155 = arith.constant 0 : index
        %263 = vector.load %arg26[%c0_153, %c0_154, %c0_155] : memref<6x2x32xf32, #tpu.memory_space<vmem>>, vector<6x2x32xf32>
        %264 = vector.shape_cast %263 : vector<6x2x32xf32> to vector<12x32xf32>
        %c0_156 = arith.constant 0 : index
        %c0_157 = arith.constant 0 : index
        %c0_158 = arith.constant 0 : index
        %265 = vector.load %arg20[%c0_156, %c0_157, %c0_158] : memref<1x32x4xf32, #tpu.memory_space<vmem>>, vector<1x32x4xf32>
        %266 = vector.shape_cast %265 : vector<1x32x4xf32> to vector<32x4xf32>
        %cst_159 = arith.constant dense<0.000000e+00> : vector<12x4xf32>
        %267 = tpu.matmul %264, %266, %cst_159 {dimension_numbers = #tpu.dot_dimension_numbers<[1], [0], [0], [1], [0, 0, 1, 1], [], []>} : vector<12x32xf32>, vector<32x4xf32>, vector<12x4xf32> -> vector<12x4xf32>
        %268 = vector.shape_cast %267 : vector<12x4xf32> to vector<6x2x4xf32>
        %269 = tpu.iota {dimensions = array<i32: 0>} : vector<6x2x1xi32>
        %270 = vector.broadcast %40 : i32 to vector<6x2x1xi32>
        %271 = arith.cmpi slt, %269, %270 : vector<6x2x1xi32>
        %cst_160 = arith.constant -1.000000e+09 : f32
        %272 = vector.shape_cast %271 : vector<6x2x1xi1> to vector<6x2x1xi1>
        %273 = vector.broadcast %272 : vector<6x2x1xi1> to vector<6x2x4xi1>
        %274 = vector.broadcast %cst_160 : f32 to vector<6x2x4xf32>
        %275 = arith.select %273, %268, %274 : vector<6x2x4xi1>, vector<6x2x4xf32>
        %cst_161 = arith.constant dense<0xFF800000> : vector<2x4xf32>
        %276 = vector.multi_reduction <maximumf>, %275, %cst_161 [0] : vector<6x2x4xf32> to vector<2x4xf32>
        %277 = vector.shape_cast %276 : vector<2x4xf32> to vector<1x2x4xf32>
        %278 = vector.broadcast %277 : vector<1x2x4xf32> to vector<6x2x4xf32>
        %279 = arith.subf %275, %278 : vector<6x2x4xf32>
        %280 = math.exp %279 : vector<6x2x4xf32>
        %281 = arith.extui %271 : vector<6x2x1xi1> to vector<6x2x1xi32>
        %282 = arith.sitofp %281 : vector<6x2x1xi32> to vector<6x2x1xf32>
        %283 = vector.broadcast %282 : vector<6x2x1xf32> to vector<6x2x4xf32>
        %284 = arith.mulf %280, %283 : vector<6x2x4xf32>
        %cst_162 = arith.constant dense<0.000000e+00> : vector<2x4xf32>
        %285 = vector.multi_reduction <add>, %284, %cst_162 [0] : vector<6x2x4xf32> to vector<2x4xf32>
        %286 = vector.shape_cast %285 : vector<2x4xf32> to vector<1x2x4xf32>
        %287 = tpu.reciprocal %286 {approx = true} : vector<1x2x4xf32> -> vector<1x2x4xf32>
        %288 = vector.broadcast %287 : vector<1x2x4xf32> to vector<6x2x4xf32>
        %289 = arith.mulf %284, %288 : vector<6x2x4xf32>
        %290 = vector.extract_strided_slice %263 {offsets = [0, 0, 0], sizes = [6, 2, 16], strides = [1, 1, 1]} : vector<6x2x32xf32> to vector<6x2x16xf32>
        %291 = vector.extract_strided_slice %263 {offsets = [0, 0, 16], sizes = [6, 2, 16], strides = [1, 1, 1]} : vector<6x2x32xf32> to vector<6x2x16xf32>
        %292 = vector.extract_strided_slice %289 {offsets = [0, 0, 0], sizes = [6, 2, 1], strides = [1, 1, 1]} : vector<6x2x4xf32> to vector<6x2x1xf32>
        %293 = vector.broadcast %292 : vector<6x2x1xf32> to vector<6x2x16xf32>
        %294 = arith.mulf %293, %290 : vector<6x2x16xf32>
        %cst_163 = arith.constant dense<0.000000e+00> : vector<2x16xf32>
        %295 = vector.multi_reduction <add>, %294, %cst_163 [0] : vector<6x2x16xf32> to vector<2x16xf32>
        %296 = vector.extract_strided_slice %289 {offsets = [0, 0, 1], sizes = [6, 2, 1], strides = [1, 1, 1]} : vector<6x2x4xf32> to vector<6x2x1xf32>
        %297 = vector.broadcast %296 : vector<6x2x1xf32> to vector<6x2x16xf32>
        %298 = arith.mulf %297, %290 : vector<6x2x16xf32>
        %cst_164 = arith.constant dense<0.000000e+00> : vector<2x16xf32>
        %299 = vector.multi_reduction <add>, %298, %cst_164 [0] : vector<6x2x16xf32> to vector<2x16xf32>
        %300 = vector.extract_strided_slice %289 {offsets = [0, 0, 2], sizes = [6, 2, 1], strides = [1, 1, 1]} : vector<6x2x4xf32> to vector<6x2x1xf32>
        %301 = vector.broadcast %300 : vector<6x2x1xf32> to vector<6x2x16xf32>
        %302 = arith.mulf %301, %291 : vector<6x2x16xf32>
        %cst_165 = arith.constant dense<0.000000e+00> : vector<2x16xf32>
        %303 = vector.multi_reduction <add>, %302, %cst_165 [0] : vector<6x2x16xf32> to vector<2x16xf32>
        %304 = vector.extract_strided_slice %289 {offsets = [0, 0, 3], sizes = [6, 2, 1], strides = [1, 1, 1]} : vector<6x2x4xf32> to vector<6x2x1xf32>
        %305 = vector.broadcast %304 : vector<6x2x1xf32> to vector<6x2x16xf32>
        %306 = arith.mulf %305, %291 : vector<6x2x16xf32>
        %cst_166 = arith.constant dense<0.000000e+00> : vector<2x16xf32>
        %307 = vector.multi_reduction <add>, %306, %cst_166 [0] : vector<6x2x16xf32> to vector<2x16xf32>
        %c0_167 = arith.constant 0 : index
        %c0_168 = arith.constant 0 : index
        %c0_169 = arith.constant 0 : index
        %308 = vector.load %arg21[%c0_167, %c0_168, %c0_169] : memref<1x2x16xf32, #tpu.memory_space<vmem>>, vector<1x2x16xf32>
        %309 = vector.shape_cast %308 : vector<1x2x16xf32> to vector<2x16xf32>
        %c0_170 = arith.constant 0 : index
        %c0_171 = arith.constant 0 : index
        %c0_172 = arith.constant 0 : index
        %310 = vector.load %arg22[%c0_170, %c0_171, %c0_172] : memref<1x1x2xf32, #tpu.memory_space<vmem>>, vector<1x1x2xf32>
        %311 = vector.shape_cast %310 : vector<1x1x2xf32> to vector<1x2xf32>
        %312 = vector.extract_strided_slice %309 {offsets = [0, 0], sizes = [1, 16], strides = [1, 1]} : vector<2x16xf32> to vector<1x16xf32>
        %313 = vector.extract_strided_slice %311 {offsets = [0, 0], sizes = [1, 1], strides = [1, 1]} : vector<1x2xf32> to vector<1x1xf32>
        %314 = vector.broadcast %312 : vector<1x16xf32> to vector<2x16xf32>
        %315 = arith.mulf %295, %314 : vector<2x16xf32>
        %cst_173 = arith.constant dense<0.000000e+00> : vector<2xf32>
        %316 = vector.multi_reduction <add>, %315, %cst_173 [1] : vector<2x16xf32> to vector<2xf32>
        %317 = vector.shape_cast %316 : vector<2xf32> to vector<2x1xf32>
        %318 = vector.broadcast %313 : vector<1x1xf32> to vector<2x1xf32>
        %319 = arith.addf %317, %318 : vector<2x1xf32>
        %320 = vector.broadcast %312 : vector<1x16xf32> to vector<2x16xf32>
        %321 = arith.mulf %303, %320 : vector<2x16xf32>
        %cst_174 = arith.constant dense<0.000000e+00> : vector<2xf32>
        %322 = vector.multi_reduction <add>, %321, %cst_174 [1] : vector<2x16xf32> to vector<2xf32>
        %323 = vector.shape_cast %322 : vector<2xf32> to vector<2x1xf32>
        %324 = vector.broadcast %313 : vector<1x1xf32> to vector<2x1xf32>
        %325 = arith.addf %323, %324 : vector<2x1xf32>
        %326 = arith.maximumf %319, %325 : vector<2x1xf32>
        %327 = arith.subf %319, %326 : vector<2x1xf32>
        %328 = math.exp %327 : vector<2x1xf32>
        %329 = arith.subf %325, %326 : vector<2x1xf32>
        %330 = math.exp %329 : vector<2x1xf32>
        %331 = arith.addf %328, %330 : vector<2x1xf32>
        %332 = tpu.reciprocal %331 {approx = true} : vector<2x1xf32> -> vector<2x1xf32>
        %333 = arith.mulf %328, %332 : vector<2x1xf32>
        %334 = arith.mulf %330, %332 : vector<2x1xf32>
        %335 = vector.extract_strided_slice %309 {offsets = [1, 0], sizes = [1, 16], strides = [1, 1]} : vector<2x16xf32> to vector<1x16xf32>
        %336 = vector.extract_strided_slice %311 {offsets = [0, 1], sizes = [1, 1], strides = [1, 1]} : vector<1x2xf32> to vector<1x1xf32>
        %337 = vector.broadcast %335 : vector<1x16xf32> to vector<2x16xf32>
        %338 = arith.mulf %307, %337 : vector<2x16xf32>
        %cst_175 = arith.constant dense<0.000000e+00> : vector<2xf32>
        %339 = vector.multi_reduction <add>, %338, %cst_175 [1] : vector<2x16xf32> to vector<2xf32>
        %340 = vector.shape_cast %339 : vector<2xf32> to vector<2x1xf32>
        %341 = vector.broadcast %336 : vector<1x1xf32> to vector<2x1xf32>
        %342 = arith.addf %340, %341 : vector<2x1xf32>
        %343 = vector.broadcast %335 : vector<1x16xf32> to vector<2x16xf32>
        %344 = arith.mulf %299, %343 : vector<2x16xf32>
        %cst_176 = arith.constant dense<0.000000e+00> : vector<2xf32>
        %345 = vector.multi_reduction <add>, %344, %cst_176 [1] : vector<2x16xf32> to vector<2xf32>
        %346 = vector.shape_cast %345 : vector<2xf32> to vector<2x1xf32>
        %347 = vector.broadcast %336 : vector<1x1xf32> to vector<2x1xf32>
        %348 = arith.addf %346, %347 : vector<2x1xf32>
        %349 = arith.maximumf %342, %348 : vector<2x1xf32>
        %350 = arith.subf %342, %349 : vector<2x1xf32>
        %351 = math.exp %350 : vector<2x1xf32>
        %352 = arith.subf %348, %349 : vector<2x1xf32>
        %353 = math.exp %352 : vector<2x1xf32>
        %354 = arith.addf %351, %353 : vector<2x1xf32>
        %355 = tpu.reciprocal %354 {approx = true} : vector<2x1xf32> -> vector<2x1xf32>
        %356 = arith.mulf %351, %355 : vector<2x1xf32>
        %357 = arith.mulf %353, %355 : vector<2x1xf32>
        %c0_177 = arith.constant 0 : index
        %c0_178 = arith.constant 0 : index
        %c0_179 = arith.constant 0 : index
        %358 = vector.load %arg23[%c0_177, %c0_178, %c0_179] : memref<1x64x32xf32, #tpu.memory_space<vmem>>, vector<1x64x32xf32>
        %359 = vector.shape_cast %358 : vector<1x64x32xf32> to vector<64x32xf32>
        %360 = vector.broadcast %333 : vector<2x1xf32> to vector<2x16xf32>
        %361 = arith.mulf %360, %295 : vector<2x16xf32>
        %362 = vector.extract_strided_slice %359 {offsets = [0, 0], sizes = [16, 32], strides = [1, 1]} : vector<64x32xf32> to vector<16x32xf32>
        %cst_180 = arith.constant dense<0.000000e+00> : vector<2x32xf32>
        %363 = tpu.matmul %361, %362, %cst_180 {dimension_numbers = #tpu.dot_dimension_numbers<[1], [0], [0], [1], [0, 0, 1, 1], [], []>} : vector<2x16xf32>, vector<16x32xf32>, vector<2x32xf32> -> vector<2x32xf32>
        %364 = vector.broadcast %334 : vector<2x1xf32> to vector<2x16xf32>
        %365 = arith.mulf %364, %303 : vector<2x16xf32>
        %366 = vector.extract_strided_slice %359 {offsets = [16, 0], sizes = [16, 32], strides = [1, 1]} : vector<64x32xf32> to vector<16x32xf32>
        %cst_181 = arith.constant dense<0.000000e+00> : vector<2x32xf32>
        %367 = tpu.matmul %365, %366, %cst_181 {dimension_numbers = #tpu.dot_dimension_numbers<[1], [0], [0], [1], [0, 0, 1, 1], [], []>} : vector<2x16xf32>, vector<16x32xf32>, vector<2x32xf32> -> vector<2x32xf32>
        %368 = arith.addf %363, %367 : vector<2x32xf32>
        %369 = vector.broadcast %356 : vector<2x1xf32> to vector<2x16xf32>
        %370 = arith.mulf %369, %307 : vector<2x16xf32>
        %371 = vector.extract_strided_slice %359 {offsets = [32, 0], sizes = [16, 32], strides = [1, 1]} : vector<64x32xf32> to vector<16x32xf32>
        %cst_182 = arith.constant dense<0.000000e+00> : vector<2x32xf32>
        %372 = tpu.matmul %370, %371, %cst_182 {dimension_numbers = #tpu.dot_dimension_numbers<[1], [0], [0], [1], [0, 0, 1, 1], [], []>} : vector<2x16xf32>, vector<16x32xf32>, vector<2x32xf32> -> vector<2x32xf32>
        %373 = arith.addf %368, %372 : vector<2x32xf32>
        %374 = vector.broadcast %357 : vector<2x1xf32> to vector<2x16xf32>
        %375 = arith.mulf %374, %299 : vector<2x16xf32>
        %376 = vector.extract_strided_slice %359 {offsets = [48, 0], sizes = [16, 32], strides = [1, 1]} : vector<64x32xf32> to vector<16x32xf32>
        %cst_183 = arith.constant dense<0.000000e+00> : vector<2x32xf32>
        %377 = tpu.matmul %375, %376, %cst_183 {dimension_numbers = #tpu.dot_dimension_numbers<[1], [0], [0], [1], [0, 0, 1, 1], [], []>} : vector<2x16xf32>, vector<16x32xf32>, vector<2x32xf32> -> vector<2x32xf32>
        %378 = arith.addf %373, %377 : vector<2x32xf32>
        %c0_184 = arith.constant 0 : index
        %c0_185 = arith.constant 0 : index
        %c0_186 = arith.constant 0 : index
        %379 = vector.load %arg24[%c0_184, %c0_185, %c0_186] : memref<1x1x32xf32, #tpu.memory_space<vmem>>, vector<1x1x32xf32>
        %380 = vector.shape_cast %379 : vector<1x1x32xf32> to vector<1x32xf32>
        %381 = vector.broadcast %380 : vector<1x32xf32> to vector<2x32xf32>
        %382 = arith.addf %378, %381 : vector<2x32xf32>
        %c0_187 = arith.constant 0 : index
        %c0_188 = arith.constant 0 : index
        %383 = vector.load %arg32[%c0_187, %c0_188] : memref<2x32xf32, #tpu.memory_space<vmem>>, vector<2x32xf32>
        tpu.vector_store %arg32[%c0_187, %c0_188], %382 {strides = array<i32>} : memref<2x32xf32, #tpu.memory_space<vmem>>, vector<2x32xf32>,
      } else {
      }
      %c0_79 = arith.constant 0 : index
      %c0_80 = arith.constant 0 : index
      %100 = vector.load %arg32[%c0_79, %c0_80] : memref<2x32xf32, #tpu.memory_space<vmem>>, vector<2x32xf32>
      %101 = arith.index_cast %40 : i32 to index
      %c0_81 = arith.constant 0 : index
      %c0_82 = arith.constant 0 : index
      %102 = vector.load %arg28[%101, %c0_81, %c0_82] : memref<6x2x96xf32, #tpu.memory_space<vmem>>, vector<1x2x96xf32>
      %103 = vector.shape_cast %102 : vector<1x2x96xf32> to vector<2x96xf32>
      %c0_83 = arith.constant 0 : index
      %c0_84 = arith.constant 0 : index
      %c0_85 = arith.constant 0 : index
      %104 = vector.load %arg12[%c0_83, %c0_84, %c0_85] : memref<1x32x96xf32, #tpu.memory_space<vmem>>, vector<1x32x96xf32>
      %105 = vector.shape_cast %104 : vector<1x32x96xf32> to vector<32x96xf32>
      %cst_86 = arith.constant dense<0.000000e+00> : vector<2x96xf32>
      %106 = tpu.matmul %100, %105, %cst_86 {dimension_numbers = #tpu.dot_dimension_numbers<[1], [0], [0], [1], [0, 0, 1, 1], [], []>} : vector<2x32xf32>, vector<32x96xf32>, vector<2x96xf32> -> vector<2x96xf32>
      %107 = arith.addf %103, %106 : vector<2x96xf32>
      %cst_87 = arith.constant 0.000000e+00 : f32
      %108 = vector.broadcast %cst_87 : f32 to vector<2x32xf32>
      %c0_88 = arith.constant 0 : index
      %c0_89 = arith.constant 0 : index
      %c0_90 = arith.constant 0 : index
      %109 = vector.load %arg30[%c0_88, %c0_89, %c0_90] : memref<2x2x32xf32, #tpu.memory_space<vmem>>, vector<1x2x32xf32>
      %110 = vector.shape_cast %109 : vector<1x2x32xf32> to vector<2x32xf32>
      %c0_91 = arith.constant 0 : index
      %c0_92 = arith.constant 0 : index
      %c0_93 = arith.constant 0 : index
      %111 = vector.load %arg13[%c0_91, %c0_92, %c0_93] : memref<1x32x96xf32, #tpu.memory_space<vmem>>, vector<1x32x96xf32>
      %112 = vector.shape_cast %111 : vector<1x32x96xf32> to vector<32x96xf32>
      %cst_94 = arith.constant dense<0.000000e+00> : vector<2x96xf32>
      %113 = tpu.matmul %110, %112, %cst_94 {dimension_numbers = #tpu.dot_dimension_numbers<[1], [0], [0], [1], [0, 0, 1, 1], [], []>} : vector<2x32xf32>, vector<32x96xf32>, vector<2x96xf32> -> vector<2x96xf32>
      %c0_95 = arith.constant 0 : index
      %c0_96 = arith.constant 0 : index
      %c0_97 = arith.constant 0 : index
      %114 = vector.load %arg15[%c0_95, %c0_96, %c0_97] : memref<1x1x96xf32, #tpu.memory_space<vmem>>, vector<1x1x96xf32>
      %115 = vector.shape_cast %114 : vector<1x1x96xf32> to vector<1x96xf32>
      %116 = vector.broadcast %115 : vector<1x96xf32> to vector<2x96xf32>
      %117 = arith.addf %113, %116 : vector<2x96xf32>
      %118 = vector.extract_strided_slice %107 {offsets = [0, 0], sizes = [2, 32], strides = [1, 1]} : vector<2x96xf32> to vector<2x32xf32>
      %119 = vector.extract_strided_slice %117 {offsets = [0, 0], sizes = [2, 32], strides = [1, 1]} : vector<2x96xf32> to vector<2x32xf32>
      %120 = arith.addf %118, %119 : vector<2x32xf32>
      %121 = arith.negf %120 : vector<2x32xf32>
      %122 = math.exp %121 : vector<2x32xf32>
      %cst_98 = arith.constant 1.000000e+00 : f32
      %123 = vector.broadcast %cst_98 : f32 to vector<2x32xf32>
      %124 = arith.addf %123, %122 : vector<2x32xf32>
      %125 = arith.divf %123, %124 : vector<2x32xf32>
      %126 = vector.extract_strided_slice %107 {offsets = [0, 32], sizes = [2, 32], strides = [1, 1]} : vector<2x96xf32> to vector<2x32xf32>
      %127 = vector.extract_strided_slice %117 {offsets = [0, 32], sizes = [2, 32], strides = [1, 1]} : vector<2x96xf32> to vector<2x32xf32>
      %128 = arith.addf %126, %127 : vector<2x32xf32>
      %129 = arith.negf %128 : vector<2x32xf32>
      %130 = math.exp %129 : vector<2x32xf32>
      %cst_99 = arith.constant 1.000000e+00 : f32
      %131 = vector.broadcast %cst_99 : f32 to vector<2x32xf32>
      %132 = arith.addf %131, %130 : vector<2x32xf32>
      %133 = arith.divf %131, %132 : vector<2x32xf32>
      %134 = vector.extract_strided_slice %107 {offsets = [0, 64], sizes = [2, 32], strides = [1, 1]} : vector<2x96xf32> to vector<2x32xf32>
      %135 = vector.extract_strided_slice %117 {offsets = [0, 64], sizes = [2, 32], strides = [1, 1]} : vector<2x96xf32> to vector<2x32xf32>
      %136 = arith.mulf %125, %135 : vector<2x32xf32>
      %137 = arith.addf %134, %136 : vector<2x32xf32>
      %138 = math.tanh %137 : vector<2x32xf32>
      %cst_100 = arith.constant 1.000000e+00 : f32
      %139 = vector.broadcast %cst_100 : f32 to vector<2x32xf32>
      %140 = arith.subf %139, %133 : vector<2x32xf32>
      %141 = arith.mulf %140, %138 : vector<2x32xf32>
      %142 = arith.mulf %133, %110 : vector<2x32xf32>
      %143 = arith.addf %141, %142 : vector<2x32xf32>
      %144 = vector.extract_strided_slice %43 {offsets = [0, 0], sizes = [2, 1], strides = [1, 1]} : vector<2x2xf32> to vector<2x1xf32>
      %cst_101 = arith.constant 1.000000e+00 : f32
      %145 = vector.broadcast %cst_101 : f32 to vector<2x1xf32>
      %146 = arith.subf %145, %144 : vector<2x1xf32>
      %147 = vector.broadcast %146 : vector<2x1xf32> to vector<2x32xf32>
      %148 = arith.mulf %110, %147 : vector<2x32xf32>
      %149 = vector.broadcast %144 : vector<2x1xf32> to vector<2x32xf32>
      %150 = arith.mulf %143, %149 : vector<2x32xf32>
      %151 = arith.addf %148, %150 : vector<2x32xf32>
      %c0_102 = arith.constant 0 : index
      %c0_103 = arith.constant 0 : index
      %c0_104 = arith.constant 0 : index
      %152 = vector.load %arg30[%c0_102, %c0_103, %c0_104] : memref<2x2x32xf32, #tpu.memory_space<vmem>>, vector<1x2x32xf32>
      %153 = vector.shape_cast %152 : vector<1x2x32xf32> to vector<2x32xf32>
      %154 = vector.shape_cast %151 : vector<2x32xf32> to vector<1x2x32xf32>
      tpu.vector_store %arg30[%c0_102, %c0_103, %c0_104], %154 {strides = array<i32>} : memref<2x2x32xf32, #tpu.memory_space<vmem>>, vector<1x2x32xf32>,
      %155 = vector.broadcast %144 : vector<2x1xf32> to vector<2x32xf32>
      %156 = arith.mulf %155, %151 : vector<2x32xf32>
      %157 = arith.addf %108, %156 : vector<2x32xf32>
      %c1_105 = arith.constant 1 : index
      %c0_106 = arith.constant 0 : index
      %c0_107 = arith.constant 0 : index
      %158 = vector.load %arg30[%c1_105, %c0_106, %c0_107] : memref<2x2x32xf32, #tpu.memory_space<vmem>>, vector<1x2x32xf32>
      %159 = vector.shape_cast %158 : vector<1x2x32xf32> to vector<2x32xf32>
      %c0_108 = arith.constant 0 : index
      %c0_109 = arith.constant 0 : index
      %c0_110 = arith.constant 0 : index
      %160 = vector.load %arg13[%c0_108, %c0_109, %c0_110] : memref<1x32x96xf32, #tpu.memory_space<vmem>>, vector<1x32x96xf32>
      %161 = vector.shape_cast %160 : vector<1x32x96xf32> to vector<32x96xf32>
      %cst_111 = arith.constant dense<0.000000e+00> : vector<2x96xf32>
      %162 = tpu.matmul %159, %161, %cst_111 {dimension_numbers = #tpu.dot_dimension_numbers<[1], [0], [0], [1], [0, 0, 1, 1], [], []>} : vector<2x32xf32>, vector<32x96xf32>, vector<2x96xf32> -> vector<2x96xf32>
      %c0_112 = arith.constant 0 : index
      %c0_113 = arith.constant 0 : index
      %c0_114 = arith.constant 0 : index
      %163 = vector.load %arg15[%c0_112, %c0_113, %c0_114] : memref<1x1x96xf32, #tpu.memory_space<vmem>>, vector<1x1x96xf32>
      %164 = vector.shape_cast %163 : vector<1x1x96xf32> to vector<1x96xf32>
      %165 = vector.broadcast %164 : vector<1x96xf32> to vector<2x96xf32>
      %166 = arith.addf %162, %165 : vector<2x96xf32>
      %167 = vector.extract_strided_slice %107 {offsets = [0, 0], sizes = [2, 32], strides = [1, 1]} : vector<2x96xf32> to vector<2x32xf32>
      %168 = vector.extract_strided_slice %166 {offsets = [0, 0], sizes = [2, 32], strides = [1, 1]} : vector<2x96xf32> to vector<2x32xf32>
      %169 = arith.addf %167, %168 : vector<2x32xf32>
      %170 = arith.negf %169 : vector<2x32xf32>
      %171 = math.exp %170 : vector<2x32xf32>
      %cst_115 = arith.constant 1.000000e+00 : f32
      %172 = vector.broadcast %cst_115 : f32 to vector<2x32xf32>
      %173 = arith.addf %172, %171 : vector<2x32xf32>
      %174 = arith.divf %172, %173 : vector<2x32xf32>
      %175 = vector.extract_strided_slice %107 {offsets = [0, 32], sizes = [2, 32], strides = [1, 1]} : vector<2x96xf32> to vector<2x32xf32>
      %176 = vector.extract_strided_slice %166 {offsets = [0, 32], sizes = [2, 32], strides = [1, 1]} : vector<2x96xf32> to vector<2x32xf32>
      %177 = arith.addf %175, %176 : vector<2x32xf32>
      %178 = arith.negf %177 : vector<2x32xf32>
      %179 = math.exp %178 : vector<2x32xf32>
      %cst_116 = arith.constant 1.000000e+00 : f32
      %180 = vector.broadcast %cst_116 : f32 to vector<2x32xf32>
      %181 = arith.addf %180, %179 : vector<2x32xf32>
      %182 = arith.divf %180, %181 : vector<2x32xf32>
      %183 = vector.extract_strided_slice %107 {offsets = [0, 64], sizes = [2, 32], strides = [1, 1]} : vector<2x96xf32> to vector<2x32xf32>
      %184 = vector.extract_strided_slice %166 {offsets = [0, 64], sizes = [2, 32], strides = [1, 1]} : vector<2x96xf32> to vector<2x32xf32>
      %185 = arith.mulf %174, %184 : vector<2x32xf32>
      %186 = arith.addf %183, %185 : vector<2x32xf32>
      %187 = math.tanh %186 : vector<2x32xf32>
      %cst_117 = arith.constant 1.000000e+00 : f32
      %188 = vector.broadcast %cst_117 : f32 to vector<2x32xf32>
      %189 = arith.subf %188, %182 : vector<2x32xf32>
      %190 = arith.mulf %189, %187 : vector<2x32xf32>
      %191 = arith.mulf %182, %159 : vector<2x32xf32>
      %192 = arith.addf %190, %191 : vector<2x32xf32>
      %193 = vector.extract_strided_slice %43 {offsets = [0, 1], sizes = [2, 1], strides = [1, 1]} : vector<2x2xf32> to vector<2x1xf32>
      %cst_118 = arith.constant 1.000000e+00 : f32
      %194 = vector.broadcast %cst_118 : f32 to vector<2x1xf32>
      %195 = arith.subf %194, %193 : vector<2x1xf32>
      %196 = vector.broadcast %195 : vector<2x1xf32> to vector<2x32xf32>
      %197 = arith.mulf %159, %196 : vector<2x32xf32>
      %198 = vector.broadcast %193 : vector<2x1xf32> to vector<2x32xf32>
      %199 = arith.mulf %192, %198 : vector<2x32xf32>
      %200 = arith.addf %197, %199 : vector<2x32xf32>
      %c1_119 = arith.constant 1 : index
      %c0_120 = arith.constant 0 : index
      %c0_121 = arith.constant 0 : index
      %201 = vector.load %arg30[%c1_119, %c0_120, %c0_121] : memref<2x2x32xf32, #tpu.memory_space<vmem>>, vector<1x2x32xf32>
      %202 = vector.shape_cast %201 : vector<1x2x32xf32> to vector<2x32xf32>
      %203 = vector.shape_cast %200 : vector<2x32xf32> to vector<1x2x32xf32>
      tpu.vector_store %arg30[%c1_119, %c0_120, %c0_121], %203 {strides = array<i32>} : memref<2x2x32xf32, #tpu.memory_space<vmem>>, vector<1x2x32xf32>,
      %204 = vector.broadcast %193 : vector<2x1xf32> to vector<2x32xf32>
      %205 = arith.mulf %204, %200 : vector<2x32xf32>
      %206 = arith.addf %157, %205 : vector<2x32xf32>
      %c0_122 = arith.constant 0 : index
      %c0_123 = arith.constant 0 : index
      %c0_124 = arith.constant 0 : index
      %207 = vector.load %arg16[%c0_122, %c0_123, %c0_124] : memref<1x32x96xf32, #tpu.memory_space<vmem>>, vector<1x32x96xf32>
      %208 = vector.shape_cast %207 : vector<1x32x96xf32> to vector<32x96xf32>
      %cst_125 = arith.constant dense<0.000000e+00> : vector<2x96xf32>
      %209 = tpu.matmul %206, %208, %cst_125 {dimension_numbers = #tpu.dot_dimension_numbers<[1], [0], [0], [1], [0, 0, 1, 1], [], []>} : vector<2x32xf32>, vector<32x96xf32>, vector<2x96xf32> -> vector<2x96xf32>
      %c0_126 = arith.constant 0 : index
      %c0_127 = arith.constant 0 : index
      %c0_128 = arith.constant 0 : index
      %210 = vector.load %arg18[%c0_126, %c0_127, %c0_128] : memref<1x1x96xf32, #tpu.memory_space<vmem>>, vector<1x1x96xf32>
      %211 = vector.shape_cast %210 : vector<1x1x96xf32> to vector<1x96xf32>
      %212 = vector.broadcast %211 : vector<1x96xf32> to vector<2x96xf32>
      %213 = arith.addf %209, %212 : vector<2x96xf32>
      %c0_129 = arith.constant 0 : index
      %c0_130 = arith.constant 0 : index
      %214 = vector.load %arg31[%c0_129, %c0_130] : memref<2x32xf32, #tpu.memory_space<vmem>>, vector<2x32xf32>
      %c0_131 = arith.constant 0 : index
      %c0_132 = arith.constant 0 : index
      %c0_133 = arith.constant 0 : index
      %215 = vector.load %arg17[%c0_131, %c0_132, %c0_133] : memref<1x32x96xf32, #tpu.memory_space<vmem>>, vector<1x32x96xf32>
      %216 = vector.shape_cast %215 : vector<1x32x96xf32> to vector<32x96xf32>
      %cst_134 = arith.constant dense<0.000000e+00> : vector<2x96xf32>
      %217 = tpu.matmul %214, %216, %cst_134 {dimension_numbers = #tpu.dot_dimension_numbers<[1], [0], [0], [1], [0, 0, 1, 1], [], []>} : vector<2x32xf32>, vector<32x96xf32>, vector<2x96xf32> -> vector<2x96xf32>
      %c0_135 = arith.constant 0 : index
      %c0_136 = arith.constant 0 : index
      %c0_137 = arith.constant 0 : index
      %218 = vector.load %arg19[%c0_135, %c0_136, %c0_137] : memref<1x1x96xf32, #tpu.memory_space<vmem>>, vector<1x1x96xf32>
      %219 = vector.shape_cast %218 : vector<1x1x96xf32> to vector<1x96xf32>
      %220 = vector.broadcast %219 : vector<1x96xf32> to vector<2x96xf32>
      %221 = arith.addf %217, %220 : vector<2x96xf32>
      %c0_138 = arith.constant 0 : index
      %c0_139 = arith.constant 0 : index
      %222 = vector.load %arg31[%c0_138, %c0_139] : memref<2x32xf32, #tpu.memory_space<vmem>>, vector<2x32xf32>
      %223 = vector.extract_strided_slice %213 {offsets = [0, 0], sizes = [2, 32], strides = [1, 1]} : vector<2x96xf32> to vector<2x32xf32>
      %224 = vector.extract_strided_slice %221 {offsets = [0, 0], sizes = [2, 32], strides = [1, 1]} : vector<2x96xf32> to vector<2x32xf32>
      %225 = arith.addf %223, %224 : vector<2x32xf32>
      %226 = arith.negf %225 : vector<2x32xf32>
      %227 = math.exp %226 : vector<2x32xf32>
      %cst_140 = arith.constant 1.000000e+00 : f32
      %228 = vector.broadcast %cst_140 : f32 to vector<2x32xf32>
      %229 = arith.addf %228, %227 : vector<2x32xf32>
      %230 = arith.divf %228, %229 : vector<2x32xf32>
      %231 = vector.extract_strided_slice %213 {offsets = [0, 32], sizes = [2, 32], strides = [1, 1]} : vector<2x96xf32> to vector<2x32xf32>
      %232 = vector.extract_strided_slice %221 {offsets = [0, 32], sizes = [2, 32], strides = [1, 1]} : vector<2x96xf32> to vector<2x32xf32>
      %233 = arith.addf %231, %232 : vector<2x32xf32>
      %234 = arith.negf %233 : vector<2x32xf32>
      %235 = math.exp %234 : vector<2x32xf32>
      %cst_141 = arith.constant 1.000000e+00 : f32
      %236 = vector.broadcast %cst_141 : f32 to vector<2x32xf32>
      %237 = arith.addf %236, %235 : vector<2x32xf32>
      %238 = arith.divf %236, %237 : vector<2x32xf32>
      %239 = vector.extract_strided_slice %213 {offsets = [0, 64], sizes = [2, 32], strides = [1, 1]} : vector<2x96xf32> to vector<2x32xf32>
      %240 = vector.extract_strided_slice %221 {offsets = [0, 64], sizes = [2, 32], strides = [1, 1]} : vector<2x96xf32> to vector<2x32xf32>
      %241 = arith.mulf %230, %240 : vector<2x32xf32>
      %242 = arith.addf %239, %241 : vector<2x32xf32>
      %243 = math.tanh %242 : vector<2x32xf32>
      %cst_142 = arith.constant 1.000000e+00 : f32
      %244 = vector.broadcast %cst_142 : f32 to vector<2x32xf32>
      %245 = arith.subf %244, %238 : vector<2x32xf32>
      %246 = arith.mulf %245, %243 : vector<2x32xf32>
      %247 = arith.mulf %238, %222 : vector<2x32xf32>
      %248 = arith.addf %246, %247 : vector<2x32xf32>
      %c0_143 = arith.constant 0 : index
      %c0_144 = arith.constant 0 : index
      %249 = vector.load %arg31[%c0_143, %c0_144] : memref<2x32xf32, #tpu.memory_space<vmem>>, vector<2x32xf32>
      tpu.vector_store %arg31[%c0_143, %c0_144], %248 {strides = array<i32>} : memref<2x32xf32, #tpu.memory_space<vmem>>, vector<2x32xf32>,
      %c0_145 = arith.constant 0 : index
      %250 = arith.index_cast %40 : i32 to index
      %c0_146 = arith.constant 0 : index
      %c0_147 = arith.constant 0 : index
      %251 = vector.load %arg25[%c0_145, %250, %c0_146, %c0_147] : memref<1x6x2x32xf32, #tpu.memory_space<vmem>>, vector<1x1x2x32xf32>
      %252 = vector.shape_cast %251 : vector<1x1x2x32xf32> to vector<2x32xf32>
      %253 = vector.shape_cast %248 : vector<2x32xf32> to vector<1x1x2x32xf32>
      tpu.vector_store %arg25[%c0_145, %250, %c0_146, %c0_147], %253 {strides = array<i32>} : memref<1x6x2x32xf32, #tpu.memory_space<vmem>>, vector<1x1x2x32xf32>,
      %254 = arith.index_cast %40 : i32 to index
      %c0_148 = arith.constant 0 : index
      %255 = vector.load %arg3[%254, %c0_148] : memref<6x32xf32, #tpu.memory_space<vmem>>, vector<1x32xf32>
      %256 = vector.broadcast %255 : vector<1x32xf32> to vector<2x32xf32>
      %257 = arith.addf %96, %256 : vector<2x32xf32>
      %258 = arith.index_cast %40 : i32 to index
      %c0_149 = arith.constant 0 : index
      %c0_150 = arith.constant 0 : index
      %259 = vector.load %arg26[%258, %c0_149, %c0_150] : memref<6x2x32xf32, #tpu.memory_space<vmem>>, vector<1x2x32xf32>
      %260 = vector.shape_cast %259 : vector<1x2x32xf32> to vector<2x32xf32>
      %261 = vector.shape_cast %257 : vector<2x32xf32> to vector<1x2x32xf32>
      tpu.vector_store %arg26[%258, %c0_149, %c0_150], %261 {strides = array<i32>} : memref<6x2x32xf32, #tpu.memory_space<vmem>>, vector<1x2x32xf32>,
      %c0_151 = arith.constant 0 : index
      %c0_152 = arith.constant 0 : index
      %262 = vector.load %arg29[%c0_151, %c0_152] : memref<2x32xf32, #tpu.memory_space<vmem>>, vector<2x32xf32>
      tpu.vector_store %arg29[%c0_151, %c0_152], %96 {strides = array<i32>} : memref<2x32xf32, #tpu.memory_space<vmem>>, vector<2x32xf32>,
    }
    %c6_i32_46 = arith.constant 6 : i32
    return
  }
  func.func @transform_0(%arg0: i32) -> (i32, i32, i32, i32) {
    %c0_i32 = arith.constant 0 : i32
    %c0_i32_0 = arith.constant 0 : i32
    %c0_i32_1 = arith.constant 0 : i32
    %c0_i32_2 = arith.constant 0 : i32
    return %arg0, %c0_i32, %c0_i32_0, %c0_i32_1 : i32, i32, i32, i32
  }
  func.func @transform_1(%arg0: i32) -> (i32, i32, i32, i32) {
    %c0_i32 = arith.constant 0 : i32
    %c0_i32_0 = arith.constant 0 : i32
    %c0_i32_1 = arith.constant 0 : i32
    %c0_i32_2 = arith.constant 0 : i32
    return %arg0, %c0_i32, %c0_i32_0, %c0_i32_1 : i32, i32, i32, i32
  }
  func.func @transform_2(%arg0: i32) -> (i32, i32) {
    %c0_i32 = arith.constant 0 : i32
    %c0_i32_0 = arith.constant 0 : i32
    %c0_i32_1 = arith.constant 0 : i32
    return %c0_i32, %c0_i32_0 : i32, i32
  }
  func.func @transform_3(%arg0: i32) -> (i32, i32, i32) {
    %c0_i32 = arith.constant 0 : i32
    %c0_i32_0 = arith.constant 0 : i32
    %c0_i32_1 = arith.constant 0 : i32
    return %arg0, %c0_i32, %c0_i32_0 : i32, i32, i32
  }
  func.func @transform_4(%arg0: i32) -> (i32, i32, i32) {
    %c0_i32 = arith.constant 0 : i32
    %c0_i32_0 = arith.constant 0 : i32
    %c0_i32_1 = arith.constant 0 : i32
    return %arg0, %c0_i32, %c0_i32_0 : i32, i32, i32
  }
  func.func @transform_5(%arg0: i32) -> (i32, i32, i32) {
    %c0_i32 = arith.constant 0 : i32
    %c0_i32_0 = arith.constant 0 : i32
    %c0_i32_1 = arith.constant 0 : i32
    return %arg0, %c0_i32, %c0_i32_0 : i32, i32, i32
  }
  func.func @transform_6(%arg0: i32) -> (i32, i32, i32) {
    %c0_i32 = arith.constant 0 : i32
    %c0_i32_0 = arith.constant 0 : i32
    %c0_i32_1 = arith.constant 0 : i32
    return %arg0, %c0_i32, %c0_i32_0 : i32, i32, i32
  }
  func.func @transform_7(%arg0: i32) -> (i32, i32, i32) {
    %c0_i32 = arith.constant 0 : i32
    %c0_i32_0 = arith.constant 0 : i32
    %c0_i32_1 = arith.constant 0 : i32
    return %arg0, %c0_i32, %c0_i32_0 : i32, i32, i32
  }
  func.func @transform_8(%arg0: i32) -> (i32, i32, i32) {
    %c0_i32 = arith.constant 0 : i32
    %c0_i32_0 = arith.constant 0 : i32
    %c0_i32_1 = arith.constant 0 : i32
    return %arg0, %c0_i32, %c0_i32_0 : i32, i32, i32
  }
  func.func @transform_9(%arg0: i32) -> (i32, i32, i32) {
    %c0_i32 = arith.constant 0 : i32
    %c0_i32_0 = arith.constant 0 : i32
    %c0_i32_1 = arith.constant 0 : i32
    return %arg0, %c0_i32, %c0_i32_0 : i32, i32, i32
  }
  func.func @transform_10(%arg0: i32) -> (i32, i32, i32) {
    %c0_i32 = arith.constant 0 : i32
    %c0_i32_0 = arith.constant 0 : i32
    %c0_i32_1 = arith.constant 0 : i32
    return %arg0, %c0_i32, %c0_i32_0 : i32, i32, i32
  }
  func.func @transform_11(%arg0: i32) -> (i32, i32, i32) {
    %c0_i32 = arith.constant 0 : i32
    %c0_i32_0 = arith.constant 0 : i32
    %c0_i32_1 = arith.constant 0 : i32
    return %arg0, %c0_i32, %c0_i32_0 : i32, i32, i32
  }
  func.func @transform_12(%arg0: i32) -> (i32, i32, i32) {
    %c0_i32 = arith.constant 0 : i32
    %c0_i32_0 = arith.constant 0 : i32
    %c0_i32_1 = arith.constant 0 : i32
    return %arg0, %c0_i32, %c0_i32_0 : i32, i32, i32
  }
  func.func @transform_13(%arg0: i32) -> (i32, i32, i32) {
    %c0_i32 = arith.constant 0 : i32
    %c0_i32_0 = arith.constant 0 : i32
    %c0_i32_1 = arith.constant 0 : i32
    return %arg0, %c0_i32, %c0_i32_0 : i32, i32, i32
  }
  func.func @transform_14(%arg0: i32) -> (i32, i32, i32) {
    %c0_i32 = arith.constant 0 : i32
    %c0_i32_0 = arith.constant 0 : i32
    %c0_i32_1 = arith.constant 0 : i32
    return %arg0, %c0_i32, %c0_i32_0 : i32, i32, i32
  }
  func.func @transform_15(%arg0: i32) -> (i32, i32, i32) {
    %c0_i32 = arith.constant 0 : i32
    %c0_i32_0 = arith.constant 0 : i32
    %c0_i32_1 = arith.constant 0 : i32
    return %arg0, %c0_i32, %c0_i32_0 : i32, i32, i32
  }
  func.func @transform_16(%arg0: i32) -> (i32, i32, i32) {
    %c0_i32 = arith.constant 0 : i32
    %c0_i32_0 = arith.constant 0 : i32
    %c0_i32_1 = arith.constant 0 : i32
    return %arg0, %c0_i32, %c0_i32_0 : i32, i32, i32
  }
  func.func @transform_17(%arg0: i32) -> (i32, i32, i32) {
    %c0_i32 = arith.constant 0 : i32
    %c0_i32_0 = arith.constant 0 : i32
    %c0_i32_1 = arith.constant 0 : i32
    return %arg0, %c0_i32, %c0_i32_0 : i32, i32, i32
  }
  func.func @transform_18(%arg0: i32) -> (i32, i32, i32) {
    %c0_i32 = arith.constant 0 : i32
    %c0_i32_0 = arith.constant 0 : i32
    %c0_i32_1 = arith.constant 0 : i32
    return %arg0, %c0_i32, %c0_i32_0 : i32, i32, i32
  }
  func.func @transform_19(%arg0: i32) -> (i32, i32, i32) {
    %c0_i32 = arith.constant 0 : i32
    %c0_i32_0 = arith.constant 0 : i32
    %c0_i32_1 = arith.constant 0 : i32
    return %arg0, %c0_i32, %c0_i32_0 : i32, i32, i32
  }
  func.func @transform_20(%arg0: i32) -> (i32, i32, i32) {
    %c0_i32 = arith.constant 0 : i32
    %c0_i32_0 = arith.constant 0 : i32
    %c0_i32_1 = arith.constant 0 : i32
    return %arg0, %c0_i32, %c0_i32_0 : i32, i32, i32
  }
  func.func @transform_21(%arg0: i32) -> (i32, i32, i32) {
    %c0_i32 = arith.constant 0 : i32
    %c0_i32_0 = arith.constant 0 : i32
    %c0_i32_1 = arith.constant 0 : i32
    return %arg0, %c0_i32, %c0_i32_0 : i32, i32, i32
  }
  func.func @transform_22(%arg0: i32) -> (i32, i32, i32) {
    %c0_i32 = arith.constant 0 : i32
    %c0_i32_0 = arith.constant 0 : i32
    %c0_i32_1 = arith.constant 0 : i32
    return %arg0, %c0_i32, %c0_i32_0 : i32, i32, i32
  }
  func.func @transform_23(%arg0: i32) -> (i32, i32, i32) {
    %c0_i32 = arith.constant 0 : i32
    %c0_i32_0 = arith.constant 0 : i32
    %c0_i32_1 = arith.constant 0 : i32
    return %arg0, %c0_i32, %c0_i32_0 : i32, i32, i32
  }
  func.func @transform_24(%arg0: i32) -> (i32, i32, i32, i32) {
    %c0_i32 = arith.constant 0 : i32
    %c0_i32_0 = arith.constant 0 : i32
    %c0_i32_1 = arith.constant 0 : i32
    %c0_i32_2 = arith.constant 0 : i32
    return %arg0, %c0_i32, %c0_i32_0, %c0_i32_1 : i32, i32, i32, i32
  }
}

</mosaic_0001>

<llo_original>
// kernel: bimodel_forward.3
$region0: #{bimodel_forward.3}
  #allocation0 [shape = 'u32[]', space=smem, size = 0x4, offset = 0x4, fixed_abs, tag = 'smem constant byte address 0x4 - core index']
  #allocation1 [shape = 'u32[144,128]{1,0:T(1,128)}', space=vmem, size = 0x12000, scoped, tag = 'internal scratch']
  %s0 = inlined_call_operand.vmem [shape: f32[2,6,64], index: 0, kind: input, shape index: {}]
  %s1 = inlined_call_operand.vmem [shape: f32[6,64], index: 1, kind: input, shape index: {}]
  %s2 = inlined_call_operand.vmem [shape: f32[64,192], index: 2, kind: input, shape index: {}]
  %s3 = inlined_call_operand.vmem [shape: f32[1,192], index: 3, kind: input, shape index: {}]
  %s4 = inlined_call_operand.vmem [shape: f32[64,64], index: 4, kind: input, shape index: {}]
  %s5 = inlined_call_operand.vmem [shape: f32[1,64], index: 5, kind: input, shape index: {}]
  %s6 = inlined_call_operand.vmem [shape: f32[64,32], index: 6, kind: input, shape index: {}]
  %s7 = inlined_call_operand.vmem [shape: f32[1,32], index: 7, kind: input, shape index: {}]
  %s8 = inlined_call_operand.vmem [shape: f32[32,7], index: 8, kind: input, shape index: {}]
  %s9 = inlined_call_operand.vmem [shape: f32[1,7], index: 9, kind: input, shape index: {}]
  %s10 = inlined_call_operand.vmem [shape: f32[12,7], index: 10, kind: output, shape index: {}]
  %s11 = sld [smem:[#allocation0]]
  $region50: #{bimodel_forward.3} parent=0
    _
  %s13 = ssub.s32 1, %s11
  %s14 = scalar_select 0, %s13, %s11
  // Predicated region
  $region2: #{bimodel_forward.3} parent=0 // pred_check
    _
  $region3: #{bimodel_forward.3} parent=0 // pred_check_branch
    %16 = sbr.rel (0) target = $region5
  $region4: #{bimodel_forward.3} parent=0 // pred_region
    _
  $region5: #{bimodel_forward.3} parent=0 // pred_fallthru
    _
  // Predicated region
  $region6: #{bimodel_forward.3} parent=0 // pred_check
    _
  $region7: #{bimodel_forward.3} parent=0 // pred_check_branch
    %18 = sbr.rel (0) target = $region9
  $region8: #{bimodel_forward.3} parent=0 // pred_region
    _
  $region9: #{bimodel_forward.3} parent=0 // pred_fallthru
    _
  // Predicated region
  $region10: #{bimodel_forward.3} parent=0 // pred_check
    _
  $region11: #{bimodel_forward.3} parent=0 // pred_check_branch
    %20 = sbr.rel (0) target = $region13
  $region12: #{bimodel_forward.3} parent=0 // pred_region
    _
  $region13: #{bimodel_forward.3} parent=0 // pred_fallthru
    _
  // Predicated region
  $region14: #{bimodel_forward.3} parent=0 // pred_check
    _
  $region15: #{bimodel_forward.3} parent=0 // pred_check_branch
    %22 = sbr.rel (0) target = $region17
  $region16: #{bimodel_forward.3} parent=0 // pred_region
    _
  $region17: #{bimodel_forward.3} parent=0 // pred_fallthru
    _
  // Predicated region
  $region18: #{bimodel_forward.3} parent=0 // pred_check
    _
  $region19: #{bimodel_forward.3} parent=0 // pred_check_branch
    %24 = sbr.rel (0) target = $region21
  $region20: #{bimodel_forward.3} parent=0 // pred_region
    _
  $region21: #{bimodel_forward.3} parent=0 // pred_fallthru
    _
  // Predicated region
  $region22: #{bimodel_forward.3} parent=0 // pred_check
    _
  $region23: #{bimodel_forward.3} parent=0 // pred_check_branch
    %26 = sbr.rel (0) target = $region25
  $region24: #{bimodel_forward.3} parent=0 // pred_region
    _
  $region25: #{bimodel_forward.3} parent=0 // pred_fallthru
    _
  // Predicated region
  $region26: #{bimodel_forward.3} parent=0 // pred_check
    _
  $region27: #{bimodel_forward.3} parent=0 // pred_check_branch
    %28 = sbr.rel (0) target = $region29
  $region28: #{bimodel_forward.3} parent=0 // pred_region
    _
  $region29: #{bimodel_forward.3} parent=0 // pred_fallthru
    _
  // Predicated region
  $region30: #{bimodel_forward.3} parent=0 // pred_check
    _
  $region31: #{bimodel_forward.3} parent=0 // pred_check_branch
    %30 = sbr.rel (0) target = $region33
  $region32: #{bimodel_forward.3} parent=0 // pred_region
    _
  $region33: #{bimodel_forward.3} parent=0 // pred_fallthru
    _
  // Predicated region
  $region34: #{bimodel_forward.3} parent=0 // pred_check
    _
  $region35: #{bimodel_forward.3} parent=0 // pred_check_branch
    %32 = sbr.rel (0) target = $region37
  $region36: #{bimodel_forward.3} parent=0 // pred_region
    _
  $region37: #{bimodel_forward.3} parent=0 // pred_fallthru
    _
  // Predicated region
  $region38: #{bimodel_forward.3} parent=0 // pred_check
    _
  $region39: #{bimodel_forward.3} parent=0 // pred_check_branch
    %34 = sbr.rel (0) target = $region41
  $region40: #{bimodel_forward.3} parent=0 // pred_region
    _
  $region41: #{bimodel_forward.3} parent=0 // pred_fallthru
    _
  %v35 = vld [vmem:[%s0] sm:$0x3f]
  %v36 = vld [vmem:[%s0 + $0x8] sm:$0x3f]
  %v37 = vld [vmem:[%s1] sm:$0x3f]
  %v38 = vadd.f32 %v35, %v37
  %v39 = vadd.f32 %v36, %v37
  %v42 = vcombine.high %v38, %v38
  %v44 = vunpack.c.l.s4 1983009808
  %v45 = vunpack.c.0.s8 %v44
  %v46 = vlaneseq
  %v47 = vshrl.u32 %v46, 7
  %v48 = vsub.s32 %v45, %v47
  %v49 = vrot.slane %v38, %v48
  %v51 = vunpack.c.l.s4 1983009808
  %v52 = vunpack.c.0.s8 %v51
  %v53 = vlaneseq
  %v54 = vshrl.u32 %v53, 7
  %v55 = vsub.s32 %v52, %v54
  %v56 = vrot.slane %v42, %v55
  %v57 = vcombine.high %v49, %v49
  %v58 = vcombine.high %v39, %v39
  %v60 = vunpack.c.l.s4 1983009808
  %v61 = vunpack.c.0.s8 %v60
  %v62 = vlaneseq
  %v63 = vshrl.u32 %v62, 7
  %v64 = vsub.s32 %v61, %v63
  %v65 = vrot.slane %v39, %v64
  %v67 = vunpack.c.l.s4 1983009808
  %v68 = vunpack.c.0.s8 %v67
  %v69 = vlaneseq
  %v70 = vshrl.u32 %v69, 7
  %v71 = vsub.s32 %v68, %v70
  %v72 = vrot.slane %v58, %v71
  %v73 = vcombine.high %v65, %v65
  %v74 = vld [vmem:[%s2] sm:$0xff]
  %v75 = vld [vmem:[%s2 + $0x8] sm:$0xff]
  %v76 = vld [vmem:[%s2 + $0x10] sm:$0xff]
  %v77 = vld [vmem:[%s2 + $0x18] sm:$0xff]
  %v78 = vld [vmem:[%s2 + $0x20] sm:$0xff]
  %v79 = vld [vmem:[%s2 + $0x28] sm:$0xff]
  %v80 = vld [vmem:[%s2 + $0x30] sm:$0xff]
  %v81 = vld [vmem:[%s2 + $0x38] sm:$0xff]
  %v82 = vld [vmem:[%s2 + $0x40] sm:$0xff]
  %v83 = vld [vmem:[%s2 + $0x48] sm:$0xff]
  %v84 = vld [vmem:[%s2 + $0x50] sm:$0xff]
  %v85 = vld [vmem:[%s2 + $0x58] sm:$0xff]
  %v86 = vld [vmem:[%s2 + $0x60] sm:$0xff]
  %v87 = vld [vmem:[%s2 + $0x68] sm:$0xff]
  %v88 = vld [vmem:[%s2 + $0x70] sm:$0xff]
  %v89 = vld [vmem:[%s2 + $0x78] sm:$0xff]
  %v90 = vld [vmem:[%s3] sm:$0x3]
  %v92 = vlaneseq
  %v93 = vshrl.u32 %v92, 7
  %v94 = vsub.s32 0, %v93
  %v95 = vrot.slane %v90, %v94
  %v96 = vlaneseq
  %v97 = vshrl.u32 %v96, 7
  %v98 = vsub.s32 1, %v97
  %v99 = vrot.slane %v90, %v98
  %v102 = vcombine.low %v49, %v57
  %v103 = vcombine.low %v56, %v65
  %v105 = vunpack.c.l.s4 1983009808
  %v106 = vunpack.c.0.s8 %v105
  %v107 = vlaneseq
  %v108 = vshrl.u32 %v107, 7
  %v109 = vsub.s32 %v106, %v108
  %v110 = vrot.slane %v102, %v109
  %v112 = vunpack.c.l.s4 1983009808
  %v113 = vunpack.c.0.s8 %v112
  %v114 = vlaneseq
  %v115 = vshrl.u32 %v114, 7
  %v116 = vsub.s32 %v113, %v115
  %v117 = vrot.slane %v103, %v116
  %v118 = vcombine.low %v110, %v117
  %v119 = vcombine.low %v73, %v72
  %v121 = vunpack.c.l.s4 1983009808
  %v122 = vunpack.c.0.s8 %v121
  %v123 = vlaneseq
  %v124 = vshrl.u32 %v123, 7
  %v125 = vsub.s32 %v122, %v124
  %v126 = vrot.slane %v119, %v125
  %vm127 = vcmask 523264
  %v128 = vsel %vm127, %v118, 0
  %v130 = vsel %vm127, %v126, 0
  %132 = vmatprep.subr.mxu0 %v75
  %133 = vmatpush1.msra.mxu0 %v74
  %134 = vmatprep.subr.mxu0 %v77
  %135 = vmatpush1.msra.mxu0 %v76
  %136 = vmatprep.subr.mxu0 %v79
  %137 = vmatpush1.msra.mxu0 %v78
  %138 = vmatprep.subr.mxu0 %v81
  %139 = vmatpush1.msra.mxu0 %v80
  %140 = vmatprep.subr.mxu0 %v83
  %141 = vmatpush1.msra.mxu0 %v82
  %142 = vmatprep.subr.mxu0 %v85
  %143 = vmatpush1.msra.mxu0 %v84
  %144 = vmatprep.subr.mxu0 %v87
  %145 = vmatpush1.msra.mxu0 %v86
  %146 = vmatprep.subr.mxu0 %v89
  %147 = vmatpush1.msra.mxu0 %v88
  %148 = vmatprep.subr.mxu0 0.0
  %149 = vmatpush1.msra.mxu0 0.0
  %150 = vmatprep.subr.mxu0 0.0
  %151 = vmatpush1.msra.mxu0 0.0
  %152 = vmatprep.subr.mxu0 0.0
  %153 = vmatpush1.msra.mxu0 0.0
  %154 = vmatprep.subr.mxu0 0.0
  %155 = vmatpush1.msra.mxu0 0.0
  %156 = vmatprep.subr.mxu0 0.0
  %157 = vmatpush1.msra.mxu0 0.0
  %158 = vmatprep.subr.mxu0 0.0
  %159 = vmatpush1.msra.mxu0 0.0
  %160 = vmatprep.subr.mxu0 0.0
  %161 = vmatpush1.msra.mxu0 0.0
  %162 = vmatprep.subr.mxu0 0.0
  %163 = vmatpush1.msra.mxu0 0.0
  %164 = vmatprep.subr.mxu0 0.0
  %165 = vmatpush1.msra.mxu0 0.0
  %166 = vmatprep.subr.mxu0 0.0
  %167 = vmatpush1.msra.mxu0 0.0
  %168 = vmatprep.subr.mxu0 0.0
  %169 = vmatpush1.msra.mxu0 0.0
  %170 = vmatprep.subr.mxu0 0.0
  %171 = vmatpush1.msra.mxu0 0.0
  %172 = vmatprep.subr.mxu0 0.0
  %173 = vmatpush1.msra.mxu0 0.0
  %174 = vmatprep.subr.mxu0 0.0
  %175 = vmatpush1.msra.mxu0 0.0
  %176 = vmatprep.subr.mxu0 0.0
  %177 = vmatpush1.msra.mxu0 0.0
  %178 = vmatprep.subr.mxu0 0.0
  %179 = vmatpush1.msra.mxu0 0.0
  %180 = vmatprep.subr.mxu0 0.0
  %181 = vmatpush1.msra.mxu0 0.0
  %182 = vmatprep.subr.mxu0 0.0
  %183 = vmatpush1.msra.mxu0 0.0
  %184 = vmatprep.subr.mxu0 0.0
  %185 = vmatpush1.msra.mxu0 0.0
  %186 = vmatprep.subr.mxu0 0.0
  %187 = vmatpush1.msra.mxu0 0.0
  %188 = vmatprep.subr.mxu0 0.0
  %189 = vmatpush1.msra.mxu0 0.0
  %190 = vmatprep.subr.mxu0 0.0
  %191 = vmatpush1.msra.mxu0 0.0
  %192 = vmatprep.subr.mxu0 0.0
  %193 = vmatpush1.msra.mxu0 0.0
  %194 = vmatprep.subr.mxu0 0.0
  %195 = vmatpush1.msra.mxu0 0.0
  %196 = vmatprep.mubr.f32.mxu0 0.0
  %197 = vmatmul.mubr.f32.gmra.mrb[0].mxu0 %v128
  %v198 = vpop.f32.mrb[0].mxu0
  %v199 = vadd.f32 %v95, %v198
  %v200 = vpop.f32.mrb[0].mxu0
  %v201 = vadd.f32 %v99, %v200
  %202 = vmatprep.mubr.f32.mxu0 0.0
  %203 = vmatmul.mubr.f32.gmra.mrb[0].mxu0 %v130
  %v204 = vpop.f32.mrb[0].mxu0
  %v205 = vadd.f32 %v95, %v204
  %v206 = vpop.f32.mrb[0].mxu0
  %v207 = vadd.f32 %v99, %v206
  %208 = vdwg.mxu0
  %v213 = vcombine.low %v199, %v201
  %v214 = vcombine.high %v199, %v201
  %v216 = vunpack.c.l.s4 1983009808
  %v217 = vunpack.c.0.s8 %v216
  %v218 = vlaneseq
  %v219 = vshrl.u32 %v218, 7
  %v220 = vsub.s32 %v217, %v219
  %v221 = vrot.slane %v213, %v220
  %v223 = vunpack.c.l.s4 1983009808
  %v224 = vunpack.c.0.s8 %v223
  %v225 = vlaneseq
  %v226 = vshrl.u32 %v225, 7
  %v227 = vsub.s32 %v224, %v226
  %v228 = vrot.slane %v214, %v227
  %v229 = vcombine.high %v221, %v221
  %v230 = vcombine.high %v228, %v228
  %v231 = vcombine.low %v205, %v207
  %v233 = vunpack.c.l.s4 1983009808
  %v234 = vunpack.c.0.s8 %v233
  %v235 = vlaneseq
  %v236 = vshrl.u32 %v235, 7
  %v237 = vsub.s32 %v234, %v236
  %v238 = vrot.slane %v231, %v237
  %v239 = vcombine.high %v238, %v238
  %v240 = vld [vmem:[%s4] sm:$0xff]
  %v241 = vld [vmem:[%s4 + $0x8] sm:$0xff]
  %v242 = vld [vmem:[%s4 + $0x10] sm:$0xff]
  %v243 = vld [vmem:[%s4 + $0x18] sm:$0xff]
  %v244 = vld [vmem:[%s4 + $0x20] sm:$0xff]
  %v245 = vld [vmem:[%s4 + $0x28] sm:$0xff]
  %v246 = vld [vmem:[%s4 + $0x30] sm:$0xff]
  %v247 = vld [vmem:[%s4 + $0x38] sm:$0xff]
  %v248 = vcombine.low %v221, %v229
  %v250 = vunpack.c.l.s4 1983009808
  %v251 = vunpack.c.0.s8 %v250
  %v252 = vlaneseq
  %v253 = vshrl.u32 %v252, 7
  %v254 = vsub.s32 %v251, %v253
  %v255 = vrot.slane %v248, %v254
  %v257 = vunpack.c.l.s4 1983009808
  %v258 = vunpack.c.0.s8 %v257
  %v259 = vlaneseq
  %v260 = vshrl.u32 %v259, 7
  %v261 = vsub.s32 %v258, %v260
  %v262 = vrot.slane %v228, %v261
  %v263 = vcombine.low %v255, %v262
  %264 = vrot.lane.b32.xlu0 %v263, 64
  %v265 = vpop.permute.xlu0 %264
  %vm266 = vcmask 130048
  %v267 = vsel %vm266, %v263, 0
  %v269 = vsel %vm266, %v265, 0
  %271 = vmatprep.subr.mxu0 0.0
  %272 = vmatpush1.xpose.msra.mxu0 %v269
  %273 = vmatprep.subr.mxu0 0.0
  %274 = vmatpush1.xpose.msra.mxu0 0.0
  %275 = vmatprep.subr.mxu0 0.0
  %276 = vmatpush1.xpose.msra.mxu0 0.0
  %277 = vmatprep.subr.mxu0 0.0
  %278 = vmatpush1.xpose.msra.mxu0 0.0
  %279 = vmatprep.subr.mxu0 0.0
  %280 = vmatpush1.xpose.msra.mxu0 0.0
  %281 = vmatprep.subr.mxu0 0.0
  %282 = vmatpush1.xpose.msra.mxu0 0.0
  %283 = vmatprep.subr.mxu0 0.0
  %284 = vmatpush1.xpose.msra.mxu0 0.0
  %285 = vmatprep.subr.mxu0 0.0
  %286 = vmatpush1.xpose.msra.mxu0 0.0
  %287 = vmatprep.subr.mxu0 0.0
  %288 = vmatpush1.xpose.msra.mxu0 0.0
  %289 = vmatprep.subr.mxu0 0.0
  %290 = vmatpush1.xpose.msra.mxu0 0.0
  %291 = vmatprep.subr.mxu0 0.0
  %292 = vmatpush1.xpose.msra.mxu0 0.0
  %293 = vmatprep.subr.mxu0 0.0
  %294 = vmatpush1.xpose.msra.mxu0 0.0
  %295 = vmatprep.subr.mxu0 0.0
  %296 = vmatpush1.xpose.msra.mxu0 0.0
  %297 = vmatprep.subr.mxu0 0.0
  %298 = vmatpush1.xpose.msra.mxu0 0.0
  %299 = vmatprep.subr.mxu0 0.0
  %300 = vmatpush1.xpose.msra.mxu0 0.0
  %301 = vmatprep.subr.mxu0 0.0
  %302 = vmatpush1.xpose.msra.mxu0 0.0
  %303 = vmatprep.subr.mxu0 0.0
  %304 = vmatpush1.xpose.msra.mxu0 0.0
  %305 = vmatprep.subr.mxu0 0.0
  %306 = vmatpush1.xpose.msra.mxu0 0.0
  %307 = vmatprep.subr.mxu0 0.0
  %308 = vmatpush1.xpose.msra.mxu0 0.0
  %309 = vmatprep.subr.mxu0 0.0
  %310 = vmatpush1.xpose.msra.mxu0 0.0
  %311 = vmatprep.subr.mxu0 0.0
  %312 = vmatpush1.xpose.msra.mxu0 0.0
  %313 = vmatprep.subr.mxu0 0.0
  %314 = vmatpush1.xpose.msra.mxu0 0.0
  %315 = vmatprep.subr.mxu0 0.0
  %316 = vmatpush1.xpose.msra.mxu0 0.0
  %317 = vmatprep.subr.mxu0 0.0
  %318 = vmatpush1.xpose.msra.mxu0 0.0
  %319 = vmatprep.subr.mxu0 0.0
  %320 = vmatpush1.xpose.msra.mxu0 0.0
  %321 = vmatprep.subr.mxu0 0.0
  %322 = vmatpush1.xpose.msra.mxu0 0.0
  %323 = vmatprep.subr.mxu0 0.0
  %324 = vmatpush1.xpose.msra.mxu0 0.0
  %325 = vmatprep.subr.mxu0 0.0
  %326 = vmatpush1.xpose.msra.mxu0 0.0
  %327 = vmatprep.subr.mxu0 0.0
  %328 = vmatpush1.xpose.msra.mxu0 0.0
  %329 = vmatprep.subr.mxu0 0.0
  %330 = vmatpush1.xpose.msra.mxu0 0.0
  %331 = vmatprep.subr.mxu0 0.0
  %332 = vmatpush1.xpose.msra.mxu0 0.0
  %333 = vmatprep.subr.mxu0 0.0
  %334 = vmatpush1.xpose.msra.mxu0 0.0
  %335 = vmatprep.mubr.f32.mxu0 0.0
  %336 = vmatmul.mubr.f32.gmra.mrb[0].mxu0 %v267
  %v337 = vpop.f32.mrb[0].mxu0
  %v338 = vadd.f32 0.0, %v337
  %v339 = vpop.f32.mrb[0].mxu0
  %340 = vdwg.mxu0
  %v341 = vcombine.low %v230, %v238
  %v343 = vunpack.c.l.s4 1983009808
  %v344 = vunpack.c.0.s8 %v343
  %v345 = vlaneseq
  %v346 = vshrl.u32 %v345, 7
  %v347 = vsub.s32 %v344, %v346
  %v348 = vrot.slane %v341, %v347
  %v350 = vunpack.c.l.s4 1983009808
  %v351 = vunpack.c.0.s8 %v350
  %v352 = vlaneseq
  %v353 = vshrl.u32 %v352, 7
  %v354 = vsub.s32 %v351, %v353
  %v355 = vrot.slane %v239, %v354
  %v356 = vcombine.low %v348, %v355
  %357 = vrot.lane.b32.xlu0 %v356, 64
  %v358 = vpop.permute.xlu0 %357
  %v359 = vsel %vm266, %v356, 0
  %v361 = vsel %vm266, %v358, 0
  %363 = vmatprep.subr.mxu0 0.0
  %364 = vmatpush1.xpose.msra.mxu0 %v361
  %365 = vmatprep.subr.mxu0 0.0
  %366 = vmatpush1.xpose.msra.mxu0 0.0
  %367 = vmatprep.subr.mxu0 0.0
  %368 = vmatpush1.xpose.msra.mxu0 0.0
  %369 = vmatprep.subr.mxu0 0.0
  %370 = vmatpush1.xpose.msra.mxu0 0.0
  %371 = vmatprep.subr.mxu0 0.0
  %372 = vmatpush1.xpose.msra.mxu0 0.0
  %373 = vmatprep.subr.mxu0 0.0
  %374 = vmatpush1.xpose.msra.mxu0 0.0
  %375 = vmatprep.subr.mxu0 0.0
  %376 = vmatpush1.xpose.msra.mxu0 0.0
  %377 = vmatprep.subr.mxu0 0.0
  %378 = vmatpush1.xpose.msra.mxu0 0.0
  %379 = vmatprep.subr.mxu0 0.0
  %380 = vmatpush1.xpose.msra.mxu0 0.0
  %381 = vmatprep.subr.mxu0 0.0
  %382 = vmatpush1.xpose.msra.mxu0 0.0
  %383 = vmatprep.subr.mxu0 0.0
  %384 = vmatpush1.xpose.msra.mxu0 0.0
  %385 = vmatprep.subr.mxu0 0.0
  %386 = vmatpush1.xpose.msra.mxu0 0.0
  %387 = vmatprep.subr.mxu0 0.0
  %388 = vmatpush1.xpose.msra.mxu0 0.0
  %389 = vmatprep.subr.mxu0 0.0
  %390 = vmatpush1.xpose.msra.mxu0 0.0
  %391 = vmatprep.subr.mxu0 0.0
  %392 = vmatpush1.xpose.msra.mxu0 0.0
  %393 = vmatprep.subr.mxu0 0.0
  %394 = vmatpush1.xpose.msra.mxu0 0.0
  %395 = vmatprep.subr.mxu0 0.0
  %396 = vmatpush1.xpose.msra.mxu0 0.0
  %397 = vmatprep.subr.mxu0 0.0
  %398 = vmatpush1.xpose.msra.mxu0 0.0
  %399 = vmatprep.subr.mxu0 0.0
  %400 = vmatpush1.xpose.msra.mxu0 0.0
  %401 = vmatprep.subr.mxu0 0.0
  %402 = vmatpush1.xpose.msra.mxu0 0.0
  %403 = vmatprep.subr.mxu0 0.0
  %404 = vmatpush1.xpose.msra.mxu0 0.0
  %405 = vmatprep.subr.mxu0 0.0
  %406 = vmatpush1.xpose.msra.mxu0 0.0
  %407 = vmatprep.subr.mxu0 0.0
  %408 = vmatpush1.xpose.msra.mxu0 0.0
  %409 = vmatprep.subr.mxu0 0.0
  %410 = vmatpush1.xpose.msra.mxu0 0.0
  %411 = vmatprep.subr.mxu0 0.0
  %412 = vmatpush1.xpose.msra.mxu0 0.0
  %413 = vmatprep.subr.mxu0 0.0
  %414 = vmatpush1.xpose.msra.mxu0 0.0
  %415 = vmatprep.subr.mxu0 0.0
  %416 = vmatpush1.xpose.msra.mxu0 0.0
  %417 = vmatprep.subr.mxu0 0.0
  %418 = vmatpush1.xpose.msra.mxu0 0.0
  %419 = vmatprep.subr.mxu0 0.0
  %420 = vmatpush1.xpose.msra.mxu0 0.0
  %421 = vmatprep.subr.mxu0 0.0
  %422 = vmatpush1.xpose.msra.mxu0 0.0
  %423 = vmatprep.subr.mxu0 0.0
  %424 = vmatpush1.xpose.msra.mxu0 0.0
  %425 = vmatprep.subr.mxu0 0.0
  %426 = vmatpush1.xpose.msra.mxu0 0.0
  %427 = vmatprep.mubr.f32.mxu0 0.0
  %428 = vmatmul.mubr.f32.gmra.mrb[0].mxu0 %v359
  %v429 = vpop.f32.mrb[0].mxu0
  %v430 = vadd.f32 0.0, %v429
  %v431 = vpop.f32.mrb[0].mxu0
  %432 = vdwg.mxu0
  %v433 = vmul.f32 %v338, 0.25
  %v434 = vmul.f32 %v430, 0.25
  %vm435 = vcmask 46080
  %v436 = vsel %vm435, %v433, -inf
  %437 = vmax.xlane.f32.xlu0 %v436
  %v438 = vpop.xlane.xlu0 %437
  %v439 = vsel %vm435, %v434, -inf
  %440 = vmax.xlane.f32.xlu0 %v439
  %v441 = vpop.xlane.xlu0 %440
  %v442 = vsub.f32 %v433, %v438
  %v443 = vsub.f32 %v434, %v441
  %v444 = vmul.f32 %v442, 1.442695
  %v445 = vpow.pop %v444
  %v446 = vmul.f32 %v443, 1.442695
  %v447 = vpow.pop %v446
  %v448 = vsel %vm435, %v445, 0.0
  %449 = vadd.xlane.f32.xlu0 %v448
  %v450 = vpop.xlane.xlu0 %449
  %v451 = vsel %vm435, %v447, 0.0
  %452 = vadd.xlane.f32.xlu0 %v451
  %v453 = vpop.xlane.xlu0 %452
  %v454 = vrcp.pop %v450
  %v455 = vrcp.pop %v453
  %v456 = vmul.f32 %v445, %v454
  %v457 = vmul.f32 %v447, %v455
  %v458 = vrot.slane %v221, 2
  %v459 = vrot.slane %v229, 2
  %v460 = vrot.slane %v228, 2
  %v461 = vcombine.low %v458, %v459
  %v463 = vunpack.c.l.s4 1983009808
  %v464 = vunpack.c.0.s8 %v463
  %v465 = vlaneseq
  %v466 = vshrl.u32 %v465, 7
  %v467 = vsub.s32 %v464, %v466
  %v468 = vrot.slane %v461, %v467
  %v470 = vunpack.c.l.s4 1983009808
  %v471 = vunpack.c.0.s8 %v470
  %v472 = vlaneseq
  %v473 = vshrl.u32 %v472, 7
  %v474 = vsub.s32 %v471, %v473
  %v475 = vrot.slane %v460, %v474
  %v476 = vcombine.low %v468, %v475
  %vm477 = vcmask 48128
  %v479 = vsel %vm477, %v456, 0
  %vm481 = vcmask 1045504
  %v482 = vsel %vm481, %v476, 0
  %484 = vmatprep.subr.mxu0 0.0
  %485 = vmatpush1.msra.mxu0 %v482
  %486 = vmatprep.subr.mxu0 0.0
  %487 = vmatpush1.msra.mxu0 0.0
  %488 = vmatprep.subr.mxu0 0.0
  %489 = vmatpush1.msra.mxu0 0.0
  %490 = vmatprep.subr.mxu0 0.0
  %491 = vmatpush1.msra.mxu0 0.0
  %492 = vmatprep.subr.mxu0 0.0
  %493 = vmatpush1.msra.mxu0 0.0
  %494 = vmatprep.subr.mxu0 0.0
  %495 = vmatpush1.msra.mxu0 0.0
  %496 = vmatprep.subr.mxu0 0.0
  %497 = vmatpush1.msra.mxu0 0.0
  %498 = vmatprep.subr.mxu0 0.0
  %499 = vmatpush1.msra.mxu0 0.0
  %500 = vmatprep.subr.mxu0 0.0
  %501 = vmatpush1.msra.mxu0 0.0
  %502 = vmatprep.subr.mxu0 0.0
  %503 = vmatpush1.msra.mxu0 0.0
  %504 = vmatprep.subr.mxu0 0.0
  %505 = vmatpush1.msra.mxu0 0.0
  %506 = vmatprep.subr.mxu0 0.0
  %507 = vmatpush1.msra.mxu0 0.0
  %508 = vmatprep.subr.mxu0 0.0
  %509 = vmatpush1.msra.mxu0 0.0
  %510 = vmatprep.subr.mxu0 0.0
  %511 = vmatpush1.msra.mxu0 0.0
  %512 = vmatprep.subr.mxu0 0.0
  %513 = vmatpush1.msra.mxu0 0.0
  %514 = vmatprep.subr.mxu0 0.0
  %515 = vmatpush1.msra.mxu0 0.0
  %516 = vmatprep.subr.mxu0 0.0
  %517 = vmatpush1.msra.mxu0 0.0
  %518 = vmatprep.subr.mxu0 0.0
  %519 = vmatpush1.msra.mxu0 0.0
  %520 = vmatprep.subr.mxu0 0.0
  %521 = vmatpush1.msra.mxu0 0.0
  %522 = vmatprep.subr.mxu0 0.0
  %523 = vmatpush1.msra.mxu0 0.0
  %524 = vmatprep.subr.mxu0 0.0
  %525 = vmatpush1.msra.mxu0 0.0
  %526 = vmatprep.subr.mxu0 0.0
  %527 = vmatpush1.msra.mxu0 0.0
  %528 = vmatprep.subr.mxu0 0.0
  %529 = vmatpush1.msra.mxu0 0.0
  %530 = vmatprep.subr.mxu0 0.0
  %531 = vmatpush1.msra.mxu0 0.0
  %532 = vmatprep.subr.mxu0 0.0
  %533 = vmatpush1.msra.mxu0 0.0
  %534 = vmatprep.subr.mxu0 0.0
  %535 = vmatpush1.msra.mxu0 0.0
  %536 = vmatprep.subr.mxu0 0.0
  %537 = vmatpush1.msra.mxu0 0.0
  %538 = vmatprep.subr.mxu0 0.0
  %539 = vmatpush1.msra.mxu0 0.0
  %540 = vmatprep.subr.mxu0 0.0
  %541 = vmatpush1.msra.mxu0 0.0
  %542 = vmatprep.subr.mxu0 0.0
  %543 = vmatpush1.msra.mxu0 0.0
  %544 = vmatprep.subr.mxu0 0.0
  %545 = vmatpush1.msra.mxu0 0.0
  %546 = vmatprep.subr.mxu0 0.0
  %547 = vmatpush1.msra.mxu0 0.0
  %548 = vmatprep.mubr.f32.mxu0 0.0
  %549 = vmatmul.mubr.f32.gmra.mrb[0].mxu0 %v479
  %v550 = vpop.f32.mrb[0].mxu0
  %v551 = vadd.f32 0.0, %v550
  %v552 = vpop.f32.mrb[0].mxu0
  %553 = vdwg.mxu0
  %v554 = vrot.slane %v230, 2
  %v555 = vrot.slane %v238, 2
  %v556 = vrot.slane %v239, 2
  %v557 = vcombine.low %v554, %v555
  %v559 = vunpack.c.l.s4 1983009808
  %v560 = vunpack.c.0.s8 %v559
  %v561 = vlaneseq
  %v562 = vshrl.u32 %v561, 7
  %v563 = vsub.s32 %v560, %v562
  %v564 = vrot.slane %v557, %v563
  %v566 = vunpack.c.l.s4 1983009808
  %v567 = vunpack.c.0.s8 %v566
  %v568 = vlaneseq
  %v569 = vshrl.u32 %v568, 7
  %v570 = vsub.s32 %v567, %v569
  %v571 = vrot.slane %v556, %v570
  %v572 = vcombine.low %v564, %v571
  %v574 = vsel %vm477, %v457, 0
  %v576 = vsel %vm481, %v572, 0
  %578 = vmatprep.subr.mxu0 0.0
  %579 = vmatpush1.msra.mxu0 %v576
  %580 = vmatprep.subr.mxu0 0.0
  %581 = vmatpush1.msra.mxu0 0.0
  %582 = vmatprep.subr.mxu0 0.0
  %583 = vmatpush1.msra.mxu0 0.0
  %584 = vmatprep.subr.mxu0 0.0
  %585 = vmatpush1.msra.mxu0 0.0
  %586 = vmatprep.subr.mxu0 0.0
  %587 = vmatpush1.msra.mxu0 0.0
  %588 = vmatprep.subr.mxu0 0.0
  %589 = vmatpush1.msra.mxu0 0.0
  %590 = vmatprep.subr.mxu0 0.0
  %591 = vmatpush1.msra.mxu0 0.0
  %592 = vmatprep.subr.mxu0 0.0
  %593 = vmatpush1.msra.mxu0 0.0
  %594 = vmatprep.subr.mxu0 0.0
  %595 = vmatpush1.msra.mxu0 0.0
  %596 = vmatprep.subr.mxu0 0.0
  %597 = vmatpush1.msra.mxu0 0.0
  %598 = vmatprep.subr.mxu0 0.0
  %599 = vmatpush1.msra.mxu0 0.0
  %600 = vmatprep.subr.mxu0 0.0
  %601 = vmatpush1.msra.mxu0 0.0
  %602 = vmatprep.subr.mxu0 0.0
  %603 = vmatpush1.msra.mxu0 0.0
  %604 = vmatprep.subr.mxu0 0.0
  %605 = vmatpush1.msra.mxu0 0.0
  %606 = vmatprep.subr.mxu0 0.0
  %607 = vmatpush1.msra.mxu0 0.0
  %608 = vmatprep.subr.mxu0 0.0
  %609 = vmatpush1.msra.mxu0 0.0
  %610 = vmatprep.subr.mxu0 0.0
  %611 = vmatpush1.msra.mxu0 0.0
  %612 = vmatprep.subr.mxu0 0.0
  %613 = vmatpush1.msra.mxu0 0.0
  %614 = vmatprep.subr.mxu0 0.0
  %615 = vmatpush1.msra.mxu0 0.0
  %616 = vmatprep.subr.mxu0 0.0
  %617 = vmatpush1.msra.mxu0 0.0
  %618 = vmatprep.subr.mxu0 0.0
  %619 = vmatpush1.msra.mxu0 0.0
  %620 = vmatprep.subr.mxu0 0.0
  %621 = vmatpush1.msra.mxu0 0.0
  %622 = vmatprep.subr.mxu0 0.0
  %623 = vmatpush1.msra.mxu0 0.0
  %624 = vmatprep.subr.mxu0 0.0
  %625 = vmatpush1.msra.mxu0 0.0
  %626 = vmatprep.subr.mxu0 0.0
  %627 = vmatpush1.msra.mxu0 0.0
  %628 = vmatprep.subr.mxu0 0.0
  %629 = vmatpush1.msra.mxu0 0.0
  %630 = vmatprep.subr.mxu0 0.0
  %631 = vmatpush1.msra.mxu0 0.0
  %632 = vmatprep.subr.mxu0 0.0
  %633 = vmatpush1.msra.mxu0 0.0
  %634 = vmatprep.subr.mxu0 0.0
  %635 = vmatpush1.msra.mxu0 0.0
  %636 = vmatprep.subr.mxu0 0.0
  %637 = vmatpush1.msra.mxu0 0.0
  %638 = vmatprep.subr.mxu0 0.0
  %639 = vmatpush1.msra.mxu0 0.0
  %640 = vmatprep.subr.mxu0 0.0
  %641 = vmatpush1.msra.mxu0 0.0
  %642 = vmatprep.mubr.f32.mxu0 0.0
  %643 = vmatmul.mubr.f32.gmra.mrb[0].mxu0 %v574
  %v644 = vpop.f32.mrb[0].mxu0
  %v645 = vadd.f32 0.0, %v644
  %v646 = vpop.f32.mrb[0].mxu0
  %647 = vdwg.mxu0
  %v650 = vcombine.high %v551, %v551
  %v652 = vunpack.c.l.s4 1983009808
  %v653 = vunpack.c.0.s8 %v652
  %v654 = vlaneseq
  %v655 = vshrl.u32 %v654, 7
  %v656 = vsub.s32 %v653, %v655
  %v657 = vrot.slane %v551, %v656
  %v659 = vunpack.c.l.s4 1983009808
  %v660 = vunpack.c.0.s8 %v659
  %v661 = vlaneseq
  %v662 = vshrl.u32 %v661, 7
  %v663 = vsub.s32 %v660, %v662
  %v664 = vrot.slane %v650, %v663
  %v665 = vcombine.high %v657, %v657
  %v666 = vcombine.high %v645, %v645
  %v668 = vunpack.c.l.s4 1983009808
  %v669 = vunpack.c.0.s8 %v668
  %v670 = vlaneseq
  %v671 = vshrl.u32 %v670, 7
  %v672 = vsub.s32 %v669, %v671
  %v673 = vrot.slane %v645, %v672
  %v675 = vunpack.c.l.s4 1983009808
  %v676 = vunpack.c.0.s8 %v675
  %v677 = vlaneseq
  %v678 = vshrl.u32 %v677, 7
  %v679 = vsub.s32 %v676, %v678
  %v680 = vrot.slane %v666, %v679
  %v681 = vcombine.high %v673, %v673
  %682 = vrot.lane.b32.xlu0 %v263, 112
  %v683 = vpop.permute.xlu0 %682
  %684 = vrot.lane.b32.xlu0 %v263, 48
  %v685 = vpop.permute.xlu0 %684
  %v686 = vsel %vm266, %v683, 0
  %v688 = vsel %vm266, %v685, 0
  %690 = vmatprep.subr.mxu0 0.0
  %691 = vmatpush1.xpose.msra.mxu0 %v688
  %692 = vmatprep.subr.mxu0 0.0
  %693 = vmatpush1.xpose.msra.mxu0 0.0
  %694 = vmatprep.subr.mxu0 0.0
  %695 = vmatpush1.xpose.msra.mxu0 0.0
  %696 = vmatprep.subr.mxu0 0.0
  %697 = vmatpush1.xpose.msra.mxu0 0.0
  %698 = vmatprep.subr.mxu0 0.0
  %699 = vmatpush1.xpose.msra.mxu0 0.0
  %700 = vmatprep.subr.mxu0 0.0
  %701 = vmatpush1.xpose.msra.mxu0 0.0
  %702 = vmatprep.subr.mxu0 0.0
  %703 = vmatpush1.xpose.msra.mxu0 0.0
  %704 = vmatprep.subr.mxu0 0.0
  %705 = vmatpush1.xpose.msra.mxu0 0.0
  %706 = vmatprep.subr.mxu0 0.0
  %707 = vmatpush1.xpose.msra.mxu0 0.0
  %708 = vmatprep.subr.mxu0 0.0
  %709 = vmatpush1.xpose.msra.mxu0 0.0
  %710 = vmatprep.subr.mxu0 0.0
  %711 = vmatpush1.xpose.msra.mxu0 0.0
  %712 = vmatprep.subr.mxu0 0.0
  %713 = vmatpush1.xpose.msra.mxu0 0.0
  %714 = vmatprep.subr.mxu0 0.0
  %715 = vmatpush1.xpose.msra.mxu0 0.0
  %716 = vmatprep.subr.mxu0 0.0
  %717 = vmatpush1.xpose.msra.mxu0 0.0
  %718 = vmatprep.subr.mxu0 0.0
  %719 = vmatpush1.xpose.msra.mxu0 0.0
  %720 = vmatprep.subr.mxu0 0.0
  %721 = vmatpush1.xpose.msra.mxu0 0.0
  %722 = vmatprep.subr.mxu0 0.0
  %723 = vmatpush1.xpose.msra.mxu0 0.0
  %724 = vmatprep.subr.mxu0 0.0
  %725 = vmatpush1.xpose.msra.mxu0 0.0
  %726 = vmatprep.subr.mxu0 0.0
  %727 = vmatpush1.xpose.msra.mxu0 0.0
  %728 = vmatprep.subr.mxu0 0.0
  %729 = vmatpush1.xpose.msra.mxu0 0.0
  %730 = vmatprep.subr.mxu0 0.0
  %731 = vmatpush1.xpose.msra.mxu0 0.0
  %732 = vmatprep.subr.mxu0 0.0
  %733 = vmatpush1.xpose.msra.mxu0 0.0
  %734 = vmatprep.subr.mxu0 0.0
  %735 = vmatpush1.xpose.msra.mxu0 0.0
  %736 = vmatprep.subr.mxu0 0.0
  %737 = vmatpush1.xpose.msra.mxu0 0.0
  %738 = vmatprep.subr.mxu0 0.0
  %739 = vmatpush1.xpose.msra.mxu0 0.0
  %740 = vmatprep.subr.mxu0 0.0
  %741 = vmatpush1.xpose.msra.mxu0 0.0
  %742 = vmatprep.subr.mxu0 0.0
  %743 = vmatpush1.xpose.msra.mxu0 0.0
  %744 = vmatprep.subr.mxu0 0.0
  %745 = vmatpush1.xpose.msra.mxu0 0.0
  %746 = vmatprep.subr.mxu0 0.0
  %747 = vmatpush1.xpose.msra.mxu0 0.0
  %748 = vmatprep.subr.mxu0 0.0
  %749 = vmatpush1.xpose.msra.mxu0 0.0
  %750 = vmatprep.subr.mxu0 0.0
  %751 = vmatpush1.xpose.msra.mxu0 0.0
  %752 = vmatprep.subr.mxu0 0.0
  %753 = vmatpush1.xpose.msra.mxu0 0.0
  %754 = vmatprep.mubr.f32.mxu0 0.0
  %755 = vmatmul.mubr.f32.gmra.mrb[0].mxu0 %v686
  %v756 = vpop.f32.mrb[0].mxu0
  %v757 = vadd.f32 0.0, %v756
  %v758 = vpop.f32.mrb[0].mxu0
  %759 = vdwg.mxu0
  %760 = vrot.lane.b32.xlu0 %v356, 112
  %v761 = vpop.permute.xlu0 %760
  %762 = vrot.lane.b32.xlu0 %v356, 48
  %v763 = vpop.permute.xlu0 %762
  %v764 = vsel %vm266, %v761, 0
  %v766 = vsel %vm266, %v763, 0
  %768 = vmatprep.subr.mxu0 0.0
  %769 = vmatpush1.xpose.msra.mxu0 %v766
  %770 = vmatprep.subr.mxu0 0.0
  %771 = vmatpush1.xpose.msra.mxu0 0.0
  %772 = vmatprep.subr.mxu0 0.0
  %773 = vmatpush1.xpose.msra.mxu0 0.0
  %774 = vmatprep.subr.mxu0 0.0
  %775 = vmatpush1.xpose.msra.mxu0 0.0
  %776 = vmatprep.subr.mxu0 0.0
  %777 = vmatpush1.xpose.msra.mxu0 0.0
  %778 = vmatprep.subr.mxu0 0.0
  %779 = vmatpush1.xpose.msra.mxu0 0.0
  %780 = vmatprep.subr.mxu0 0.0
  %781 = vmatpush1.xpose.msra.mxu0 0.0
  %782 = vmatprep.subr.mxu0 0.0
  %783 = vmatpush1.xpose.msra.mxu0 0.0
  %784 = vmatprep.subr.mxu0 0.0
  %785 = vmatpush1.xpose.msra.mxu0 0.0
  %786 = vmatprep.subr.mxu0 0.0
  %787 = vmatpush1.xpose.msra.mxu0 0.0
  %788 = vmatprep.subr.mxu0 0.0
  %789 = vmatpush1.xpose.msra.mxu0 0.0
  %790 = vmatprep.subr.mxu0 0.0
  %791 = vmatpush1.xpose.msra.mxu0 0.0
  %792 = vmatprep.subr.mxu0 0.0
  %793 = vmatpush1.xpose.msra.mxu0 0.0
  %794 = vmatprep.subr.mxu0 0.0
  %795 = vmatpush1.xpose.msra.mxu0 0.0
  %796 = vmatprep.subr.mxu0 0.0
  %797 = vmatpush1.xpose.msra.mxu0 0.0
  %798 = vmatprep.subr.mxu0 0.0
  %799 = vmatpush1.xpose.msra.mxu0 0.0
  %800 = vmatprep.subr.mxu0 0.0
  %801 = vmatpush1.xpose.msra.mxu0 0.0
  %802 = vmatprep.subr.mxu0 0.0
  %803 = vmatpush1.xpose.msra.mxu0 0.0
  %804 = vmatprep.subr.mxu0 0.0
  %805 = vmatpush1.xpose.msra.mxu0 0.0
  %806 = vmatprep.subr.mxu0 0.0
  %807 = vmatpush1.xpose.msra.mxu0 0.0
  %808 = vmatprep.subr.mxu0 0.0
  %809 = vmatpush1.xpose.msra.mxu0 0.0
  %810 = vmatprep.subr.mxu0 0.0
  %811 = vmatpush1.xpose.msra.mxu0 0.0
  %812 = vmatprep.subr.mxu0 0.0
  %813 = vmatpush1.xpose.msra.mxu0 0.0
  %814 = vmatprep.subr.mxu0 0.0
  %815 = vmatpush1.xpose.msra.mxu0 0.0
  %816 = vmatprep.subr.mxu0 0.0
  %817 = vmatpush1.xpose.msra.mxu0 0.0
  %818 = vmatprep.subr.mxu0 0.0
  %819 = vmatpush1.xpose.msra.mxu0 0.0
  %820 = vmatprep.subr.mxu0 0.0
  %821 = vmatpush1.xpose.msra.mxu0 0.0
  %822 = vmatprep.subr.mxu0 0.0
  %823 = vmatpush1.xpose.msra.mxu0 0.0
  %824 = vmatprep.subr.mxu0 0.0
  %825 = vmatpush1.xpose.msra.mxu0 0.0
  %826 = vmatprep.subr.mxu0 0.0
  %827 = vmatpush1.xpose.msra.mxu0 0.0
  %828 = vmatprep.subr.mxu0 0.0
  %829 = vmatpush1.xpose.msra.mxu0 0.0
  %830 = vmatprep.subr.mxu0 0.0
  %831 = vmatpush1.xpose.msra.mxu0 0.0
  %832 = vmatprep.mubr.f32.mxu0 0.0
  %833 = vmatmul.mubr.f32.gmra.mrb[0].mxu0 %v764
  %v834 = vpop.f32.mrb[0].mxu0
  %v835 = vadd.f32 0.0, %v834
  %v836 = vpop.f32.mrb[0].mxu0
  %837 = vdwg.mxu0
  %v838 = vmul.f32 %v757, 0.25
  %v839 = vmul.f32 %v835, 0.25
  %v840 = vsel %vm435, %v838, -inf
  %841 = vmax.xlane.f32.xlu0 %v840
  %v842 = vpop.xlane.xlu0 %841
  %v843 = vsel %vm435, %v839, -inf
  %844 = vmax.xlane.f32.xlu0 %v843
  %v845 = vpop.xlane.xlu0 %844
  %v846 = vsub.f32 %v838, %v842
  %v847 = vsub.f32 %v839, %v845
  %v848 = vmul.f32 %v846, 1.442695
  %v849 = vpow.pop %v848
  %v850 = vmul.f32 %v847, 1.442695
  %v851 = vpow.pop %v850
  %v852 = vsel %vm435, %v849, 0.0
  %853 = vadd.xlane.f32.xlu0 %v852
  %v854 = vpop.xlane.xlu0 %853
  %v855 = vsel %vm435, %v851, 0.0
  %856 = vadd.xlane.f32.xlu0 %v855
  %v857 = vpop.xlane.xlu0 %856
  %v858 = vrcp.pop %v854
  %v859 = vrcp.pop %v857
  %v860 = vmul.f32 %v849, %v858
  %v861 = vmul.f32 %v851, %v859
  %862 = vrot.lane.b32.xlu0 %v221, 112
  %v863 = vpop.permute.xlu0 %862
  %864 = vrot.lane.b32.xlu0 %v229, 112
  %v865 = vpop.permute.xlu0 %864
  %866 = vrot.lane.b32.xlu0 %v228, 112
  %v867 = vpop.permute.xlu0 %866
  %v868 = vrot.slane %v863, 2
  %v869 = vrot.slane %v865, 2
  %v870 = vrot.slane %v867, 2
  %v871 = vcombine.low %v868, %v869
  %v873 = vunpack.c.l.s4 1983009808
  %v874 = vunpack.c.0.s8 %v873
  %v875 = vlaneseq
  %v876 = vshrl.u32 %v875, 7
  %v877 = vsub.s32 %v874, %v876
  %v878 = vrot.slane %v871, %v877
  %v880 = vunpack.c.l.s4 1983009808
  %v881 = vunpack.c.0.s8 %v880
  %v882 = vlaneseq
  %v883 = vshrl.u32 %v882, 7
  %v884 = vsub.s32 %v881, %v883
  %v885 = vrot.slane %v870, %v884
  %v886 = vcombine.low %v878, %v885
  %v888 = vsel %vm477, %v860, 0
  %v890 = vsel %vm481, %v886, 0
  %892 = vmatprep.subr.mxu0 0.0
  %893 = vmatpush1.msra.mxu0 %v890
  %894 = vmatprep.subr.mxu0 0.0
  %895 = vmatpush1.msra.mxu0 0.0
  %896 = vmatprep.subr.mxu0 0.0
  %897 = vmatpush1.msra.mxu0 0.0
  %898 = vmatprep.subr.mxu0 0.0
  %899 = vmatpush1.msra.mxu0 0.0
  %900 = vmatprep.subr.mxu0 0.0
  %901 = vmatpush1.msra.mxu0 0.0
  %902 = vmatprep.subr.mxu0 0.0
  %903 = vmatpush1.msra.mxu0 0.0
  %904 = vmatprep.subr.mxu0 0.0
  %905 = vmatpush1.msra.mxu0 0.0
  %906 = vmatprep.subr.mxu0 0.0
  %907 = vmatpush1.msra.mxu0 0.0
  %908 = vmatprep.subr.mxu0 0.0
  %909 = vmatpush1.msra.mxu0 0.0
  %910 = vmatprep.subr.mxu0 0.0
  %911 = vmatpush1.msra.mxu0 0.0
  %912 = vmatprep.subr.mxu0 0.0
  %913 = vmatpush1.msra.mxu0 0.0
  %914 = vmatprep.subr.mxu0 0.0
  %915 = vmatpush1.msra.mxu0 0.0
  %916 = vmatprep.subr.mxu0 0.0
  %917 = vmatpush1.msra.mxu0 0.0
  %918 = vmatprep.subr.mxu0 0.0
  %919 = vmatpush1.msra.mxu0 0.0
  %920 = vmatprep.subr.mxu0 0.0
  %921 = vmatpush1.msra.mxu0 0.0
  %922 = vmatprep.subr.mxu0 0.0
  %923 = vmatpush1.msra.mxu0 0.0
  %924 = vmatprep.subr.mxu0 0.0
  %925 = vmatpush1.msra.mxu0 0.0
  %926 = vmatprep.subr.mxu0 0.0
  %927 = vmatpush1.msra.mxu0 0.0
  %928 = vmatprep.subr.mxu0 0.0
  %929 = vmatpush1.msra.mxu0 0.0
  %930 = vmatprep.subr.mxu0 0.0
  %931 = vmatpush1.msra.mxu0 0.0
  %932 = vmatprep.subr.mxu0 0.0
  %933 = vmatpush1.msra.mxu0 0.0
  %934 = vmatprep.subr.mxu0 0.0
  %935 = vmatpush1.msra.mxu0 0.0
  %936 = vmatprep.subr.mxu0 0.0
  %937 = vmatpush1.msra.mxu0 0.0
  %938 = vmatprep.subr.mxu0 0.0
  %939 = vmatpush1.msra.mxu0 0.0
  %940 = vmatprep.subr.mxu0 0.0
  %941 = vmatpush1.msra.mxu0 0.0
  %942 = vmatprep.subr.mxu0 0.0
  %943 = vmatpush1.msra.mxu0 0.0
  %944 = vmatprep.subr.mxu0 0.0
  %945 = vmatpush1.msra.mxu0 0.0
  %946 = vmatprep.subr.mxu0 0.0
  %947 = vmatpush1.msra.mxu0 0.0
  %948 = vmatprep.subr.mxu0 0.0
  %949 = vmatpush1.msra.mxu0 0.0
  %950 = vmatprep.subr.mxu0 0.0
  %951 = vmatpush1.msra.mxu0 0.0
  %952 = vmatprep.subr.mxu0 0.0
  %953 = vmatpush1.msra.mxu0 0.0
  %954 = vmatprep.subr.mxu0 0.0
  %955 = vmatpush1.msra.mxu0 0.0
  %956 = vmatprep.mubr.f32.mxu0 0.0
  %957 = vmatmul.mubr.f32.gmra.mrb[0].mxu0 %v888
  %v958 = vpop.f32.mrb[0].mxu0
  %v959 = vadd.f32 0.0, %v958
  %v960 = vpop.f32.mrb[0].mxu0
  %961 = vdwg.mxu0
  %962 = vrot.lane.b32.xlu0 %v230, 112
  %v963 = vpop.permute.xlu0 %962
  %964 = vrot.lane.b32.xlu0 %v238, 112
  %v965 = vpop.permute.xlu0 %964
  %966 = vrot.lane.b32.xlu0 %v239, 112
  %v967 = vpop.permute.xlu0 %966
  %v968 = vrot.slane %v963, 2
  %v969 = vrot.slane %v965, 2
  %v970 = vrot.slane %v967, 2
  %v971 = vcombine.low %v968, %v969
  %v973 = vunpack.c.l.s4 1983009808
  %v974 = vunpack.c.0.s8 %v973
  %v975 = vlaneseq
  %v976 = vshrl.u32 %v975, 7
  %v977 = vsub.s32 %v974, %v976
  %v978 = vrot.slane %v971, %v977
  %v980 = vunpack.c.l.s4 1983009808
  %v981 = vunpack.c.0.s8 %v980
  %v982 = vlaneseq
  %v983 = vshrl.u32 %v982, 7
  %v984 = vsub.s32 %v981, %v983
  %v985 = vrot.slane %v970, %v984
  %v986 = vcombine.low %v978, %v985
  %v988 = vsel %vm477, %v861, 0
  %v990 = vsel %vm481, %v986, 0
  %992 = vmatprep.subr.mxu0 0.0
  %993 = vmatpush1.msra.mxu0 %v990
  %994 = vmatprep.subr.mxu0 0.0
  %995 = vmatpush1.msra.mxu0 0.0
  %996 = vmatprep.subr.mxu0 0.0
  %997 = vmatpush1.msra.mxu0 0.0
  %998 = vmatprep.subr.mxu0 0.0
  %999 = vmatpush1.msra.mxu0 0.0
  %1000 = vmatprep.subr.mxu0 0.0
  %1001 = vmatpush1.msra.mxu0 0.0
  %1002 = vmatprep.subr.mxu0 0.0
  %1003 = vmatpush1.msra.mxu0 0.0
  %1004 = vmatprep.subr.mxu0 0.0
  %1005 = vmatpush1.msra.mxu0 0.0
  %1006 = vmatprep.subr.mxu0 0.0
  %1007 = vmatpush1.msra.mxu0 0.0
  %1008 = vmatprep.subr.mxu0 0.0
  %1009 = vmatpush1.msra.mxu0 0.0
  %1010 = vmatprep.subr.mxu0 0.0
  %1011 = vmatpush1.msra.mxu0 0.0
  %1012 = vmatprep.subr.mxu0 0.0
  %1013 = vmatpush1.msra.mxu0 0.0
  %1014 = vmatprep.subr.mxu0 0.0
  %1015 = vmatpush1.msra.mxu0 0.0
  %1016 = vmatprep.subr.mxu0 0.0
  %1017 = vmatpush1.msra.mxu0 0.0
  %1018 = vmatprep.subr.mxu0 0.0
  %1019 = vmatpush1.msra.mxu0 0.0
  %1020 = vmatprep.subr.mxu0 0.0
  %1021 = vmatpush1.msra.mxu0 0.0
  %1022 = vmatprep.subr.mxu0 0.0
  %1023 = vmatpush1.msra.mxu0 0.0
  %1024 = vmatprep.subr.mxu0 0.0
  %1025 = vmatpush1.msra.mxu0 0.0
  %1026 = vmatprep.subr.mxu0 0.0
  %1027 = vmatpush1.msra.mxu0 0.0
  %1028 = vmatprep.subr.mxu0 0.0
  %1029 = vmatpush1.msra.mxu0 0.0
  %1030 = vmatprep.subr.mxu0 0.0
  %1031 = vmatpush1.msra.mxu0 0.0
  %1032 = vmatprep.subr.mxu0 0.0
  %1033 = vmatpush1.msra.mxu0 0.0
  %1034 = vmatprep.subr.mxu0 0.0
  %1035 = vmatpush1.msra.mxu0 0.0
  %1036 = vmatprep.subr.mxu0 0.0
  %1037 = vmatpush1.msra.mxu0 0.0
  %1038 = vmatprep.subr.mxu0 0.0
  %1039 = vmatpush1.msra.mxu0 0.0
  %1040 = vmatprep.subr.mxu0 0.0
  %1041 = vmatpush1.msra.mxu0 0.0
  %1042 = vmatprep.subr.mxu0 0.0
  %1043 = vmatpush1.msra.mxu0 0.0
  %1044 = vmatprep.subr.mxu0 0.0
  %1045 = vmatpush1.msra.mxu0 0.0
  %1046 = vmatprep.subr.mxu0 0.0
  %1047 = vmatpush1.msra.mxu0 0.0
  %1048 = vmatprep.subr.mxu0 0.0
  %1049 = vmatpush1.msra.mxu0 0.0
  %1050 = vmatprep.subr.mxu0 0.0
  %1051 = vmatpush1.msra.mxu0 0.0
  %1052 = vmatprep.subr.mxu0 0.0
  %1053 = vmatpush1.msra.mxu0 0.0
  %1054 = vmatprep.subr.mxu0 0.0
  %1055 = vmatpush1.msra.mxu0 0.0
  %1056 = vmatprep.mubr.f32.mxu0 0.0
  %1057 = vmatmul.mubr.f32.gmra.mrb[0].mxu0 %v988
  %v1058 = vpop.f32.mrb[0].mxu0
  %v1059 = vadd.f32 0.0, %v1058
  %v1060 = vpop.f32.mrb[0].mxu0
  %1061 = vdwg.mxu0
  %v1064 = vcombine.high %v959, %v959
  %v1066 = vunpack.c.l.s4 1983009808
  %v1067 = vunpack.c.0.s8 %v1066
  %v1068 = vlaneseq
  %v1069 = vshrl.u32 %v1068, 7
  %v1070 = vsub.s32 %v1067, %v1069
  %v1071 = vrot.slane %v959, %v1070
  %v1073 = vunpack.c.l.s4 1983009808
  %v1074 = vunpack.c.0.s8 %v1073
  %v1075 = vlaneseq
  %v1076 = vshrl.u32 %v1075, 7
  %v1077 = vsub.s32 %v1074, %v1076
  %v1078 = vrot.slane %v1064, %v1077
  %v1079 = vcombine.high %v1071, %v1071
  %v1080 = vcombine.high %v1059, %v1059
  %v1082 = vunpack.c.l.s4 1983009808
  %v1083 = vunpack.c.0.s8 %v1082
  %v1084 = vlaneseq
  %v1085 = vshrl.u32 %v1084, 7
  %v1086 = vsub.s32 %v1083, %v1085
  %v1087 = vrot.slane %v1059, %v1086
  %v1089 = vunpack.c.l.s4 1983009808
  %v1090 = vunpack.c.0.s8 %v1089
  %v1091 = vlaneseq
  %v1092 = vshrl.u32 %v1091, 7
  %v1093 = vsub.s32 %v1090, %v1092
  %v1094 = vrot.slane %v1080, %v1093
  %v1095 = vcombine.high %v1087, %v1087
  %v1096 = vcombine.low %v1071, %v1079
  %v1097 = vcombine.low %v1078, %v1087
  %v1099 = vunpack.c.l.s4 1983009808
  %v1100 = vunpack.c.0.s8 %v1099
  %v1101 = vlaneseq
  %v1102 = vshrl.u32 %v1101, 7
  %v1103 = vsub.s32 %v1100, %v1102
  %v1104 = vrot.slane %v1096, %v1103
  %v1106 = vunpack.c.l.s4 1983009808
  %v1107 = vunpack.c.0.s8 %v1106
  %v1108 = vlaneseq
  %v1109 = vshrl.u32 %v1108, 7
  %v1110 = vsub.s32 %v1107, %v1109
  %v1111 = vrot.slane %v1097, %v1110
  %v1112 = vcombine.low %v1104, %v1111
  %v1113 = vcombine.low %v1095, %v1094
  %v1115 = vunpack.c.l.s4 1983009808
  %v1116 = vunpack.c.0.s8 %v1115
  %v1117 = vlaneseq
  %v1118 = vshrl.u32 %v1117, 7
  %v1119 = vsub.s32 %v1116, %v1118
  %v1120 = vrot.slane %v1113, %v1119
  %v1121 = vsel %vm266, %v1112, 0
  %v1123 = vsel %vm266, %v1120, 0
  %1125 = vmatprep.subr.mxu0 0.0
  %1126 = vmatpush1.msra.mxu0 %v242
  %1127 = vmatprep.subr.mxu0 0.0
  %1128 = vmatpush1.msra.mxu0 %v243
  %1129 = vmatprep.subr.mxu0 0.0
  %1130 = vmatpush1.msra.mxu0 0.0
  %1131 = vmatprep.subr.mxu0 0.0
  %1132 = vmatpush1.msra.mxu0 0.0
  %1133 = vmatprep.subr.mxu0 0.0
  %1134 = vmatpush1.msra.mxu0 0.0
  %1135 = vmatprep.subr.mxu0 0.0
  %1136 = vmatpush1.msra.mxu0 0.0
  %1137 = vmatprep.subr.mxu0 0.0
  %1138 = vmatpush1.msra.mxu0 0.0
  %1139 = vmatprep.subr.mxu0 0.0
  %1140 = vmatpush1.msra.mxu0 0.0
  %1141 = vmatprep.subr.mxu0 0.0
  %1142 = vmatpush1.msra.mxu0 0.0
  %1143 = vmatprep.subr.mxu0 0.0
  %1144 = vmatpush1.msra.mxu0 0.0
  %1145 = vmatprep.subr.mxu0 0.0
  %1146 = vmatpush1.msra.mxu0 0.0
  %1147 = vmatprep.subr.mxu0 0.0
  %1148 = vmatpush1.msra.mxu0 0.0
  %1149 = vmatprep.subr.mxu0 0.0
  %1150 = vmatpush1.msra.mxu0 0.0
  %1151 = vmatprep.subr.mxu0 0.0
  %1152 = vmatpush1.msra.mxu0 0.0
  %1153 = vmatprep.subr.mxu0 0.0
  %1154 = vmatpush1.msra.mxu0 0.0
  %1155 = vmatprep.subr.mxu0 0.0
  %1156 = vmatpush1.msra.mxu0 0.0
  %1157 = vmatprep.subr.mxu0 0.0
  %1158 = vmatpush1.msra.mxu0 0.0
  %1159 = vmatprep.subr.mxu0 0.0
  %1160 = vmatpush1.msra.mxu0 0.0
  %1161 = vmatprep.subr.mxu0 0.0
  %1162 = vmatpush1.msra.mxu0 0.0
  %1163 = vmatprep.subr.mxu0 0.0
  %1164 = vmatpush1.msra.mxu0 0.0
  %1165 = vmatprep.subr.mxu0 0.0
  %1166 = vmatpush1.msra.mxu0 0.0
  %1167 = vmatprep.subr.mxu0 0.0
  %1168 = vmatpush1.msra.mxu0 0.0
  %1169 = vmatprep.subr.mxu0 0.0
  %1170 = vmatpush1.msra.mxu0 0.0
  %1171 = vmatprep.subr.mxu0 0.0
  %1172 = vmatpush1.msra.mxu0 0.0
  %1173 = vmatprep.subr.mxu0 0.0
  %1174 = vmatpush1.msra.mxu0 0.0
  %1175 = vmatprep.subr.mxu0 0.0
  %1176 = vmatpush1.msra.mxu0 0.0
  %1177 = vmatprep.subr.mxu0 0.0
  %1178 = vmatpush1.msra.mxu0 0.0
  %1179 = vmatprep.subr.mxu0 0.0
  %1180 = vmatpush1.msra.mxu0 0.0
  %1181 = vmatprep.subr.mxu0 0.0
  %1182 = vmatpush1.msra.mxu0 0.0
  %1183 = vmatprep.subr.mxu0 0.0
  %1184 = vmatpush1.msra.mxu0 0.0
  %1185 = vmatprep.subr.mxu0 0.0
  %1186 = vmatpush1.msra.mxu0 0.0
  %1187 = vmatprep.subr.mxu0 0.0
  %1188 = vmatpush1.msra.mxu0 0.0
  %1189 = vmatprep.mubr.f32.mxu0 0.0
  %1190 = vmatmul.mubr.f32.gmra.mrb[0].mxu0 %v1121
  %v1191 = vpop.f32.mrb[0].mxu0
  %v1192 = vadd.f32 0.0, %v1191
  %v1193 = vpop.f32.mrb[0].mxu0
  %1194 = vmatprep.mubr.f32.mxu0 0.0
  %1195 = vmatmul.mubr.f32.gmra.mrb[0].mxu0 %v1123
  %v1196 = vpop.f32.mrb[0].mxu0
  %v1197 = vadd.f32 0.0, %v1196
  %v1198 = vpop.f32.mrb[0].mxu0
  %1199 = vdwg.mxu0
  %v1200 = vcombine.low %v657, %v665
  %v1201 = vcombine.low %v664, %v673
  %v1203 = vunpack.c.l.s4 1983009808
  %v1204 = vunpack.c.0.s8 %v1203
  %v1205 = vlaneseq
  %v1206 = vshrl.u32 %v1205, 7
  %v1207 = vsub.s32 %v1204, %v1206
  %v1208 = vrot.slane %v1200, %v1207
  %v1210 = vunpack.c.l.s4 1983009808
  %v1211 = vunpack.c.0.s8 %v1210
  %v1212 = vlaneseq
  %v1213 = vshrl.u32 %v1212, 7
  %v1214 = vsub.s32 %v1211, %v1213
  %v1215 = vrot.slane %v1201, %v1214
  %v1216 = vcombine.low %v1208, %v1215
  %v1217 = vcombine.low %v681, %v680
  %v1219 = vunpack.c.l.s4 1983009808
  %v1220 = vunpack.c.0.s8 %v1219
  %v1221 = vlaneseq
  %v1222 = vshrl.u32 %v1221, 7
  %v1223 = vsub.s32 %v1220, %v1222
  %v1224 = vrot.slane %v1217, %v1223
  %v1225 = vsel %vm266, %v1216, 0
  %v1227 = vsel %vm266, %v1224, 0
  %1229 = vmatprep.subr.mxu0 0.0
  %1230 = vmatpush1.msra.mxu0 %v240
  %1231 = vmatprep.subr.mxu0 0.0
  %1232 = vmatpush1.msra.mxu0 %v241
  %1233 = vmatprep.subr.mxu0 0.0
  %1234 = vmatpush1.msra.mxu0 0.0
  %1235 = vmatprep.subr.mxu0 0.0
  %1236 = vmatpush1.msra.mxu0 0.0
  %1237 = vmatprep.subr.mxu0 0.0
  %1238 = vmatpush1.msra.mxu0 0.0
  %1239 = vmatprep.subr.mxu0 0.0
  %1240 = vmatpush1.msra.mxu0 0.0
  %1241 = vmatprep.subr.mxu0 0.0
  %1242 = vmatpush1.msra.mxu0 0.0
  %1243 = vmatprep.subr.mxu0 0.0
  %1244 = vmatpush1.msra.mxu0 0.0
  %1245 = vmatprep.subr.mxu0 0.0
  %1246 = vmatpush1.msra.mxu0 0.0
  %1247 = vmatprep.subr.mxu0 0.0
  %1248 = vmatpush1.msra.mxu0 0.0
  %1249 = vmatprep.subr.mxu0 0.0
  %1250 = vmatpush1.msra.mxu0 0.0
  %1251 = vmatprep.subr.mxu0 0.0
  %1252 = vmatpush1.msra.mxu0 0.0
  %1253 = vmatprep.subr.mxu0 0.0
  %1254 = vmatpush1.msra.mxu0 0.0
  %1255 = vmatprep.subr.mxu0 0.0
  %1256 = vmatpush1.msra.mxu0 0.0
  %1257 = vmatprep.subr.mxu0 0.0
  %1258 = vmatpush1.msra.mxu0 0.0
  %1259 = vmatprep.subr.mxu0 0.0
  %1260 = vmatpush1.msra.mxu0 0.0
  %1261 = vmatprep.subr.mxu0 0.0
  %1262 = vmatpush1.msra.mxu0 0.0
  %1263 = vmatprep.subr.mxu0 0.0
  %1264 = vmatpush1.msra.mxu0 0.0
  %1265 = vmatprep.subr.mxu0 0.0
  %1266 = vmatpush1.msra.mxu0 0.0
  %1267 = vmatprep.subr.mxu0 0.0
  %1268 = vmatpush1.msra.mxu0 0.0
  %1269 = vmatprep.subr.mxu0 0.0
  %1270 = vmatpush1.msra.mxu0 0.0
  %1271 = vmatprep.subr.mxu0 0.0
  %1272 = vmatpush1.msra.mxu0 0.0
  %1273 = vmatprep.subr.mxu0 0.0
  %1274 = vmatpush1.msra.mxu0 0.0
  %1275 = vmatprep.subr.mxu0 0.0
  %1276 = vmatpush1.msra.mxu0 0.0
  %1277 = vmatprep.subr.mxu0 0.0
  %1278 = vmatpush1.msra.mxu0 0.0
  %1279 = vmatprep.subr.mxu0 0.0
  %1280 = vmatpush1.msra.mxu0 0.0
  %1281 = vmatprep.subr.mxu0 0.0
  %1282 = vmatpush1.msra.mxu0 0.0
  %1283 = vmatprep.subr.mxu0 0.0
  %1284 = vmatpush1.msra.mxu0 0.0
  %1285 = vmatprep.subr.mxu0 0.0
  %1286 = vmatpush1.msra.mxu0 0.0
  %1287 = vmatprep.subr.mxu0 0.0
  %1288 = vmatpush1.msra.mxu0 0.0
  %1289 = vmatprep.subr.mxu0 0.0
  %1290 = vmatpush1.msra.mxu0 0.0
  %1291 = vmatprep.subr.mxu0 0.0
  %1292 = vmatpush1.msra.mxu0 0.0
  %1293 = vmatprep.mubr.f32.mxu0 0.0
  %1294 = vmatmul.mubr.f32.gmra.mrb[0].mxu0 %v1225
  %v1295 = vpop.f32.mrb[0].mxu0
  %v1296 = vadd.f32 %v1192, %v1295
  %v1297 = vpop.f32.mrb[0].mxu0
  %1298 = vmatprep.mubr.f32.mxu0 0.0
  %1299 = vmatmul.mubr.f32.gmra.mrb[0].mxu0 %v1227
  %v1300 = vpop.f32.mrb[0].mxu0
  %v1301 = vadd.f32 %v1197, %v1300
  %v1302 = vpop.f32.mrb[0].mxu0
  %1303 = vdwg.mxu0
  %1304 = vrot.lane.b32.xlu0 %v263, 96
  %v1305 = vpop.permute.xlu0 %1304
  %1306 = vrot.lane.b32.xlu0 %v263, 32
  %v1307 = vpop.permute.xlu0 %1306
  %v1308 = vsel %vm266, %v1305, 0
  %v1310 = vsel %vm266, %v1307, 0
  %1312 = vmatprep.subr.mxu0 0.0
  %1313 = vmatpush1.xpose.msra.mxu0 %v1310
  %1314 = vmatprep.subr.mxu0 0.0
  %1315 = vmatpush1.xpose.msra.mxu0 0.0
  %1316 = vmatprep.subr.mxu0 0.0
  %1317 = vmatpush1.xpose.msra.mxu0 0.0
  %1318 = vmatprep.subr.mxu0 0.0
  %1319 = vmatpush1.xpose.msra.mxu0 0.0
  %1320 = vmatprep.subr.mxu0 0.0
  %1321 = vmatpush1.xpose.msra.mxu0 0.0
  %1322 = vmatprep.subr.mxu0 0.0
  %1323 = vmatpush1.xpose.msra.mxu0 0.0
  %1324 = vmatprep.subr.mxu0 0.0
  %1325 = vmatpush1.xpose.msra.mxu0 0.0
  %1326 = vmatprep.subr.mxu0 0.0
  %1327 = vmatpush1.xpose.msra.mxu0 0.0
  %1328 = vmatprep.subr.mxu0 0.0
  %1329 = vmatpush1.xpose.msra.mxu0 0.0
  %1330 = vmatprep.subr.mxu0 0.0
  %1331 = vmatpush1.xpose.msra.mxu0 0.0
  %1332 = vmatprep.subr.mxu0 0.0
  %1333 = vmatpush1.xpose.msra.mxu0 0.0
  %1334 = vmatprep.subr.mxu0 0.0
  %1335 = vmatpush1.xpose.msra.mxu0 0.0
  %1336 = vmatprep.subr.mxu0 0.0
  %1337 = vmatpush1.xpose.msra.mxu0 0.0
  %1338 = vmatprep.subr.mxu0 0.0
  %1339 = vmatpush1.xpose.msra.mxu0 0.0
  %1340 = vmatprep.subr.mxu0 0.0
  %1341 = vmatpush1.xpose.msra.mxu0 0.0
  %1342 = vmatprep.subr.mxu0 0.0
  %1343 = vmatpush1.xpose.msra.mxu0 0.0
  %1344 = vmatprep.subr.mxu0 0.0
  %1345 = vmatpush1.xpose.msra.mxu0 0.0
  %1346 = vmatprep.subr.mxu0 0.0
  %1347 = vmatpush1.xpose.msra.mxu0 0.0
  %1348 = vmatprep.subr.mxu0 0.0
  %1349 = vmatpush1.xpose.msra.mxu0 0.0
  %1350 = vmatprep.subr.mxu0 0.0
  %1351 = vmatpush1.xpose.msra.mxu0 0.0
  %1352 = vmatprep.subr.mxu0 0.0
  %1353 = vmatpush1.xpose.msra.mxu0 0.0
  %1354 = vmatprep.subr.mxu0 0.0
  %1355 = vmatpush1.xpose.msra.mxu0 0.0
  %1356 = vmatprep.subr.mxu0 0.0
  %1357 = vmatpush1.xpose.msra.mxu0 0.0
  %1358 = vmatprep.subr.mxu0 0.0
  %1359 = vmatpush1.xpose.msra.mxu0 0.0
  %1360 = vmatprep.subr.mxu0 0.0
  %1361 = vmatpush1.xpose.msra.mxu0 0.0
  %1362 = vmatprep.subr.mxu0 0.0
  %1363 = vmatpush1.xpose.msra.mxu0 0.0
  %1364 = vmatprep.subr.mxu0 0.0
  %1365 = vmatpush1.xpose.msra.mxu0 0.0
  %1366 = vmatprep.subr.mxu0 0.0
  %1367 = vmatpush1.xpose.msra.mxu0 0.0
  %1368 = vmatprep.subr.mxu0 0.0
  %1369 = vmatpush1.xpose.msra.mxu0 0.0
  %1370 = vmatprep.subr.mxu0 0.0
  %1371 = vmatpush1.xpose.msra.mxu0 0.0
  %1372 = vmatprep.subr.mxu0 0.0
  %1373 = vmatpush1.xpose.msra.mxu0 0.0
  %1374 = vmatprep.subr.mxu0 0.0
  %1375 = vmatpush1.xpose.msra.mxu0 0.0
  %1376 = vmatprep.mubr.f32.mxu0 0.0
  %1377 = vmatmul.mubr.f32.gmra.mrb[0].mxu0 %v1308
  %v1378 = vpop.f32.mrb[0].mxu0
  %v1379 = vadd.f32 0.0, %v1378
  %v1380 = vpop.f32.mrb[0].mxu0
  %1381 = vdwg.mxu0
  %1382 = vrot.lane.b32.xlu0 %v356, 96
  %v1383 = vpop.permute.xlu0 %1382
  %1384 = vrot.lane.b32.xlu0 %v356, 32
  %v1385 = vpop.permute.xlu0 %1384
  %v1386 = vsel %vm266, %v1383, 0
  %v1388 = vsel %vm266, %v1385, 0
  %1390 = vmatprep.subr.mxu0 0.0
  %1391 = vmatpush1.xpose.msra.mxu0 %v1388
  %1392 = vmatprep.subr.mxu0 0.0
  %1393 = vmatpush1.xpose.msra.mxu0 0.0
  %1394 = vmatprep.subr.mxu0 0.0
  %1395 = vmatpush1.xpose.msra.mxu0 0.0
  %1396 = vmatprep.subr.mxu0 0.0
  %1397 = vmatpush1.xpose.msra.mxu0 0.0
  %1398 = vmatprep.subr.mxu0 0.0
  %1399 = vmatpush1.xpose.msra.mxu0 0.0
  %1400 = vmatprep.subr.mxu0 0.0
  %1401 = vmatpush1.xpose.msra.mxu0 0.0
  %1402 = vmatprep.subr.mxu0 0.0
  %1403 = vmatpush1.xpose.msra.mxu0 0.0
  %1404 = vmatprep.subr.mxu0 0.0
  %1405 = vmatpush1.xpose.msra.mxu0 0.0
  %1406 = vmatprep.subr.mxu0 0.0
  %1407 = vmatpush1.xpose.msra.mxu0 0.0
  %1408 = vmatprep.subr.mxu0 0.0
  %1409 = vmatpush1.xpose.msra.mxu0 0.0
  %1410 = vmatprep.subr.mxu0 0.0
  %1411 = vmatpush1.xpose.msra.mxu0 0.0
  %1412 = vmatprep.subr.mxu0 0.0
  %1413 = vmatpush1.xpose.msra.mxu0 0.0
  %1414 = vmatprep.subr.mxu0 0.0
  %1415 = vmatpush1.xpose.msra.mxu0 0.0
  %1416 = vmatprep.subr.mxu0 0.0
  %1417 = vmatpush1.xpose.msra.mxu0 0.0
  %1418 = vmatprep.subr.mxu0 0.0
  %1419 = vmatpush1.xpose.msra.mxu0 0.0
  %1420 = vmatprep.subr.mxu0 0.0
  %1421 = vmatpush1.xpose.msra.mxu0 0.0
  %1422 = vmatprep.subr.mxu0 0.0
  %1423 = vmatpush1.xpose.msra.mxu0 0.0
  %1424 = vmatprep.subr.mxu0 0.0
  %1425 = vmatpush1.xpose.msra.mxu0 0.0
  %1426 = vmatprep.subr.mxu0 0.0
  %1427 = vmatpush1.xpose.msra.mxu0 0.0
  %1428 = vmatprep.subr.mxu0 0.0
  %1429 = vmatpush1.xpose.msra.mxu0 0.0
  %1430 = vmatprep.subr.mxu0 0.0
  %1431 = vmatpush1.xpose.msra.mxu0 0.0
  %1432 = vmatprep.subr.mxu0 0.0
  %1433 = vmatpush1.xpose.msra.mxu0 0.0
  %1434 = vmatprep.subr.mxu0 0.0
  %1435 = vmatpush1.xpose.msra.mxu0 0.0
  %1436 = vmatprep.subr.mxu0 0.0
  %1437 = vmatpush1.xpose.msra.mxu0 0.0
  %1438 = vmatprep.subr.mxu0 0.0
  %1439 = vmatpush1.xpose.msra.mxu0 0.0
  %1440 = vmatprep.subr.mxu0 0.0
  %1441 = vmatpush1.xpose.msra.mxu0 0.0
  %1442 = vmatprep.subr.mxu0 0.0
  %1443 = vmatpush1.xpose.msra.mxu0 0.0
  %1444 = vmatprep.subr.mxu0 0.0
  %1445 = vmatpush1.xpose.msra.mxu0 0.0
  %1446 = vmatprep.subr.mxu0 0.0
  %1447 = vmatpush1.xpose.msra.mxu0 0.0
  %1448 = vmatprep.subr.mxu0 0.0
  %1449 = vmatpush1.xpose.msra.mxu0 0.0
  %1450 = vmatprep.subr.mxu0 0.0
  %1451 = vmatpush1.xpose.msra.mxu0 0.0
  %1452 = vmatprep.subr.mxu0 0.0
  %1453 = vmatpush1.xpose.msra.mxu0 0.0
  %1454 = vmatprep.mubr.f32.mxu0 0.0
  %1455 = vmatmul.mubr.f32.gmra.mrb[0].mxu0 %v1386
  %v1456 = vpop.f32.mrb[0].mxu0
  %v1457 = vadd.f32 0.0, %v1456
  %v1458 = vpop.f32.mrb[0].mxu0
  %1459 = vdwg.mxu0
  %v1460 = vmul.f32 %v1379, 0.25
  %v1461 = vmul.f32 %v1457, 0.25
  %v1462 = vsel %vm435, %v1460, -inf
  %1463 = vmax.xlane.f32.xlu0 %v1462
  %v1464 = vpop.xlane.xlu0 %1463
  %v1465 = vsel %vm435, %v1461, -inf
  %1466 = vmax.xlane.f32.xlu0 %v1465
  %v1467 = vpop.xlane.xlu0 %1466
  %v1468 = vsub.f32 %v1460, %v1464
  %v1469 = vsub.f32 %v1461, %v1467
  %v1470 = vmul.f32 %v1468, 1.442695
  %v1471 = vpow.pop %v1470
  %v1472 = vmul.f32 %v1469, 1.442695
  %v1473 = vpow.pop %v1472
  %v1474 = vsel %vm435, %v1471, 0.0
  %1475 = vadd.xlane.f32.xlu0 %v1474
  %v1476 = vpop.xlane.xlu0 %1475
  %v1477 = vsel %vm435, %v1473, 0.0
  %1478 = vadd.xlane.f32.xlu0 %v1477
  %v1479 = vpop.xlane.xlu0 %1478
  %v1480 = vrcp.pop %v1476
  %v1481 = vrcp.pop %v1479
  %v1482 = vmul.f32 %v1471, %v1480
  %v1483 = vmul.f32 %v1473, %v1481
  %1484 = vrot.lane.b32.xlu0 %v221, 96
  %v1485 = vpop.permute.xlu0 %1484
  %1486 = vrot.lane.b32.xlu0 %v229, 96
  %v1487 = vpop.permute.xlu0 %1486
  %1488 = vrot.lane.b32.xlu0 %v228, 96
  %v1489 = vpop.permute.xlu0 %1488
  %v1490 = vrot.slane %v1485, 2
  %v1491 = vrot.slane %v1487, 2
  %v1492 = vrot.slane %v1489, 2
  %v1493 = vcombine.low %v1490, %v1491
  %v1495 = vunpack.c.l.s4 1983009808
  %v1496 = vunpack.c.0.s8 %v1495
  %v1497 = vlaneseq
  %v1498 = vshrl.u32 %v1497, 7
  %v1499 = vsub.s32 %v1496, %v1498
  %v1500 = vrot.slane %v1493, %v1499
  %v1502 = vunpack.c.l.s4 1983009808
  %v1503 = vunpack.c.0.s8 %v1502
  %v1504 = vlaneseq
  %v1505 = vshrl.u32 %v1504, 7
  %v1506 = vsub.s32 %v1503, %v1505
  %v1507 = vrot.slane %v1492, %v1506
  %v1508 = vcombine.low %v1500, %v1507
  %v1510 = vsel %vm477, %v1482, 0
  %v1512 = vsel %vm481, %v1508, 0
  %1514 = vmatprep.subr.mxu0 0.0
  %1515 = vmatpush1.msra.mxu0 %v1512
  %1516 = vmatprep.subr.mxu0 0.0
  %1517 = vmatpush1.msra.mxu0 0.0
  %1518 = vmatprep.subr.mxu0 0.0
  %1519 = vmatpush1.msra.mxu0 0.0
  %1520 = vmatprep.subr.mxu0 0.0
  %1521 = vmatpush1.msra.mxu0 0.0
  %1522 = vmatprep.subr.mxu0 0.0
  %1523 = vmatpush1.msra.mxu0 0.0
  %1524 = vmatprep.subr.mxu0 0.0
  %1525 = vmatpush1.msra.mxu0 0.0
  %1526 = vmatprep.subr.mxu0 0.0
  %1527 = vmatpush1.msra.mxu0 0.0
  %1528 = vmatprep.subr.mxu0 0.0
  %1529 = vmatpush1.msra.mxu0 0.0
  %1530 = vmatprep.subr.mxu0 0.0
  %1531 = vmatpush1.msra.mxu0 0.0
  %1532 = vmatprep.subr.mxu0 0.0
  %1533 = vmatpush1.msra.mxu0 0.0
  %1534 = vmatprep.subr.mxu0 0.0
  %1535 = vmatpush1.msra.mxu0 0.0
  %1536 = vmatprep.subr.mxu0 0.0
  %1537 = vmatpush1.msra.mxu0 0.0
  %1538 = vmatprep.subr.mxu0 0.0
  %1539 = vmatpush1.msra.mxu0 0.0
  %1540 = vmatprep.subr.mxu0 0.0
  %1541 = vmatpush1.msra.mxu0 0.0
  %1542 = vmatprep.subr.mxu0 0.0
  %1543 = vmatpush1.msra.mxu0 0.0
  %1544 = vmatprep.subr.mxu0 0.0
  %1545 = vmatpush1.msra.mxu0 0.0
  %1546 = vmatprep.subr.mxu0 0.0
  %1547 = vmatpush1.msra.mxu0 0.0
  %1548 = vmatprep.subr.mxu0 0.0
  %1549 = vmatpush1.msra.mxu0 0.0
  %1550 = vmatprep.subr.mxu0 0.0
  %1551 = vmatpush1.msra.mxu0 0.0
  %1552 = vmatprep.subr.mxu0 0.0
  %1553 = vmatpush1.msra.mxu0 0.0
  %1554 = vmatprep.subr.mxu0 0.0
  %1555 = vmatpush1.msra.mxu0 0.0
  %1556 = vmatprep.subr.mxu0 0.0
  %1557 = vmatpush1.msra.mxu0 0.0
  %1558 = vmatprep.subr.mxu0 0.0
  %1559 = vmatpush1.msra.mxu0 0.0
  %1560 = vmatprep.subr.mxu0 0.0
  %1561 = vmatpush1.msra.mxu0 0.0
  %1562 = vmatprep.subr.mxu0 0.0
  %1563 = vmatpush1.msra.mxu0 0.0
  %1564 = vmatprep.subr.mxu0 0.0
  %1565 = vmatpush1.msra.mxu0 0.0
  %1566 = vmatprep.subr.mxu0 0.0
  %1567 = vmatpush1.msra.mxu0 0.0
  %1568 = vmatprep.subr.mxu0 0.0
  %1569 = vmatpush1.msra.mxu0 0.0
  %1570 = vmatprep.subr.mxu0 0.0
  %1571 = vmatpush1.msra.mxu0 0.0
  %1572 = vmatprep.subr.mxu0 0.0
  %1573 = vmatpush1.msra.mxu0 0.0
  %1574 = vmatprep.subr.mxu0 0.0
  %1575 = vmatpush1.msra.mxu0 0.0
  %1576 = vmatprep.subr.mxu0 0.0
  %1577 = vmatpush1.msra.mxu0 0.0
  %1578 = vmatprep.mubr.f32.mxu0 0.0
  %1579 = vmatmul.mubr.f32.gmra.mrb[0].mxu0 %v1510
  %v1580 = vpop.f32.mrb[0].mxu0
  %v1581 = vadd.f32 0.0, %v1580
  %v1582 = vpop.f32.mrb[0].mxu0
  %1583 = vdwg.mxu0
  %1584 = vrot.lane.b32.xlu0 %v230, 96
  %v1585 = vpop.permute.xlu0 %1584
  %1586 = vrot.lane.b32.xlu0 %v238, 96
  %v1587 = vpop.permute.xlu0 %1586
  %1588 = vrot.lane.b32.xlu0 %v239, 96
  %v1589 = vpop.permute.xlu0 %1588
  %v1590 = vrot.slane %v1585, 2
  %v1591 = vrot.slane %v1587, 2
  %v1592 = vrot.slane %v1589, 2
  %v1593 = vcombine.low %v1590, %v1591
  %v1595 = vunpack.c.l.s4 1983009808
  %v1596 = vunpack.c.0.s8 %v1595
  %v1597 = vlaneseq
  %v1598 = vshrl.u32 %v1597, 7
  %v1599 = vsub.s32 %v1596, %v1598
  %v1600 = vrot.slane %v1593, %v1599
  %v1602 = vunpack.c.l.s4 1983009808
  %v1603 = vunpack.c.0.s8 %v1602
  %v1604 = vlaneseq
  %v1605 = vshrl.u32 %v1604, 7
  %v1606 = vsub.s32 %v1603, %v1605
  %v1607 = vrot.slane %v1592, %v1606
  %v1608 = vcombine.low %v1600, %v1607
  %v1610 = vsel %vm477, %v1483, 0
  %v1612 = vsel %vm481, %v1608, 0
  %1614 = vmatprep.subr.mxu0 0.0
  %1615 = vmatpush1.msra.mxu0 %v1612
  %1616 = vmatprep.subr.mxu0 0.0
  %1617 = vmatpush1.msra.mxu0 0.0
  %1618 = vmatprep.subr.mxu0 0.0
  %1619 = vmatpush1.msra.mxu0 0.0
  %1620 = vmatprep.subr.mxu0 0.0
  %1621 = vmatpush1.msra.mxu0 0.0
  %1622 = vmatprep.subr.mxu0 0.0
  %1623 = vmatpush1.msra.mxu0 0.0
  %1624 = vmatprep.subr.mxu0 0.0
  %1625 = vmatpush1.msra.mxu0 0.0
  %1626 = vmatprep.subr.mxu0 0.0
  %1627 = vmatpush1.msra.mxu0 0.0
  %1628 = vmatprep.subr.mxu0 0.0
  %1629 = vmatpush1.msra.mxu0 0.0
  %1630 = vmatprep.subr.mxu0 0.0
  %1631 = vmatpush1.msra.mxu0 0.0
  %1632 = vmatprep.subr.mxu0 0.0
  %1633 = vmatpush1.msra.mxu0 0.0
  %1634 = vmatprep.subr.mxu0 0.0
  %1635 = vmatpush1.msra.mxu0 0.0
  %1636 = vmatprep.subr.mxu0 0.0
  %1637 = vmatpush1.msra.mxu0 0.0
  %1638 = vmatprep.subr.mxu0 0.0
  %1639 = vmatpush1.msra.mxu0 0.0
  %1640 = vmatprep.subr.mxu0 0.0
  %1641 = vmatpush1.msra.mxu0 0.0
  %1642 = vmatprep.subr.mxu0 0.0
  %1643 = vmatpush1.msra.mxu0 0.0
  %1644 = vmatprep.subr.mxu0 0.0
  %1645 = vmatpush1.msra.mxu0 0.0
  %1646 = vmatprep.subr.mxu0 0.0
  %1647 = vmatpush1.msra.mxu0 0.0
  %1648 = vmatprep.subr.mxu0 0.0
  %1649 = vmatpush1.msra.mxu0 0.0
  %1650 = vmatprep.subr.mxu0 0.0
  %1651 = vmatpush1.msra.mxu0 0.0
  %1652 = vmatprep.subr.mxu0 0.0
  %1653 = vmatpush1.msra.mxu0 0.0
  %1654 = vmatprep.subr.mxu0 0.0
  %1655 = vmatpush1.msra.mxu0 0.0
  %1656 = vmatprep.subr.mxu0 0.0
  %1657 = vmatpush1.msra.mxu0 0.0
  %1658 = vmatprep.subr.mxu0 0.0
  %1659 = vmatpush1.msra.mxu0 0.0
  %1660 = vmatprep.subr.mxu0 0.0
  %1661 = vmatpush1.msra.mxu0 0.0
  %1662 = vmatprep.subr.mxu0 0.0
  %1663 = vmatpush1.msra.mxu0 0.0
  %1664 = vmatprep.subr.mxu0 0.0
  %1665 = vmatpush1.msra.mxu0 0.0
  %1666 = vmatprep.subr.mxu0 0.0
  %1667 = vmatpush1.msra.mxu0 0.0
  %1668 = vmatprep.subr.mxu0 0.0
  %1669 = vmatpush1.msra.mxu0 0.0
  %1670 = vmatprep.subr.mxu0 0.0
  %1671 = vmatpush1.msra.mxu0 0.0
  %1672 = vmatprep.subr.mxu0 0.0
  %1673 = vmatpush1.msra.mxu0 0.0
  %1674 = vmatprep.subr.mxu0 0.0
  %1675 = vmatpush1.msra.mxu0 0.0
  %1676 = vmatprep.subr.mxu0 0.0
  %1677 = vmatpush1.msra.mxu0 0.0
  %1678 = vmatprep.mubr.f32.mxu0 0.0
  %1679 = vmatmul.mubr.f32.gmra.mrb[0].mxu0 %v1610
  %v1680 = vpop.f32.mrb[0].mxu0
  %v1681 = vadd.f32 0.0, %v1680
  %v1682 = vpop.f32.mrb[0].mxu0
  %1683 = vdwg.mxu0
  %v1686 = vcombine.high %v1581, %v1581
  %v1688 = vunpack.c.l.s4 1983009808
  %v1689 = vunpack.c.0.s8 %v1688
  %v1690 = vlaneseq
  %v1691 = vshrl.u32 %v1690, 7
  %v1692 = vsub.s32 %v1689, %v1691
  %v1693 = vrot.slane %v1581, %v1692
  %v1695 = vunpack.c.l.s4 1983009808
  %v1696 = vunpack.c.0.s8 %v1695
  %v1697 = vlaneseq
  %v1698 = vshrl.u32 %v1697, 7
  %v1699 = vsub.s32 %v1696, %v1698
  %v1700 = vrot.slane %v1686, %v1699
  %v1701 = vcombine.high %v1693, %v1693
  %v1702 = vcombine.high %v1681, %v1681
  %v1704 = vunpack.c.l.s4 1983009808
  %v1705 = vunpack.c.0.s8 %v1704
  %v1706 = vlaneseq
  %v1707 = vshrl.u32 %v1706, 7
  %v1708 = vsub.s32 %v1705, %v1707
  %v1709 = vrot.slane %v1681, %v1708
  %v1711 = vunpack.c.l.s4 1983009808
  %v1712 = vunpack.c.0.s8 %v1711
  %v1713 = vlaneseq
  %v1714 = vshrl.u32 %v1713, 7
  %v1715 = vsub.s32 %v1712, %v1714
  %v1716 = vrot.slane %v1702, %v1715
  %v1717 = vcombine.high %v1709, %v1709
  %v1718 = vcombine.low %v1693, %v1701
  %v1719 = vcombine.low %v1700, %v1709
  %v1721 = vunpack.c.l.s4 1983009808
  %v1722 = vunpack.c.0.s8 %v1721
  %v1723 = vlaneseq
  %v1724 = vshrl.u32 %v1723, 7
  %v1725 = vsub.s32 %v1722, %v1724
  %v1726 = vrot.slane %v1718, %v1725
  %v1728 = vunpack.c.l.s4 1983009808
  %v1729 = vunpack.c.0.s8 %v1728
  %v1730 = vlaneseq
  %v1731 = vshrl.u32 %v1730, 7
  %v1732 = vsub.s32 %v1729, %v1731
  %v1733 = vrot.slane %v1719, %v1732
  %v1734 = vcombine.low %v1726, %v1733
  %v1735 = vcombine.low %v1717, %v1716
  %v1737 = vunpack.c.l.s4 1983009808
  %v1738 = vunpack.c.0.s8 %v1737
  %v1739 = vlaneseq
  %v1740 = vshrl.u32 %v1739, 7
  %v1741 = vsub.s32 %v1738, %v1740
  %v1742 = vrot.slane %v1735, %v1741
  %v1743 = vsel %vm266, %v1734, 0
  %v1745 = vsel %vm266, %v1742, 0
  %1747 = vmatprep.subr.mxu0 0.0
  %1748 = vmatpush1.msra.mxu0 %v244
  %1749 = vmatprep.subr.mxu0 0.0
  %1750 = vmatpush1.msra.mxu0 %v245
  %1751 = vmatprep.subr.mxu0 0.0
  %1752 = vmatpush1.msra.mxu0 0.0
  %1753 = vmatprep.subr.mxu0 0.0
  %1754 = vmatpush1.msra.mxu0 0.0
  %1755 = vmatprep.subr.mxu0 0.0
  %1756 = vmatpush1.msra.mxu0 0.0
  %1757 = vmatprep.subr.mxu0 0.0
  %1758 = vmatpush1.msra.mxu0 0.0
  %1759 = vmatprep.subr.mxu0 0.0
  %1760 = vmatpush1.msra.mxu0 0.0
  %1761 = vmatprep.subr.mxu0 0.0
  %1762 = vmatpush1.msra.mxu0 0.0
  %1763 = vmatprep.subr.mxu0 0.0
  %1764 = vmatpush1.msra.mxu0 0.0
  %1765 = vmatprep.subr.mxu0 0.0
  %1766 = vmatpush1.msra.mxu0 0.0
  %1767 = vmatprep.subr.mxu0 0.0
  %1768 = vmatpush1.msra.mxu0 0.0
  %1769 = vmatprep.subr.mxu0 0.0
  %1770 = vmatpush1.msra.mxu0 0.0
  %1771 = vmatprep.subr.mxu0 0.0
  %1772 = vmatpush1.msra.mxu0 0.0
  %1773 = vmatprep.subr.mxu0 0.0
  %1774 = vmatpush1.msra.mxu0 0.0
  %1775 = vmatprep.subr.mxu0 0.0
  %1776 = vmatpush1.msra.mxu0 0.0
  %1777 = vmatprep.subr.mxu0 0.0
  %1778 = vmatpush1.msra.mxu0 0.0
  %1779 = vmatprep.subr.mxu0 0.0
  %1780 = vmatpush1.msra.mxu0 0.0
  %1781 = vmatprep.subr.mxu0 0.0
  %1782 = vmatpush1.msra.mxu0 0.0
  %1783 = vmatprep.subr.mxu0 0.0
  %1784 = vmatpush1.msra.mxu0 0.0
  %1785 = vmatprep.subr.mxu0 0.0
  %1786 = vmatpush1.msra.mxu0 0.0
  %1787 = vmatprep.subr.mxu0 0.0
  %1788 = vmatpush1.msra.mxu0 0.0
  %1789 = vmatprep.subr.mxu0 0.0
  %1790 = vmatpush1.msra.mxu0 0.0
  %1791 = vmatprep.subr.mxu0 0.0
  %1792 = vmatpush1.msra.mxu0 0.0
  %1793 = vmatprep.subr.mxu0 0.0
  %1794 = vmatpush1.msra.mxu0 0.0
  %1795 = vmatprep.subr.mxu0 0.0
  %1796 = vmatpush1.msra.mxu0 0.0
  %1797 = vmatprep.subr.mxu0 0.0
  %1798 = vmatpush1.msra.mxu0 0.0
  %1799 = vmatprep.subr.mxu0 0.0
  %1800 = vmatpush1.msra.mxu0 0.0
  %1801 = vmatprep.subr.mxu0 0.0
  %1802 = vmatpush1.msra.mxu0 0.0
  %1803 = vmatprep.subr.mxu0 0.0
  %1804 = vmatpush1.msra.mxu0 0.0
  %1805 = vmatprep.subr.mxu0 0.0
  %1806 = vmatpush1.msra.mxu0 0.0
  %1807 = vmatprep.subr.mxu0 0.0
  %1808 = vmatpush1.msra.mxu0 0.0
  %1809 = vmatprep.subr.mxu0 0.0
  %1810 = vmatpush1.msra.mxu0 0.0
  %1811 = vmatprep.mubr.f32.mxu0 0.0
  %1812 = vmatmul.mubr.f32.gmra.mrb[0].mxu0 %v1743
  %v1813 = vpop.f32.mrb[0].mxu0
  %v1814 = vadd.f32 0.0, %v1813
  %v1815 = vpop.f32.mrb[0].mxu0
  %1816 = vmatprep.mubr.f32.mxu0 0.0
  %1817 = vmatmul.mubr.f32.gmra.mrb[0].mxu0 %v1745
  %v1818 = vpop.f32.mrb[0].mxu0
  %v1819 = vadd.f32 0.0, %v1818
  %v1820 = vpop.f32.mrb[0].mxu0
  %1821 = vdwg.mxu0
  %v1822 = vadd.f32 %v1296, %v1814
  %v1823 = vadd.f32 %v1301, %v1819
  %1824 = vrot.lane.b32.xlu0 %v263, 80
  %v1825 = vpop.permute.xlu0 %1824
  %1826 = vrot.lane.b32.xlu0 %v263, 16
  %v1827 = vpop.permute.xlu0 %1826
  %v1828 = vsel %vm266, %v1825, 0
  %v1830 = vsel %vm266, %v1827, 0
  %1832 = vmatprep.subr.mxu0 0.0
  %1833 = vmatpush1.xpose.msra.mxu0 %v1830
  %1834 = vmatprep.subr.mxu0 0.0
  %1835 = vmatpush1.xpose.msra.mxu0 0.0
  %1836 = vmatprep.subr.mxu0 0.0
  %1837 = vmatpush1.xpose.msra.mxu0 0.0
  %1838 = vmatprep.subr.mxu0 0.0
  %1839 = vmatpush1.xpose.msra.mxu0 0.0
  %1840 = vmatprep.subr.mxu0 0.0
  %1841 = vmatpush1.xpose.msra.mxu0 0.0
  %1842 = vmatprep.subr.mxu0 0.0
  %1843 = vmatpush1.xpose.msra.mxu0 0.0
  %1844 = vmatprep.subr.mxu0 0.0
  %1845 = vmatpush1.xpose.msra.mxu0 0.0
  %1846 = vmatprep.subr.mxu0 0.0
  %1847 = vmatpush1.xpose.msra.mxu0 0.0
  %1848 = vmatprep.subr.mxu0 0.0
  %1849 = vmatpush1.xpose.msra.mxu0 0.0
  %1850 = vmatprep.subr.mxu0 0.0
  %1851 = vmatpush1.xpose.msra.mxu0 0.0
  %1852 = vmatprep.subr.mxu0 0.0
  %1853 = vmatpush1.xpose.msra.mxu0 0.0
  %1854 = vmatprep.subr.mxu0 0.0
  %1855 = vmatpush1.xpose.msra.mxu0 0.0
  %1856 = vmatprep.subr.mxu0 0.0
  %1857 = vmatpush1.xpose.msra.mxu0 0.0
  %1858 = vmatprep.subr.mxu0 0.0
  %1859 = vmatpush1.xpose.msra.mxu0 0.0
  %1860 = vmatprep.subr.mxu0 0.0
  %1861 = vmatpush1.xpose.msra.mxu0 0.0
  %1862 = vmatprep.subr.mxu0 0.0
  %1863 = vmatpush1.xpose.msra.mxu0 0.0
  %1864 = vmatprep.subr.mxu0 0.0
  %1865 = vmatpush1.xpose.msra.mxu0 0.0
  %1866 = vmatprep.subr.mxu0 0.0
  %1867 = vmatpush1.xpose.msra.mxu0 0.0
  %1868 = vmatprep.subr.mxu0 0.0
  %1869 = vmatpush1.xpose.msra.mxu0 0.0
  %1870 = vmatprep.subr.mxu0 0.0
  %1871 = vmatpush1.xpose.msra.mxu0 0.0
  %1872 = vmatprep.subr.mxu0 0.0
  %1873 = vmatpush1.xpose.msra.mxu0 0.0
  %1874 = vmatprep.subr.mxu0 0.0
  %1875 = vmatpush1.xpose.msra.mxu0 0.0
  %1876 = vmatprep.subr.mxu0 0.0
  %1877 = vmatpush1.xpose.msra.mxu0 0.0
  %1878 = vmatprep.subr.mxu0 0.0
  %1879 = vmatpush1.xpose.msra.mxu0 0.0
  %1880 = vmatprep.subr.mxu0 0.0
  %1881 = vmatpush1.xpose.msra.mxu0 0.0
  %1882 = vmatprep.subr.mxu0 0.0
  %1883 = vmatpush1.xpose.msra.mxu0 0.0
  %1884 = vmatprep.subr.mxu0 0.0
  %1885 = vmatpush1.xpose.msra.mxu0 0.0
  %1886 = vmatprep.subr.mxu0 0.0
  %1887 = vmatpush1.xpose.msra.mxu0 0.0
  %1888 = vmatprep.subr.mxu0 0.0
  %1889 = vmatpush1.xpose.msra.mxu0 0.0
  %1890 = vmatprep.subr.mxu0 0.0
  %1891 = vmatpush1.xpose.msra.mxu0 0.0
  %1892 = vmatprep.subr.mxu0 0.0
  %1893 = vmatpush1.xpose.msra.mxu0 0.0
  %1894 = vmatprep.subr.mxu0 0.0
  %1895 = vmatpush1.xpose.msra.mxu0 0.0
  %1896 = vmatprep.mubr.f32.mxu0 0.0
  %1897 = vmatmul.mubr.f32.gmra.mrb[0].mxu0 %v1828
  %v1898 = vpop.f32.mrb[0].mxu0
  %v1899 = vadd.f32 0.0, %v1898
  %v1900 = vpop.f32.mrb[0].mxu0
  %1901 = vdwg.mxu0
  %1902 = vrot.lane.b32.xlu0 %v356, 80
  %v1903 = vpop.permute.xlu0 %1902
  %1904 = vrot.lane.b32.xlu0 %v356, 16
  %v1905 = vpop.permute.xlu0 %1904
  %v1906 = vsel %vm266, %v1903, 0
  %v1908 = vsel %vm266, %v1905, 0
  %1910 = vmatprep.subr.mxu0 0.0
  %1911 = vmatpush1.xpose.msra.mxu0 %v1908
  %1912 = vmatprep.subr.mxu0 0.0
  %1913 = vmatpush1.xpose.msra.mxu0 0.0
  %1914 = vmatprep.subr.mxu0 0.0
  %1915 = vmatpush1.xpose.msra.mxu0 0.0
  %1916 = vmatprep.subr.mxu0 0.0
  %1917 = vmatpush1.xpose.msra.mxu0 0.0
  %1918 = vmatprep.subr.mxu0 0.0
  %1919 = vmatpush1.xpose.msra.mxu0 0.0
  %1920 = vmatprep.subr.mxu0 0.0
  %1921 = vmatpush1.xpose.msra.mxu0 0.0
  %1922 = vmatprep.subr.mxu0 0.0
  %1923 = vmatpush1.xpose.msra.mxu0 0.0
  %1924 = vmatprep.subr.mxu0 0.0
  %1925 = vmatpush1.xpose.msra.mxu0 0.0
  %1926 = vmatprep.subr.mxu0 0.0
  %1927 = vmatpush1.xpose.msra.mxu0 0.0
  %1928 = vmatprep.subr.mxu0 0.0
  %1929 = vmatpush1.xpose.msra.mxu0 0.0
  %1930 = vmatprep.subr.mxu0 0.0
  %1931 = vmatpush1.xpose.msra.mxu0 0.0
  %1932 = vmatprep.subr.mxu0 0.0
  %1933 = vmatpush1.xpose.msra.mxu0 0.0
  %1934 = vmatprep.subr.mxu0 0.0
  %1935 = vmatpush1.xpose.msra.mxu0 0.0
  %1936 = vmatprep.subr.mxu0 0.0
  %1937 = vmatpush1.xpose.msra.mxu0 0.0
  %1938 = vmatprep.subr.mxu0 0.0
  %1939 = vmatpush1.xpose.msra.mxu0 0.0
  %1940 = vmatprep.subr.mxu0 0.0
  %1941 = vmatpush1.xpose.msra.mxu0 0.0
  %1942 = vmatprep.subr.mxu0 0.0
  %1943 = vmatpush1.xpose.msra.mxu0 0.0
  %1944 = vmatprep.subr.mxu0 0.0
  %1945 = vmatpush1.xpose.msra.mxu0 0.0
  %1946 = vmatprep.subr.mxu0 0.0
  %1947 = vmatpush1.xpose.msra.mxu0 0.0
  %1948 = vmatprep.subr.mxu0 0.0
  %1949 = vmatpush1.xpose.msra.mxu0 0.0
  %1950 = vmatprep.subr.mxu0 0.0
  %1951 = vmatpush1.xpose.msra.mxu0 0.0
  %1952 = vmatprep.subr.mxu0 0.0
  %1953 = vmatpush1.xpose.msra.mxu0 0.0
  %1954 = vmatprep.subr.mxu0 0.0
  %1955 = vmatpush1.xpose.msra.mxu0 0.0
  %1956 = vmatprep.subr.mxu0 0.0
  %1957 = vmatpush1.xpose.msra.mxu0 0.0
  %1958 = vmatprep.subr.mxu0 0.0
  %1959 = vmatpush1.xpose.msra.mxu0 0.0
  %1960 = vmatprep.subr.mxu0 0.0
  %1961 = vmatpush1.xpose.msra.mxu0 0.0
  %1962 = vmatprep.subr.mxu0 0.0
  %1963 = vmatpush1.xpose.msra.mxu0 0.0
  %1964 = vmatprep.subr.mxu0 0.0
  %1965 = vmatpush1.xpose.msra.mxu0 0.0
  %1966 = vmatprep.subr.mxu0 0.0
  %1967 = vmatpush1.xpose.msra.mxu0 0.0
  %1968 = vmatprep.subr.mxu0 0.0
  %1969 = vmatpush1.xpose.msra.mxu0 0.0
  %1970 = vmatprep.subr.mxu0 0.0
  %1971 = vmatpush1.xpose.msra.mxu0 0.0
  %1972 = vmatprep.subr.mxu0 0.0
  %1973 = vmatpush1.xpose.msra.mxu0 0.0
  %1974 = vmatprep.mubr.f32.mxu0 0.0
  %1975 = vmatmul.mubr.f32.gmra.mrb[0].mxu0 %v1906
  %v1976 = vpop.f32.mrb[0].mxu0
  %v1977 = vadd.f32 0.0, %v1976
  %v1978 = vpop.f32.mrb[0].mxu0
  %1979 = vdwg.mxu0
  %v1980 = vmul.f32 %v1899, 0.25
  %v1981 = vmul.f32 %v1977, 0.25
  %v1982 = vsel %vm435, %v1980, -inf
  %1983 = vmax.xlane.f32.xlu0 %v1982
  %v1984 = vpop.xlane.xlu0 %1983
  %v1985 = vsel %vm435, %v1981, -inf
  %1986 = vmax.xlane.f32.xlu0 %v1985
  %v1987 = vpop.xlane.xlu0 %1986
  %v1988 = vsub.f32 %v1980, %v1984
  %v1989 = vsub.f32 %v1981, %v1987
  %v1990 = vmul.f32 %v1988, 1.442695
  %v1991 = vpow.pop %v1990
  %v1992 = vmul.f32 %v1989, 1.442695
  %v1993 = vpow.pop %v1992
  %v1994 = vsel %vm435, %v1991, 0.0
  %1995 = vadd.xlane.f32.xlu0 %v1994
  %v1996 = vpop.xlane.xlu0 %1995
  %v1997 = vsel %vm435, %v1993, 0.0
  %1998 = vadd.xlane.f32.xlu0 %v1997
  %v1999 = vpop.xlane.xlu0 %1998
  %v2000 = vrcp.pop %v1996
  %v2001 = vrcp.pop %v1999
  %v2002 = vmul.f32 %v1991, %v2000
  %v2003 = vmul.f32 %v1993, %v2001
  %2004 = vrot.lane.b32.xlu0 %v221, 80
  %v2005 = vpop.permute.xlu0 %2004
  %2006 = vrot.lane.b32.xlu0 %v229, 80
  %v2007 = vpop.permute.xlu0 %2006
  %2008 = vrot.lane.b32.xlu0 %v228, 80
  %v2009 = vpop.permute.xlu0 %2008
  %v2010 = vrot.slane %v2005, 2
  %v2011 = vrot.slane %v2007, 2
  %v2012 = vrot.slane %v2009, 2
  %v2013 = vcombine.low %v2010, %v2011
  %v2015 = vunpack.c.l.s4 1983009808
  %v2016 = vunpack.c.0.s8 %v2015
  %v2017 = vlaneseq
  %v2018 = vshrl.u32 %v2017, 7
  %v2019 = vsub.s32 %v2016, %v2018
  %v2020 = vrot.slane %v2013, %v2019
  %v2022 = vunpack.c.l.s4 1983009808
  %v2023 = vunpack.c.0.s8 %v2022
  %v2024 = vlaneseq
  %v2025 = vshrl.u32 %v2024, 7
  %v2026 = vsub.s32 %v2023, %v2025
  %v2027 = vrot.slane %v2012, %v2026
  %v2028 = vcombine.low %v2020, %v2027
  %v2030 = vsel %vm477, %v2002, 0
  %v2032 = vsel %vm481, %v2028, 0
  %2034 = vmatprep.subr.mxu0 0.0
  %2035 = vmatpush1.msra.mxu0 %v2032
  %2036 = vmatprep.subr.mxu0 0.0
  %2037 = vmatpush1.msra.mxu0 0.0
  %2038 = vmatprep.subr.mxu0 0.0
  %2039 = vmatpush1.msra.mxu0 0.0
  %2040 = vmatprep.subr.mxu0 0.0
  %2041 = vmatpush1.msra.mxu0 0.0
  %2042 = vmatprep.subr.mxu0 0.0
  %2043 = vmatpush1.msra.mxu0 0.0
  %2044 = vmatprep.subr.mxu0 0.0
  %2045 = vmatpush1.msra.mxu0 0.0
  %2046 = vmatprep.subr.mxu0 0.0
  %2047 = vmatpush1.msra.mxu0 0.0
  %2048 = vmatprep.subr.mxu0 0.0
  %2049 = vmatpush1.msra.mxu0 0.0
  %2050 = vmatprep.subr.mxu0 0.0
  %2051 = vmatpush1.msra.mxu0 0.0
  %2052 = vmatprep.subr.mxu0 0.0
  %2053 = vmatpush1.msra.mxu0 0.0
  %2054 = vmatprep.subr.mxu0 0.0
  %2055 = vmatpush1.msra.mxu0 0.0
  %2056 = vmatprep.subr.mxu0 0.0
  %2057 = vmatpush1.msra.mxu0 0.0
  %2058 = vmatprep.subr.mxu0 0.0
  %2059 = vmatpush1.msra.mxu0 0.0
  %2060 = vmatprep.subr.mxu0 0.0
  %2061 = vmatpush1.msra.mxu0 0.0
  %2062 = vmatprep.subr.mxu0 0.0
  %2063 = vmatpush1.msra.mxu0 0.0
  %2064 = vmatprep.subr.mxu0 0.0
  %2065 = vmatpush1.msra.mxu0 0.0
  %2066 = vmatprep.subr.mxu0 0.0
  %2067 = vmatpush1.msra.mxu0 0.0
  %2068 = vmatprep.subr.mxu0 0.0
  %2069 = vmatpush1.msra.mxu0 0.0
  %2070 = vmatprep.subr.mxu0 0.0
  %2071 = vmatpush1.msra.mxu0 0.0
  %2072 = vmatprep.subr.mxu0 0.0
  %2073 = vmatpush1.msra.mxu0 0.0
  %2074 = vmatprep.subr.mxu0 0.0
  %2075 = vmatpush1.msra.mxu0 0.0
  %2076 = vmatprep.subr.mxu0 0.0
  %2077 = vmatpush1.msra.mxu0 0.0
  %2078 = vmatprep.subr.mxu0 0.0
  %2079 = vmatpush1.msra.mxu0 0.0
  %2080 = vmatprep.subr.mxu0 0.0
  %2081 = vmatpush1.msra.mxu0 0.0
  %2082 = vmatprep.subr.mxu0 0.0
  %2083 = vmatpush1.msra.mxu0 0.0
  %2084 = vmatprep.subr.mxu0 0.0
  %2085 = vmatpush1.msra.mxu0 0.0
  %2086 = vmatprep.subr.mxu0 0.0
  %2087 = vmatpush1.msra.mxu0 0.0
  %2088 = vmatprep.subr.mxu0 0.0
  %2089 = vmatpush1.msra.mxu0 0.0
  %2090 = vmatprep.subr.mxu0 0.0
  %2091 = vmatpush1.msra.mxu0 0.0
  %2092 = vmatprep.subr.mxu0 0.0
  %2093 = vmatpush1.msra.mxu0 0.0
  %2094 = vmatprep.subr.mxu0 0.0
  %2095 = vmatpush1.msra.mxu0 0.0
  %2096 = vmatprep.subr.mxu0 0.0
  %2097 = vmatpush1.msra.mxu0 0.0
  %2098 = vmatprep.mubr.f32.mxu0 0.0
  %2099 = vmatmul.mubr.f32.gmra.mrb[0].mxu0 %v2030
  %v2100 = vpop.f32.mrb[0].mxu0
  %v2101 = vadd.f32 0.0, %v2100
  %v2102 = vpop.f32.mrb[0].mxu0
  %2103 = vdwg.mxu0
  %2104 = vrot.lane.b32.xlu0 %v230, 80
  %v2105 = vpop.permute.xlu0 %2104
  %2106 = vrot.lane.b32.xlu0 %v238, 80
  %v2107 = vpop.permute.xlu0 %2106
  %2108 = vrot.lane.b32.xlu0 %v239, 80
  %v2109 = vpop.permute.xlu0 %2108
  %v2110 = vrot.slane %v2105, 2
  %v2111 = vrot.slane %v2107, 2
  %v2112 = vrot.slane %v2109, 2
  %v2113 = vcombine.low %v2110, %v2111
  %v2115 = vunpack.c.l.s4 1983009808
  %v2116 = vunpack.c.0.s8 %v2115
  %v2117 = vlaneseq
  %v2118 = vshrl.u32 %v2117, 7
  %v2119 = vsub.s32 %v2116, %v2118
  %v2120 = vrot.slane %v2113, %v2119
  %v2122 = vunpack.c.l.s4 1983009808
  %v2123 = vunpack.c.0.s8 %v2122
  %v2124 = vlaneseq
  %v2125 = vshrl.u32 %v2124, 7
  %v2126 = vsub.s32 %v2123, %v2125
  %v2127 = vrot.slane %v2112, %v2126
  %v2128 = vcombine.low %v2120, %v2127
  %v2130 = vsel %vm477, %v2003, 0
  %v2132 = vsel %vm481, %v2128, 0
  %2134 = vmatprep.subr.mxu0 0.0
  %2135 = vmatpush1.msra.mxu0 %v2132
  %2136 = vmatprep.subr.mxu0 0.0
  %2137 = vmatpush1.msra.mxu0 0.0
  %2138 = vmatprep.subr.mxu0 0.0
  %2139 = vmatpush1.msra.mxu0 0.0
  %2140 = vmatprep.subr.mxu0 0.0
  %2141 = vmatpush1.msra.mxu0 0.0
  %2142 = vmatprep.subr.mxu0 0.0
  %2143 = vmatpush1.msra.mxu0 0.0
  %2144 = vmatprep.subr.mxu0 0.0
  %2145 = vmatpush1.msra.mxu0 0.0
  %2146 = vmatprep.subr.mxu0 0.0
  %2147 = vmatpush1.msra.mxu0 0.0
  %2148 = vmatprep.subr.mxu0 0.0
  %2149 = vmatpush1.msra.mxu0 0.0
  %2150 = vmatprep.subr.mxu0 0.0
  %2151 = vmatpush1.msra.mxu0 0.0
  %2152 = vmatprep.subr.mxu0 0.0
  %2153 = vmatpush1.msra.mxu0 0.0
  %2154 = vmatprep.subr.mxu0 0.0
  %2155 = vmatpush1.msra.mxu0 0.0
  %2156 = vmatprep.subr.mxu0 0.0
  %2157 = vmatpush1.msra.mxu0 0.0
  %2158 = vmatprep.subr.mxu0 0.0
  %2159 = vmatpush1.msra.mxu0 0.0
  %2160 = vmatprep.subr.mxu0 0.0
  %2161 = vmatpush1.msra.mxu0 0.0
  %2162 = vmatprep.subr.mxu0 0.0
  %2163 = vmatpush1.msra.mxu0 0.0
  %2164 = vmatprep.subr.mxu0 0.0
  %2165 = vmatpush1.msra.mxu0 0.0
  %2166 = vmatprep.subr.mxu0 0.0
  %2167 = vmatpush1.msra.mxu0 0.0
  %2168 = vmatprep.subr.mxu0 0.0
  %2169 = vmatpush1.msra.mxu0 0.0
  %2170 = vmatprep.subr.mxu0 0.0
  %2171 = vmatpush1.msra.mxu0 0.0
  %2172 = vmatprep.subr.mxu0 0.0
  %2173 = vmatpush1.msra.mxu0 0.0
  %2174 = vmatprep.subr.mxu0 0.0
  %2175 = vmatpush1.msra.mxu0 0.0
  %2176 = vmatprep.subr.mxu0 0.0
  %2177 = vmatpush1.msra.mxu0 0.0
  %2178 = vmatprep.subr.mxu0 0.0
  %2179 = vmatpush1.msra.mxu0 0.0
  %2180 = vmatprep.subr.mxu0 0.0
  %2181 = vmatpush1.msra.mxu0 0.0
  %2182 = vmatprep.subr.mxu0 0.0
  %2183 = vmatpush1.msra.mxu0 0.0
  %2184 = vmatprep.subr.mxu0 0.0
  %2185 = vmatpush1.msra.mxu0 0.0
  %2186 = vmatprep.subr.mxu0 0.0
  %2187 = vmatpush1.msra.mxu0 0.0
  %2188 = vmatprep.subr.mxu0 0.0
  %2189 = vmatpush1.msra.mxu0 0.0
  %2190 = vmatprep.subr.mxu0 0.0
  %2191 = vmatpush1.msra.mxu0 0.0
  %2192 = vmatprep.subr.mxu0 0.0
  %2193 = vmatpush1.msra.mxu0 0.0
  %2194 = vmatprep.subr.mxu0 0.0
  %2195 = vmatpush1.msra.mxu0 0.0
  %2196 = vmatprep.subr.mxu0 0.0
  %2197 = vmatpush1.msra.mxu0 0.0
  %2198 = vmatprep.mubr.f32.mxu0 0.0
  %2199 = vmatmul.mubr.f32.gmra.mrb[0].mxu0 %v2130
  %v2200 = vpop.f32.mrb[0].mxu0
  %v2201 = vadd.f32 0.0, %v2200
  %v2202 = vpop.f32.mrb[0].mxu0
  %2203 = vdwg.mxu0
  %v2206 = vcombine.high %v2101, %v2101
  %v2208 = vunpack.c.l.s4 1983009808
  %v2209 = vunpack.c.0.s8 %v2208
  %v2210 = vlaneseq
  %v2211 = vshrl.u32 %v2210, 7
  %v2212 = vsub.s32 %v2209, %v2211
  %v2213 = vrot.slane %v2101, %v2212
  %v2215 = vunpack.c.l.s4 1983009808
  %v2216 = vunpack.c.0.s8 %v2215
  %v2217 = vlaneseq
  %v2218 = vshrl.u32 %v2217, 7
  %v2219 = vsub.s32 %v2216, %v2218
  %v2220 = vrot.slane %v2206, %v2219
  %v2221 = vcombine.high %v2213, %v2213
  %v2222 = vcombine.high %v2201, %v2201
  %v2224 = vunpack.c.l.s4 1983009808
  %v2225 = vunpack.c.0.s8 %v2224
  %v2226 = vlaneseq
  %v2227 = vshrl.u32 %v2226, 7
  %v2228 = vsub.s32 %v2225, %v2227
  %v2229 = vrot.slane %v2201, %v2228
  %v2231 = vunpack.c.l.s4 1983009808
  %v2232 = vunpack.c.0.s8 %v2231
  %v2233 = vlaneseq
  %v2234 = vshrl.u32 %v2233, 7
  %v2235 = vsub.s32 %v2232, %v2234
  %v2236 = vrot.slane %v2222, %v2235
  %v2237 = vcombine.high %v2229, %v2229
  %v2238 = vcombine.low %v2213, %v2221
  %v2239 = vcombine.low %v2220, %v2229
  %v2241 = vunpack.c.l.s4 1983009808
  %v2242 = vunpack.c.0.s8 %v2241
  %v2243 = vlaneseq
  %v2244 = vshrl.u32 %v2243, 7
  %v2245 = vsub.s32 %v2242, %v2244
  %v2246 = vrot.slane %v2238, %v2245
  %v2248 = vunpack.c.l.s4 1983009808
  %v2249 = vunpack.c.0.s8 %v2248
  %v2250 = vlaneseq
  %v2251 = vshrl.u32 %v2250, 7
  %v2252 = vsub.s32 %v2249, %v2251
  %v2253 = vrot.slane %v2239, %v2252
  %v2254 = vcombine.low %v2246, %v2253
  %v2255 = vcombine.low %v2237, %v2236
  %v2257 = vunpack.c.l.s4 1983009808
  %v2258 = vunpack.c.0.s8 %v2257
  %v2259 = vlaneseq
  %v2260 = vshrl.u32 %v2259, 7
  %v2261 = vsub.s32 %v2258, %v2260
  %v2262 = vrot.slane %v2255, %v2261
  %v2263 = vsel %vm266, %v2254, 0
  %v2265 = vsel %vm266, %v2262, 0
  %2267 = vmatprep.subr.mxu0 0.0
  %2268 = vmatpush1.msra.mxu0 %v246
  %2269 = vmatprep.subr.mxu0 0.0
  %2270 = vmatpush1.msra.mxu0 %v247
  %2271 = vmatprep.subr.mxu0 0.0
  %2272 = vmatpush1.msra.mxu0 0.0
  %2273 = vmatprep.subr.mxu0 0.0
  %2274 = vmatpush1.msra.mxu0 0.0
  %2275 = vmatprep.subr.mxu0 0.0
  %2276 = vmatpush1.msra.mxu0 0.0
  %2277 = vmatprep.subr.mxu0 0.0
  %2278 = vmatpush1.msra.mxu0 0.0
  %2279 = vmatprep.subr.mxu0 0.0
  %2280 = vmatpush1.msra.mxu0 0.0
  %2281 = vmatprep.subr.mxu0 0.0
  %2282 = vmatpush1.msra.mxu0 0.0
  %2283 = vmatprep.subr.mxu0 0.0
  %2284 = vmatpush1.msra.mxu0 0.0
  %2285 = vmatprep.subr.mxu0 0.0
  %2286 = vmatpush1.msra.mxu0 0.0
  %2287 = vmatprep.subr.mxu0 0.0
  %2288 = vmatpush1.msra.mxu0 0.0
  %2289 = vmatprep.subr.mxu0 0.0
  %2290 = vmatpush1.msra.mxu0 0.0
  %2291 = vmatprep.subr.mxu0 0.0
  %2292 = vmatpush1.msra.mxu0 0.0
  %2293 = vmatprep.subr.mxu0 0.0
  %2294 = vmatpush1.msra.mxu0 0.0
  %2295 = vmatprep.subr.mxu0 0.0
  %2296 = vmatpush1.msra.mxu0 0.0
  %2297 = vmatprep.subr.mxu0 0.0
  %2298 = vmatpush1.msra.mxu0 0.0
  %2299 = vmatprep.subr.mxu0 0.0
  %2300 = vmatpush1.msra.mxu0 0.0
  %2301 = vmatprep.subr.mxu0 0.0
  %2302 = vmatpush1.msra.mxu0 0.0
  %2303 = vmatprep.subr.mxu0 0.0
  %2304 = vmatpush1.msra.mxu0 0.0
  %2305 = vmatprep.subr.mxu0 0.0
  %2306 = vmatpush1.msra.mxu0 0.0
  %2307 = vmatprep.subr.mxu0 0.0
  %2308 = vmatpush1.msra.mxu0 0.0
  %2309 = vmatprep.subr.mxu0 0.0
  %2310 = vmatpush1.msra.mxu0 0.0
  %2311 = vmatprep.subr.mxu0 0.0
  %2312 = vmatpush1.msra.mxu0 0.0
  %2313 = vmatprep.subr.mxu0 0.0
  %2314 = vmatpush1.msra.mxu0 0.0
  %2315 = vmatprep.subr.mxu0 0.0
  %2316 = vmatpush1.msra.mxu0 0.0
  %2317 = vmatprep.subr.mxu0 0.0
  %2318 = vmatpush1.msra.mxu0 0.0
  %2319 = vmatprep.subr.mxu0 0.0
  %2320 = vmatpush1.msra.mxu0 0.0
  %2321 = vmatprep.subr.mxu0 0.0
  %2322 = vmatpush1.msra.mxu0 0.0
  %2323 = vmatprep.subr.mxu0 0.0
  %2324 = vmatpush1.msra.mxu0 0.0
  %2325 = vmatprep.subr.mxu0 0.0
  %2326 = vmatpush1.msra.mxu0 0.0
  %2327 = vmatprep.subr.mxu0 0.0
  %2328 = vmatpush1.msra.mxu0 0.0
  %2329 = vmatprep.subr.mxu0 0.0
  %2330 = vmatpush1.msra.mxu0 0.0
  %2331 = vmatprep.mubr.f32.mxu0 0.0
  %2332 = vmatmul.mubr.f32.gmra.mrb[0].mxu0 %v2263
  %v2333 = vpop.f32.mrb[0].mxu0
  %v2334 = vadd.f32 0.0, %v2333
  %v2335 = vpop.f32.mrb[0].mxu0
  %2336 = vmatprep.mubr.f32.mxu0 0.0
  %2337 = vmatmul.mubr.f32.gmra.mrb[0].mxu0 %v2265
  %v2338 = vpop.f32.mrb[0].mxu0
  %v2339 = vadd.f32 0.0, %v2338
  %v2340 = vpop.f32.mrb[0].mxu0
  %2341 = vdwg.mxu0
  %v2342 = vadd.f32 %v1822, %v2334
  %v2343 = vadd.f32 %v1823, %v2339
  %v2344 = vld [vmem:[%s5] sm:$0x1]
  %v2346 = vlaneseq
  %v2347 = vshrl.u32 %v2346, 7
  %v2348 = vsub.s32 0, %v2347
  %v2349 = vrot.slane %v2344, %v2348
  %v2351 = vadd.f32 %v2342, %v2349
  %v2352 = vadd.f32 %v2343, %v2349
  %v2353 = vld [vmem:[%s6] sm:$0xff]
  %v2354 = vld [vmem:[%s6 + $0x8] sm:$0xff]
  %v2355 = vld [vmem:[%s6 + $0x10] sm:$0xff]
  %v2356 = vld [vmem:[%s6 + $0x18] sm:$0xff]
  %v2357 = vld [vmem:[%s6 + $0x20] sm:$0xff]
  %v2358 = vld [vmem:[%s6 + $0x28] sm:$0xff]
  %v2359 = vld [vmem:[%s6 + $0x30] sm:$0xff]
  %v2360 = vld [vmem:[%s6 + $0x38] sm:$0xff]
  %v2361 = vld [vmem:[%s7] sm:$0x1]
  %v2363 = vlaneseq
  %v2364 = vshrl.u32 %v2363, 7
  %v2365 = vsub.s32 0, %v2364
  %v2366 = vrot.slane %v2361, %v2365
  %v2369 = vsel %vm127, %v2351, 0
  %v2372 = vsel %vm127, %v2352, 0
  %2374 = vmatprep.subr.mxu0 0.0
  %2375 = vmatpush1.msra.mxu0 %v2353
  %2376 = vmatprep.subr.mxu0 0.0
  %2377 = vmatpush1.msra.mxu0 %v2354
  %2378 = vmatprep.subr.mxu0 0.0
  %2379 = vmatpush1.msra.mxu0 %v2355
  %2380 = vmatprep.subr.mxu0 0.0
  %2381 = vmatpush1.msra.mxu0 %v2356
  %2382 = vmatprep.subr.mxu0 0.0
  %2383 = vmatpush1.msra.mxu0 %v2357
  %2384 = vmatprep.subr.mxu0 0.0
  %2385 = vmatpush1.msra.mxu0 %v2358
  %2386 = vmatprep.subr.mxu0 0.0
  %2387 = vmatpush1.msra.mxu0 %v2359
  %2388 = vmatprep.subr.mxu0 0.0
  %2389 = vmatpush1.msra.mxu0 %v2360
  %2390 = vmatprep.subr.mxu0 0.0
  %2391 = vmatpush1.msra.mxu0 0.0
  %2392 = vmatprep.subr.mxu0 0.0
  %2393 = vmatpush1.msra.mxu0 0.0
  %2394 = vmatprep.subr.mxu0 0.0
  %2395 = vmatpush1.msra.mxu0 0.0
  %2396 = vmatprep.subr.mxu0 0.0
  %2397 = vmatpush1.msra.mxu0 0.0
  %2398 = vmatprep.subr.mxu0 0.0
  %2399 = vmatpush1.msra.mxu0 0.0
  %2400 = vmatprep.subr.mxu0 0.0
  %2401 = vmatpush1.msra.mxu0 0.0
  %2402 = vmatprep.subr.mxu0 0.0
  %2403 = vmatpush1.msra.mxu0 0.0
  %2404 = vmatprep.subr.mxu0 0.0
  %2405 = vmatpush1.msra.mxu0 0.0
  %2406 = vmatprep.subr.mxu0 0.0
  %2407 = vmatpush1.msra.mxu0 0.0
  %2408 = vmatprep.subr.mxu0 0.0
  %2409 = vmatpush1.msra.mxu0 0.0
  %2410 = vmatprep.subr.mxu0 0.0
  %2411 = vmatpush1.msra.mxu0 0.0
  %2412 = vmatprep.subr.mxu0 0.0
  %2413 = vmatpush1.msra.mxu0 0.0
  %2414 = vmatprep.subr.mxu0 0.0
  %2415 = vmatpush1.msra.mxu0 0.0
  %2416 = vmatprep.subr.mxu0 0.0
  %2417 = vmatpush1.msra.mxu0 0.0
  %2418 = vmatprep.subr.mxu0 0.0
  %2419 = vmatpush1.msra.mxu0 0.0
  %2420 = vmatprep.subr.mxu0 0.0
  %2421 = vmatpush1.msra.mxu0 0.0
  %2422 = vmatprep.subr.mxu0 0.0
  %2423 = vmatpush1.msra.mxu0 0.0
  %2424 = vmatprep.subr.mxu0 0.0
  %2425 = vmatpush1.msra.mxu0 0.0
  %2426 = vmatprep.subr.mxu0 0.0
  %2427 = vmatpush1.msra.mxu0 0.0
  %2428 = vmatprep.subr.mxu0 0.0
  %2429 = vmatpush1.msra.mxu0 0.0
  %2430 = vmatprep.subr.mxu0 0.0
  %2431 = vmatpush1.msra.mxu0 0.0
  %2432 = vmatprep.subr.mxu0 0.0
  %2433 = vmatpush1.msra.mxu0 0.0
  %2434 = vmatprep.subr.mxu0 0.0
  %2435 = vmatpush1.msra.mxu0 0.0
  %2436 = vmatprep.subr.mxu0 0.0
  %2437 = vmatpush1.msra.mxu0 0.0
  %2438 = vmatprep.mubr.f32.mxu0 0.0
  %2439 = vmatmul.mubr.f32.gmra.mrb[0].mxu0 %v2369
  %v2440 = vpop.f32.mrb[0].mxu0
  %v2441 = vadd.f32 %v2366, %v2440
  %v2442 = vpop.f32.mrb[0].mxu0
  %2443 = vmatprep.mubr.f32.mxu0 0.0
  %2444 = vmatmul.mubr.f32.gmra.mrb[0].mxu0 %v2372
  %v2445 = vpop.f32.mrb[0].mxu0
  %v2446 = vadd.f32 %v2366, %v2445
  %v2447 = vpop.f32.mrb[0].mxu0
  %2448 = vdwg.mxu0
  %v2449 = vmax.f32 %v2441, 0.0
  %v2450 = vmax.f32 %v2446, 0.0
  %v2451 = vld [vmem:[%s8] sm:$0xff]
  %v2452 = vld [vmem:[%s8 + $0x8] sm:$0xff]
  %v2453 = vld [vmem:[%s8 + $0x10] sm:$0xff]
  %v2454 = vld [vmem:[%s8 + $0x18] sm:$0xff]
  %v2455 = vld [vmem:[%s9] sm:$0x1]
  %v2457 = vlaneseq
  %v2458 = vshrl.u32 %v2457, 7
  %v2459 = vsub.s32 0, %v2458
  %v2460 = vrot.slane %v2455, %v2459
  %vm2462 = vcmask 261120
  %v2464 = vsel %vm2462, %v2449, 0
  %v2467 = vsel %vm2462, %v2450, 0
  %2469 = vmatprep.subr.mxu0 0.0
  %2470 = vmatpush1.msra.mxu0 %v2451
  %2471 = vmatprep.subr.mxu0 0.0
  %2472 = vmatpush1.msra.mxu0 %v2452
  %2473 = vmatprep.subr.mxu0 0.0
  %2474 = vmatpush1.msra.mxu0 %v2453
  %2475 = vmatprep.subr.mxu0 0.0
  %2476 = vmatpush1.msra.mxu0 %v2454
  %2477 = vmatprep.subr.mxu0 0.0
  %2478 = vmatpush1.msra.mxu0 0.0
  %2479 = vmatprep.subr.mxu0 0.0
  %2480 = vmatpush1.msra.mxu0 0.0
  %2481 = vmatprep.subr.mxu0 0.0
  %2482 = vmatpush1.msra.mxu0 0.0
  %2483 = vmatprep.subr.mxu0 0.0
  %2484 = vmatpush1.msra.mxu0 0.0
  %2485 = vmatprep.subr.mxu0 0.0
  %2486 = vmatpush1.msra.mxu0 0.0
  %2487 = vmatprep.subr.mxu0 0.0
  %2488 = vmatpush1.msra.mxu0 0.0
  %2489 = vmatprep.subr.mxu0 0.0
  %2490 = vmatpush1.msra.mxu0 0.0
  %2491 = vmatprep.subr.mxu0 0.0
  %2492 = vmatpush1.msra.mxu0 0.0
  %2493 = vmatprep.subr.mxu0 0.0
  %2494 = vmatpush1.msra.mxu0 0.0
  %2495 = vmatprep.subr.mxu0 0.0
  %2496 = vmatpush1.msra.mxu0 0.0
  %2497 = vmatprep.subr.mxu0 0.0
  %2498 = vmatpush1.msra.mxu0 0.0
  %2499 = vmatprep.subr.mxu0 0.0
  %2500 = vmatpush1.msra.mxu0 0.0
  %2501 = vmatprep.subr.mxu0 0.0
  %2502 = vmatpush1.msra.mxu0 0.0
  %2503 = vmatprep.subr.mxu0 0.0
  %2504 = vmatpush1.msra.mxu0 0.0
  %2505 = vmatprep.subr.mxu0 0.0
  %2506 = vmatpush1.msra.mxu0 0.0
  %2507 = vmatprep.subr.mxu0 0.0
  %2508 = vmatpush1.msra.mxu0 0.0
  %2509 = vmatprep.subr.mxu0 0.0
  %2510 = vmatpush1.msra.mxu0 0.0
  %2511 = vmatprep.subr.mxu0 0.0
  %2512 = vmatpush1.msra.mxu0 0.0
  %2513 = vmatprep.subr.mxu0 0.0
  %2514 = vmatpush1.msra.mxu0 0.0
  %2515 = vmatprep.subr.mxu0 0.0
  %2516 = vmatpush1.msra.mxu0 0.0
  %2517 = vmatprep.subr.mxu0 0.0
  %2518 = vmatpush1.msra.mxu0 0.0
  %2519 = vmatprep.subr.mxu0 0.0
  %2520 = vmatpush1.msra.mxu0 0.0
  %2521 = vmatprep.subr.mxu0 0.0
  %2522 = vmatpush1.msra.mxu0 0.0
  %2523 = vmatprep.subr.mxu0 0.0
  %2524 = vmatpush1.msra.mxu0 0.0
  %2525 = vmatprep.subr.mxu0 0.0
  %2526 = vmatpush1.msra.mxu0 0.0
  %2527 = vmatprep.subr.mxu0 0.0
  %2528 = vmatpush1.msra.mxu0 0.0
  %2529 = vmatprep.subr.mxu0 0.0
  %2530 = vmatpush1.msra.mxu0 0.0
  %2531 = vmatprep.subr.mxu0 0.0
  %2532 = vmatpush1.msra.mxu0 0.0
  %2533 = vmatprep.mubr.f32.mxu0 0.0
  %2534 = vmatmul.mubr.f32.gmra.mrb[0].mxu0 %v2464
  %v2535 = vpop.f32.mrb[0].mxu0
  %v2536 = vadd.f32 %v2460, %v2535
  %v2537 = vpop.f32.mrb[0].mxu0
  %2538 = vmatprep.mubr.f32.mxu0 0.0
  %2539 = vmatmul.mubr.f32.gmra.mrb[0].mxu0 %v2467
  %v2540 = vpop.f32.mrb[0].mxu0
  %v2541 = vadd.f32 %v2460, %v2540
  %v2542 = vpop.f32.mrb[0].mxu0
  %2543 = vdwg.mxu0
  %vm2544 = vcmask 56320
  %v2545 = vsel %vm2544, %v2536, -inf
  %2546 = vmax.xlane.f32.xlu0 %v2545
  %v2547 = vpop.xlane.xlu0 %2546
  %vm2548 = vcmask 52224
  %v2549 = vsel %vm2548, %v2541, -inf
  %2550 = vmax.xlane.f32.xlu0 %v2549
  %v2551 = vpop.xlane.xlu0 %2550
  %v2552 = vsub.f32 %v2536, %v2547
  %v2553 = vsub.f32 %v2541, %v2551
  %v2554 = vmul.f32 %v2552, 1.442695
  %v2555 = vpow.pop %v2554
  %v2556 = vmul.f32 %v2553, 1.442695
  %v2557 = vpow.pop %v2556
  %v2558 = vsel %vm2544, %v2555, 0.0
  %2559 = vadd.xlane.f32.xlu0 %v2558
  %v2560 = vpop.xlane.xlu0 %2559
  %v2561 = vsel %vm2548, %v2557, 0.0
  %2562 = vadd.xlane.f32.xlu0 %v2561
  %v2563 = vpop.xlane.xlu0 %2562
  %v2564 = vlog2.pop %v2560
  %v2565 = vmul.f32 %v2564, 0.6931472
  %v2566 = vlog2.pop %v2563
  %v2567 = vmul.f32 %v2566, 0.6931472
  %v2568 = vadd.f32 %v2565, %v2547
  %v2569 = vadd.f32 %v2567, %v2551
  %v2570 = vsub.f32 %v2536, %v2568
  %v2571 = vsub.f32 %v2541, %v2569
  %2572 = vst.msk [vmem:[%s10] sm:$0xff] %vm2544, %v2570
  %2573 = vst.msk [vmem:[%s10 + $0x8] sm:$0xf] %vm2548, %v2571
  // Predicated region
  $region42: #{bimodel_forward.3} parent=0 // pred_check
    _
  $region43: #{bimodel_forward.3} parent=0 // pred_check_branch
    %2575 = sbr.rel (0) target = $region45
  $region44: #{bimodel_forward.3} parent=0 // pred_region
    _
  $region45: #{bimodel_forward.3} parent=0 // pred_fallthru
    _
  // Predicated region
  $region46: #{bimodel_forward.3} parent=0 // pred_check
    _
  $region47: #{bimodel_forward.3} parent=0 // pred_check_branch
    %2577 = sbr.rel (0) target = $region49
  $region48: #{bimodel_forward.3} parent=0 // pred_region
    _
  $region49: #{bimodel_forward.3} parent=0 // pred_fallthru
    _

// kernel: bimodel_forward.2
$region0: #{bimodel_forward.2}
  #allocation0 [shape = 'u32[]', space=smem, size = 0x4, offset = 0x4, fixed_abs, tag = 'smem constant byte address 0x4 - core index']
  #allocation1 [shape = 'u32[144,128]{1,0:T(1,128)}', space=vmem, size = 0x12000, scoped, tag = 'internal scratch']
  #allocation2 [shape = 'f32[6,2,32]{2,1,0:T(2,128)}', space=vmem, size = 0x1800, scoped, tag = 'scratch operand']
  #allocation3 [shape = 'f32[6,2,96]{2,1,0:T(2,128)}', space=vmem, size = 0x1800, scoped, tag = 'scratch operand']
  #allocation4 [shape = 'f32[6,2,96]{2,1,0:T(2,128)}', space=vmem, size = 0x1800, scoped, tag = 'scratch operand']
  #allocation5 [shape = 'f32[2,32]{1,0:T(2,128)}', space=vmem, size = 0x400, scoped, tag = 'scratch operand']
  #allocation6 [shape = 'f32[2,2,32]{2,1,0:T(2,128)}', space=vmem, size = 0x800, scoped, tag = 'scratch operand']
  #allocation7 [shape = 'f32[2,32]{1,0:T(2,128)}', space=vmem, size = 0x400, scoped, tag = 'scratch operand']
  #allocation8 [shape = 'f32[2,32]{1,0:T(2,128)}', space=vmem, size = 0x400, scoped, tag = 'scratch operand']
  %s0 = inlined_call_operand.vmem [shape: f32[2,6,2,22], index: 0, kind: input, shape index: {}]
  %s1 = inlined_call_operand.vmem [shape: f32[2,6,2,2], index: 1, kind: input, shape index: {}]
  %s2 = inlined_call_operand.vmem [shape: f32[6,32], index: 2, kind: input, shape index: {}]
  %s3 = inlined_call_operand.vmem [shape: f32[2,22,32], index: 3, kind: input, shape index: {}]
  %s4 = inlined_call_operand.vmem [shape: f32[2,1,32], index: 4, kind: input, shape index: {}]
  %s5 = inlined_call_operand.vmem [shape: f32[2,32,96], index: 5, kind: input, shape index: {}]
  %s6 = inlined_call_operand.vmem [shape: f32[2,32,96], index: 6, kind: input, shape index: {}]
  %s7 = inlined_call_operand.vmem [shape: f32[2,32,96], index: 7, kind: input, shape index: {}]
  %s8 = inlined_call_operand.vmem [shape: f32[2,1,96], index: 8, kind: input, shape index: {}]
  %s9 = inlined_call_operand.vmem [shape: f32[2,1,96], index: 9, kind: input, shape index: {}]
  %s10 = inlined_call_operand.vmem [shape: f32[2,32,96], index: 10, kind: input, shape index: {}]
  %s11 = inlined_call_operand.vmem [shape: f32[2,32,96], index: 11, kind: input, shape index: {}]
  %s12 = inlined_call_operand.vmem [shape: f32[2,32,96], index: 12, kind: input, shape index: {}]
  %s13 = inlined_call_operand.vmem [shape: f32[2,1,96], index: 13, kind: input, shape index: {}]
  %s14 = inlined_call_operand.vmem [shape: f32[2,1,96], index: 14, kind: input, shape index: {}]
  %s15 = inlined_call_operand.vmem [shape: f32[2,32,96], index: 15, kind: input, shape index: {}]
  %s16 = inlined_call_operand.vmem [shape: f32[2,32,96], index: 16, kind: input, shape index: {}]
  %s17 = inlined_call_operand.vmem [shape: f32[2,1,96], index: 17, kind: input, shape index: {}]
  %s18 = inlined_call_operand.vmem [shape: f32[2,1,96], index: 18, kind: input, shape index: {}]
  %s19 = inlined_call_operand.vmem [shape: f32[2,32,4], index: 19, kind: input, shape index: {}]
  %s20 = inlined_call_operand.vmem [shape: f32[2,2,16], index: 20, kind: input, shape index: {}]
  %s21 = inlined_call_operand.vmem [shape: f32[2,1,2], index: 21, kind: input, shape index: {}]
  %s22 = inlined_call_operand.vmem [shape: f32[2,64,32], index: 22, kind: input, shape index: {}]
  %s23 = inlined_call_operand.vmem [shape: f32[2,1,32], index: 23, kind: input, shape index: {}]
  %s24 = inlined_call_operand.vmem [shape: f32[2,6,2,32], index: 24, kind: output, shape index: {}]
  %s25 = sld [smem:[#allocation0]]
  $region140: #{bimodel_forward.2} parent=0
    _
  %s27 = ssub.s32 1, %s25
  %s28 = scalar_select 0, %s27, %s25
  loop: start=0, step=1, limit=4
  $region2: #{bimodel_forward.2} parent=0 // loop_pre_header
    _
  $region3: #{bimodel_forward.2} parent=0 // loop_header
    %s30 = sphi 0, %s34
    %p31 = scmp.ge.s32.totalorder %s30, 4
    %s40 = sphi 0, %s42
    %s43 = sphi 0, %s40
    %s44 = sphi 0, %s43
    %s60 = sphi 0, %s44
    %s66 = sphi 0, %s68
    %s69 = sphi 0, %s66
    %s70 = sphi 0, %s69
    %s86 = sphi 0, %s70
    %s90 = sphi 0, %s90
    %s92 = sphi 0, %s90
    %s93 = sphi 0, %s92
    %s107 = sphi 0, %s93
    %s113 = sphi 0, %s115
    %s116 = sphi 0, %s113
    %s117 = sphi 0, %s116
    %s133 = sphi 0, %s117
    %s139 = sphi 0, %s141
    %s142 = sphi 0, %s139
    %s143 = sphi 0, %s142
    %s159 = sphi 0, %s143
    %s165 = sphi 0, %s167
    %s168 = sphi 0, %s165
    %s169 = sphi 0, %s168
    %s185 = sphi 0, %s169
    %s191 = sphi 0, %s193
    %s194 = sphi 0, %s191
    %s195 = sphi 0, %s194
    %s211 = sphi 0, %s195
    %s217 = sphi 0, %s219
    %s220 = sphi 0, %s217
    %s221 = sphi 0, %s220
    %s237 = sphi 0, %s221
    %s243 = sphi 0, %s245
    %s246 = sphi 0, %s243
    %s247 = sphi 0, %s246
    %s263 = sphi 0, %s247
    %s269 = sphi 0, %s271
    %s272 = sphi 0, %s269
    %s273 = sphi 0, %s272
    %s289 = sphi 0, %s273
    %s295 = sphi 0, %s297
    %s298 = sphi 0, %s295
    %s299 = sphi 0, %s298
    %s315 = sphi 0, %s299
    %s321 = sphi 0, %s323
    %s324 = sphi 0, %s321
    %s325 = sphi 0, %s324
    %s341 = sphi 0, %s325
    %s347 = sphi 0, %s349
    %s350 = sphi 0, %s347
    %s351 = sphi 0, %s350
    %s367 = sphi 0, %s351
    %s373 = sphi 0, %s375
    %s376 = sphi 0, %s373
    %s377 = sphi 0, %s376
    %s393 = sphi 0, %s377
    %s399 = sphi 0, %s401
    %s402 = sphi 0, %s399
    %s403 = sphi 0, %s402
    %s419 = sphi 0, %s403
    %s425 = sphi 0, %s427
    %s428 = sphi 0, %s425
    %s429 = sphi 0, %s428
    %s445 = sphi 0, %s429
    %s451 = sphi 0, %s453
    %s454 = sphi 0, %s451
    %s455 = sphi 0, %s454
    %s471 = sphi 0, %s455
    %s477 = sphi 0, %s479
    %s480 = sphi 0, %s477
    %s481 = sphi 0, %s480
    %s497 = sphi 0, %s481
    %s503 = sphi 0, %s505
    %s506 = sphi 0, %s503
    %s507 = sphi 0, %s506
    %s523 = sphi 0, %s507
    %s529 = sphi 0, %s531
    %s532 = sphi 0, %s529
    %s533 = sphi 0, %s532
    %s549 = sphi 0, %s533
    %s555 = sphi 0, %s557
    %s558 = sphi 0, %s555
    %s559 = sphi 0, %s558
    %s575 = sphi 0, %s559
    %s581 = sphi 0, %s583
    %s584 = sphi 0, %s581
    %s585 = sphi 0, %s584
    %s601 = sphi 0, %s585
    %s607 = sphi 0, %s609
    %s610 = sphi 0, %s607
    %s611 = sphi 0, %s610
    %s627 = sphi 0, %s611
    %s633 = sphi 0, %s635
    %s636 = sphi 0, %s633
    %s637 = sphi 0, %s636
    %s653 = sphi 0, %s637
    %s659 = sphi 0, %s661
    %s662 = sphi 0, %s659
    %s663 = sphi 0, %s662
    %s679 = sphi 0, %s663
  $region4: #{bimodel_forward.2} parent=0 // loop_header_branch
    %33 = sbr.rel (%p31) target = $region8
  $region5: #{bimodel_forward.2} parent=0 // loop_body
    %s35 = ssub.s32 %s30, 1
    %s36 = ssub.s32 %s30, 2
    %s37 = sadd.s32 %s30, 1
    %s38 = ssub.s32 %s30, %s37
    %p39 = scmp.eq.s32.totalorder %s38, 0
    %s41 = sadd.s32 %s40, 1
    %s42 = scalar_select %p39, %s40, %s41
    %p45 = pneg %p39
    %p46 = scmp.eq.s32.totalorder %s30, 1
    %p47 = por %p45, %p46
    %p48 = scmp.ne.s32.totalorder %s40, %s43
    %p49 = scmp.eq.s32.totalorder %s30, 0
    %p50 = por %p48, %p49
    %p51 = scmp.ne.s32.totalorder %s40, %s43
    %p52 = scmp.eq.s32.totalorder %s35, 1
    %p53 = por %p51, %p52
    %p54 = scmp.ne.s32.totalorder %s43, %s44
    %p55 = scmp.eq.s32.totalorder %s35, 0
    %p56 = por %p54, %p55
    %p57 = scmp.ne.s32.totalorder %s43, %s44
    %p58 = scmp.eq.s32.totalorder %s36, 1
    %p59 = por %p57, %p58
    %p61 = scmp.ne.s32.totalorder %s44, %s60
    %p62 = scmp.eq.s32.totalorder %s36, 0
    %p63 = por %p61, %p62
    %s64 = ssub.s32 %s30, %s37
    %p65 = scmp.eq.s32.totalorder %s64, 0
    %s67 = sadd.s32 %s66, 1
    %s68 = scalar_select %p65, %s66, %s67
    %p71 = pneg %p65
    %p72 = scmp.eq.s32.totalorder %s30, 1
    %p73 = por %p71, %p72
    %p74 = scmp.ne.s32.totalorder %s66, %s69
    %p75 = scmp.eq.s32.totalorder %s30, 0
    %p76 = por %p74, %p75
    %p77 = scmp.ne.s32.totalorder %s66, %s69
    %p78 = scmp.eq.s32.totalorder %s35, 1
    %p79 = por %p77, %p78
    %p80 = scmp.ne.s32.totalorder %s69, %s70
    %p81 = scmp.eq.s32.totalorder %s35, 0
    %p82 = por %p80, %p81
    %p83 = scmp.ne.s32.totalorder %s69, %s70
    %p84 = scmp.eq.s32.totalorder %s36, 1
    %p85 = por %p83, %p84
    %p87 = scmp.ne.s32.totalorder %s70, %s86
    %p88 = scmp.eq.s32.totalorder %s36, 0
    %p89 = por %p87, %p88
    %s91 = sadd.s32 %s90, 1
    %p94 = scmp.eq.s32.totalorder %s30, 1
    %p95 = scmp.ne.s32.totalorder %s90, %s92
    %p96 = scmp.eq.s32.totalorder %s30, 0
    %p97 = por %p95, %p96
    %p98 = scmp.ne.s32.totalorder %s90, %s92
    %p99 = scmp.eq.s32.totalorder %s35, 1
    %p100 = por %p98, %p99
    %p101 = scmp.ne.s32.totalorder %s92, %s93
    %p102 = scmp.eq.s32.totalorder %s35, 0
    %p103 = por %p101, %p102
    %p104 = scmp.ne.s32.totalorder %s92, %s93
    %p105 = scmp.eq.s32.totalorder %s36, 1
    %p106 = por %p104, %p105
    %p108 = scmp.ne.s32.totalorder %s93, %s107
    %p109 = scmp.eq.s32.totalorder %s36, 0
    %p110 = por %p108, %p109
    %s111 = ssub.s32 %s30, %s37
    %p112 = scmp.eq.s32.totalorder %s111, 0
    %s114 = sadd.s32 %s113, 1
    %s115 = scalar_select %p112, %s113, %s114
    %p118 = pneg %p112
    %p119 = scmp.eq.s32.totalorder %s30, 1
    %p120 = por %p118, %p119
    %p121 = scmp.ne.s32.totalorder %s113, %s116
    %p122 = scmp.eq.s32.totalorder %s30, 0
    %p123 = por %p121, %p122
    %p124 = scmp.ne.s32.totalorder %s113, %s116
    %p125 = scmp.eq.s32.totalorder %s35, 1
    %p126 = por %p124, %p125
    %p127 = scmp.ne.s32.totalorder %s116, %s117
    %p128 = scmp.eq.s32.totalorder %s35, 0
    %p129 = por %p127, %p128
    %p130 = scmp.ne.s32.totalorder %s116, %s117
    %p131 = scmp.eq.s32.totalorder %s36, 1
    %p132 = por %p130, %p131
    %p134 = scmp.ne.s32.totalorder %s117, %s133
    %p135 = scmp.eq.s32.totalorder %s36, 0
    %p136 = por %p134, %p135
    %s137 = ssub.s32 %s30, %s37
    %p138 = scmp.eq.s32.totalorder %s137, 0
    %s140 = sadd.s32 %s139, 1
    %s141 = scalar_select %p138, %s139, %s140
    %p144 = pneg %p138
    %p145 = scmp.eq.s32.totalorder %s30, 1
    %p146 = por %p144, %p145
    %p147 = scmp.ne.s32.totalorder %s139, %s142
    %p148 = scmp.eq.s32.totalorder %s30, 0
    %p149 = por %p147, %p148
    %p150 = scmp.ne.s32.totalorder %s139, %s142
    %p151 = scmp.eq.s32.totalorder %s35, 1
    %p152 = por %p150, %p151
    %p153 = scmp.ne.s32.totalorder %s142, %s143
    %p154 = scmp.eq.s32.totalorder %s35, 0
    %p155 = por %p153, %p154
    %p156 = scmp.ne.s32.totalorder %s142, %s143
    %p157 = scmp.eq.s32.totalorder %s36, 1
    %p158 = por %p156, %p157
    %p160 = scmp.ne.s32.totalorder %s143, %s159
    %p161 = scmp.eq.s32.totalorder %s36, 0
    %p162 = por %p160, %p161
    %s163 = ssub.s32 %s30, %s37
    %p164 = scmp.eq.s32.totalorder %s163, 0
    %s166 = sadd.s32 %s165, 1
    %s167 = scalar_select %p164, %s165, %s166
    %p170 = pneg %p164
    %p171 = scmp.eq.s32.totalorder %s30, 1
    %p172 = por %p170, %p171
    %p173 = scmp.ne.s32.totalorder %s165, %s168
    %p174 = scmp.eq.s32.totalorder %s30, 0
    %p175 = por %p173, %p174
    %p176 = scmp.ne.s32.totalorder %s165, %s168
    %p177 = scmp.eq.s32.totalorder %s35, 1
    %p178 = por %p176, %p177
    %p179 = scmp.ne.s32.totalorder %s168, %s169
    %p180 = scmp.eq.s32.totalorder %s35, 0
    %p181 = por %p179, %p180
    %p182 = scmp.ne.s32.totalorder %s168, %s169
    %p183 = scmp.eq.s32.totalorder %s36, 1
    %p184 = por %p182, %p183
    %p186 = scmp.ne.s32.totalorder %s169, %s185
    %p187 = scmp.eq.s32.totalorder %s36, 0
    %p188 = por %p186, %p187
    %s189 = ssub.s32 %s30, %s37
    %p190 = scmp.eq.s32.totalorder %s189, 0
    %s192 = sadd.s32 %s191, 1
    %s193 = scalar_select %p190, %s191, %s192
    %p196 = pneg %p190
    %p197 = scmp.eq.s32.totalorder %s30, 1
    %p198 = por %p196, %p197
    %p199 = scmp.ne.s32.totalorder %s191, %s194
    %p200 = scmp.eq.s32.totalorder %s30, 0
    %p201 = por %p199, %p200
    %p202 = scmp.ne.s32.totalorder %s191, %s194
    %p203 = scmp.eq.s32.totalorder %s35, 1
    %p204 = por %p202, %p203
    %p205 = scmp.ne.s32.totalorder %s194, %s195
    %p206 = scmp.eq.s32.totalorder %s35, 0
    %p207 = por %p205, %p206
    %p208 = scmp.ne.s32.totalorder %s194, %s195
    %p209 = scmp.eq.s32.totalorder %s36, 1
    %p210 = por %p208, %p209
    %p212 = scmp.ne.s32.totalorder %s195, %s211
    %p213 = scmp.eq.s32.totalorder %s36, 0
    %p214 = por %p212, %p213
    %s215 = ssub.s32 %s30, %s37
    %p216 = scmp.eq.s32.totalorder %s215, 0
    %s218 = sadd.s32 %s217, 1
    %s219 = scalar_select %p216, %s217, %s218
    %p222 = pneg %p216
    %p223 = scmp.eq.s32.totalorder %s30, 1
    %p224 = por %p222, %p223
    %p225 = scmp.ne.s32.totalorder %s217, %s220
    %p226 = scmp.eq.s32.totalorder %s30, 0
    %p227 = por %p225, %p226
    %p228 = scmp.ne.s32.totalorder %s217, %s220
    %p229 = scmp.eq.s32.totalorder %s35, 1
    %p230 = por %p228, %p229
    %p231 = scmp.ne.s32.totalorder %s220, %s221
    %p232 = scmp.eq.s32.totalorder %s35, 0
    %p233 = por %p231, %p232
    %p234 = scmp.ne.s32.totalorder %s220, %s221
    %p235 = scmp.eq.s32.totalorder %s36, 1
    %p236 = por %p234, %p235
    %p238 = scmp.ne.s32.totalorder %s221, %s237
    %p239 = scmp.eq.s32.totalorder %s36, 0
    %p240 = por %p238, %p239
    %s241 = ssub.s32 %s30, %s37
    %p242 = scmp.eq.s32.totalorder %s241, 0
    %s244 = sadd.s32 %s243, 1
    %s245 = scalar_select %p242, %s243, %s244
    %p248 = pneg %p242
    %p249 = scmp.eq.s32.totalorder %s30, 1
    %p250 = por %p248, %p249
    %p251 = scmp.ne.s32.totalorder %s243, %s246
    %p252 = scmp.eq.s32.totalorder %s30, 0
    %p253 = por %p251, %p252
    %p254 = scmp.ne.s32.totalorder %s243, %s246
    %p255 = scmp.eq.s32.totalorder %s35, 1
    %p256 = por %p254, %p255
    %p257 = scmp.ne.s32.totalorder %s246, %s247
    %p258 = scmp.eq.s32.totalorder %s35, 0
    %p259 = por %p257, %p258
    %p260 = scmp.ne.s32.totalorder %s246, %s247
    %p261 = scmp.eq.s32.totalorder %s36, 1
    %p262 = por %p260, %p261
    %p264 = scmp.ne.s32.totalorder %s247, %s263
    %p265 = scmp.eq.s32.totalorder %s36, 0
    %p266 = por %p264, %p265
    %s267 = ssub.s32 %s30, %s37
    %p268 = scmp.eq.s32.totalorder %s267, 0
    %s270 = sadd.s32 %s269, 1
    %s271 = scalar_select %p268, %s269, %s270
    %p274 = pneg %p268
    %p275 = scmp.eq.s32.totalorder %s30, 1
    %p276 = por %p274, %p275
    %p277 = scmp.ne.s32.totalorder %s269, %s272
    %p278 = scmp.eq.s32.totalorder %s30, 0
    %p279 = por %p277, %p278
    %p280 = scmp.ne.s32.totalorder %s269, %s272
    %p281 = scmp.eq.s32.totalorder %s35, 1
    %p282 = por %p280, %p281
    %p283 = scmp.ne.s32.totalorder %s272, %s273
    %p284 = scmp.eq.s32.totalorder %s35, 0
    %p285 = por %p283, %p284
    %p286 = scmp.ne.s32.totalorder %s272, %s273
    %p287 = scmp.eq.s32.totalorder %s36, 1
    %p288 = por %p286, %p287
    %p290 = scmp.ne.s32.totalorder %s273, %s289
    %p291 = scmp.eq.s32.totalorder %s36, 0
    %p292 = por %p290, %p291
    %s293 = ssub.s32 %s30, %s37
    %p294 = scmp.eq.s32.totalorder %s293, 0
    %s296 = sadd.s32 %s295, 1
    %s297 = scalar_select %p294, %s295, %s296
    %p300 = pneg %p294
    %p301 = scmp.eq.s32.totalorder %s30, 1
    %p302 = por %p300, %p301
    %p303 = scmp.ne.s32.totalorder %s295, %s298
    %p304 = scmp.eq.s32.totalorder %s30, 0
    %p305 = por %p303, %p304
    %p306 = scmp.ne.s32.totalorder %s295, %s298
    %p307 = scmp.eq.s32.totalorder %s35, 1
    %p308 = por %p306, %p307
    %p309 = scmp.ne.s32.totalorder %s298, %s299
    %p310 = scmp.eq.s32.totalorder %s35, 0
    %p311 = por %p309, %p310
    %p312 = scmp.ne.s32.totalorder %s298, %s299
    %p313 = scmp.eq.s32.totalorder %s36, 1
    %p314 = por %p312, %p313
    %p316 = scmp.ne.s32.totalorder %s299, %s315
    %p317 = scmp.eq.s32.totalorder %s36, 0
    %p318 = por %p316, %p317
    %s319 = ssub.s32 %s30, %s37
    %p320 = scmp.eq.s32.totalorder %s319, 0
    %s322 = sadd.s32 %s321, 1
    %s323 = scalar_select %p320, %s321, %s322
    %p326 = pneg %p320
    %p327 = scmp.eq.s32.totalorder %s30, 1
    %p328 = por %p326, %p327
    %p329 = scmp.ne.s32.totalorder %s321, %s324
    %p330 = scmp.eq.s32.totalorder %s30, 0
    %p331 = por %p329, %p330
    %p332 = scmp.ne.s32.totalorder %s321, %s324
    %p333 = scmp.eq.s32.totalorder %s35, 1
    %p334 = por %p332, %p333
    %p335 = scmp.ne.s32.totalorder %s324, %s325
    %p336 = scmp.eq.s32.totalorder %s35, 0
    %p337 = por %p335, %p336
    %p338 = scmp.ne.s32.totalorder %s324, %s325
    %p339 = scmp.eq.s32.totalorder %s36, 1
    %p340 = por %p338, %p339
    %p342 = scmp.ne.s32.totalorder %s325, %s341
    %p343 = scmp.eq.s32.totalorder %s36, 0
    %p344 = por %p342, %p343
    %s345 = ssub.s32 %s30, %s37
    %p346 = scmp.eq.s32.totalorder %s345, 0
    %s348 = sadd.s32 %s347, 1
    %s349 = scalar_select %p346, %s347, %s348
    %p352 = pneg %p346
    %p353 = scmp.eq.s32.totalorder %s30, 1
    %p354 = por %p352, %p353
    %p355 = scmp.ne.s32.totalorder %s347, %s350
    %p356 = scmp.eq.s32.totalorder %s30, 0
    %p357 = por %p355, %p356
    %p358 = scmp.ne.s32.totalorder %s347, %s350
    %p359 = scmp.eq.s32.totalorder %s35, 1
    %p360 = por %p358, %p359
    %p361 = scmp.ne.s32.totalorder %s350, %s351
    %p362 = scmp.eq.s32.totalorder %s35, 0
    %p363 = por %p361, %p362
    %p364 = scmp.ne.s32.totalorder %s350, %s351
    %p365 = scmp.eq.s32.totalorder %s36, 1
    %p366 = por %p364, %p365
    %p368 = scmp.ne.s32.totalorder %s351, %s367
    %p369 = scmp.eq.s32.totalorder %s36, 0
    %p370 = por %p368, %p369
    %s371 = ssub.s32 %s30, %s37
    %p372 = scmp.eq.s32.totalorder %s371, 0
    %s374 = sadd.s32 %s373, 1
    %s375 = scalar_select %p372, %s373, %s374
    %p378 = pneg %p372
    %p379 = scmp.eq.s32.totalorder %s30, 1
    %p380 = por %p378, %p379
    %p381 = scmp.ne.s32.totalorder %s373, %s376
    %p382 = scmp.eq.s32.totalorder %s30, 0
    %p383 = por %p381, %p382
    %p384 = scmp.ne.s32.totalorder %s373, %s376
    %p385 = scmp.eq.s32.totalorder %s35, 1
    %p386 = por %p384, %p385
    %p387 = scmp.ne.s32.totalorder %s376, %s377
    %p388 = scmp.eq.s32.totalorder %s35, 0
    %p389 = por %p387, %p388
    %p390 = scmp.ne.s32.totalorder %s376, %s377
    %p391 = scmp.eq.s32.totalorder %s36, 1
    %p392 = por %p390, %p391
    %p394 = scmp.ne.s32.totalorder %s377, %s393
    %p395 = scmp.eq.s32.totalorder %s36, 0
    %p396 = por %p394, %p395
    %s397 = ssub.s32 %s30, %s37
    %p398 = scmp.eq.s32.totalorder %s397, 0
    %s400 = sadd.s32 %s399, 1
    %s401 = scalar_select %p398, %s399, %s400
    %p404 = pneg %p398
    %p405 = scmp.eq.s32.totalorder %s30, 1
    %p406 = por %p404, %p405
    %p407 = scmp.ne.s32.totalorder %s399, %s402
    %p408 = scmp.eq.s32.totalorder %s30, 0
    %p409 = por %p407, %p408
    %p410 = scmp.ne.s32.totalorder %s399, %s402
    %p411 = scmp.eq.s32.totalorder %s35, 1
    %p412 = por %p410, %p411
    %p413 = scmp.ne.s32.totalorder %s402, %s403
    %p414 = scmp.eq.s32.totalorder %s35, 0
    %p415 = por %p413, %p414
    %p416 = scmp.ne.s32.totalorder %s402, %s403
    %p417 = scmp.eq.s32.totalorder %s36, 1
    %p418 = por %p416, %p417
    %p420 = scmp.ne.s32.totalorder %s403, %s419
    %p421 = scmp.eq.s32.totalorder %s36, 0
    %p422 = por %p420, %p421
    %s423 = ssub.s32 %s30, %s37
    %p424 = scmp.eq.s32.totalorder %s423, 0
    %s426 = sadd.s32 %s425, 1
    %s427 = scalar_select %p424, %s425, %s426
    %p430 = pneg %p424
    %p431 = scmp.eq.s32.totalorder %s30, 1
    %p432 = por %p430, %p431
    %p433 = scmp.ne.s32.totalorder %s425, %s428
    %p434 = scmp.eq.s32.totalorder %s30, 0
    %p435 = por %p433, %p434
    %p436 = scmp.ne.s32.totalorder %s425, %s428
    %p437 = scmp.eq.s32.totalorder %s35, 1
    %p438 = por %p436, %p437
    %p439 = scmp.ne.s32.totalorder %s428, %s429
    %p440 = scmp.eq.s32.totalorder %s35, 0
    %p441 = por %p439, %p440
    %p442 = scmp.ne.s32.totalorder %s428, %s429
    %p443 = scmp.eq.s32.totalorder %s36, 1
    %p444 = por %p442, %p443
    %p446 = scmp.ne.s32.totalorder %s429, %s445
    %p447 = scmp.eq.s32.totalorder %s36, 0
    %p448 = por %p446, %p447
    %s449 = ssub.s32 %s30, %s37
    %p450 = scmp.eq.s32.totalorder %s449, 0
    %s452 = sadd.s32 %s451, 1
    %s453 = scalar_select %p450, %s451, %s452
    %p456 = pneg %p450
    %p457 = scmp.eq.s32.totalorder %s30, 1
    %p458 = por %p456, %p457
    %p459 = scmp.ne.s32.totalorder %s451, %s454
    %p460 = scmp.eq.s32.totalorder %s30, 0
    %p461 = por %p459, %p460
    %p462 = scmp.ne.s32.totalorder %s451, %s454
    %p463 = scmp.eq.s32.totalorder %s35, 1
    %p464 = por %p462, %p463
    %p465 = scmp.ne.s32.totalorder %s454, %s455
    %p466 = scmp.eq.s32.totalorder %s35, 0
    %p467 = por %p465, %p466
    %p468 = scmp.ne.s32.totalorder %s454, %s455
    %p469 = scmp.eq.s32.totalorder %s36, 1
    %p470 = por %p468, %p469
    %p472 = scmp.ne.s32.totalorder %s455, %s471
    %p473 = scmp.eq.s32.totalorder %s36, 0
    %p474 = por %p472, %p473
    %s475 = ssub.s32 %s30, %s37
    %p476 = scmp.eq.s32.totalorder %s475, 0
    %s478 = sadd.s32 %s477, 1
    %s479 = scalar_select %p476, %s477, %s478
    %p482 = pneg %p476
    %p483 = scmp.eq.s32.totalorder %s30, 1
    %p484 = por %p482, %p483
    %p485 = scmp.ne.s32.totalorder %s477, %s480
    %p486 = scmp.eq.s32.totalorder %s30, 0
    %p487 = por %p485, %p486
    %p488 = scmp.ne.s32.totalorder %s477, %s480
    %p489 = scmp.eq.s32.totalorder %s35, 1
    %p490 = por %p488, %p489
    %p491 = scmp.ne.s32.totalorder %s480, %s481
    %p492 = scmp.eq.s32.totalorder %s35, 0
    %p493 = por %p491, %p492
    %p494 = scmp.ne.s32.totalorder %s480, %s481
    %p495 = scmp.eq.s32.totalorder %s36, 1
    %p496 = por %p494, %p495
    %p498 = scmp.ne.s32.totalorder %s481, %s497
    %p499 = scmp.eq.s32.totalorder %s36, 0
    %p500 = por %p498, %p499
    %s501 = ssub.s32 %s30, %s37
    %p502 = scmp.eq.s32.totalorder %s501, 0
    %s504 = sadd.s32 %s503, 1
    %s505 = scalar_select %p502, %s503, %s504
    %p508 = pneg %p502
    %p509 = scmp.eq.s32.totalorder %s30, 1
    %p510 = por %p508, %p509
    %p511 = scmp.ne.s32.totalorder %s503, %s506
    %p512 = scmp.eq.s32.totalorder %s30, 0
    %p513 = por %p511, %p512
    %p514 = scmp.ne.s32.totalorder %s503, %s506
    %p515 = scmp.eq.s32.totalorder %s35, 1
    %p516 = por %p514, %p515
    %p517 = scmp.ne.s32.totalorder %s506, %s507
    %p518 = scmp.eq.s32.totalorder %s35, 0
    %p519 = por %p517, %p518
    %p520 = scmp.ne.s32.totalorder %s506, %s507
    %p521 = scmp.eq.s32.totalorder %s36, 1
    %p522 = por %p520, %p521
    %p524 = scmp.ne.s32.totalorder %s507, %s523
    %p525 = scmp.eq.s32.totalorder %s36, 0
    %p526 = por %p524, %p525
    %s527 = ssub.s32 %s30, %s37
    %p528 = scmp.eq.s32.totalorder %s527, 0
    %s530 = sadd.s32 %s529, 1
    %s531 = scalar_select %p528, %s529, %s530
    %p534 = pneg %p528
    %p535 = scmp.eq.s32.totalorder %s30, 1
    %p536 = por %p534, %p535
    %p537 = scmp.ne.s32.totalorder %s529, %s532
    %p538 = scmp.eq.s32.totalorder %s30, 0
    %p539 = por %p537, %p538
    %p540 = scmp.ne.s32.totalorder %s529, %s532
    %p541 = scmp.eq.s32.totalorder %s35, 1
    %p542 = por %p540, %p541
    %p543 = scmp.ne.s32.totalorder %s532, %s533
    %p544 = scmp.eq.s32.totalorder %s35, 0
    %p545 = por %p543, %p544
    %p546 = scmp.ne.s32.totalorder %s532, %s533
    %p547 = scmp.eq.s32.totalorder %s36, 1
    %p548 = por %p546, %p547
    %p550 = scmp.ne.s32.totalorder %s533, %s549
    %p551 = scmp.eq.s32.totalorder %s36, 0
    %p552 = por %p550, %p551
    %s553 = ssub.s32 %s30, %s37
    %p554 = scmp.eq.s32.totalorder %s553, 0
    %s556 = sadd.s32 %s555, 1
    %s557 = scalar_select %p554, %s555, %s556
    %p560 = pneg %p554
    %p561 = scmp.eq.s32.totalorder %s30, 1
    %p562 = por %p560, %p561
    %p563 = scmp.ne.s32.totalorder %s555, %s558
    %p564 = scmp.eq.s32.totalorder %s30, 0
    %p565 = por %p563, %p564
    %p566 = scmp.ne.s32.totalorder %s555, %s558
    %p567 = scmp.eq.s32.totalorder %s35, 1
    %p568 = por %p566, %p567
    %p569 = scmp.ne.s32.totalorder %s558, %s559
    %p570 = scmp.eq.s32.totalorder %s35, 0
    %p571 = por %p569, %p570
    %p572 = scmp.ne.s32.totalorder %s558, %s559
    %p573 = scmp.eq.s32.totalorder %s36, 1
    %p574 = por %p572, %p573
    %p576 = scmp.ne.s32.totalorder %s559, %s575
    %p577 = scmp.eq.s32.totalorder %s36, 0
    %p578 = por %p576, %p577
    %s579 = ssub.s32 %s30, %s37
    %p580 = scmp.eq.s32.totalorder %s579, 0
    %s582 = sadd.s32 %s581, 1
    %s583 = scalar_select %p580, %s581, %s582
    %p586 = pneg %p580
    %p587 = scmp.eq.s32.totalorder %s30, 1
    %p588 = por %p586, %p587
    %p589 = scmp.ne.s32.totalorder %s581, %s584
    %p590 = scmp.eq.s32.totalorder %s30, 0
    %p591 = por %p589, %p590
    %p592 = scmp.ne.s32.totalorder %s581, %s584
    %p593 = scmp.eq.s32.totalorder %s35, 1
    %p594 = por %p592, %p593
    %p595 = scmp.ne.s32.totalorder %s584, %s585
    %p596 = scmp.eq.s32.totalorder %s35, 0
    %p597 = por %p595, %p596
    %p598 = scmp.ne.s32.totalorder %s584, %s585
    %p599 = scmp.eq.s32.totalorder %s36, 1
    %p600 = por %p598, %p599
    %p602 = scmp.ne.s32.totalorder %s585, %s601
    %p603 = scmp.eq.s32.totalorder %s36, 0
    %p604 = por %p602, %p603
    %s605 = ssub.s32 %s30, %s37
    %p606 = scmp.eq.s32.totalorder %s605, 0
    %s608 = sadd.s32 %s607, 1
    %s609 = scalar_select %p606, %s607, %s608
    %p612 = pneg %p606
    %p613 = scmp.eq.s32.totalorder %s30, 1
    %p614 = por %p612, %p613
    %p615 = scmp.ne.s32.totalorder %s607, %s610
    %p616 = scmp.eq.s32.totalorder %s30, 0
    %p617 = por %p615, %p616
    %p618 = scmp.ne.s32.totalorder %s607, %s610
    %p619 = scmp.eq.s32.totalorder %s35, 1
    %p620 = por %p618, %p619
    %p621 = scmp.ne.s32.totalorder %s610, %s611
    %p622 = scmp.eq.s32.totalorder %s35, 0
    %p623 = por %p621, %p622
    %p624 = scmp.ne.s32.totalorder %s610, %s611
    %p625 = scmp.eq.s32.totalorder %s36, 1
    %p626 = por %p624, %p625
    %p628 = scmp.ne.s32.totalorder %s611, %s627
    %p629 = scmp.eq.s32.totalorder %s36, 0
    %p630 = por %p628, %p629
    %s631 = ssub.s32 %s30, %s37
    %p632 = scmp.eq.s32.totalorder %s631, 0
    %s634 = sadd.s32 %s633, 1
    %s635 = scalar_select %p632, %s633, %s634
    %p638 = pneg %p632
    %p639 = scmp.eq.s32.totalorder %s30, 1
    %p640 = por %p638, %p639
    %p641 = scmp.ne.s32.totalorder %s633, %s636
    %p642 = scmp.eq.s32.totalorder %s30, 0
    %p643 = por %p641, %p642
    %p644 = scmp.ne.s32.totalorder %s633, %s636
    %p645 = scmp.eq.s32.totalorder %s35, 1
    %p646 = por %p644, %p645
    %p647 = scmp.ne.s32.totalorder %s636, %s637
    %p648 = scmp.eq.s32.totalorder %s35, 0
    %p649 = por %p647, %p648
    %p650 = scmp.ne.s32.totalorder %s636, %s637
    %p651 = scmp.eq.s32.totalorder %s36, 1
    %p652 = por %p650, %p651
    %p654 = scmp.ne.s32.totalorder %s637, %s653
    %p655 = scmp.eq.s32.totalorder %s36, 0
    %p656 = por %p654, %p655
    %s657 = ssub.s32 %s30, %s37
    %p658 = scmp.eq.s32.totalorder %s657, 0
    %s660 = sadd.s32 %s659, 1
    %s661 = scalar_select %p658, %s659, %s660
    %p664 = pneg %p658
    %p665 = scmp.eq.s32.totalorder %s30, 1
    %p666 = por %p664, %p665
    %p667 = scmp.ne.s32.totalorder %s659, %s662
    %p668 = scmp.eq.s32.totalorder %s30, 0
    %p669 = por %p667, %p668
    %p670 = scmp.ne.s32.totalorder %s659, %s662
    %p671 = scmp.eq.s32.totalorder %s35, 1
    %p672 = por %p670, %p671
    %p673 = scmp.ne.s32.totalorder %s662, %s663
    %p674 = scmp.eq.s32.totalorder %s35, 0
    %p675 = por %p673, %p674
    %p676 = scmp.ne.s32.totalorder %s662, %s663
    %p677 = scmp.eq.s32.totalorder %s36, 1
    %p678 = por %p676, %p677
    %p680 = scmp.ne.s32.totalorder %s663, %s679
    %p681 = scmp.eq.s32.totalorder %s36, 0
    %p682 = por %p680, %p681
    %p683 = scmp.le.s32.totalorder 1, %s30
    %p684 = scmp.lt.s32.totalorder %s30, 3
    %p685 = pnand %p683, %p684
    %p686 = pneg %p685
    // Predicated region
    $region9: #{bimodel_forward.2} parent=5 // pred_check
      _
    $region10: #{bimodel_forward.2} parent=5 // pred_check_branch
      %688 = sbr.rel (%p685) target = $region12
    $region11: #{bimodel_forward.2} parent=5 // pred_region
      %s689 = ssub.s32 %s30, 1
      // Predicated region
      $region13: #{bimodel_forward.2} parent=11 // pred_check
        %p690 = pneg %p103
      $region14: #{bimodel_forward.2} parent=11 // pred_check_branch
        %692 = sbr.rel (%p690) target = $region16
      $region15: #{bimodel_forward.2} parent=11 // pred_region
        _
      $region16: #{bimodel_forward.2} parent=11 // pred_fallthru
        _
    $region12: #{bimodel_forward.2} parent=5 // pred_fallthru
      _
    %p693 = scmp.lt.s32.totalorder %s30, 2
    // Predicated region
    $region17: #{bimodel_forward.2} parent=5 // pred_check
      %p694 = pneg %p693
    $region18: #{bimodel_forward.2} parent=5 // pred_check_branch
      %696 = sbr.rel (%p694) target = $region20
    $region19: #{bimodel_forward.2} parent=5 // pred_region
      // Predicated region
      $region21: #{bimodel_forward.2} parent=19 // pred_check
        %p697 = pneg %p50
      $region22: #{bimodel_forward.2} parent=19 // pred_check_branch
        %699 = sbr.rel (%p697) target = $region24
      $region23: #{bimodel_forward.2} parent=19 // pred_region
        %p700 = scmp.lt.s32.totalorder %s30, 1
        %s701 = scalar_select %p700, %s30, 1
        %s702 = smul.addr %s701, 6
        %s703 = smul.addr %s702, 2
        %s704 = scalar_lea.vmem %s0, %s703
      $region24: #{bimodel_forward.2} parent=19 // pred_fallthru
        _
      // Predicated region
      $region25: #{bimodel_forward.2} parent=19 // pred_check
        %p705 = pneg %p76
      $region26: #{bimodel_forward.2} parent=19 // pred_check_branch
        %707 = sbr.rel (%p705) target = $region28
      $region27: #{bimodel_forward.2} parent=19 // pred_region
        %p708 = scmp.lt.s32.totalorder %s30, 1
        %s709 = scalar_select %p708, %s30, 1
        %s710 = smul.addr %s709, 6
        %s711 = smul.addr %s710, 2
        %s712 = scalar_lea.vmem %s1, %s711
      $region28: #{bimodel_forward.2} parent=19 // pred_fallthru
        _
      // Predicated region
      $region29: #{bimodel_forward.2} parent=19 // pred_check
        %p713 = pneg %p123
      $region30: #{bimodel_forward.2} parent=19 // pred_check_branch
        %715 = sbr.rel (%p713) target = $region32
      $region31: #{bimodel_forward.2} parent=19 // pred_region
        %p716 = scmp.lt.s32.totalorder %s30, 1
        %s717 = scalar_select %p716, %s30, 1
        %s718 = smul.addr %s717, 3
        %s719 = smul.addr %s718, 8
        %s720 = scalar_lea.vmem %s3, %s719
      $region32: #{bimodel_forward.2} parent=19 // pred_fallthru
        _
      // Predicated region
      $region33: #{bimodel_forward.2} parent=19 // pred_check
        %p721 = pneg %p149
      $region34: #{bimodel_forward.2} parent=19 // pred_check_branch
        %723 = sbr.rel (%p721) target = $region36
      $region35: #{bimodel_forward.2} parent=19 // pred_region
        %p724 = scmp.lt.s32.totalorder %s30, 1
        %s725 = scalar_select %p724, %s30, 1
        %s726 = scalar_lea.vmem %s4, %s725
      $region36: #{bimodel_forward.2} parent=19 // pred_fallthru
        _
      // Predicated region
      $region37: #{bimodel_forward.2} parent=19 // pred_check
        %p727 = pneg %p175
      $region38: #{bimodel_forward.2} parent=19 // pred_check_branch
        %729 = sbr.rel (%p727) target = $region40
      $region39: #{bimodel_forward.2} parent=19 // pred_region
        %p730 = scmp.lt.s32.totalorder %s30, 1
        %s731 = scalar_select %p730, %s30, 1
        %s732 = smul.addr %s731, 4
        %s733 = smul.addr %s732, 8
        %s734 = scalar_lea.vmem %s5, %s733
      $region40: #{bimodel_forward.2} parent=19 // pred_fallthru
        _
      // Predicated region
      $region41: #{bimodel_forward.2} parent=19 // pred_check
        %p735 = pneg %p201
      $region42: #{bimodel_forward.2} parent=19 // pred_check_branch
        %737 = sbr.rel (%p735) target = $region44
      $region43: #{bimodel_forward.2} parent=19 // pred_region
        %p738 = scmp.lt.s32.totalorder %s30, 1
        %s739 = scalar_select %p738, %s30, 1
        %s740 = smul.addr %s739, 4
        %s741 = smul.addr %s740, 8
        %s742 = scalar_lea.vmem %s6, %s741
      $region44: #{bimodel_forward.2} parent=19 // pred_fallthru
        _
      // Predicated region
      $region45: #{bimodel_forward.2} parent=19 // pred_check
        %p743 = pneg %p227
      $region46: #{bimodel_forward.2} parent=19 // pred_check_branch
        %745 = sbr.rel (%p743) target = $region48
      $region47: #{bimodel_forward.2} parent=19 // pred_region
        %p746 = scmp.lt.s32.totalorder %s30, 1
        %s747 = scalar_select %p746, %s30, 1
        %s748 = smul.addr %s747, 4
        %s749 = smul.addr %s748, 8
        %s750 = scalar_lea.vmem %s7, %s749
      $region48: #{bimodel_forward.2} parent=19 // pred_fallthru
        _
      // Predicated region
      $region49: #{bimodel_forward.2} parent=19 // pred_check
        %p751 = pneg %p253
      $region50: #{bimodel_forward.2} parent=19 // pred_check_branch
        %753 = sbr.rel (%p751) target = $region52
      $region51: #{bimodel_forward.2} parent=19 // pred_region
        %p754 = scmp.lt.s32.totalorder %s30, 1
        %s755 = scalar_select %p754, %s30, 1
        %s756 = scalar_lea.vmem %s8, %s755
      $region52: #{bimodel_forward.2} parent=19 // pred_fallthru
        _
      // Predicated region
      $region53: #{bimodel_forward.2} parent=19 // pred_check
        %p757 = pneg %p279
      $region54: #{bimodel_forward.2} parent=19 // pred_check_branch
        %759 = sbr.rel (%p757) target = $region56
      $region55: #{bimodel_forward.2} parent=19 // pred_region
        %p760 = scmp.lt.s32.totalorder %s30, 1
        %s761 = scalar_select %p760, %s30, 1
        %s762 = scalar_lea.vmem %s9, %s761
      $region56: #{bimodel_forward.2} parent=19 // pred_fallthru
        _
      // Predicated region
      $region57: #{bimodel_forward.2} parent=19 // pred_check
        %p763 = pneg %p305
      $region58: #{bimodel_forward.2} parent=19 // pred_check_branch
        %765 = sbr.rel (%p763) target = $region60
      $region59: #{bimodel_forward.2} parent=19 // pred_region
        %p766 = scmp.lt.s32.totalorder %s30, 1
        %s767 = scalar_select %p766, %s30, 1
        %s768 = smul.addr %s767, 4
        %s769 = smul.addr %s768, 8
        %s770 = scalar_lea.vmem %s10, %s769
      $region60: #{bimodel_forward.2} parent=19 // pred_fallthru
        _
      // Predicated region
      $region61: #{bimodel_forward.2} parent=19 // pred_check
        %p771 = pneg %p331
      $region62: #{bimodel_forward.2} parent=19 // pred_check_branch
        %773 = sbr.rel (%p771) target = $region64
      $region63: #{bimodel_forward.2} parent=19 // pred_region
        %p774 = scmp.lt.s32.totalorder %s30, 1
        %s775 = scalar_select %p774, %s30, 1
        %s776 = smul.addr %s775, 4
        %s777 = smul.addr %s776, 8
        %s778 = scalar_lea.vmem %s11, %s777
      $region64: #{bimodel_forward.2} parent=19 // pred_fallthru
        _
      // Predicated region
      $region65: #{bimodel_forward.2} parent=19 // pred_check
        %p779 = pneg %p357
      $region66: #{bimodel_forward.2} parent=19 // pred_check_branch
        %781 = sbr.rel (%p779) target = $region68
      $region67: #{bimodel_forward.2} parent=19 // pred_region
        %p782 = scmp.lt.s32.totalorder %s30, 1
        %s783 = scalar_select %p782, %s30, 1
        %s784 = smul.addr %s783, 4
        %s785 = smul.addr %s784, 8
        %s786 = scalar_lea.vmem %s12, %s785
      $region68: #{bimodel_forward.2} parent=19 // pred_fallthru
        _
      // Predicated region
      $region69: #{bimodel_forward.2} parent=19 // pred_check
        %p787 = pneg %p383
      $region70: #{bimodel_forward.2} parent=19 // pred_check_branch
        %789 = sbr.rel (%p787) target = $region72
      $region71: #{bimodel_forward.2} parent=19 // pred_region
        %p790 = scmp.lt.s32.totalorder %s30, 1
        %s791 = scalar_select %p790, %s30, 1
        %s792 = scalar_lea.vmem %s13, %s791
      $region72: #{bimodel_forward.2} parent=19 // pred_fallthru
        _
      // Predicated region
      $region73: #{bimodel_forward.2} parent=19 // pred_check
        %p793 = pneg %p409
      $region74: #{bimodel_forward.2} parent=19 // pred_check_branch
        %795 = sbr.rel (%p793) target = $region76
      $region75: #{bimodel_forward.2} parent=19 // pred_region
        %p796 = scmp.lt.s32.totalorder %s30, 1
        %s797 = scalar_select %p796, %s30, 1
        %s798 = scalar_lea.vmem %s14, %s797
      $region76: #{bimodel_forward.2} parent=19 // pred_fallthru
        _
      // Predicated region
      $region77: #{bimodel_forward.2} parent=19 // pred_check
        %p799 = pneg %p435
      $region78: #{bimodel_forward.2} parent=19 // pred_check_branch
        %801 = sbr.rel (%p799) target = $region80
      $region79: #{bimodel_forward.2} parent=19 // pred_region
        %p802 = scmp.lt.s32.totalorder %s30, 1
        %s803 = scalar_select %p802, %s30, 1
        %s804 = smul.addr %s803, 4
        %s805 = smul.addr %s804, 8
        %s806 = scalar_lea.vmem %s15, %s805
      $region80: #{bimodel_forward.2} parent=19 // pred_fallthru
        _
      // Predicated region
      $region81: #{bimodel_forward.2} parent=19 // pred_check
        %p807 = pneg %p461
      $region82: #{bimodel_forward.2} parent=19 // pred_check_branch
        %809 = sbr.rel (%p807) target = $region84
      $region83: #{bimodel_forward.2} parent=19 // pred_region
        %p810 = scmp.lt.s32.totalorder %s30, 1
        %s811 = scalar_select %p810, %s30, 1
        %s812 = smul.addr %s811, 4
        %s813 = smul.addr %s812, 8
        %s814 = scalar_lea.vmem %s16, %s813
      $region84: #{bimodel_forward.2} parent=19 // pred_fallthru
        _
      // Predicated region
      $region85: #{bimodel_forward.2} parent=19 // pred_check
        %p815 = pneg %p487
      $region86: #{bimodel_forward.2} parent=19 // pred_check_branch
        %817 = sbr.rel (%p815) target = $region88
      $region87: #{bimodel_forward.2} parent=19 // pred_region
        %p818 = scmp.lt.s32.totalorder %s30, 1
        %s819 = scalar_select %p818, %s30, 1
        %s820 = scalar_lea.vmem %s17, %s819
      $region88: #{bimodel_forward.2} parent=19 // pred_fallthru
        _
      // Predicated region
      $region89: #{bimodel_forward.2} parent=19 // pred_check
        %p821 = pneg %p513
      $region90: #{bimodel_forward.2} parent=19 // pred_check_branch
        %823 = sbr.rel (%p821) target = $region92
      $region91: #{bimodel_forward.2} parent=19 // pred_region
        %p824 = scmp.lt.s32.totalorder %s30, 1
        %s825 = scalar_select %p824, %s30, 1
        %s826 = scalar_lea.vmem %s18, %s825
      $region92: #{bimodel_forward.2} parent=19 // pred_fallthru
        _
      // Predicated region
      $region93: #{bimodel_forward.2} parent=19 // pred_check
        %p827 = pneg %p539
      $region94: #{bimodel_forward.2} parent=19 // pred_check_branch
        %829 = sbr.rel (%p827) target = $region96
      $region95: #{bimodel_forward.2} parent=19 // pred_region
        %p830 = scmp.lt.s32.totalorder %s30, 1
        %s831 = scalar_select %p830, %s30, 1
        %s832 = smul.addr %s831, 4
        %s833 = smul.addr %s832, 8
        %s834 = scalar_lea.vmem %s19, %s833
      $region96: #{bimodel_forward.2} parent=19 // pred_fallthru
        _
      // Predicated region
      $region97: #{bimodel_forward.2} parent=19 // pred_check
        %p835 = pneg %p565
      $region98: #{bimodel_forward.2} parent=19 // pred_check_branch
        %837 = sbr.rel (%p835) target = $region100
      $region99: #{bimodel_forward.2} parent=19 // pred_region
        %p838 = scmp.lt.s32.totalorder %s30, 1
        %s839 = scalar_select %p838, %s30, 1
        %s840 = smul.addr %s839, 2
        %s841 = scalar_lea.vmem %s20, %s840
      $region100: #{bimodel_forward.2} parent=19 // pred_fallthru
        _
      // Predicated region
      $region101: #{bimodel_forward.2} parent=19 // pred_check
        %p842 = pneg %p591
      $region102: #{bimodel_forward.2} parent=19 // pred_check_branch
        %844 = sbr.rel (%p842) target = $region104
      $region103: #{bimodel_forward.2} parent=19 // pred_region
        %p845 = scmp.lt.s32.totalorder %s30, 1
        %s846 = scalar_select %p845, %s30, 1
        %s847 = scalar_lea.vmem %s21, %s846
      $region104: #{bimodel_forward.2} parent=19 // pred_fallthru
        _
      // Predicated region
      $region105: #{bimodel_forward.2} parent=19 // pred_check
        %p848 = pneg %p617
      $region106: #{bimodel_forward.2} parent=19 // pred_check_branch
        %850 = sbr.rel (%p848) target = $region108
      $region107: #{bimodel_forward.2} parent=19 // pred_region
        %p851 = scmp.lt.s32.totalorder %s30, 1
        %s852 = scalar_select %p851, %s30, 1
        %s853 = smul.addr %s852, 8
        %s854 = smul.addr %s853, 8
        %s855 = scalar_lea.vmem %s22, %s854
      $region108: #{bimodel_forward.2} parent=19 // pred_fallthru
        _
      // Predicated region
      $region109: #{bimodel_forward.2} parent=19 // pred_check
        %p856 = pneg %p643
      $region110: #{bimodel_forward.2} parent=19 // pred_check_branch
        %858 = sbr.rel (%p856) target = $region112
      $region111: #{bimodel_forward.2} parent=19 // pred_region
        %p859 = scmp.lt.s32.totalorder %s30, 1
        %s860 = scalar_select %p859, %s30, 1
        %s861 = scalar_lea.vmem %s23, %s860
      $region112: #{bimodel_forward.2} parent=19 // pred_fallthru
        _
    $region20: #{bimodel_forward.2} parent=5 // pred_fallthru
      _
    %p862 = scmp.le.s32.totalorder 1, %s30
    %p863 = scmp.lt.s32.totalorder %s30, 3
    %p864 = pnand %p862, %p863
    %p865 = pneg %p864
    // Predicated region
    $region113: #{bimodel_forward.2} parent=5 // pred_check
      _
    $region114: #{bimodel_forward.2} parent=5 // pred_check_branch
      %867 = sbr.rel (%p864) target = $region116
    $region115: #{bimodel_forward.2} parent=5 // pred_region
      %s868 = ssub.s32 %s30, 1
      %p869 = scmp.lt.s32.totalorder %s35, 1
      %s870 = scalar_select %p869, %s35, 1
      %s871 = smul.addr %s870, 6
      %s872 = smul.addr %s871, 2
      %s873 = scalar_lea.vmem %s0, %s872
      %p874 = pneg %p56
      %p875 = pneg %p53
      %p876 = scmp.lt.s32.totalorder %s35, 1
      %s877 = scalar_select %p876, %s35, 1
      %s878 = smul.addr %s877, 6
      %s879 = smul.addr %s878, 2
      %s880 = scalar_lea.vmem %s1, %s879
      %p881 = pneg %p82
      %p882 = pneg %p79
      %p883 = pneg %p103
      %p884 = pneg %p100
      %p885 = scmp.lt.s32.totalorder %s35, 1
      %s886 = scalar_select %p885, %s35, 1
      %s887 = smul.addr %s886, 3
      %s888 = smul.addr %s887, 8
      %s889 = scalar_lea.vmem %s3, %s888
      %p890 = pneg %p129
      %p891 = pneg %p126
      %p892 = scmp.lt.s32.totalorder %s35, 1
      %s893 = scalar_select %p892, %s35, 1
      %s894 = scalar_lea.vmem %s4, %s893
      %p895 = pneg %p155
      %p896 = pneg %p152
      %p897 = scmp.lt.s32.totalorder %s35, 1
      %s898 = scalar_select %p897, %s35, 1
      %s899 = smul.addr %s898, 4
      %s900 = smul.addr %s899, 8
      %s901 = scalar_lea.vmem %s5, %s900
      %p902 = pneg %p181
      %p903 = pneg %p178
      %p904 = scmp.lt.s32.totalorder %s35, 1
      %s905 = scalar_select %p904, %s35, 1
      %s906 = smul.addr %s905, 4
      %s907 = smul.addr %s906, 8
      %s908 = scalar_lea.vmem %s6, %s907
      %p909 = pneg %p207
      %p910 = pneg %p204
      %p911 = scmp.lt.s32.totalorder %s35, 1
      %s912 = scalar_select %p911, %s35, 1
      %s913 = smul.addr %s912, 4
      %s914 = smul.addr %s913, 8
      %s915 = scalar_lea.vmem %s7, %s914
      %p916 = pneg %p233
      %p917 = pneg %p230
      %p918 = scmp.lt.s32.totalorder %s35, 1
      %s919 = scalar_select %p918, %s35, 1
      %s920 = scalar_lea.vmem %s8, %s919
      %p921 = pneg %p259
      %p922 = pneg %p256
      %p923 = scmp.lt.s32.totalorder %s35, 1
      %s924 = scalar_select %p923, %s35, 1
      %s925 = scalar_lea.vmem %s9, %s924
      %p926 = pneg %p285
      %p927 = pneg %p282
      %p928 = scmp.lt.s32.totalorder %s35, 1
      %s929 = scalar_select %p928, %s35, 1
      %s930 = smul.addr %s929, 4
      %s931 = smul.addr %s930, 8
      %s932 = scalar_lea.vmem %s10, %s931
      %p933 = pneg %p311
      %p934 = pneg %p308
      %p935 = scmp.lt.s32.totalorder %s35, 1
      %s936 = scalar_select %p935, %s35, 1
      %s937 = smul.addr %s936, 4
      %s938 = smul.addr %s937, 8
      %s939 = scalar_lea.vmem %s11, %s938
      %p940 = pneg %p337
      %p941 = pneg %p334
      %p942 = scmp.lt.s32.totalorder %s35, 1
      %s943 = scalar_select %p942, %s35, 1
      %s944 = smul.addr %s943, 4
      %s945 = smul.addr %s944, 8
      %s946 = scalar_lea.vmem %s12, %s945
      %p947 = pneg %p363
      %p948 = pneg %p360
      %p949 = scmp.lt.s32.totalorder %s35, 1
      %s950 = scalar_select %p949, %s35, 1
      %s951 = scalar_lea.vmem %s13, %s950
      %p952 = pneg %p389
      %p953 = pneg %p386
      %p954 = scmp.lt.s32.totalorder %s35, 1
      %s955 = scalar_select %p954, %s35, 1
      %s956 = scalar_lea.vmem %s14, %s955
      %p957 = pneg %p415
      %p958 = pneg %p412
      %p959 = scmp.lt.s32.totalorder %s35, 1
      %s960 = scalar_select %p959, %s35, 1
      %s961 = smul.addr %s960, 4
      %s962 = smul.addr %s961, 8
      %s963 = scalar_lea.vmem %s15, %s962
      %p964 = pneg %p441
      %p965 = pneg %p438
      %p966 = scmp.lt.s32.totalorder %s35, 1
      %s967 = scalar_select %p966, %s35, 1
      %s968 = smul.addr %s967, 4
      %s969 = smul.addr %s968, 8
      %s970 = scalar_lea.vmem %s16, %s969
      %p971 = pneg %p467
      %p972 = pneg %p464
      %p973 = scmp.lt.s32.totalorder %s35, 1
      %s974 = scalar_select %p973, %s35, 1
      %s975 = scalar_lea.vmem %s17, %s974
      %p976 = pneg %p493
      %p977 = pneg %p490
      %p978 = scmp.lt.s32.totalorder %s35, 1
      %s979 = scalar_select %p978, %s35, 1
      %s980 = scalar_lea.vmem %s18, %s979
      %p981 = pneg %p519
      %p982 = pneg %p516
      %p983 = scmp.lt.s32.totalorder %s35, 1
      %s984 = scalar_select %p983, %s35, 1
      %s985 = smul.addr %s984, 4
      %s986 = smul.addr %s985, 8
      %s987 = scalar_lea.vmem %s19, %s986
      %p988 = pneg %p545
      %p989 = pneg %p542
      %p990 = scmp.lt.s32.totalorder %s35, 1
      %s991 = scalar_select %p990, %s35, 1
      %s992 = smul.addr %s991, 2
      %s993 = scalar_lea.vmem %s20, %s992
      %p994 = pneg %p571
      %p995 = pneg %p568
      %p996 = scmp.lt.s32.totalorder %s35, 1
      %s997 = scalar_select %p996, %s35, 1
      %s998 = scalar_lea.vmem %s21, %s997
      %p999 = pneg %p597
      %p1000 = pneg %p594
      %p1001 = scmp.lt.s32.totalorder %s35, 1
      %s1002 = scalar_select %p1001, %s35, 1
      %s1003 = smul.addr %s1002, 8
      %s1004 = smul.addr %s1003, 8
      %s1005 = scalar_lea.vmem %s22, %s1004
      %p1006 = pneg %p623
      %p1007 = pneg %p620
      %p1008 = scmp.lt.s32.totalorder %s35, 1
      %s1009 = scalar_select %p1008, %s35, 1
      %s1010 = scalar_lea.vmem %s23, %s1009
      %p1011 = pneg %p649
      %p1012 = pneg %p646
      %p1013 = pneg %p675
      %p1014 = pneg %p672
      %p1015 = scmp.lt.s32.totalorder %s35, 1
      %s1016 = scalar_select %p1015, %s35, 1
      %s1017 = smul.addr %s1016, 6
      %s1018 = smul.addr %s1017, 2
      %s1019 = scalar_lea.vmem %s24, %s1018
      %p1020 = scmp.lt.s32.totalorder %s35, 1
      %s1021 = scalar_select %p1020, %s35, 1
      %s1022 = smul.addr %s1021, 6
      %s1023 = smul.addr %s1022, 2
      %s1024 = scalar_lea.vmem %s0, %s1023
      %p1025 = scmp.lt.s32.totalorder %s35, 1
      %s1026 = scalar_select %p1025, %s35, 1
      %s1027 = smul.addr %s1026, 6
      %s1028 = smul.addr %s1027, 2
      %s1029 = scalar_lea.vmem %s1, %s1028
      %p1030 = scmp.lt.s32.totalorder %s35, 1
      %s1031 = scalar_select %p1030, %s35, 1
      %s1032 = smul.addr %s1031, 3
      %s1033 = smul.addr %s1032, 8
      %s1034 = scalar_lea.vmem %s3, %s1033
      %p1035 = scmp.lt.s32.totalorder %s35, 1
      %s1036 = scalar_select %p1035, %s35, 1
      %s1037 = scalar_lea.vmem %s4, %s1036
      %p1038 = scmp.lt.s32.totalorder %s35, 1
      %s1039 = scalar_select %p1038, %s35, 1
      %s1040 = smul.addr %s1039, 4
      %s1041 = smul.addr %s1040, 8
      %s1042 = scalar_lea.vmem %s5, %s1041
      %p1043 = scmp.lt.s32.totalorder %s35, 1
      %s1044 = scalar_select %p1043, %s35, 1
      %s1045 = smul.addr %s1044, 4
      %s1046 = smul.addr %s1045, 8
      %s1047 = scalar_lea.vmem %s6, %s1046
      %p1048 = scmp.lt.s32.totalorder %s35, 1
      %s1049 = scalar_select %p1048, %s35, 1
      %s1050 = smul.addr %s1049, 4
      %s1051 = smul.addr %s1050, 8
      %s1052 = scalar_lea.vmem %s7, %s1051
      %p1053 = scmp.lt.s32.totalorder %s35, 1
      %s1054 = scalar_select %p1053, %s35, 1
      %s1055 = scalar_lea.vmem %s8, %s1054
      %p1056 = scmp.lt.s32.totalorder %s35, 1
      %s1057 = scalar_select %p1056, %s35, 1
      %s1058 = scalar_lea.vmem %s9, %s1057
      %p1059 = scmp.lt.s32.totalorder %s35, 1
      %s1060 = scalar_select %p1059, %s35, 1
      %s1061 = smul.addr %s1060, 4
      %s1062 = smul.addr %s1061, 8
      %s1063 = scalar_lea.vmem %s10, %s1062
      %p1064 = scmp.lt.s32.totalorder %s35, 1
      %s1065 = scalar_select %p1064, %s35, 1
      %s1066 = smul.addr %s1065, 4
      %s1067 = smul.addr %s1066, 8
      %s1068 = scalar_lea.vmem %s11, %s1067
      %p1069 = scmp.lt.s32.totalorder %s35, 1
      %s1070 = scalar_select %p1069, %s35, 1
      %s1071 = smul.addr %s1070, 4
      %s1072 = smul.addr %s1071, 8
      %s1073 = scalar_lea.vmem %s12, %s1072
      %p1074 = scmp.lt.s32.totalorder %s35, 1
      %s1075 = scalar_select %p1074, %s35, 1
      %s1076 = scalar_lea.vmem %s13, %s1075
      %p1077 = scmp.lt.s32.totalorder %s35, 1
      %s1078 = scalar_select %p1077, %s35, 1
      %s1079 = scalar_lea.vmem %s14, %s1078
      %p1080 = scmp.lt.s32.totalorder %s35, 1
      %s1081 = scalar_select %p1080, %s35, 1
      %s1082 = smul.addr %s1081, 4
      %s1083 = smul.addr %s1082, 8
      %s1084 = scalar_lea.vmem %s15, %s1083
      %p1085 = scmp.lt.s32.totalorder %s35, 1
      %s1086 = scalar_select %p1085, %s35, 1
      %s1087 = smul.addr %s1086, 4
      %s1088 = smul.addr %s1087, 8
      %s1089 = scalar_lea.vmem %s16, %s1088
      %p1090 = scmp.lt.s32.totalorder %s35, 1
      %s1091 = scalar_select %p1090, %s35, 1
      %s1092 = scalar_lea.vmem %s17, %s1091
      %p1093 = scmp.lt.s32.totalorder %s35, 1
      %s1094 = scalar_select %p1093, %s35, 1
      %s1095 = scalar_lea.vmem %s18, %s1094
      %p1096 = scmp.lt.s32.totalorder %s35, 1
      %s1097 = scalar_select %p1096, %s35, 1
      %s1098 = smul.addr %s1097, 4
      %s1099 = smul.addr %s1098, 8
      %s1100 = scalar_lea.vmem %s19, %s1099
      %p1101 = scmp.lt.s32.totalorder %s35, 1
      %s1102 = scalar_select %p1101, %s35, 1
      %s1103 = smul.addr %s1102, 2
      %s1104 = scalar_lea.vmem %s20, %s1103
      %p1105 = scmp.lt.s32.totalorder %s35, 1
      %s1106 = scalar_select %p1105, %s35, 1
      %s1107 = scalar_lea.vmem %s21, %s1106
      %p1108 = scmp.lt.s32.totalorder %s35, 1
      %s1109 = scalar_select %p1108, %s35, 1
      %s1110 = smul.addr %s1109, 8
      %s1111 = smul.addr %s1110, 8
      %s1112 = scalar_lea.vmem %s22, %s1111
      %p1113 = scmp.lt.s32.totalorder %s35, 1
      %s1114 = scalar_select %p1113, %s35, 1
      %s1115 = scalar_lea.vmem %s23, %s1114
      %p1116 = scmp.lt.s32.totalorder %s35, 1
      %s1117 = scalar_select %p1116, %s35, 1
      %s1118 = smul.addr %s1117, 6
      %s1119 = smul.addr %s1118, 2
      %s1120 = scalar_lea.vmem %s24, %s1119
      %vm1121 = vcmask 254976
      %1122 = vst.msk [vmem:[#allocation2] sm:$0x3] %vm1121, 0.0
      %1123 = vst.msk [vmem:[#allocation2 + $0x2] sm:$0x3] %vm1121, 0.0
      %1124 = vst.msk [vmem:[#allocation2 + $0x4] sm:$0x3] %vm1121, 0.0
      %1125 = vst.msk [vmem:[#allocation2 + $0x6] sm:$0x3] %vm1121, 0.0
      %1126 = vst.msk [vmem:[#allocation2 + $0x8] sm:$0x3] %vm1121, 0.0
      %1127 = vst.msk [vmem:[#allocation2 + $0xa] sm:$0x3] %vm1121, 0.0
      %1128 = vst.msk [vmem:[#allocation5] sm:$0x3] %vm1121, 0.0
      %1129 = vst.msk [vmem:[#allocation6] sm:$0x3] %vm1121, 0.0
      %1130 = vst.msk [vmem:[#allocation6 + $0x2] sm:$0x3] %vm1121, 0.0
      %1131 = vst.msk [vmem:[#allocation7] sm:$0x3] %vm1121, 0.0
      %1132 = vst.msk [vmem:[#allocation8] sm:$0x3] %vm1121, 0.0
      %v1133 = vld [vmem:[%s1024] sm:$0x3]
      %v1134 = vld [vmem:[%s1024 + $0x2] sm:$0x3]
      %v1135 = vld [vmem:[%s1024 + $0x4] sm:$0x3]
      %v1136 = vld [vmem:[%s1024 + $0x6] sm:$0x3]
      %v1137 = vld [vmem:[%s1024 + $0x8] sm:$0x3]
      %v1138 = vld [vmem:[%s1024 + $0xa] sm:$0x3]
      %v1139 = vld [vmem:[%s1034] sm:$0xff]
      %v1140 = vld [vmem:[%s1034 + $0x8] sm:$0xff]
      %v1141 = vld [vmem:[%s1034 + $0x10] sm:$0x3f]
      %v1142 = vld [vmem:[%s1037] sm:$0x1]
      %v1144 = vlaneseq
      %v1145 = vshrl.u32 %v1144, 7
      %v1146 = vsub.s32 0, %v1145
      %v1147 = vrot.slane %v1142, %v1146
      %v1155 = vcombine.low %v1133, %v1134
      %v1156 = vcombine.low %v1135, %v1136
      %v1158 = vunpack.c.l.s4 1983009808
      %v1159 = vunpack.c.0.s8 %v1158
      %v1160 = vlaneseq
      %v1161 = vshrl.u32 %v1160, 7
      %v1162 = vsub.s32 %v1159, %v1161
      %v1163 = vrot.slane %v1155, %v1162
      %v1165 = vunpack.c.l.s4 1983009808
      %v1166 = vunpack.c.0.s8 %v1165
      %v1167 = vlaneseq
      %v1168 = vshrl.u32 %v1167, 7
      %v1169 = vsub.s32 %v1166, %v1168
      %v1170 = vrot.slane %v1156, %v1169
      %v1171 = vcombine.low %v1163, %v1170
      %v1172 = vcombine.low %v1137, %v1138
      %v1174 = vunpack.c.l.s4 1983009808
      %v1175 = vunpack.c.0.s8 %v1174
      %v1176 = vlaneseq
      %v1177 = vshrl.u32 %v1176, 7
      %v1178 = vsub.s32 %v1175, %v1177
      %v1179 = vrot.slane %v1172, %v1178
      %vm1180 = vcmask 179200
      %v1181 = vsel %vm1180, %v1171, 0
      %v1183 = vsel %vm1180, %v1179, 0
      %vm1185 = vcmask 1045504
      %v1187 = vsel %vm1185, %v1141, 0
      %1189 = vmatprep.subr.mxu0 0.0
      %1190 = vmatpush1.msra.mxu0 %v1139
      %1191 = vmatprep.subr.mxu0 0.0
      %1192 = vmatpush1.msra.mxu0 %v1140
      %1193 = vmatprep.subr.mxu0 0.0
      %1194 = vmatpush1.msra.mxu0 %v1187
      %1195 = vmatprep.subr.mxu0 0.0
      %1196 = vmatpush1.msra.mxu0 0.0
      %1197 = vmatprep.subr.mxu0 0.0
      %1198 = vmatpush1.msra.mxu0 0.0
      %1199 = vmatprep.subr.mxu0 0.0
      %1200 = vmatpush1.msra.mxu0 0.0
      %1201 = vmatprep.subr.mxu0 0.0
      %1202 = vmatpush1.msra.mxu0 0.0
      %1203 = vmatprep.subr.mxu0 0.0
      %1204 = vmatpush1.msra.mxu0 0.0
      %1205 = vmatprep.subr.mxu0 0.0
      %1206 = vmatpush1.msra.mxu0 0.0
      %1207 = vmatprep.subr.mxu0 0.0
      %1208 = vmatpush1.msra.mxu0 0.0
      %1209 = vmatprep.subr.mxu0 0.0
      %1210 = vmatpush1.msra.mxu0 0.0
      %1211 = vmatprep.subr.mxu0 0.0
      %1212 = vmatpush1.msra.mxu0 0.0
      %1213 = vmatprep.subr.mxu0 0.0
      %1214 = vmatpush1.msra.mxu0 0.0
      %1215 = vmatprep.subr.mxu0 0.0
      %1216 = vmatpush1.msra.mxu0 0.0
      %1217 = vmatprep.subr.mxu0 0.0
      %1218 = vmatpush1.msra.mxu0 0.0
      %1219 = vmatprep.subr.mxu0 0.0
      %1220 = vmatpush1.msra.mxu0 0.0
      %1221 = vmatprep.subr.mxu0 0.0
      %1222 = vmatpush1.msra.mxu0 0.0
      %1223 = vmatprep.subr.mxu0 0.0
      %1224 = vmatpush1.msra.mxu0 0.0
      %1225 = vmatprep.subr.mxu0 0.0
      %1226 = vmatpush1.msra.mxu0 0.0
      %1227 = vmatprep.subr.mxu0 0.0
      %1228 = vmatpush1.msra.mxu0 0.0
      %1229 = vmatprep.subr.mxu0 0.0
      %1230 = vmatpush1.msra.mxu0 0.0
      %1231 = vmatprep.subr.mxu0 0.0
      %1232 = vmatpush1.msra.mxu0 0.0
      %1233 = vmatprep.subr.mxu0 0.0
      %1234 = vmatpush1.msra.mxu0 0.0
      %1235 = vmatprep.subr.mxu0 0.0
      %1236 = vmatpush1.msra.mxu0 0.0
      %1237 = vmatprep.subr.mxu0 0.0
      %1238 = vmatpush1.msra.mxu0 0.0
      %1239 = vmatprep.subr.mxu0 0.0
      %1240 = vmatpush1.msra.mxu0 0.0
      %1241 = vmatprep.subr.mxu0 0.0
      %1242 = vmatpush1.msra.mxu0 0.0
      %1243 = vmatprep.subr.mxu0 0.0
      %1244 = vmatpush1.msra.mxu0 0.0
      %1245 = vmatprep.subr.mxu0 0.0
      %1246 = vmatpush1.msra.mxu0 0.0
      %1247 = vmatprep.subr.mxu0 0.0
      %1248 = vmatpush1.msra.mxu0 0.0
      %1249 = vmatprep.subr.mxu0 0.0
      %1250 = vmatpush1.msra.mxu0 0.0
      %1251 = vmatprep.subr.mxu0 0.0
      %1252 = vmatpush1.msra.mxu0 0.0
      %1253 = vmatprep.mubr.f32.mxu0 0.0
      %1254 = vmatmul.mubr.f32.gmra.mrb[0].mxu0 %v1181
      %v1255 = vpop.f32.mrb[0].mxu0
      %v1256 = vadd.f32 %v1147, %v1255
      %v1257 = vpop.f32.mrb[0].mxu0
      %1258 = vmatprep.mubr.f32.mxu0 0.0
      %1259 = vmatmul.mubr.f32.gmra.mrb[0].mxu0 %v1183
      %v1260 = vpop.f32.mrb[0].mxu0
      %v1261 = vadd.f32 %v1147, %v1260
      %v1262 = vpop.f32.mrb[0].mxu0
      %1263 = vdwg.mxu0
      %v1264 = vld [vmem:[%s1042] sm:$0xff]
      %v1265 = vld [vmem:[%s1042 + $0x8] sm:$0xff]
      %v1266 = vld [vmem:[%s1042 + $0x10] sm:$0xff]
      %v1267 = vld [vmem:[%s1042 + $0x18] sm:$0xff]
      %v1268 = vld [vmem:[%s1055] sm:$0x1]
      %v1270 = vlaneseq
      %v1271 = vshrl.u32 %v1270, 7
      %v1272 = vsub.s32 0, %v1271
      %v1273 = vrot.slane %v1268, %v1272
      %vm1275 = vcmask 261120
      %v1277 = vsel %vm1275, %v1256, 0
      %v1280 = vsel %vm1275, %v1261, 0
      %1282 = vmatprep.subr.mxu0 0.0
      %1283 = vmatpush1.msra.mxu0 %v1264
      %1284 = vmatprep.subr.mxu0 0.0
      %1285 = vmatpush1.msra.mxu0 %v1265
      %1286 = vmatprep.subr.mxu0 0.0
      %1287 = vmatpush1.msra.mxu0 %v1266
      %1288 = vmatprep.subr.mxu0 0.0
      %1289 = vmatpush1.msra.mxu0 %v1267
      %1290 = vmatprep.subr.mxu0 0.0
      %1291 = vmatpush1.msra.mxu0 0.0
      %1292 = vmatprep.subr.mxu0 0.0
      %1293 = vmatpush1.msra.mxu0 0.0
      %1294 = vmatprep.subr.mxu0 0.0
      %1295 = vmatpush1.msra.mxu0 0.0
      %1296 = vmatprep.subr.mxu0 0.0
      %1297 = vmatpush1.msra.mxu0 0.0
      %1298 = vmatprep.subr.mxu0 0.0
      %1299 = vmatpush1.msra.mxu0 0.0
      %1300 = vmatprep.subr.mxu0 0.0
      %1301 = vmatpush1.msra.mxu0 0.0
      %1302 = vmatprep.subr.mxu0 0.0
      %1303 = vmatpush1.msra.mxu0 0.0
      %1304 = vmatprep.subr.mxu0 0.0
      %1305 = vmatpush1.msra.mxu0 0.0
      %1306 = vmatprep.subr.mxu0 0.0
      %1307 = vmatpush1.msra.mxu0 0.0
      %1308 = vmatprep.subr.mxu0 0.0
      %1309 = vmatpush1.msra.mxu0 0.0
      %1310 = vmatprep.subr.mxu0 0.0
      %1311 = vmatpush1.msra.mxu0 0.0
      %1312 = vmatprep.subr.mxu0 0.0
      %1313 = vmatpush1.msra.mxu0 0.0
      %1314 = vmatprep.subr.mxu0 0.0
      %1315 = vmatpush1.msra.mxu0 0.0
      %1316 = vmatprep.subr.mxu0 0.0
      %1317 = vmatpush1.msra.mxu0 0.0
      %1318 = vmatprep.subr.mxu0 0.0
      %1319 = vmatpush1.msra.mxu0 0.0
      %1320 = vmatprep.subr.mxu0 0.0
      %1321 = vmatpush1.msra.mxu0 0.0
      %1322 = vmatprep.subr.mxu0 0.0
      %1323 = vmatpush1.msra.mxu0 0.0
      %1324 = vmatprep.subr.mxu0 0.0
      %1325 = vmatpush1.msra.mxu0 0.0
      %1326 = vmatprep.subr.mxu0 0.0
      %1327 = vmatpush1.msra.mxu0 0.0
      %1328 = vmatprep.subr.mxu0 0.0
      %1329 = vmatpush1.msra.mxu0 0.0
      %1330 = vmatprep.subr.mxu0 0.0
      %1331 = vmatpush1.msra.mxu0 0.0
      %1332 = vmatprep.subr.mxu0 0.0
      %1333 = vmatpush1.msra.mxu0 0.0
      %1334 = vmatprep.subr.mxu0 0.0
      %1335 = vmatpush1.msra.mxu0 0.0
      %1336 = vmatprep.subr.mxu0 0.0
      %1337 = vmatpush1.msra.mxu0 0.0
      %1338 = vmatprep.subr.mxu0 0.0
      %1339 = vmatpush1.msra.mxu0 0.0
      %1340 = vmatprep.subr.mxu0 0.0
      %1341 = vmatpush1.msra.mxu0 0.0
      %1342 = vmatprep.subr.mxu0 0.0
      %1343 = vmatpush1.msra.mxu0 0.0
      %1344 = vmatprep.subr.mxu0 0.0
      %1345 = vmatpush1.msra.mxu0 0.0
      %1346 = vmatprep.mubr.f32.mxu0 0.0
      %1347 = vmatmul.mubr.f32.gmra.mrb[0].mxu0 %v1277
      %v1348 = vpop.f32.mrb[0].mxu0
      %v1349 = vadd.f32 %v1273, %v1348
      %v1350 = vpop.f32.mrb[0].mxu0
      %1351 = vmatprep.mubr.f32.mxu0 0.0
      %1352 = vmatmul.mubr.f32.gmra.mrb[0].mxu0 %v1280
      %v1353 = vpop.f32.mrb[0].mxu0
      %v1354 = vadd.f32 %v1273, %v1353
      %v1355 = vpop.f32.mrb[0].mxu0
      %1356 = vdwg.mxu0
      %v1357 = vld [vmem:[%s1063] sm:$0xff]
      %v1358 = vld [vmem:[%s1063 + $0x8] sm:$0xff]
      %v1359 = vld [vmem:[%s1063 + $0x10] sm:$0xff]
      %v1360 = vld [vmem:[%s1063 + $0x18] sm:$0xff]
      %v1361 = vld [vmem:[%s1076] sm:$0x1]
      %v1363 = vlaneseq
      %v1364 = vshrl.u32 %v1363, 7
      %v1365 = vsub.s32 0, %v1364
      %v1366 = vrot.slane %v1361, %v1365
      %1368 = vmatprep.subr.mxu0 0.0
      %1369 = vmatpush1.msra.mxu0 %v1357
      %1370 = vmatprep.subr.mxu0 0.0
      %1371 = vmatpush1.msra.mxu0 %v1358
      %1372 = vmatprep.subr.mxu0 0.0
      %1373 = vmatpush1.msra.mxu0 %v1359
      %1374 = vmatprep.subr.mxu0 0.0
      %1375 = vmatpush1.msra.mxu0 %v1360
      %1376 = vmatprep.subr.mxu0 0.0
      %1377 = vmatpush1.msra.mxu0 0.0
      %1378 = vmatprep.subr.mxu0 0.0
      %1379 = vmatpush1.msra.mxu0 0.0
      %1380 = vmatprep.subr.mxu0 0.0
      %1381 = vmatpush1.msra.mxu0 0.0
      %1382 = vmatprep.subr.mxu0 0.0
      %1383 = vmatpush1.msra.mxu0 0.0
      %1384 = vmatprep.subr.mxu0 0.0
      %1385 = vmatpush1.msra.mxu0 0.0
      %1386 = vmatprep.subr.mxu0 0.0
      %1387 = vmatpush1.msra.mxu0 0.0
      %1388 = vmatprep.subr.mxu0 0.0
      %1389 = vmatpush1.msra.mxu0 0.0
      %1390 = vmatprep.subr.mxu0 0.0
      %1391 = vmatpush1.msra.mxu0 0.0
      %1392 = vmatprep.subr.mxu0 0.0
      %1393 = vmatpush1.msra.mxu0 0.0
      %1394 = vmatprep.subr.mxu0 0.0
      %1395 = vmatpush1.msra.mxu0 0.0
      %1396 = vmatprep.subr.mxu0 0.0
      %1397 = vmatpush1.msra.mxu0 0.0
      %1398 = vmatprep.subr.mxu0 0.0
      %1399 = vmatpush1.msra.mxu0 0.0
      %1400 = vmatprep.subr.mxu0 0.0
      %1401 = vmatpush1.msra.mxu0 0.0
      %1402 = vmatprep.subr.mxu0 0.0
      %1403 = vmatpush1.msra.mxu0 0.0
      %1404 = vmatprep.subr.mxu0 0.0
      %1405 = vmatpush1.msra.mxu0 0.0
      %1406 = vmatprep.subr.mxu0 0.0
      %1407 = vmatpush1.msra.mxu0 0.0
      %1408 = vmatprep.subr.mxu0 0.0
      %1409 = vmatpush1.msra.mxu0 0.0
      %1410 = vmatprep.subr.mxu0 0.0
      %1411 = vmatpush1.msra.mxu0 0.0
      %1412 = vmatprep.subr.mxu0 0.0
      %1413 = vmatpush1.msra.mxu0 0.0
      %1414 = vmatprep.subr.mxu0 0.0
      %1415 = vmatpush1.msra.mxu0 0.0
      %1416 = vmatprep.subr.mxu0 0.0
      %1417 = vmatpush1.msra.mxu0 0.0
      %1418 = vmatprep.subr.mxu0 0.0
      %1419 = vmatpush1.msra.mxu0 0.0
      %1420 = vmatprep.subr.mxu0 0.0
      %1421 = vmatpush1.msra.mxu0 0.0
      %1422 = vmatprep.subr.mxu0 0.0
      %1423 = vmatpush1.msra.mxu0 0.0
      %1424 = vmatprep.subr.mxu0 0.0
      %1425 = vmatpush1.msra.mxu0 0.0
      %1426 = vmatprep.subr.mxu0 0.0
      %1427 = vmatpush1.msra.mxu0 0.0
      %1428 = vmatprep.subr.mxu0 0.0
      %1429 = vmatpush1.msra.mxu0 0.0
      %1430 = vmatprep.subr.mxu0 0.0
      %1431 = vmatpush1.msra.mxu0 0.0
      %1432 = vmatprep.mubr.f32.mxu0 0.0
      %1433 = vmatmul.mubr.f32.gmra.mrb[0].mxu0 %v1277
      %v1434 = vpop.f32.mrb[0].mxu0
      %v1435 = vadd.f32 %v1366, %v1434
      %v1436 = vpop.f32.mrb[0].mxu0
      %1437 = vmatprep.mubr.f32.mxu0 0.0
      %1438 = vmatmul.mubr.f32.gmra.mrb[0].mxu0 %v1280
      %v1439 = vpop.f32.mrb[0].mxu0
      %v1440 = vadd.f32 %v1366, %v1439
      %v1441 = vpop.f32.mrb[0].mxu0
      %1442 = vdwg.mxu0
      %v1445 = vcombine.high %v1349, %v1349
      %v1447 = vunpack.c.l.s4 1983009808
      %v1448 = vunpack.c.0.s8 %v1447
      %v1449 = vlaneseq
      %v1450 = vshrl.u32 %v1449, 7
      %v1451 = vsub.s32 %v1448, %v1450
      %v1452 = vrot.slane %v1349, %v1451
      %v1454 = vunpack.c.l.s4 1983009808
      %v1455 = vunpack.c.0.s8 %v1454
      %v1456 = vlaneseq
      %v1457 = vshrl.u32 %v1456, 7
      %v1458 = vsub.s32 %v1455, %v1457
      %v1459 = vrot.slane %v1445, %v1458
      %v1460 = vcombine.high %v1452, %v1452
      %v1461 = vcombine.high %v1459, %v1459
      %v1463 = vunpack.c.l.s4 1983009808
      %v1464 = vunpack.c.0.s8 %v1463
      %v1465 = vlaneseq
      %v1466 = vshrl.u32 %v1465, 7
      %v1467 = vsub.s32 %v1464, %v1466
      %v1468 = vrot.slane %v1354, %v1467
      %v1469 = vcombine.high %v1468, %v1468
      %vm1476 = vcmask 779264
      %1477 = vst.msk [vmem:[#allocation3] sm:$0x3] %vm1476, %v1452
      %1478 = vst.msk [vmem:[#allocation3 + $0x2] sm:$0x3] %vm1476, %v1460
      %1479 = vst.msk [vmem:[#allocation3 + $0x4] sm:$0x3] %vm1476, %v1459
      %1480 = vst.msk [vmem:[#allocation3 + $0x6] sm:$0x3] %vm1476, %v1461
      %1481 = vst.msk [vmem:[#allocation3 + $0x8] sm:$0x3] %vm1476, %v1468
      %1482 = vst.msk [vmem:[#allocation3 + $0xa] sm:$0x3] %vm1476, %v1469
      %v1485 = vcombine.high %v1435, %v1435
      %v1487 = vunpack.c.l.s4 1983009808
      %v1488 = vunpack.c.0.s8 %v1487
      %v1489 = vlaneseq
      %v1490 = vshrl.u32 %v1489, 7
      %v1491 = vsub.s32 %v1488, %v1490
      %v1492 = vrot.slane %v1435, %v1491
      %v1494 = vunpack.c.l.s4 1983009808
      %v1495 = vunpack.c.0.s8 %v1494
      %v1496 = vlaneseq
      %v1497 = vshrl.u32 %v1496, 7
      %v1498 = vsub.s32 %v1495, %v1497
      %v1499 = vrot.slane %v1485, %v1498
      %v1500 = vcombine.high %v1492, %v1492
      %v1501 = vcombine.high %v1499, %v1499
      %v1503 = vunpack.c.l.s4 1983009808
      %v1504 = vunpack.c.0.s8 %v1503
      %v1505 = vlaneseq
      %v1506 = vshrl.u32 %v1505, 7
      %v1507 = vsub.s32 %v1504, %v1506
      %v1508 = vrot.slane %v1440, %v1507
      %v1509 = vcombine.high %v1508, %v1508
      %1516 = vst.msk [vmem:[#allocation4] sm:$0x3] %vm1476, %v1492
      %1517 = vst.msk [vmem:[#allocation4 + $0x2] sm:$0x3] %vm1476, %v1500
      %1518 = vst.msk [vmem:[#allocation4 + $0x4] sm:$0x3] %vm1476, %v1499
      %1519 = vst.msk [vmem:[#allocation4 + $0x6] sm:$0x3] %vm1476, %v1501
      %1520 = vst.msk [vmem:[#allocation4 + $0x8] sm:$0x3] %vm1476, %v1508
      %1521 = vst.msk [vmem:[#allocation4 + $0xa] sm:$0x3] %vm1476, %v1509
      loop: start=0, step=1, limit=6
      $region117: #{bimodel_forward.2} parent=115 // loop_pre_header
        _
      $region118: #{bimodel_forward.2} parent=115 // loop_header
        %s1523 = sphi 0, %s1527
        %p1524 = scmp.ge.s32.totalorder %s1523, 6
      $region119: #{bimodel_forward.2} parent=115 // loop_header_branch
        %1526 = sbr.rel (%p1524) target = $region123
      $region120: #{bimodel_forward.2} parent=115 // loop_body
        %s1528 = smul.u32 %s1523, 2
        %s1529 = scalar_lea.vmem %s1029, %s1528
        %v1530 = vld [vmem:[%s1529] sm:$0x3]
        %v1531 = vld [vmem:[#allocation6] sm:$0x3]
        %1533 = vset.pattern.permute.xlu0 0
        %1534 = vperm.xlu0 %1533, %v1530
        %v1535 = vpop.permute.xlu0 %1534
        %v1537 = vmul.f32 %v1535, %v1531
        %s1538 = scalar_lea.vmem [#allocation6], 2
        %v1539 = vld [vmem:[%s1538] sm:$0x3]
        %1540 = vset.pattern.permute.xlu0 1
        %1541 = vperm.xlu0 %1540, %v1530
        %v1542 = vpop.permute.xlu0 %1541
        %v1544 = vmul.f32 %v1542, %v1539
        %v1545 = vadd.f32 %v1537, %v1544
        %s1546 = scalar_lea.vmem [#allocation3], %s1528
        %v1547 = vld [vmem:[%s1546] sm:$0x3]
        %v1548 = vld [vmem:[%s1047] sm:$0xff]
        %v1549 = vld [vmem:[%s1047 + $0x8] sm:$0xff]
        %v1550 = vld [vmem:[%s1047 + $0x10] sm:$0xff]
        %v1551 = vld [vmem:[%s1047 + $0x18] sm:$0xff]
        %v1553 = vsel %vm1275, %v1545, 0
        %1555 = vmatprep.subr.mxu0 0.0
        %1556 = vmatpush1.msra.mxu0 %v1548
        %1557 = vmatprep.subr.mxu0 0.0
        %1558 = vmatpush1.msra.mxu0 %v1549
        %1559 = vmatprep.subr.mxu0 0.0
        %1560 = vmatpush1.msra.mxu0 %v1550
        %1561 = vmatprep.subr.mxu0 0.0
        %1562 = vmatpush1.msra.mxu0 %v1551
        %1563 = vmatprep.subr.mxu0 0.0
        %1564 = vmatpush1.msra.mxu0 0.0
        %1565 = vmatprep.subr.mxu0 0.0
        %1566 = vmatpush1.msra.mxu0 0.0
        %1567 = vmatprep.subr.mxu0 0.0
        %1568 = vmatpush1.msra.mxu0 0.0
        %1569 = vmatprep.subr.mxu0 0.0
        %1570 = vmatpush1.msra.mxu0 0.0
        %1571 = vmatprep.subr.mxu0 0.0
        %1572 = vmatpush1.msra.mxu0 0.0
        %1573 = vmatprep.subr.mxu0 0.0
        %1574 = vmatpush1.msra.mxu0 0.0
        %1575 = vmatprep.subr.mxu0 0.0
        %1576 = vmatpush1.msra.mxu0 0.0
        %1577 = vmatprep.subr.mxu0 0.0
        %1578 = vmatpush1.msra.mxu0 0.0
        %1579 = vmatprep.subr.mxu0 0.0
        %1580 = vmatpush1.msra.mxu0 0.0
        %1581 = vmatprep.subr.mxu0 0.0
        %1582 = vmatpush1.msra.mxu0 0.0
        %1583 = vmatprep.subr.mxu0 0.0
        %1584 = vmatpush1.msra.mxu0 0.0
        %1585 = vmatprep.subr.mxu0 0.0
        %1586 = vmatpush1.msra.mxu0 0.0
        %1587 = vmatprep.subr.mxu0 0.0
        %1588 = vmatpush1.msra.mxu0 0.0
        %1589 = vmatprep.subr.mxu0 0.0
        %1590 = vmatpush1.msra.mxu0 0.0
        %1591 = vmatprep.subr.mxu0 0.0
        %1592 = vmatpush1.msra.mxu0 0.0
        %1593 = vmatprep.subr.mxu0 0.0
        %1594 = vmatpush1.msra.mxu0 0.0
        %1595 = vmatprep.subr.mxu0 0.0
        %1596 = vmatpush1.msra.mxu0 0.0
        %1597 = vmatprep.subr.mxu0 0.0
        %1598 = vmatpush1.msra.mxu0 0.0
        %1599 = vmatprep.subr.mxu0 0.0
        %1600 = vmatpush1.msra.mxu0 0.0
        %1601 = vmatprep.subr.mxu0 0.0
        %1602 = vmatpush1.msra.mxu0 0.0
        %1603 = vmatprep.subr.mxu0 0.0
        %1604 = vmatpush1.msra.mxu0 0.0
        %1605 = vmatprep.subr.mxu0 0.0
        %1606 = vmatpush1.msra.mxu0 0.0
        %1607 = vmatprep.subr.mxu0 0.0
        %1608 = vmatpush1.msra.mxu0 0.0
        %1609 = vmatprep.subr.mxu0 0.0
        %1610 = vmatpush1.msra.mxu0 0.0
        %1611 = vmatprep.subr.mxu0 0.0
        %1612 = vmatpush1.msra.mxu0 0.0
        %1613 = vmatprep.subr.mxu0 0.0
        %1614 = vmatpush1.msra.mxu0 0.0
        %1615 = vmatprep.subr.mxu0 0.0
        %1616 = vmatpush1.msra.mxu0 0.0
        %1617 = vmatprep.subr.mxu0 0.0
        %1618 = vmatpush1.msra.mxu0 0.0
        %1619 = vmatprep.mubr.f32.mxu0 0.0
        %1620 = vmatmul.mubr.f32.gmra.mrb[0].mxu0 %v1553
        %v1621 = vpop.f32.mrb[0].mxu0
        %v1622 = vadd.f32 0.0, %v1621
        %v1623 = vpop.f32.mrb[0].mxu0
        %1624 = vdwg.mxu0
        %v1625 = vadd.f32 %v1547, %v1622
        %v1626 = vld [vmem:[#allocation5] sm:$0x3]
        %v1627 = vld [vmem:[%s1052] sm:$0xff]
        %v1628 = vld [vmem:[%s1052 + $0x8] sm:$0xff]
        %v1629 = vld [vmem:[%s1052 + $0x10] sm:$0xff]
        %v1630 = vld [vmem:[%s1052 + $0x18] sm:$0xff]
        %v1631 = vld [vmem:[%s1058] sm:$0x1]
        %v1633 = vlaneseq
        %v1634 = vshrl.u32 %v1633, 7
        %v1635 = vsub.s32 0, %v1634
        %v1636 = vrot.slane %v1631, %v1635
        %v1639 = vsel %vm1275, %v1626, 0
        %1641 = vmatprep.subr.mxu0 0.0
        %1642 = vmatpush1.msra.mxu0 %v1627
        %1643 = vmatprep.subr.mxu0 0.0
        %1644 = vmatpush1.msra.mxu0 %v1628
        %1645 = vmatprep.subr.mxu0 0.0
        %1646 = vmatpush1.msra.mxu0 %v1629
        %1647 = vmatprep.subr.mxu0 0.0
        %1648 = vmatpush1.msra.mxu0 %v1630
        %1649 = vmatprep.subr.mxu0 0.0
        %1650 = vmatpush1.msra.mxu0 0.0
        %1651 = vmatprep.subr.mxu0 0.0
        %1652 = vmatpush1.msra.mxu0 0.0
        %1653 = vmatprep.subr.mxu0 0.0
        %1654 = vmatpush1.msra.mxu0 0.0
        %1655 = vmatprep.subr.mxu0 0.0
        %1656 = vmatpush1.msra.mxu0 0.0
        %1657 = vmatprep.subr.mxu0 0.0
        %1658 = vmatpush1.msra.mxu0 0.0
        %1659 = vmatprep.subr.mxu0 0.0
        %1660 = vmatpush1.msra.mxu0 0.0
        %1661 = vmatprep.subr.mxu0 0.0
        %1662 = vmatpush1.msra.mxu0 0.0
        %1663 = vmatprep.subr.mxu0 0.0
        %1664 = vmatpush1.msra.mxu0 0.0
        %1665 = vmatprep.subr.mxu0 0.0
        %1666 = vmatpush1.msra.mxu0 0.0
        %1667 = vmatprep.subr.mxu0 0.0
        %1668 = vmatpush1.msra.mxu0 0.0
        %1669 = vmatprep.subr.mxu0 0.0
        %1670 = vmatpush1.msra.mxu0 0.0
        %1671 = vmatprep.subr.mxu0 0.0
        %1672 = vmatpush1.msra.mxu0 0.0
        %1673 = vmatprep.subr.mxu0 0.0
        %1674 = vmatpush1.msra.mxu0 0.0
        %1675 = vmatprep.subr.mxu0 0.0
        %1676 = vmatpush1.msra.mxu0 0.0
        %1677 = vmatprep.subr.mxu0 0.0
        %1678 = vmatpush1.msra.mxu0 0.0
        %1679 = vmatprep.subr.mxu0 0.0
        %1680 = vmatpush1.msra.mxu0 0.0
        %1681 = vmatprep.subr.mxu0 0.0
        %1682 = vmatpush1.msra.mxu0 0.0
        %1683 = vmatprep.subr.mxu0 0.0
        %1684 = vmatpush1.msra.mxu0 0.0
        %1685 = vmatprep.subr.mxu0 0.0
        %1686 = vmatpush1.msra.mxu0 0.0
        %1687 = vmatprep.subr.mxu0 0.0
        %1688 = vmatpush1.msra.mxu0 0.0
        %1689 = vmatprep.subr.mxu0 0.0
        %1690 = vmatpush1.msra.mxu0 0.0
        %1691 = vmatprep.subr.mxu0 0.0
        %1692 = vmatpush1.msra.mxu0 0.0
        %1693 = vmatprep.subr.mxu0 0.0
        %1694 = vmatpush1.msra.mxu0 0.0
        %1695 = vmatprep.subr.mxu0 0.0
        %1696 = vmatpush1.msra.mxu0 0.0
        %1697 = vmatprep.subr.mxu0 0.0
        %1698 = vmatpush1.msra.mxu0 0.0
        %1699 = vmatprep.subr.mxu0 0.0
        %1700 = vmatpush1.msra.mxu0 0.0
        %1701 = vmatprep.subr.mxu0 0.0
        %1702 = vmatpush1.msra.mxu0 0.0
        %1703 = vmatprep.subr.mxu0 0.0
        %1704 = vmatpush1.msra.mxu0 0.0
        %1705 = vmatprep.mubr.f32.mxu0 0.0
        %1706 = vmatmul.mubr.f32.gmra.mrb[0].mxu0 %v1639
        %v1707 = vpop.f32.mrb[0].mxu0
        %v1708 = vadd.f32 %v1636, %v1707
        %v1709 = vpop.f32.mrb[0].mxu0
        %1710 = vdwg.mxu0
        %v1711 = vadd.f32 %v1625, %v1708
        %v1712 = vxor.u32 %v1711, 2147483648
        %v1713 = vmul.f32 %v1712, 1.442695
        %v1714 = vpow.pop %v1713
        %v1715 = vadd.f32 %v1714, 1.0
        %v1716 = vrcp.pop %v1715
        %v1717 = vmul.f32 1.0, %v1716
        %1719 = vrot.lane.b32.xlu0 %v1708, 64
        %v1720 = vpop.permute.xlu0 %1719
        %v1722 = vmul.f32 %v1717, %v1720
        %1724 = vrot.lane.b32.xlu0 %v1722, 64
        %v1725 = vpop.permute.xlu0 %1724
        %v1727 = vadd.f32 %v1625, %v1725
        %v1728 = vtanh.pop %v1727
        %v1729 = vsub.f32 1.0, %v1717
        %1731 = vrot.lane.b32.xlu0 %v1728, 96
        %v1732 = vpop.permute.xlu0 %1731
        %v1734 = vmul.f32 %v1729, %v1732
        %1735 = vrot.lane.b32.xlu0 %v1626, 32
        %v1736 = vpop.permute.xlu0 %1735
        %v1738 = vmul.f32 %v1717, %v1736
        %v1739 = vadd.f32 %v1734, %v1738
        %p1740 = scmp.gt.s32.totalorder %s1523, 0
        // Predicated region
        $region124: #{bimodel_forward.2} parent=120 // pred_check
          %p1741 = pneg %p1740
        $region125: #{bimodel_forward.2} parent=120 // pred_check_branch
          %1743 = sbr.rel (%p1741) target = $region127
        $region126: #{bimodel_forward.2} parent=120 // pred_region
          %v1744 = vld [vmem:[#allocation2] sm:$0x3]
          %v1745 = vld [vmem:[#allocation2 + $0x2] sm:$0x3]
          %v1746 = vld [vmem:[#allocation2 + $0x4] sm:$0x3]
          %v1747 = vld [vmem:[#allocation2 + $0x6] sm:$0x3]
          %v1748 = vld [vmem:[#allocation2 + $0x8] sm:$0x3]
          %v1749 = vld [vmem:[#allocation2 + $0xa] sm:$0x3]
          %v1750 = vld [vmem:[%s1100] sm:$0xff]
          %v1751 = vld [vmem:[%s1100 + $0x8] sm:$0xff]
          %v1752 = vld [vmem:[%s1100 + $0x10] sm:$0xff]
          %v1753 = vld [vmem:[%s1100 + $0x18] sm:$0xff]
          %v1760 = vcombine.low %v1744, %v1745
          %v1761 = vcombine.low %v1746, %v1747
          %v1763 = vunpack.c.l.s4 1983009808
          %v1764 = vunpack.c.0.s8 %v1763
          %v1765 = vlaneseq
          %v1766 = vshrl.u32 %v1765, 7
          %v1767 = vsub.s32 %v1764, %v1766
          %v1768 = vrot.slane %v1760, %v1767
          %v1770 = vunpack.c.l.s4 1983009808
          %v1771 = vunpack.c.0.s8 %v1770
          %v1772 = vlaneseq
          %v1773 = vshrl.u32 %v1772, 7
          %v1774 = vsub.s32 %v1771, %v1773
          %v1775 = vrot.slane %v1761, %v1774
          %v1776 = vcombine.low %v1768, %v1775
          %v1777 = vcombine.low %v1748, %v1749
          %v1779 = vunpack.c.l.s4 1983009808
          %v1780 = vunpack.c.0.s8 %v1779
          %v1781 = vlaneseq
          %v1782 = vshrl.u32 %v1781, 7
          %v1783 = vsub.s32 %v1780, %v1782
          %v1784 = vrot.slane %v1777, %v1783
          %v1785 = vsel %vm1275, %v1776, 0
          %v1787 = vsel %vm1275, %v1784, 0
          %1789 = vmatprep.subr.mxu0 0.0
          %1790 = vmatpush1.msra.mxu0 %v1750
          %1791 = vmatprep.subr.mxu0 0.0
          %1792 = vmatpush1.msra.mxu0 %v1751
          %1793 = vmatprep.subr.mxu0 0.0
          %1794 = vmatpush1.msra.mxu0 %v1752
          %1795 = vmatprep.subr.mxu0 0.0
          %1796 = vmatpush1.msra.mxu0 %v1753
          %1797 = vmatprep.subr.mxu0 0.0
          %1798 = vmatpush1.msra.mxu0 0.0
          %1799 = vmatprep.subr.mxu0 0.0
          %1800 = vmatpush1.msra.mxu0 0.0
          %1801 = vmatprep.subr.mxu0 0.0
          %1802 = vmatpush1.msra.mxu0 0.0
          %1803 = vmatprep.subr.mxu0 0.0
          %1804 = vmatpush1.msra.mxu0 0.0
          %1805 = vmatprep.subr.mxu0 0.0
          %1806 = vmatpush1.msra.mxu0 0.0
          %1807 = vmatprep.subr.mxu0 0.0
          %1808 = vmatpush1.msra.mxu0 0.0
          %1809 = vmatprep.subr.mxu0 0.0
          %1810 = vmatpush1.msra.mxu0 0.0
          %1811 = vmatprep.subr.mxu0 0.0
          %1812 = vmatpush1.msra.mxu0 0.0
          %1813 = vmatprep.subr.mxu0 0.0
          %1814 = vmatpush1.msra.mxu0 0.0
          %1815 = vmatprep.subr.mxu0 0.0
          %1816 = vmatpush1.msra.mxu0 0.0
          %1817 = vmatprep.subr.mxu0 0.0
          %1818 = vmatpush1.msra.mxu0 0.0
          %1819 = vmatprep.subr.mxu0 0.0
          %1820 = vmatpush1.msra.mxu0 0.0
          %1821 = vmatprep.subr.mxu0 0.0
          %1822 = vmatpush1.msra.mxu0 0.0
          %1823 = vmatprep.subr.mxu0 0.0
          %1824 = vmatpush1.msra.mxu0 0.0
          %1825 = vmatprep.subr.mxu0 0.0
          %1826 = vmatpush1.msra.mxu0 0.0
          %1827 = vmatprep.subr.mxu0 0.0
          %1828 = vmatpush1.msra.mxu0 0.0
          %1829 = vmatprep.subr.mxu0 0.0
          %1830 = vmatpush1.msra.mxu0 0.0
          %1831 = vmatprep.subr.mxu0 0.0
          %1832 = vmatpush1.msra.mxu0 0.0
          %1833 = vmatprep.subr.mxu0 0.0
          %1834 = vmatpush1.msra.mxu0 0.0
          %1835 = vmatprep.subr.mxu0 0.0
          %1836 = vmatpush1.msra.mxu0 0.0
          %1837 = vmatprep.subr.mxu0 0.0
          %1838 = vmatpush1.msra.mxu0 0.0
          %1839 = vmatprep.subr.mxu0 0.0
          %1840 = vmatpush1.msra.mxu0 0.0
          %1841 = vmatprep.subr.mxu0 0.0
          %1842 = vmatpush1.msra.mxu0 0.0
          %1843 = vmatprep.subr.mxu0 0.0
          %1844 = vmatpush1.msra.mxu0 0.0
          %1845 = vmatprep.subr.mxu0 0.0
          %1846 = vmatpush1.msra.mxu0 0.0
          %1847 = vmatprep.subr.mxu0 0.0
          %1848 = vmatpush1.msra.mxu0 0.0
          %1849 = vmatprep.subr.mxu0 0.0
          %1850 = vmatpush1.msra.mxu0 0.0
          %1851 = vmatprep.subr.mxu0 0.0
          %1852 = vmatpush1.msra.mxu0 0.0
          %1853 = vmatprep.mubr.f32.mxu0 0.0
          %1854 = vmatmul.mubr.f32.gmra.mrb[0].mxu0 %v1785
          %v1855 = vpop.f32.mrb[0].mxu0
          %v1856 = vadd.f32 0.0, %v1855
          %v1857 = vpop.f32.mrb[0].mxu0
          %1858 = vmatprep.mubr.f32.mxu0 0.0
          %1859 = vmatmul.mubr.f32.gmra.mrb[0].mxu0 %v1787
          %v1860 = vpop.f32.mrb[0].mxu0
          %v1861 = vadd.f32 0.0, %v1860
          %v1862 = vpop.f32.mrb[0].mxu0
          %1863 = vdwg.mxu0
          %v1866 = vcombine.high %v1856, %v1856
          %v1868 = vunpack.c.l.s4 1983009808
          %v1869 = vunpack.c.0.s8 %v1868
          %v1870 = vlaneseq
          %v1871 = vshrl.u32 %v1870, 7
          %v1872 = vsub.s32 %v1869, %v1871
          %v1873 = vrot.slane %v1856, %v1872
          %v1875 = vunpack.c.l.s4 1983009808
          %v1876 = vunpack.c.0.s8 %v1875
          %v1877 = vlaneseq
          %v1878 = vshrl.u32 %v1877, 7
          %v1879 = vsub.s32 %v1876, %v1878
          %v1880 = vrot.slane %v1866, %v1879
          %v1881 = vcombine.high %v1873, %v1873
          %v1882 = vcombine.high %v1880, %v1880
          %v1884 = vunpack.c.l.s4 1983009808
          %v1885 = vunpack.c.0.s8 %v1884
          %v1886 = vlaneseq
          %v1887 = vshrl.u32 %v1886, 7
          %v1888 = vsub.s32 %v1885, %v1887
          %v1889 = vrot.slane %v1861, %v1888
          %v1890 = vcombine.high %v1889, %v1889
          %v1897 = vstv %s1523
          %vm1898 = vcmp.gt.s32.totalorder %v1897, 0
          %vm1899 = vcmp.gt.s32.totalorder %v1897, 1
          %vm1900 = vcmp.gt.s32.totalorder %v1897, 2
          %vm1901 = vcmp.gt.s32.totalorder %v1897, 3
          %vm1902 = vcmp.gt.s32.totalorder %v1897, 4
          %vm1903 = vcmp.gt.s32.totalorder %v1897, 5
          %v1904 = vsel %vm1898, 1, 0
          %v1905 = vsel %vm1899, 1, 0
          %v1906 = vsel %vm1900, 1, 0
          %v1907 = vsel %vm1901, 1, 0
          %v1908 = vsel %vm1902, 1, 0
          %v1909 = vsel %vm1903, 1, 0
          %vm1910 = vcmp.eq.s32.totalorder %v1904, 1
          %vm1911 = vcmp.eq.s32.totalorder %v1905, 1
          %vm1912 = vcmp.eq.s32.totalorder %v1906, 1
          %vm1913 = vcmp.eq.s32.totalorder %v1907, 1
          %vm1914 = vcmp.eq.s32.totalorder %v1908, 1
          %vm1915 = vcmp.eq.s32.totalorder %v1909, 1
          %v1916 = vsel %vm1910, %v1873, -1e+09
          %v1917 = vsel %vm1911, %v1881, -1e+09
          %v1918 = vsel %vm1912, %v1880, -1e+09
          %v1919 = vsel %vm1913, %v1882, -1e+09
          %v1920 = vsel %vm1914, %v1889, -1e+09
          %v1921 = vsel %vm1915, %v1890, -1e+09
          %vm1922 = vcmask 25600
          %v1923 = vsel %vm1922, %v1916, -inf
          %v1924 = vsel %vm1922, %v1917, -inf
          %v1925 = vsel %vm1922, %v1918, -inf
          %v1926 = vsel %vm1922, %v1919, -inf
          %v1927 = vsel %vm1922, %v1920, -inf
          %v1928 = vmax.f32 %v1923, %v1927
          %v1929 = vsel %vm1922, %v1921, -inf
          %v1930 = vmax.f32 %v1924, %v1929
          %v1931 = vmax.f32 %v1928, %v1930
          %v1932 = vmax.f32 %v1925, %v1926
          %v1933 = vmax.f32 %v1931, %v1932
          %v1934 = vsub.f32 %v1916, %v1933
          %v1935 = vsub.f32 %v1917, %v1933
          %v1936 = vsub.f32 %v1918, %v1933
          %v1937 = vsub.f32 %v1919, %v1933
          %v1938 = vsub.f32 %v1920, %v1933
          %v1939 = vsub.f32 %v1921, %v1933
          %v1940 = vmul.f32 %v1934, 1.442695
          %v1941 = vpow.pop %v1940
          %v1942 = vmul.f32 %v1935, 1.442695
          %v1943 = vpow.pop %v1942
          %v1944 = vmul.f32 %v1936, 1.442695
          %v1945 = vpow.pop %v1944
          %v1946 = vmul.f32 %v1937, 1.442695
          %v1947 = vpow.pop %v1946
          %v1948 = vmul.f32 %v1938, 1.442695
          %v1949 = vpow.pop %v1948
          %v1950 = vmul.f32 %v1939, 1.442695
          %v1951 = vpow.pop %v1950
          %v1952 = vcvt.s32.f32 %v1904
          %v1953 = vcvt.s32.f32 %v1905
          %v1954 = vcvt.s32.f32 %v1906
          %v1955 = vcvt.s32.f32 %v1907
          %v1956 = vcvt.s32.f32 %v1908
          %v1957 = vcvt.s32.f32 %v1909
          %v1958 = vmul.f32 %v1941, %v1952
          %v1959 = vmul.f32 %v1943, %v1953
          %v1960 = vmul.f32 %v1945, %v1954
          %v1961 = vmul.f32 %v1947, %v1955
          %v1962 = vmul.f32 %v1949, %v1956
          %v1963 = vmul.f32 %v1951, %v1957
          %v1964 = vsel %vm1922, %v1958, 0.0
          %v1965 = vsel %vm1922, %v1959, 0.0
          %v1966 = vadd.f32 %v1964, %v1965
          %v1967 = vsel %vm1922, %v1960, 0.0
          %v1968 = vadd.f32 %v1966, %v1967
          %v1969 = vsel %vm1922, %v1961, 0.0
          %v1970 = vadd.f32 %v1968, %v1969
          %v1971 = vsel %vm1922, %v1962, 0.0
          %v1972 = vadd.f32 %v1970, %v1971
          %v1973 = vsel %vm1922, %v1963, 0.0
          %v1974 = vadd.f32 %v1972, %v1973
          %v1975 = vrcp.pop %v1974
          %v1976 = vmul.f32 %v1958, %v1975
          %v1977 = vmul.f32 %v1959, %v1975
          %v1978 = vmul.f32 %v1960, %v1975
          %v1979 = vmul.f32 %v1961, %v1975
          %v1980 = vmul.f32 %v1962, %v1975
          %v1981 = vmul.f32 %v1963, %v1975
          %1983 = vset.pattern.permute.xlu0 0
          %1984 = vperm.xlu0 %1983, %v1976
          %v1985 = vpop.permute.xlu0 %1984
          %v1988 = vunpack.c.l.s4 269488144
          %v1989 = vunpack.c.0.s8 %v1988
          %v1990 = vlaneseq
          %v1991 = vshrl.u32 %v1990, 7
          %v1992 = vsub.s32 %v1989, %v1991
          %v1993 = vrot.slane %v1985, %v1992
          %1995 = vset.pattern.permute.xlu0 0
          %1996 = vperm.xlu0 %1995, %v1977
          %v1997 = vpop.permute.xlu0 %1996
          %v2000 = vunpack.c.l.s4 269488144
          %v2001 = vunpack.c.0.s8 %v2000
          %v2002 = vlaneseq
          %v2003 = vshrl.u32 %v2002, 7
          %v2004 = vsub.s32 %v2001, %v2003
          %v2005 = vrot.slane %v1997, %v2004
          %2007 = vset.pattern.permute.xlu0 0
          %2008 = vperm.xlu0 %2007, %v1978
          %v2009 = vpop.permute.xlu0 %2008
          %v2012 = vunpack.c.l.s4 269488144
          %v2013 = vunpack.c.0.s8 %v2012
          %v2014 = vlaneseq
          %v2015 = vshrl.u32 %v2014, 7
          %v2016 = vsub.s32 %v2013, %v2015
          %v2017 = vrot.slane %v2009, %v2016
          %2019 = vset.pattern.permute.xlu0 0
          %2020 = vperm.xlu0 %2019, %v1979
          %v2021 = vpop.permute.xlu0 %2020
          %v2024 = vunpack.c.l.s4 269488144
          %v2025 = vunpack.c.0.s8 %v2024
          %v2026 = vlaneseq
          %v2027 = vshrl.u32 %v2026, 7
          %v2028 = vsub.s32 %v2025, %v2027
          %v2029 = vrot.slane %v2021, %v2028
          %2031 = vset.pattern.permute.xlu0 0
          %2032 = vperm.xlu0 %2031, %v1980
          %v2033 = vpop.permute.xlu0 %2032
          %v2036 = vunpack.c.l.s4 269488144
          %v2037 = vunpack.c.0.s8 %v2036
          %v2038 = vlaneseq
          %v2039 = vshrl.u32 %v2038, 7
          %v2040 = vsub.s32 %v2037, %v2039
          %v2041 = vrot.slane %v2033, %v2040
          %2043 = vset.pattern.permute.xlu0 0
          %2044 = vperm.xlu0 %2043, %v1981
          %v2045 = vpop.permute.xlu0 %2044
          %v2048 = vunpack.c.l.s4 269488144
          %v2049 = vunpack.c.0.s8 %v2048
          %v2050 = vlaneseq
          %v2051 = vshrl.u32 %v2050, 7
          %v2052 = vsub.s32 %v2049, %v2051
          %v2053 = vrot.slane %v2045, %v2052
          %v2054 = vmul.f32 %v1993, %v1744
          %v2055 = vmul.f32 %v2005, %v1745
          %v2056 = vmul.f32 %v2017, %v1746
          %v2057 = vmul.f32 %v2029, %v1747
          %v2058 = vmul.f32 %v2041, %v1748
          %v2059 = vmul.f32 %v2053, %v1749
          %vm2060 = vcmask 123904
          %v2061 = vsel %vm2060, %v2054, 0.0
          %v2062 = vsel %vm2060, %v2055, 0.0
          %v2063 = vadd.f32 %v2061, %v2062
          %v2064 = vsel %vm2060, %v2056, 0.0
          %v2065 = vadd.f32 %v2063, %v2064
          %v2066 = vsel %vm2060, %v2057, 0.0
          %v2067 = vadd.f32 %v2065, %v2066
          %v2068 = vsel %vm2060, %v2058, 0.0
          %v2069 = vadd.f32 %v2067, %v2068
          %v2070 = vsel %vm2060, %v2059, 0.0
          %v2071 = vadd.f32 %v2069, %v2070
          %2072 = vset.pattern.permute.xlu0 1
          %2073 = vperm.xlu0 %2072, %v1976
          %v2074 = vpop.permute.xlu0 %2073
          %v2077 = vunpack.c.l.s4 269488144
          %v2078 = vunpack.c.0.s8 %v2077
          %v2079 = vlaneseq
          %v2080 = vshrl.u32 %v2079, 7
          %v2081 = vsub.s32 %v2078, %v2080
          %v2082 = vrot.slane %v2074, %v2081
          %2083 = vset.pattern.permute.xlu0 1
          %2084 = vperm.xlu0 %2083, %v1977
          %v2085 = vpop.permute.xlu0 %2084
          %v2088 = vunpack.c.l.s4 269488144
          %v2089 = vunpack.c.0.s8 %v2088
          %v2090 = vlaneseq
          %v2091 = vshrl.u32 %v2090, 7
          %v2092 = vsub.s32 %v2089, %v2091
          %v2093 = vrot.slane %v2085, %v2092
          %2094 = vset.pattern.permute.xlu0 1
          %2095 = vperm.xlu0 %2094, %v1978
          %v2096 = vpop.permute.xlu0 %2095
          %v2099 = vunpack.c.l.s4 269488144
          %v2100 = vunpack.c.0.s8 %v2099
          %v2101 = vlaneseq
          %v2102 = vshrl.u32 %v2101, 7
          %v2103 = vsub.s32 %v2100, %v2102
          %v2104 = vrot.slane %v2096, %v2103
          %2105 = vset.pattern.permute.xlu0 1
          %2106 = vperm.xlu0 %2105, %v1979
          %v2107 = vpop.permute.xlu0 %2106
          %v2110 = vunpack.c.l.s4 269488144
          %v2111 = vunpack.c.0.s8 %v2110
          %v2112 = vlaneseq
          %v2113 = vshrl.u32 %v2112, 7
          %v2114 = vsub.s32 %v2111, %v2113
          %v2115 = vrot.slane %v2107, %v2114
          %2116 = vset.pattern.permute.xlu0 1
          %2117 = vperm.xlu0 %2116, %v1980
          %v2118 = vpop.permute.xlu0 %2117
          %v2121 = vunpack.c.l.s4 269488144
          %v2122 = vunpack.c.0.s8 %v2121
          %v2123 = vlaneseq
          %v2124 = vshrl.u32 %v2123, 7
          %v2125 = vsub.s32 %v2122, %v2124
          %v2126 = vrot.slane %v2118, %v2125
          %2127 = vset.pattern.permute.xlu0 1
          %2128 = vperm.xlu0 %2127, %v1981
          %v2129 = vpop.permute.xlu0 %2128
          %v2132 = vunpack.c.l.s4 269488144
          %v2133 = vunpack.c.0.s8 %v2132
          %v2134 = vlaneseq
          %v2135 = vshrl.u32 %v2134, 7
          %v2136 = vsub.s32 %v2133, %v2135
          %v2137 = vrot.slane %v2129, %v2136
          %v2138 = vmul.f32 %v2082, %v1744
          %v2139 = vmul.f32 %v2093, %v1745
          %v2140 = vmul.f32 %v2104, %v1746
          %v2141 = vmul.f32 %v2115, %v1747
          %v2142 = vmul.f32 %v2126, %v1748
          %v2143 = vmul.f32 %v2137, %v1749
          %v2144 = vsel %vm2060, %v2138, 0.0
          %v2145 = vsel %vm2060, %v2139, 0.0
          %v2146 = vadd.f32 %v2144, %v2145
          %v2147 = vsel %vm2060, %v2140, 0.0
          %v2148 = vadd.f32 %v2146, %v2147
          %v2149 = vsel %vm2060, %v2141, 0.0
          %v2150 = vadd.f32 %v2148, %v2149
          %v2151 = vsel %vm2060, %v2142, 0.0
          %v2152 = vadd.f32 %v2150, %v2151
          %v2153 = vsel %vm2060, %v2143, 0.0
          %v2154 = vadd.f32 %v2152, %v2153
          %2155 = vset.pattern.permute.xlu0 2
          %2156 = vperm.xlu0 %2155, %v1976
          %v2157 = vpop.permute.xlu0 %2156
          %v2160 = vunpack.c.l.s4 269488144
          %v2161 = vunpack.c.0.s8 %v2160
          %v2162 = vlaneseq
          %v2163 = vshrl.u32 %v2162, 7
          %v2164 = vsub.s32 %v2161, %v2163
          %v2165 = vrot.slane %v2157, %v2164
          %2166 = vset.pattern.permute.xlu0 2
          %2167 = vperm.xlu0 %2166, %v1977
          %v2168 = vpop.permute.xlu0 %2167
          %v2171 = vunpack.c.l.s4 269488144
          %v2172 = vunpack.c.0.s8 %v2171
          %v2173 = vlaneseq
          %v2174 = vshrl.u32 %v2173, 7
          %v2175 = vsub.s32 %v2172, %v2174
          %v2176 = vrot.slane %v2168, %v2175
          %2177 = vset.pattern.permute.xlu0 2
          %2178 = vperm.xlu0 %2177, %v1978
          %v2179 = vpop.permute.xlu0 %2178
          %v2182 = vunpack.c.l.s4 269488144
          %v2183 = vunpack.c.0.s8 %v2182
          %v2184 = vlaneseq
          %v2185 = vshrl.u32 %v2184, 7
          %v2186 = vsub.s32 %v2183, %v2185
          %v2187 = vrot.slane %v2179, %v2186
          %2188 = vset.pattern.permute.xlu0 2
          %2189 = vperm.xlu0 %2188, %v1979
          %v2190 = vpop.permute.xlu0 %2189
          %v2193 = vunpack.c.l.s4 269488144
          %v2194 = vunpack.c.0.s8 %v2193
          %v2195 = vlaneseq
          %v2196 = vshrl.u32 %v2195, 7
          %v2197 = vsub.s32 %v2194, %v2196
          %v2198 = vrot.slane %v2190, %v2197
          %2199 = vset.pattern.permute.xlu0 2
          %2200 = vperm.xlu0 %2199, %v1980
          %v2201 = vpop.permute.xlu0 %2200
          %v2204 = vunpack.c.l.s4 269488144
          %v2205 = vunpack.c.0.s8 %v2204
          %v2206 = vlaneseq
          %v2207 = vshrl.u32 %v2206, 7
          %v2208 = vsub.s32 %v2205, %v2207
          %v2209 = vrot.slane %v2201, %v2208
          %2210 = vset.pattern.permute.xlu0 2
          %2211 = vperm.xlu0 %2210, %v1981
          %v2212 = vpop.permute.xlu0 %2211
          %v2215 = vunpack.c.l.s4 269488144
          %v2216 = vunpack.c.0.s8 %v2215
          %v2217 = vlaneseq
          %v2218 = vshrl.u32 %v2217, 7
          %v2219 = vsub.s32 %v2216, %v2218
          %v2220 = vrot.slane %v2212, %v2219
          %v2222 = vunpack.c.l.s4 1983009808
          %v2223 = vunpack.c.0.s8 %v2222
          %v2224 = vlaneseq
          %v2225 = vshrl.u32 %v2224, 7
          %v2226 = vsub.s32 %v2223, %v2225
          %v2227 = vrot.slane %v1744, %v2226
          %v2229 = vunpack.c.l.s4 1983009808
          %v2230 = vunpack.c.0.s8 %v2229
          %v2231 = vlaneseq
          %v2232 = vshrl.u32 %v2231, 7
          %v2233 = vsub.s32 %v2230, %v2232
          %v2234 = vrot.slane %v1745, %v2233
          %v2236 = vunpack.c.l.s4 1983009808
          %v2237 = vunpack.c.0.s8 %v2236
          %v2238 = vlaneseq
          %v2239 = vshrl.u32 %v2238, 7
          %v2240 = vsub.s32 %v2237, %v2239
          %v2241 = vrot.slane %v1746, %v2240
          %v2243 = vunpack.c.l.s4 1983009808
          %v2244 = vunpack.c.0.s8 %v2243
          %v2245 = vlaneseq
          %v2246 = vshrl.u32 %v2245, 7
          %v2247 = vsub.s32 %v2244, %v2246
          %v2248 = vrot.slane %v1747, %v2247
          %v2250 = vunpack.c.l.s4 1983009808
          %v2251 = vunpack.c.0.s8 %v2250
          %v2252 = vlaneseq
          %v2253 = vshrl.u32 %v2252, 7
          %v2254 = vsub.s32 %v2251, %v2253
          %v2255 = vrot.slane %v1748, %v2254
          %v2257 = vunpack.c.l.s4 1983009808
          %v2258 = vunpack.c.0.s8 %v2257
          %v2259 = vlaneseq
          %v2260 = vshrl.u32 %v2259, 7
          %v2261 = vsub.s32 %v2258, %v2260
          %v2262 = vrot.slane %v1749, %v2261
          %2263 = vrot.lane.b32.xlu0 %v2227, 112
          %v2264 = vpop.permute.xlu0 %2263
          %2265 = vrot.lane.b32.xlu0 %v2234, 112
          %v2266 = vpop.permute.xlu0 %2265
          %2267 = vrot.lane.b32.xlu0 %v2241, 112
          %v2268 = vpop.permute.xlu0 %2267
          %2269 = vrot.lane.b32.xlu0 %v2248, 112
          %v2270 = vpop.permute.xlu0 %2269
          %2271 = vrot.lane.b32.xlu0 %v2255, 112
          %v2272 = vpop.permute.xlu0 %2271
          %2273 = vrot.lane.b32.xlu0 %v2262, 112
          %v2274 = vpop.permute.xlu0 %2273
          %v2281 = vmul.f32 %v2165, %v2264
          %v2282 = vmul.f32 %v2176, %v2266
          %v2283 = vmul.f32 %v2187, %v2268
          %v2284 = vmul.f32 %v2198, %v2270
          %v2285 = vmul.f32 %v2209, %v2272
          %v2286 = vmul.f32 %v2220, %v2274
          %v2287 = vsel %vm2060, %v2281, 0.0
          %v2288 = vsel %vm2060, %v2282, 0.0
          %v2289 = vadd.f32 %v2287, %v2288
          %v2290 = vsel %vm2060, %v2283, 0.0
          %v2291 = vadd.f32 %v2289, %v2290
          %v2292 = vsel %vm2060, %v2284, 0.0
          %v2293 = vadd.f32 %v2291, %v2292
          %v2294 = vsel %vm2060, %v2285, 0.0
          %v2295 = vadd.f32 %v2293, %v2294
          %v2296 = vsel %vm2060, %v2286, 0.0
          %v2297 = vadd.f32 %v2295, %v2296
          %2298 = vset.pattern.permute.xlu0 3
          %2299 = vperm.xlu0 %2298, %v1976
          %v2300 = vpop.permute.xlu0 %2299
          %v2303 = vunpack.c.l.s4 269488144
          %v2304 = vunpack.c.0.s8 %v2303
          %v2305 = vlaneseq
          %v2306 = vshrl.u32 %v2305, 7
          %v2307 = vsub.s32 %v2304, %v2306
          %v2308 = vrot.slane %v2300, %v2307
          %2309 = vset.pattern.permute.xlu0 3
          %2310 = vperm.xlu0 %2309, %v1977
          %v2311 = vpop.permute.xlu0 %2310
          %v2314 = vunpack.c.l.s4 269488144
          %v2315 = vunpack.c.0.s8 %v2314
          %v2316 = vlaneseq
          %v2317 = vshrl.u32 %v2316, 7
          %v2318 = vsub.s32 %v2315, %v2317
          %v2319 = vrot.slane %v2311, %v2318
          %2320 = vset.pattern.permute.xlu0 3
          %2321 = vperm.xlu0 %2320, %v1978
          %v2322 = vpop.permute.xlu0 %2321
          %v2325 = vunpack.c.l.s4 269488144
          %v2326 = vunpack.c.0.s8 %v2325
          %v2327 = vlaneseq
          %v2328 = vshrl.u32 %v2327, 7
          %v2329 = vsub.s32 %v2326, %v2328
          %v2330 = vrot.slane %v2322, %v2329
          %2331 = vset.pattern.permute.xlu0 3
          %2332 = vperm.xlu0 %2331, %v1979
          %v2333 = vpop.permute.xlu0 %2332
          %v2336 = vunpack.c.l.s4 269488144
          %v2337 = vunpack.c.0.s8 %v2336
          %v2338 = vlaneseq
          %v2339 = vshrl.u32 %v2338, 7
          %v2340 = vsub.s32 %v2337, %v2339
          %v2341 = vrot.slane %v2333, %v2340
          %2342 = vset.pattern.permute.xlu0 3
          %2343 = vperm.xlu0 %2342, %v1980
          %v2344 = vpop.permute.xlu0 %2343
          %v2347 = vunpack.c.l.s4 269488144
          %v2348 = vunpack.c.0.s8 %v2347
          %v2349 = vlaneseq
          %v2350 = vshrl.u32 %v2349, 7
          %v2351 = vsub.s32 %v2348, %v2350
          %v2352 = vrot.slane %v2344, %v2351
          %2353 = vset.pattern.permute.xlu0 3
          %2354 = vperm.xlu0 %2353, %v1981
          %v2355 = vpop.permute.xlu0 %2354
          %v2358 = vunpack.c.l.s4 269488144
          %v2359 = vunpack.c.0.s8 %v2358
          %v2360 = vlaneseq
          %v2361 = vshrl.u32 %v2360, 7
          %v2362 = vsub.s32 %v2359, %v2361
          %v2363 = vrot.slane %v2355, %v2362
          %v2364 = vmul.f32 %v2308, %v2264
          %v2365 = vmul.f32 %v2319, %v2266
          %v2366 = vmul.f32 %v2330, %v2268
          %v2367 = vmul.f32 %v2341, %v2270
          %v2368 = vmul.f32 %v2352, %v2272
          %v2369 = vmul.f32 %v2363, %v2274
          %v2370 = vsel %vm2060, %v2364, 0.0
          %v2371 = vsel %vm2060, %v2365, 0.0
          %v2372 = vadd.f32 %v2370, %v2371
          %v2373 = vsel %vm2060, %v2366, 0.0
          %v2374 = vadd.f32 %v2372, %v2373
          %v2375 = vsel %vm2060, %v2367, 0.0
          %v2376 = vadd.f32 %v2374, %v2375
          %v2377 = vsel %vm2060, %v2368, 0.0
          %v2378 = vadd.f32 %v2376, %v2377
          %v2379 = vsel %vm2060, %v2369, 0.0
          %v2380 = vadd.f32 %v2378, %v2379
          %v2381 = vld [vmem:[%s1104] sm:$0x3]
          %v2382 = vld [vmem:[%s1107] sm:$0x1]
          %v2383 = vlaneseq
          %v2384 = vshrl.u32 %v2383, 7
          %v2385 = vsub.s32 0, %v2384
          %v2386 = vrot.slane %v2381, %v2385
          %v2387 = vmul.f32 %v2071, %v2386
          %v2388 = vsel %vm2060, %v2387, 0.0
          %2389 = vadd.xlane.f32.xlu0 %v2388
          %v2390 = vpop.xlane.xlu0 %2389
          %v2392 = vlaneseq
          %v2393 = vshrl.u32 %v2392, 7
          %v2394 = vsub.s32 0, %v2393
          %v2395 = vrot.slane %v2382, %v2394
          %v2397 = vadd.f32 %v2390, %v2395
          %v2398 = vmul.f32 %v2297, %v2386
          %v2399 = vsel %vm2060, %v2398, 0.0
          %2400 = vadd.xlane.f32.xlu0 %v2399
          %v2401 = vpop.xlane.xlu0 %2400
          %v2402 = vadd.f32 %v2401, %v2395
          %v2403 = vmax.f32 %v2397, %v2402
          %v2404 = vsub.f32 %v2397, %v2403
          %v2405 = vmul.f32 %v2404, 1.442695
          %v2406 = vpow.pop %v2405
          %v2407 = vsub.f32 %v2402, %v2403
          %v2408 = vmul.f32 %v2407, 1.442695
          %v2409 = vpow.pop %v2408
          %v2410 = vadd.f32 %v2406, %v2409
          %v2411 = vrcp.pop %v2410
          %v2412 = vmul.f32 %v2406, %v2411
          %v2413 = vmul.f32 %v2409, %v2411
          %v2414 = vlaneseq
          %v2415 = vshrl.u32 %v2414, 7
          %v2416 = vsub.s32 1, %v2415
          %v2417 = vrot.slane %v2381, %v2416
          %v2418 = vmul.f32 %v2380, %v2417
          %v2419 = vsel %vm2060, %v2418, 0.0
          %2420 = vadd.xlane.f32.xlu0 %v2419
          %v2421 = vpop.xlane.xlu0 %2420
          %v2422 = vadd.f32 %v2421, %v2395
          %v2423 = vmul.f32 %v2154, %v2417
          %v2424 = vsel %vm2060, %v2423, 0.0
          %2425 = vadd.xlane.f32.xlu0 %v2424
          %v2426 = vpop.xlane.xlu0 %2425
          %v2427 = vadd.f32 %v2426, %v2395
          %v2428 = vmax.f32 %v2422, %v2427
          %v2429 = vsub.f32 %v2422, %v2428
          %v2430 = vmul.f32 %v2429, 1.442695
          %v2431 = vpow.pop %v2430
          %v2432 = vsub.f32 %v2427, %v2428
          %v2433 = vmul.f32 %v2432, 1.442695
          %v2434 = vpow.pop %v2433
          %v2435 = vadd.f32 %v2431, %v2434
          %v2436 = vrcp.pop %v2435
          %v2437 = vmul.f32 %v2431, %v2436
          %v2438 = vmul.f32 %v2434, %v2436
          %v2439 = vld [vmem:[%s1112] sm:$0xff]
          %v2440 = vld [vmem:[%s1112 + $0x8] sm:$0xff]
          %v2441 = vld [vmem:[%s1112 + $0x10] sm:$0xff]
          %v2442 = vld [vmem:[%s1112 + $0x18] sm:$0xff]
          %v2443 = vld [vmem:[%s1112 + $0x20] sm:$0xff]
          %v2444 = vld [vmem:[%s1112 + $0x28] sm:$0xff]
          %v2445 = vld [vmem:[%s1112 + $0x30] sm:$0xff]
          %v2446 = vld [vmem:[%s1112 + $0x38] sm:$0xff]
          %2448 = vset.pattern.permute.xlu0 0
          %2449 = vperm.xlu0 %2448, %v2412
          %v2450 = vpop.permute.xlu0 %2449
          %v2452 = vmul.f32 %v2450, %v2071
          %2454 = vset.pattern.permute.xlu0 0
          %2455 = vperm.xlu0 %2454, %v2413
          %v2456 = vpop.permute.xlu0 %2455
          %v2458 = vmul.f32 %v2456, %v2297
          %vm2459 = vcmask 130048
          %v2461 = vsel %vm2459, %v2458, 0
          %2463 = vmatprep.subr.mxu0 0.0
          %2464 = vmatpush1.msra.mxu0 %v2441
          %2465 = vmatprep.subr.mxu0 0.0
          %2466 = vmatpush1.msra.mxu0 %v2442
          %2467 = vmatprep.subr.mxu0 0.0
          %2468 = vmatpush1.msra.mxu0 0.0
          %2469 = vmatprep.subr.mxu0 0.0
          %2470 = vmatpush1.msra.mxu0 0.0
          %2471 = vmatprep.subr.mxu0 0.0
          %2472 = vmatpush1.msra.mxu0 0.0
          %2473 = vmatprep.subr.mxu0 0.0
          %2474 = vmatpush1.msra.mxu0 0.0
          %2475 = vmatprep.subr.mxu0 0.0
          %2476 = vmatpush1.msra.mxu0 0.0
          %2477 = vmatprep.subr.mxu0 0.0
          %2478 = vmatpush1.msra.mxu0 0.0
          %2479 = vmatprep.subr.mxu0 0.0
          %2480 = vmatpush1.msra.mxu0 0.0
          %2481 = vmatprep.subr.mxu0 0.0
          %2482 = vmatpush1.msra.mxu0 0.0
          %2483 = vmatprep.subr.mxu0 0.0
          %2484 = vmatpush1.msra.mxu0 0.0
          %2485 = vmatprep.subr.mxu0 0.0
          %2486 = vmatpush1.msra.mxu0 0.0
          %2487 = vmatprep.subr.mxu0 0.0
          %2488 = vmatpush1.msra.mxu0 0.0
          %2489 = vmatprep.subr.mxu0 0.0
          %2490 = vmatpush1.msra.mxu0 0.0
          %2491 = vmatprep.subr.mxu0 0.0
          %2492 = vmatpush1.msra.mxu0 0.0
          %2493 = vmatprep.subr.mxu0 0.0
          %2494 = vmatpush1.msra.mxu0 0.0
          %2495 = vmatprep.subr.mxu0 0.0
          %2496 = vmatpush1.msra.mxu0 0.0
          %2497 = vmatprep.subr.mxu0 0.0
          %2498 = vmatpush1.msra.mxu0 0.0
          %2499 = vmatprep.subr.mxu0 0.0
          %2500 = vmatpush1.msra.mxu0 0.0
          %2501 = vmatprep.subr.mxu0 0.0
          %2502 = vmatpush1.msra.mxu0 0.0
          %2503 = vmatprep.subr.mxu0 0.0
          %2504 = vmatpush1.msra.mxu0 0.0
          %2505 = vmatprep.subr.mxu0 0.0
          %2506 = vmatpush1.msra.mxu0 0.0
          %2507 = vmatprep.subr.mxu0 0.0
          %2508 = vmatpush1.msra.mxu0 0.0
          %2509 = vmatprep.subr.mxu0 0.0
          %2510 = vmatpush1.msra.mxu0 0.0
          %2511 = vmatprep.subr.mxu0 0.0
          %2512 = vmatpush1.msra.mxu0 0.0
          %2513 = vmatprep.subr.mxu0 0.0
          %2514 = vmatpush1.msra.mxu0 0.0
          %2515 = vmatprep.subr.mxu0 0.0
          %2516 = vmatpush1.msra.mxu0 0.0
          %2517 = vmatprep.subr.mxu0 0.0
          %2518 = vmatpush1.msra.mxu0 0.0
          %2519 = vmatprep.subr.mxu0 0.0
          %2520 = vmatpush1.msra.mxu0 0.0
          %2521 = vmatprep.subr.mxu0 0.0
          %2522 = vmatpush1.msra.mxu0 0.0
          %2523 = vmatprep.subr.mxu0 0.0
          %2524 = vmatpush1.msra.mxu0 0.0
          %2525 = vmatprep.subr.mxu0 0.0
          %2526 = vmatpush1.msra.mxu0 0.0
          %2527 = vmatprep.mubr.f32.mxu0 0.0
          %2528 = vmatmul.mubr.f32.gmra.mrb[0].mxu0 %v2461
          %v2529 = vpop.f32.mrb[0].mxu0
          %v2530 = vadd.f32 0.0, %v2529
          %v2531 = vpop.f32.mrb[0].mxu0
          %2532 = vdwg.mxu0
          %v2534 = vsel %vm2459, %v2452, 0
          %2536 = vmatprep.subr.mxu0 0.0
          %2537 = vmatpush1.msra.mxu0 %v2439
          %2538 = vmatprep.subr.mxu0 0.0
          %2539 = vmatpush1.msra.mxu0 %v2440
          %2540 = vmatprep.subr.mxu0 0.0
          %2541 = vmatpush1.msra.mxu0 0.0
          %2542 = vmatprep.subr.mxu0 0.0
          %2543 = vmatpush1.msra.mxu0 0.0
          %2544 = vmatprep.subr.mxu0 0.0
          %2545 = vmatpush1.msra.mxu0 0.0
          %2546 = vmatprep.subr.mxu0 0.0
          %2547 = vmatpush1.msra.mxu0 0.0
          %2548 = vmatprep.subr.mxu0 0.0
          %2549 = vmatpush1.msra.mxu0 0.0
          %2550 = vmatprep.subr.mxu0 0.0
          %2551 = vmatpush1.msra.mxu0 0.0
          %2552 = vmatprep.subr.mxu0 0.0
          %2553 = vmatpush1.msra.mxu0 0.0
          %2554 = vmatprep.subr.mxu0 0.0
          %2555 = vmatpush1.msra.mxu0 0.0
          %2556 = vmatprep.subr.mxu0 0.0
          %2557 = vmatpush1.msra.mxu0 0.0
          %2558 = vmatprep.subr.mxu0 0.0
          %2559 = vmatpush1.msra.mxu0 0.0
          %2560 = vmatprep.subr.mxu0 0.0
          %2561 = vmatpush1.msra.mxu0 0.0
          %2562 = vmatprep.subr.mxu0 0.0
          %2563 = vmatpush1.msra.mxu0 0.0
          %2564 = vmatprep.subr.mxu0 0.0
          %2565 = vmatpush1.msra.mxu0 0.0
          %2566 = vmatprep.subr.mxu0 0.0
          %2567 = vmatpush1.msra.mxu0 0.0
          %2568 = vmatprep.subr.mxu0 0.0
          %2569 = vmatpush1.msra.mxu0 0.0
          %2570 = vmatprep.subr.mxu0 0.0
          %2571 = vmatpush1.msra.mxu0 0.0
          %2572 = vmatprep.subr.mxu0 0.0
          %2573 = vmatpush1.msra.mxu0 0.0
          %2574 = vmatprep.subr.mxu0 0.0
          %2575 = vmatpush1.msra.mxu0 0.0
          %2576 = vmatprep.subr.mxu0 0.0
          %2577 = vmatpush1.msra.mxu0 0.0
          %2578 = vmatprep.subr.mxu0 0.0
          %2579 = vmatpush1.msra.mxu0 0.0
          %2580 = vmatprep.subr.mxu0 0.0
          %2581 = vmatpush1.msra.mxu0 0.0
          %2582 = vmatprep.subr.mxu0 0.0
          %2583 = vmatpush1.msra.mxu0 0.0
          %2584 = vmatprep.subr.mxu0 0.0
          %2585 = vmatpush1.msra.mxu0 0.0
          %2586 = vmatprep.subr.mxu0 0.0
          %2587 = vmatpush1.msra.mxu0 0.0
          %2588 = vmatprep.subr.mxu0 0.0
          %2589 = vmatpush1.msra.mxu0 0.0
          %2590 = vmatprep.subr.mxu0 0.0
          %2591 = vmatpush1.msra.mxu0 0.0
          %2592 = vmatprep.subr.mxu0 0.0
          %2593 = vmatpush1.msra.mxu0 0.0
          %2594 = vmatprep.subr.mxu0 0.0
          %2595 = vmatpush1.msra.mxu0 0.0
          %2596 = vmatprep.subr.mxu0 0.0
          %2597 = vmatpush1.msra.mxu0 0.0
          %2598 = vmatprep.subr.mxu0 0.0
          %2599 = vmatpush1.msra.mxu0 0.0
          %2600 = vmatprep.mubr.f32.mxu0 0.0
          %2601 = vmatmul.mubr.f32.gmra.mrb[0].mxu0 %v2534
          %v2602 = vpop.f32.mrb[0].mxu0
          %v2603 = vadd.f32 %v2530, %v2602
          %v2604 = vpop.f32.mrb[0].mxu0
          %2605 = vdwg.mxu0
          %2607 = vset.pattern.permute.xlu0 1
          %2608 = vperm.xlu0 %2607, %v2437
          %v2609 = vpop.permute.xlu0 %2608
          %v2611 = vmul.f32 %v2609, %v2380
          %v2613 = vsel %vm2459, %v2611, 0
          %2615 = vmatprep.subr.mxu0 0.0
          %2616 = vmatpush1.msra.mxu0 %v2443
          %2617 = vmatprep.subr.mxu0 0.0
          %2618 = vmatpush1.msra.mxu0 %v2444
          %2619 = vmatprep.subr.mxu0 0.0
          %2620 = vmatpush1.msra.mxu0 0.0
          %2621 = vmatprep.subr.mxu0 0.0
          %2622 = vmatpush1.msra.mxu0 0.0
          %2623 = vmatprep.subr.mxu0 0.0
          %2624 = vmatpush1.msra.mxu0 0.0
          %2625 = vmatprep.subr.mxu0 0.0
          %2626 = vmatpush1.msra.mxu0 0.0
          %2627 = vmatprep.subr.mxu0 0.0
          %2628 = vmatpush1.msra.mxu0 0.0
          %2629 = vmatprep.subr.mxu0 0.0
          %2630 = vmatpush1.msra.mxu0 0.0
          %2631 = vmatprep.subr.mxu0 0.0
          %2632 = vmatpush1.msra.mxu0 0.0
          %2633 = vmatprep.subr.mxu0 0.0
          %2634 = vmatpush1.msra.mxu0 0.0
          %2635 = vmatprep.subr.mxu0 0.0
          %2636 = vmatpush1.msra.mxu0 0.0
          %2637 = vmatprep.subr.mxu0 0.0
          %2638 = vmatpush1.msra.mxu0 0.0
          %2639 = vmatprep.subr.mxu0 0.0
          %2640 = vmatpush1.msra.mxu0 0.0
          %2641 = vmatprep.subr.mxu0 0.0
          %2642 = vmatpush1.msra.mxu0 0.0
          %2643 = vmatprep.subr.mxu0 0.0
          %2644 = vmatpush1.msra.mxu0 0.0
          %2645 = vmatprep.subr.mxu0 0.0
          %2646 = vmatpush1.msra.mxu0 0.0
          %2647 = vmatprep.subr.mxu0 0.0
          %2648 = vmatpush1.msra.mxu0 0.0
          %2649 = vmatprep.subr.mxu0 0.0
          %2650 = vmatpush1.msra.mxu0 0.0
          %2651 = vmatprep.subr.mxu0 0.0
          %2652 = vmatpush1.msra.mxu0 0.0
          %2653 = vmatprep.subr.mxu0 0.0
          %2654 = vmatpush1.msra.mxu0 0.0
          %2655 = vmatprep.subr.mxu0 0.0
          %2656 = vmatpush1.msra.mxu0 0.0
          %2657 = vmatprep.subr.mxu0 0.0
          %2658 = vmatpush1.msra.mxu0 0.0
          %2659 = vmatprep.subr.mxu0 0.0
          %2660 = vmatpush1.msra.mxu0 0.0
          %2661 = vmatprep.subr.mxu0 0.0
          %2662 = vmatpush1.msra.mxu0 0.0
          %2663 = vmatprep.subr.mxu0 0.0
          %2664 = vmatpush1.msra.mxu0 0.0
          %2665 = vmatprep.subr.mxu0 0.0
          %2666 = vmatpush1.msra.mxu0 0.0
          %2667 = vmatprep.subr.mxu0 0.0
          %2668 = vmatpush1.msra.mxu0 0.0
          %2669 = vmatprep.subr.mxu0 0.0
          %2670 = vmatpush1.msra.mxu0 0.0
          %2671 = vmatprep.subr.mxu0 0.0
          %2672 = vmatpush1.msra.mxu0 0.0
          %2673 = vmatprep.subr.mxu0 0.0
          %2674 = vmatpush1.msra.mxu0 0.0
          %2675 = vmatprep.subr.mxu0 0.0
          %2676 = vmatpush1.msra.mxu0 0.0
          %2677 = vmatprep.subr.mxu0 0.0
          %2678 = vmatpush1.msra.mxu0 0.0
          %2679 = vmatprep.mubr.f32.mxu0 0.0
          %2680 = vmatmul.mubr.f32.gmra.mrb[0].mxu0 %v2613
          %v2681 = vpop.f32.mrb[0].mxu0
          %v2682 = vadd.f32 0.0, %v2681
          %v2683 = vpop.f32.mrb[0].mxu0
          %2684 = vdwg.mxu0
          %v2685 = vadd.f32 %v2603, %v2682
          %2687 = vset.pattern.permute.xlu0 1
          %2688 = vperm.xlu0 %2687, %v2438
          %v2689 = vpop.permute.xlu0 %2688
          %v2691 = vmul.f32 %v2689, %v2154
          %v2693 = vsel %vm2459, %v2691, 0
          %2695 = vmatprep.subr.mxu0 0.0
          %2696 = vmatpush1.msra.mxu0 %v2445
          %2697 = vmatprep.subr.mxu0 0.0
          %2698 = vmatpush1.msra.mxu0 %v2446
          %2699 = vmatprep.subr.mxu0 0.0
          %2700 = vmatpush1.msra.mxu0 0.0
          %2701 = vmatprep.subr.mxu0 0.0
          %2702 = vmatpush1.msra.mxu0 0.0
          %2703 = vmatprep.subr.mxu0 0.0
          %2704 = vmatpush1.msra.mxu0 0.0
          %2705 = vmatprep.subr.mxu0 0.0
          %2706 = vmatpush1.msra.mxu0 0.0
          %2707 = vmatprep.subr.mxu0 0.0
          %2708 = vmatpush1.msra.mxu0 0.0
          %2709 = vmatprep.subr.mxu0 0.0
          %2710 = vmatpush1.msra.mxu0 0.0
          %2711 = vmatprep.subr.mxu0 0.0
          %2712 = vmatpush1.msra.mxu0 0.0
          %2713 = vmatprep.subr.mxu0 0.0
          %2714 = vmatpush1.msra.mxu0 0.0
          %2715 = vmatprep.subr.mxu0 0.0
          %2716 = vmatpush1.msra.mxu0 0.0
          %2717 = vmatprep.subr.mxu0 0.0
          %2718 = vmatpush1.msra.mxu0 0.0
          %2719 = vmatprep.subr.mxu0 0.0
          %2720 = vmatpush1.msra.mxu0 0.0
          %2721 = vmatprep.subr.mxu0 0.0
          %2722 = vmatpush1.msra.mxu0 0.0
          %2723 = vmatprep.subr.mxu0 0.0
          %2724 = vmatpush1.msra.mxu0 0.0
          %2725 = vmatprep.subr.mxu0 0.0
          %2726 = vmatpush1.msra.mxu0 0.0
          %2727 = vmatprep.subr.mxu0 0.0
          %2728 = vmatpush1.msra.mxu0 0.0
          %2729 = vmatprep.subr.mxu0 0.0
          %2730 = vmatpush1.msra.mxu0 0.0
          %2731 = vmatprep.subr.mxu0 0.0
          %2732 = vmatpush1.msra.mxu0 0.0
          %2733 = vmatprep.subr.mxu0 0.0
          %2734 = vmatpush1.msra.mxu0 0.0
          %2735 = vmatprep.subr.mxu0 0.0
          %2736 = vmatpush1.msra.mxu0 0.0
          %2737 = vmatprep.subr.mxu0 0.0
          %2738 = vmatpush1.msra.mxu0 0.0
          %2739 = vmatprep.subr.mxu0 0.0
          %2740 = vmatpush1.msra.mxu0 0.0
          %2741 = vmatprep.subr.mxu0 0.0
          %2742 = vmatpush1.msra.mxu0 0.0
          %2743 = vmatprep.subr.mxu0 0.0
          %2744 = vmatpush1.msra.mxu0 0.0
          %2745 = vmatprep.subr.mxu0 0.0
          %2746 = vmatpush1.msra.mxu0 0.0
          %2747 = vmatprep.subr.mxu0 0.0
          %2748 = vmatpush1.msra.mxu0 0.0
          %2749 = vmatprep.subr.mxu0 0.0
          %2750 = vmatpush1.msra.mxu0 0.0
          %2751 = vmatprep.subr.mxu0 0.0
          %2752 = vmatpush1.msra.mxu0 0.0
          %2753 = vmatprep.subr.mxu0 0.0
          %2754 = vmatpush1.msra.mxu0 0.0
          %2755 = vmatprep.subr.mxu0 0.0
          %2756 = vmatpush1.msra.mxu0 0.0
          %2757 = vmatprep.subr.mxu0 0.0
          %2758 = vmatpush1.msra.mxu0 0.0
          %2759 = vmatprep.mubr.f32.mxu0 0.0
          %2760 = vmatmul.mubr.f32.gmra.mrb[0].mxu0 %v2693
          %v2761 = vpop.f32.mrb[0].mxu0
          %v2762 = vadd.f32 0.0, %v2761
          %v2763 = vpop.f32.mrb[0].mxu0
          %2764 = vdwg.mxu0
          %v2765 = vadd.f32 %v2685, %v2762
          %v2766 = vld [vmem:[%s1115] sm:$0x1]
          %v2768 = vlaneseq
          %v2769 = vshrl.u32 %v2768, 7
          %v2770 = vsub.s32 0, %v2769
          %v2771 = vrot.slane %v2766, %v2770
          %v2773 = vadd.f32 %v2765, %v2771
          %2774 = vst.msk [vmem:[#allocation8] sm:$0x3] %vm1121, %v2773
        $region127: #{bimodel_forward.2} parent=120 // pred_fallthru
          _
        %v2775 = vld [vmem:[#allocation8] sm:$0x3]
        %s2776 = scalar_lea.vmem [#allocation4], %s1528
        %v2777 = vld [vmem:[%s2776] sm:$0x3]
        %v2778 = vld [vmem:[%s1068] sm:$0xff]
        %v2779 = vld [vmem:[%s1068 + $0x8] sm:$0xff]
        %v2780 = vld [vmem:[%s1068 + $0x10] sm:$0xff]
        %v2781 = vld [vmem:[%s1068 + $0x18] sm:$0xff]
        %v2783 = vsel %vm1275, %v2775, 0
        %2785 = vmatprep.subr.mxu0 0.0
        %2786 = vmatpush1.msra.mxu0 %v2778
        %2787 = vmatprep.subr.mxu0 0.0
        %2788 = vmatpush1.msra.mxu0 %v2779
        %2789 = vmatprep.subr.mxu0 0.0
        %2790 = vmatpush1.msra.mxu0 %v2780
        %2791 = vmatprep.subr.mxu0 0.0
        %2792 = vmatpush1.msra.mxu0 %v2781
        %2793 = vmatprep.subr.mxu0 0.0
        %2794 = vmatpush1.msra.mxu0 0.0
        %2795 = vmatprep.subr.mxu0 0.0
        %2796 = vmatpush1.msra.mxu0 0.0
        %2797 = vmatprep.subr.mxu0 0.0
        %2798 = vmatpush1.msra.mxu0 0.0
        %2799 = vmatprep.subr.mxu0 0.0
        %2800 = vmatpush1.msra.mxu0 0.0
        %2801 = vmatprep.subr.mxu0 0.0
        %2802 = vmatpush1.msra.mxu0 0.0
        %2803 = vmatprep.subr.mxu0 0.0
        %2804 = vmatpush1.msra.mxu0 0.0
        %2805 = vmatprep.subr.mxu0 0.0
        %2806 = vmatpush1.msra.mxu0 0.0
        %2807 = vmatprep.subr.mxu0 0.0
        %2808 = vmatpush1.msra.mxu0 0.0
        %2809 = vmatprep.subr.mxu0 0.0
        %2810 = vmatpush1.msra.mxu0 0.0
        %2811 = vmatprep.subr.mxu0 0.0
        %2812 = vmatpush1.msra.mxu0 0.0
        %2813 = vmatprep.subr.mxu0 0.0
        %2814 = vmatpush1.msra.mxu0 0.0
        %2815 = vmatprep.subr.mxu0 0.0
        %2816 = vmatpush1.msra.mxu0 0.0
        %2817 = vmatprep.subr.mxu0 0.0
        %2818 = vmatpush1.msra.mxu0 0.0
        %2819 = vmatprep.subr.mxu0 0.0
        %2820 = vmatpush1.msra.mxu0 0.0
        %2821 = vmatprep.subr.mxu0 0.0
        %2822 = vmatpush1.msra.mxu0 0.0
        %2823 = vmatprep.subr.mxu0 0.0
        %2824 = vmatpush1.msra.mxu0 0.0
        %2825 = vmatprep.subr.mxu0 0.0
        %2826 = vmatpush1.msra.mxu0 0.0
        %2827 = vmatprep.subr.mxu0 0.0
        %2828 = vmatpush1.msra.mxu0 0.0
        %2829 = vmatprep.subr.mxu0 0.0
        %2830 = vmatpush1.msra.mxu0 0.0
        %2831 = vmatprep.subr.mxu0 0.0
        %2832 = vmatpush1.msra.mxu0 0.0
        %2833 = vmatprep.subr.mxu0 0.0
        %2834 = vmatpush1.msra.mxu0 0.0
        %2835 = vmatprep.subr.mxu0 0.0
        %2836 = vmatpush1.msra.mxu0 0.0
        %2837 = vmatprep.subr.mxu0 0.0
        %2838 = vmatpush1.msra.mxu0 0.0
        %2839 = vmatprep.subr.mxu0 0.0
        %2840 = vmatpush1.msra.mxu0 0.0
        %2841 = vmatprep.subr.mxu0 0.0
        %2842 = vmatpush1.msra.mxu0 0.0
        %2843 = vmatprep.subr.mxu0 0.0
        %2844 = vmatpush1.msra.mxu0 0.0
        %2845 = vmatprep.subr.mxu0 0.0
        %2846 = vmatpush1.msra.mxu0 0.0
        %2847 = vmatprep.subr.mxu0 0.0
        %2848 = vmatpush1.msra.mxu0 0.0
        %2849 = vmatprep.mubr.f32.mxu0 0.0
        %2850 = vmatmul.mubr.f32.gmra.mrb[0].mxu0 %v2783
        %v2851 = vpop.f32.mrb[0].mxu0
        %v2852 = vadd.f32 0.0, %v2851
        %v2853 = vpop.f32.mrb[0].mxu0
        %2854 = vdwg.mxu0
        %v2855 = vadd.f32 %v2777, %v2852
        %v2856 = vld [vmem:[#allocation6] sm:$0x3]
        %v2857 = vld [vmem:[%s1073] sm:$0xff]
        %v2858 = vld [vmem:[%s1073 + $0x8] sm:$0xff]
        %v2859 = vld [vmem:[%s1073 + $0x10] sm:$0xff]
        %v2860 = vld [vmem:[%s1073 + $0x18] sm:$0xff]
        %v2861 = vld [vmem:[%s1079] sm:$0x1]
        %v2863 = vlaneseq
        %v2864 = vshrl.u32 %v2863, 7
        %v2865 = vsub.s32 0, %v2864
        %v2866 = vrot.slane %v2861, %v2865
        %v2869 = vsel %vm1275, %v2856, 0
        %2871 = vmatprep.subr.mxu0 0.0
        %2872 = vmatpush1.msra.mxu0 %v2857
        %2873 = vmatprep.subr.mxu0 0.0
        %2874 = vmatpush1.msra.mxu0 %v2858
        %2875 = vmatprep.subr.mxu0 0.0
        %2876 = vmatpush1.msra.mxu0 %v2859
        %2877 = vmatprep.subr.mxu0 0.0
        %2878 = vmatpush1.msra.mxu0 %v2860
        %2879 = vmatprep.subr.mxu0 0.0
        %2880 = vmatpush1.msra.mxu0 0.0
        %2881 = vmatprep.subr.mxu0 0.0
        %2882 = vmatpush1.msra.mxu0 0.0
        %2883 = vmatprep.subr.mxu0 0.0
        %2884 = vmatpush1.msra.mxu0 0.0
        %2885 = vmatprep.subr.mxu0 0.0
        %2886 = vmatpush1.msra.mxu0 0.0
        %2887 = vmatprep.subr.mxu0 0.0
        %2888 = vmatpush1.msra.mxu0 0.0
        %2889 = vmatprep.subr.mxu0 0.0
        %2890 = vmatpush1.msra.mxu0 0.0
        %2891 = vmatprep.subr.mxu0 0.0
        %2892 = vmatpush1.msra.mxu0 0.0
        %2893 = vmatprep.subr.mxu0 0.0
        %2894 = vmatpush1.msra.mxu0 0.0
        %2895 = vmatprep.subr.mxu0 0.0
        %2896 = vmatpush1.msra.mxu0 0.0
        %2897 = vmatprep.subr.mxu0 0.0
        %2898 = vmatpush1.msra.mxu0 0.0
        %2899 = vmatprep.subr.mxu0 0.0
        %2900 = vmatpush1.msra.mxu0 0.0
        %2901 = vmatprep.subr.mxu0 0.0
        %2902 = vmatpush1.msra.mxu0 0.0
        %2903 = vmatprep.subr.mxu0 0.0
        %2904 = vmatpush1.msra.mxu0 0.0
        %2905 = vmatprep.subr.mxu0 0.0
        %2906 = vmatpush1.msra.mxu0 0.0
        %2907 = vmatprep.subr.mxu0 0.0
        %2908 = vmatpush1.msra.mxu0 0.0
        %2909 = vmatprep.subr.mxu0 0.0
        %2910 = vmatpush1.msra.mxu0 0.0
        %2911 = vmatprep.subr.mxu0 0.0
        %2912 = vmatpush1.msra.mxu0 0.0
        %2913 = vmatprep.subr.mxu0 0.0
        %2914 = vmatpush1.msra.mxu0 0.0
        %2915 = vmatprep.subr.mxu0 0.0
        %2916 = vmatpush1.msra.mxu0 0.0
        %2917 = vmatprep.subr.mxu0 0.0
        %2918 = vmatpush1.msra.mxu0 0.0
        %2919 = vmatprep.subr.mxu0 0.0
        %2920 = vmatpush1.msra.mxu0 0.0
        %2921 = vmatprep.subr.mxu0 0.0
        %2922 = vmatpush1.msra.mxu0 0.0
        %2923 = vmatprep.subr.mxu0 0.0
        %2924 = vmatpush1.msra.mxu0 0.0
        %2925 = vmatprep.subr.mxu0 0.0
        %2926 = vmatpush1.msra.mxu0 0.0
        %2927 = vmatprep.subr.mxu0 0.0
        %2928 = vmatpush1.msra.mxu0 0.0
        %2929 = vmatprep.subr.mxu0 0.0
        %2930 = vmatpush1.msra.mxu0 0.0
        %2931 = vmatprep.subr.mxu0 0.0
        %2932 = vmatpush1.msra.mxu0 0.0
        %2933 = vmatprep.subr.mxu0 0.0
        %2934 = vmatpush1.msra.mxu0 0.0
        %2935 = vmatprep.mubr.f32.mxu0 0.0
        %2936 = vmatmul.mubr.f32.gmra.mrb[0].mxu0 %v2869
        %v2937 = vpop.f32.mrb[0].mxu0
        %v2938 = vadd.f32 %v2866, %v2937
        %v2939 = vpop.f32.mrb[0].mxu0
        %2940 = vdwg.mxu0
        %v2941 = vadd.f32 %v2855, %v2938
        %v2942 = vxor.u32 %v2941, 2147483648
        %v2943 = vmul.f32 %v2942, 1.442695
        %v2944 = vpow.pop %v2943
        %v2945 = vadd.f32 %v2944, 1.0
        %v2946 = vrcp.pop %v2945
        %v2947 = vmul.f32 1.0, %v2946
        %2949 = vrot.lane.b32.xlu0 %v2938, 64
        %v2950 = vpop.permute.xlu0 %2949
        %v2952 = vmul.f32 %v2947, %v2950
        %2954 = vrot.lane.b32.xlu0 %v2952, 64
        %v2955 = vpop.permute.xlu0 %2954
        %v2957 = vadd.f32 %v2855, %v2955
        %v2958 = vtanh.pop %v2957
        %v2959 = vsub.f32 1.0, %v2947
        %2961 = vrot.lane.b32.xlu0 %v2958, 96
        %v2962 = vpop.permute.xlu0 %2961
        %v2964 = vmul.f32 %v2959, %v2962
        %2965 = vrot.lane.b32.xlu0 %v2856, 32
        %v2966 = vpop.permute.xlu0 %2965
        %v2968 = vmul.f32 %v2947, %v2966
        %v2969 = vadd.f32 %v2964, %v2968
        %v2970 = vsub.f32 1.0, %v1530
        %2972 = vset.pattern.permute.xlu0 0
        %2973 = vperm.xlu0 %2972, %v2970
        %v2974 = vpop.permute.xlu0 %2973
        %v2976 = vmul.f32 %v2856, %v2974
        %v2977 = vmul.f32 %v2969, %v1535
        %2979 = vrot.lane.b32.xlu0 %v2977, 96
        %v2980 = vpop.permute.xlu0 %2979
        %v2982 = vadd.f32 %v2976, %v2980
        %2983 = vst.msk [vmem:[#allocation6] sm:$0x3] %vm1121, %v2982
        %v2984 = vmul.f32 %v1535, %v2982
        %v2985 = vadd.f32 %v2984, 0.0
        %v2986 = vld [vmem:[%s1538] sm:$0x3]
        %v2987 = vld [vmem:[%s1073] sm:$0xff]
        %v2988 = vld [vmem:[%s1073 + $0x8] sm:$0xff]
        %v2989 = vld [vmem:[%s1073 + $0x10] sm:$0xff]
        %v2990 = vld [vmem:[%s1073 + $0x18] sm:$0xff]
        %v2991 = vld [vmem:[%s1079] sm:$0x1]
        %v2993 = vlaneseq
        %v2994 = vshrl.u32 %v2993, 7
        %v2995 = vsub.s32 0, %v2994
        %v2996 = vrot.slane %v2991, %v2995
        %v2999 = vsel %vm1275, %v2986, 0
        %3001 = vmatprep.subr.mxu0 0.0
        %3002 = vmatpush1.msra.mxu0 %v2987
        %3003 = vmatprep.subr.mxu0 0.0
        %3004 = vmatpush1.msra.mxu0 %v2988
        %3005 = vmatprep.subr.mxu0 0.0
        %3006 = vmatpush1.msra.mxu0 %v2989
        %3007 = vmatprep.subr.mxu0 0.0
        %3008 = vmatpush1.msra.mxu0 %v2990
        %3009 = vmatprep.subr.mxu0 0.0
        %3010 = vmatpush1.msra.mxu0 0.0
        %3011 = vmatprep.subr.mxu0 0.0
        %3012 = vmatpush1.msra.mxu0 0.0
        %3013 = vmatprep.subr.mxu0 0.0
        %3014 = vmatpush1.msra.mxu0 0.0
        %3015 = vmatprep.subr.mxu0 0.0
        %3016 = vmatpush1.msra.mxu0 0.0
        %3017 = vmatprep.subr.mxu0 0.0
        %3018 = vmatpush1.msra.mxu0 0.0
        %3019 = vmatprep.subr.mxu0 0.0
        %3020 = vmatpush1.msra.mxu0 0.0
        %3021 = vmatprep.subr.mxu0 0.0
        %3022 = vmatpush1.msra.mxu0 0.0
        %3023 = vmatprep.subr.mxu0 0.0
        %3024 = vmatpush1.msra.mxu0 0.0
        %3025 = vmatprep.subr.mxu0 0.0
        %3026 = vmatpush1.msra.mxu0 0.0
        %3027 = vmatprep.subr.mxu0 0.0
        %3028 = vmatpush1.msra.mxu0 0.0
        %3029 = vmatprep.subr.mxu0 0.0
        %3030 = vmatpush1.msra.mxu0 0.0
        %3031 = vmatprep.subr.mxu0 0.0
        %3032 = vmatpush1.msra.mxu0 0.0
        %3033 = vmatprep.subr.mxu0 0.0
        %3034 = vmatpush1.msra.mxu0 0.0
        %3035 = vmatprep.subr.mxu0 0.0
        %3036 = vmatpush1.msra.mxu0 0.0
        %3037 = vmatprep.subr.mxu0 0.0
        %3038 = vmatpush1.msra.mxu0 0.0
        %3039 = vmatprep.subr.mxu0 0.0
        %3040 = vmatpush1.msra.mxu0 0.0
        %3041 = vmatprep.subr.mxu0 0.0
        %3042 = vmatpush1.msra.mxu0 0.0
        %3043 = vmatprep.subr.mxu0 0.0
        %3044 = vmatpush1.msra.mxu0 0.0
        %3045 = vmatprep.subr.mxu0 0.0
        %3046 = vmatpush1.msra.mxu0 0.0
        %3047 = vmatprep.subr.mxu0 0.0
        %3048 = vmatpush1.msra.mxu0 0.0
        %3049 = vmatprep.subr.mxu0 0.0
        %3050 = vmatpush1.msra.mxu0 0.0
        %3051 = vmatprep.subr.mxu0 0.0
        %3052 = vmatpush1.msra.mxu0 0.0
        %3053 = vmatprep.subr.mxu0 0.0
        %3054 = vmatpush1.msra.mxu0 0.0
        %3055 = vmatprep.subr.mxu0 0.0
        %3056 = vmatpush1.msra.mxu0 0.0
        %3057 = vmatprep.subr.mxu0 0.0
        %3058 = vmatpush1.msra.mxu0 0.0
        %3059 = vmatprep.subr.mxu0 0.0
        %3060 = vmatpush1.msra.mxu0 0.0
        %3061 = vmatprep.subr.mxu0 0.0
        %3062 = vmatpush1.msra.mxu0 0.0
        %3063 = vmatprep.subr.mxu0 0.0
        %3064 = vmatpush1.msra.mxu0 0.0
        %3065 = vmatprep.mubr.f32.mxu0 0.0
        %3066 = vmatmul.mubr.f32.gmra.mrb[0].mxu0 %v2999
        %v3067 = vpop.f32.mrb[0].mxu0
        %v3068 = vadd.f32 %v2996, %v3067
        %v3069 = vpop.f32.mrb[0].mxu0
        %3070 = vdwg.mxu0
        %v3071 = vadd.f32 %v2855, %v3068
        %v3072 = vxor.u32 %v3071, 2147483648
        %v3073 = vmul.f32 %v3072, 1.442695
        %v3074 = vpow.pop %v3073
        %v3075 = vadd.f32 %v3074, 1.0
        %v3076 = vrcp.pop %v3075
        %v3077 = vmul.f32 1.0, %v3076
        %3079 = vrot.lane.b32.xlu0 %v3068, 64
        %v3080 = vpop.permute.xlu0 %3079
        %v3082 = vmul.f32 %v3077, %v3080
        %3084 = vrot.lane.b32.xlu0 %v3082, 64
        %v3085 = vpop.permute.xlu0 %3084
        %v3087 = vadd.f32 %v2855, %v3085
        %v3088 = vtanh.pop %v3087
        %v3089 = vsub.f32 1.0, %v3077
        %3091 = vrot.lane.b32.xlu0 %v3088, 96
        %v3092 = vpop.permute.xlu0 %3091
        %v3094 = vmul.f32 %v3089, %v3092
        %3095 = vrot.lane.b32.xlu0 %v2986, 32
        %v3096 = vpop.permute.xlu0 %3095
        %v3098 = vmul.f32 %v3077, %v3096
        %v3099 = vadd.f32 %v3094, %v3098
        %3100 = vset.pattern.permute.xlu0 1
        %3101 = vperm.xlu0 %3100, %v2970
        %v3102 = vpop.permute.xlu0 %3101
        %v3104 = vmul.f32 %v2986, %v3102
        %v3105 = vmul.f32 %v3099, %v1542
        %3107 = vrot.lane.b32.xlu0 %v3105, 96
        %v3108 = vpop.permute.xlu0 %3107
        %v3110 = vadd.f32 %v3104, %v3108
        %3111 = vst.msk [vmem:[%s1538] sm:$0x3] %vm1121, %v3110
        %v3112 = vmul.f32 %v1542, %v3110
        %v3113 = vadd.f32 %v2985, %v3112
        %v3114 = vld [vmem:[%s1084] sm:$0xff]
        %v3115 = vld [vmem:[%s1084 + $0x8] sm:$0xff]
        %v3116 = vld [vmem:[%s1084 + $0x10] sm:$0xff]
        %v3117 = vld [vmem:[%s1084 + $0x18] sm:$0xff]
        %v3118 = vld [vmem:[%s1092] sm:$0x1]
        %v3120 = vlaneseq
        %v3121 = vshrl.u32 %v3120, 7
        %v3122 = vsub.s32 0, %v3121
        %v3123 = vrot.slane %v3118, %v3122
        %v3126 = vsel %vm1275, %v3113, 0
        %3128 = vmatprep.subr.mxu0 0.0
        %3129 = vmatpush1.msra.mxu0 %v3114
        %3130 = vmatprep.subr.mxu0 0.0
        %3131 = vmatpush1.msra.mxu0 %v3115
        %3132 = vmatprep.subr.mxu0 0.0
        %3133 = vmatpush1.msra.mxu0 %v3116
        %3134 = vmatprep.subr.mxu0 0.0
        %3135 = vmatpush1.msra.mxu0 %v3117
        %3136 = vmatprep.subr.mxu0 0.0
        %3137 = vmatpush1.msra.mxu0 0.0
        %3138 = vmatprep.subr.mxu0 0.0
        %3139 = vmatpush1.msra.mxu0 0.0
        %3140 = vmatprep.subr.mxu0 0.0
        %3141 = vmatpush1.msra.mxu0 0.0
        %3142 = vmatprep.subr.mxu0 0.0
        %3143 = vmatpush1.msra.mxu0 0.0
        %3144 = vmatprep.subr.mxu0 0.0
        %3145 = vmatpush1.msra.mxu0 0.0
        %3146 = vmatprep.subr.mxu0 0.0
        %3147 = vmatpush1.msra.mxu0 0.0
        %3148 = vmatprep.subr.mxu0 0.0
        %3149 = vmatpush1.msra.mxu0 0.0
        %3150 = vmatprep.subr.mxu0 0.0
        %3151 = vmatpush1.msra.mxu0 0.0
        %3152 = vmatprep.subr.mxu0 0.0
        %3153 = vmatpush1.msra.mxu0 0.0
        %3154 = vmatprep.subr.mxu0 0.0
        %3155 = vmatpush1.msra.mxu0 0.0
        %3156 = vmatprep.subr.mxu0 0.0
        %3157 = vmatpush1.msra.mxu0 0.0
        %3158 = vmatprep.subr.mxu0 0.0
        %3159 = vmatpush1.msra.mxu0 0.0
        %3160 = vmatprep.subr.mxu0 0.0
        %3161 = vmatpush1.msra.mxu0 0.0
        %3162 = vmatprep.subr.mxu0 0.0
        %3163 = vmatpush1.msra.mxu0 0.0
        %3164 = vmatprep.subr.mxu0 0.0
        %3165 = vmatpush1.msra.mxu0 0.0
        %3166 = vmatprep.subr.mxu0 0.0
        %3167 = vmatpush1.msra.mxu0 0.0
        %3168 = vmatprep.subr.mxu0 0.0
        %3169 = vmatpush1.msra.mxu0 0.0
        %3170 = vmatprep.subr.mxu0 0.0
        %3171 = vmatpush1.msra.mxu0 0.0
        %3172 = vmatprep.subr.mxu0 0.0
        %3173 = vmatpush1.msra.mxu0 0.0
        %3174 = vmatprep.subr.mxu0 0.0
        %3175 = vmatpush1.msra.mxu0 0.0
        %3176 = vmatprep.subr.mxu0 0.0
        %3177 = vmatpush1.msra.mxu0 0.0
        %3178 = vmatprep.subr.mxu0 0.0
        %3179 = vmatpush1.msra.mxu0 0.0
        %3180 = vmatprep.subr.mxu0 0.0
        %3181 = vmatpush1.msra.mxu0 0.0
        %3182 = vmatprep.subr.mxu0 0.0
        %3183 = vmatpush1.msra.mxu0 0.0
        %3184 = vmatprep.subr.mxu0 0.0
        %3185 = vmatpush1.msra.mxu0 0.0
        %3186 = vmatprep.subr.mxu0 0.0
        %3187 = vmatpush1.msra.mxu0 0.0
        %3188 = vmatprep.subr.mxu0 0.0
        %3189 = vmatpush1.msra.mxu0 0.0
        %3190 = vmatprep.subr.mxu0 0.0
        %3191 = vmatpush1.msra.mxu0 0.0
        %3192 = vmatprep.mubr.f32.mxu0 0.0
        %3193 = vmatmul.mubr.f32.gmra.mrb[0].mxu0 %v3126
        %v3194 = vpop.f32.mrb[0].mxu0
        %v3195 = vadd.f32 %v3123, %v3194
        %v3196 = vpop.f32.mrb[0].mxu0
        %3197 = vdwg.mxu0
        %v3198 = vld [vmem:[#allocation7] sm:$0x3]
        %v3199 = vld [vmem:[%s1089] sm:$0xff]
        %v3200 = vld [vmem:[%s1089 + $0x8] sm:$0xff]
        %v3201 = vld [vmem:[%s1089 + $0x10] sm:$0xff]
        %v3202 = vld [vmem:[%s1089 + $0x18] sm:$0xff]
        %v3203 = vld [vmem:[%s1095] sm:$0x1]
        %v3205 = vlaneseq
        %v3206 = vshrl.u32 %v3205, 7
        %v3207 = vsub.s32 0, %v3206
        %v3208 = vrot.slane %v3203, %v3207
        %v3211 = vsel %vm1275, %v3198, 0
        %3213 = vmatprep.subr.mxu0 0.0
        %3214 = vmatpush1.msra.mxu0 %v3199
        %3215 = vmatprep.subr.mxu0 0.0
        %3216 = vmatpush1.msra.mxu0 %v3200
        %3217 = vmatprep.subr.mxu0 0.0
        %3218 = vmatpush1.msra.mxu0 %v3201
        %3219 = vmatprep.subr.mxu0 0.0
        %3220 = vmatpush1.msra.mxu0 %v3202
        %3221 = vmatprep.subr.mxu0 0.0
        %3222 = vmatpush1.msra.mxu0 0.0
        %3223 = vmatprep.subr.mxu0 0.0
        %3224 = vmatpush1.msra.mxu0 0.0
        %3225 = vmatprep.subr.mxu0 0.0
        %3226 = vmatpush1.msra.mxu0 0.0
        %3227 = vmatprep.subr.mxu0 0.0
        %3228 = vmatpush1.msra.mxu0 0.0
        %3229 = vmatprep.subr.mxu0 0.0
        %3230 = vmatpush1.msra.mxu0 0.0
        %3231 = vmatprep.subr.mxu0 0.0
        %3232 = vmatpush1.msra.mxu0 0.0
        %3233 = vmatprep.subr.mxu0 0.0
        %3234 = vmatpush1.msra.mxu0 0.0
        %3235 = vmatprep.subr.mxu0 0.0
        %3236 = vmatpush1.msra.mxu0 0.0
        %3237 = vmatprep.subr.mxu0 0.0
        %3238 = vmatpush1.msra.mxu0 0.0
        %3239 = vmatprep.subr.mxu0 0.0
        %3240 = vmatpush1.msra.mxu0 0.0
        %3241 = vmatprep.subr.mxu0 0.0
        %3242 = vmatpush1.msra.mxu0 0.0
        %3243 = vmatprep.subr.mxu0 0.0
        %3244 = vmatpush1.msra.mxu0 0.0
        %3245 = vmatprep.subr.mxu0 0.0
        %3246 = vmatpush1.msra.mxu0 0.0
        %3247 = vmatprep.subr.mxu0 0.0
        %3248 = vmatpush1.msra.mxu0 0.0
        %3249 = vmatprep.subr.mxu0 0.0
        %3250 = vmatpush1.msra.mxu0 0.0
        %3251 = vmatprep.subr.mxu0 0.0
        %3252 = vmatpush1.msra.mxu0 0.0
        %3253 = vmatprep.subr.mxu0 0.0
        %3254 = vmatpush1.msra.mxu0 0.0
        %3255 = vmatprep.subr.mxu0 0.0
        %3256 = vmatpush1.msra.mxu0 0.0
        %3257 = vmatprep.subr.mxu0 0.0
        %3258 = vmatpush1.msra.mxu0 0.0
        %3259 = vmatprep.subr.mxu0 0.0
        %3260 = vmatpush1.msra.mxu0 0.0
        %3261 = vmatprep.subr.mxu0 0.0
        %3262 = vmatpush1.msra.mxu0 0.0
        %3263 = vmatprep.subr.mxu0 0.0
        %3264 = vmatpush1.msra.mxu0 0.0
        %3265 = vmatprep.subr.mxu0 0.0
        %3266 = vmatpush1.msra.mxu0 0.0
        %3267 = vmatprep.subr.mxu0 0.0
        %3268 = vmatpush1.msra.mxu0 0.0
        %3269 = vmatprep.subr.mxu0 0.0
        %3270 = vmatpush1.msra.mxu0 0.0
        %3271 = vmatprep.subr.mxu0 0.0
        %3272 = vmatpush1.msra.mxu0 0.0
        %3273 = vmatprep.subr.mxu0 0.0
        %3274 = vmatpush1.msra.mxu0 0.0
        %3275 = vmatprep.subr.mxu0 0.0
        %3276 = vmatpush1.msra.mxu0 0.0
        %3277 = vmatprep.mubr.f32.mxu0 0.0
        %3278 = vmatmul.mubr.f32.gmra.mrb[0].mxu0 %v3211
        %v3279 = vpop.f32.mrb[0].mxu0
        %v3280 = vadd.f32 %v3208, %v3279
        %v3281 = vpop.f32.mrb[0].mxu0
        %3282 = vdwg.mxu0
        %v3283 = vadd.f32 %v3195, %v3280
        %v3284 = vxor.u32 %v3283, 2147483648
        %v3285 = vmul.f32 %v3284, 1.442695
        %v3286 = vpow.pop %v3285
        %v3287 = vadd.f32 %v3286, 1.0
        %v3288 = vrcp.pop %v3287
        %v3289 = vmul.f32 1.0, %v3288
        %3291 = vrot.lane.b32.xlu0 %v3280, 64
        %v3292 = vpop.permute.xlu0 %3291
        %v3294 = vmul.f32 %v3289, %v3292
        %3296 = vrot.lane.b32.xlu0 %v3294, 64
        %v3297 = vpop.permute.xlu0 %3296
        %v3299 = vadd.f32 %v3195, %v3297
        %v3300 = vtanh.pop %v3299
        %v3301 = vsub.f32 1.0, %v3289
        %3303 = vrot.lane.b32.xlu0 %v3300, 96
        %v3304 = vpop.permute.xlu0 %3303
        %v3306 = vmul.f32 %v3301, %v3304
        %3307 = vrot.lane.b32.xlu0 %v3198, 32
        %v3308 = vpop.permute.xlu0 %3307
        %v3310 = vmul.f32 %v3289, %v3308
        %v3311 = vadd.f32 %v3306, %v3310
        %3313 = vrot.lane.b32.xlu0 %v3311, 96
        %v3314 = vpop.permute.xlu0 %3313
        %3316 = vst.msk [vmem:[#allocation7] sm:$0x3] %vm1121, %v3314
        %s3317 = scalar_lea.vmem %s1120, %s1528
        %3318 = vst.msk [vmem:[%s3317] sm:$0x3] %vm1121, %v3314
        %s3319 = scalar_lea.vmem %s2, %s1523
        %v3320 = vld [vmem:[%s3319] sm:$0x1]
        %v3321 = vlaneseq
        %v3322 = vshrl.u32 %v3321, 7
        %v3323 = vsub.s32 0, %v3322
        %v3324 = vrot.slane %v3320, %v3323
        %3326 = vrot.lane.b32.xlu0 %v3324, 32
        %v3327 = vpop.permute.xlu0 %3326
        %v3329 = vadd.f32 %v1739, %v3327
        %3331 = vrot.lane.b32.xlu0 %v3329, 96
        %v3332 = vpop.permute.xlu0 %3331
        %s3334 = scalar_lea.vmem [#allocation2], %s1528
        %3335 = vst.msk [vmem:[%s3334] sm:$0x3] %vm1121, %v3332
        %3337 = vrot.lane.b32.xlu0 %v1739, 96
        %v3338 = vpop.permute.xlu0 %3337
        %3340 = vst.msk [vmem:[#allocation5] sm:$0x3] %vm1121, %v3338
      $region121: #{bimodel_forward.2} parent=115 // loop_footer
        %s1527 = sadd.s32 1, %s1523
      $region122: #{bimodel_forward.2} parent=115 // loop_footer_branch
        %1522 = sbr.rel target = $region118
      $region123: #{bimodel_forward.2} parent=115 // loop_exit
        _
      %p3341 = scmp.lt.s32.totalorder %s35, 1
      %s3342 = scalar_select %p3341, %s35, 1
      %s3343 = smul.addr %s3342, 6
      %s3344 = smul.addr %s3343, 2
      %s3345 = scalar_lea.vmem %s24, %s3344
      // Predicated region
      $region128: #{bimodel_forward.2} parent=115 // pred_check
        %p3346 = pneg %p672
      $region129: #{bimodel_forward.2} parent=115 // pred_check_branch
        %3348 = sbr.rel (%p3346) target = $region131
      $region130: #{bimodel_forward.2} parent=115 // pred_region
        _
      $region131: #{bimodel_forward.2} parent=115 // pred_fallthru
        _
    $region116: #{bimodel_forward.2} parent=5 // pred_fallthru
      _
    %p3349 = scmp.le.s32.totalorder 2, %s30
    // Predicated region
    $region132: #{bimodel_forward.2} parent=5 // pred_check
      %p3350 = pneg %p3349
    $region133: #{bimodel_forward.2} parent=5 // pred_check_branch
      %3352 = sbr.rel (%p3350) target = $region135
    $region134: #{bimodel_forward.2} parent=5 // pred_region
      %s3353 = ssub.s32 %s30, 2
      // Predicated region
      $region136: #{bimodel_forward.2} parent=134 // pred_check
        %p3354 = pneg %p678
      $region137: #{bimodel_forward.2} parent=134 // pred_check_branch
        %3356 = sbr.rel (%p3354) target = $region139
      $region138: #{bimodel_forward.2} parent=134 // pred_region
        %p3357 = scmp.lt.s32.totalorder %s36, 1
        %s3358 = scalar_select %p3357, %s36, 1
        %s3359 = smul.addr %s3358, 6
        %s3360 = smul.addr %s3359, 2
        %s3361 = scalar_lea.vmem %s24, %s3360
      $region139: #{bimodel_forward.2} parent=134 // pred_fallthru
        _
    $region135: #{bimodel_forward.2} parent=5 // pred_fallthru
      _
  $region6: #{bimodel_forward.2} parent=0 // loop_footer
    %s34 = sadd.s32 1, %s30
  $region7: #{bimodel_forward.2} parent=0 // loop_footer_branch
    %29 = sbr.rel target = $region3
  $region8: #{bimodel_forward.2} parent=0 // loop_exit
    _

</llo_original>
